<compile_context>
chip_gen: v6e
topology: v6e:2x2x1
jax: 0.10.0
libtpu: 0.0.40
codegen_flags: <defaults>
</compile_context>

<pallas_src>
import functools

import jax
import jax.numpy as jnp
from jax.experimental import pallas as pl
from jax.experimental.pallas import tpu as pltpu

LANE = 128          # lane width -> output-channel padding target
_BN_EPS = 1e-5


def _round_up(x, m):
    return ((x + m - 1) // m) * m


# ----------------------------------------------------------------------------
# Generation-aware tuning knobs (defensive: fall back to safe defaults).
# ----------------------------------------------------------------------------
def _chip_kind():
    try:
        return jax.devices()[0].device_kind.lower()
    except Exception:
        return ""


def _pick_tc(cp):
    kind = _chip_kind()
    is_v5e = ("v5e" in kind) or ("v5 lite" in kind) or ("v5litepod" in kind)
    if cp % 256 == 0 and not is_v5e:
        return 256      # 256x256 MXU on v6e/v7x likes wider N tiles
    return 128          # v5e (128-deep MXU) / small Cout


def _vmem_limit_bytes():
    phys = 64 * 1024 * 1024                  # conservative default (v7x-sized)
    try:
        info = pltpu.get_tpu_info()
        phys = int(getattr(info, "vmem_capacity_bytes", phys))
    except Exception:
        pass
    lim = phys * 3 // 4
    return int(min(max(lim, 32 * 1024 * 1024), 100 * 1024 * 1024))


def _grid_and_maps(N, n_m, n_c, x_blk_bytes, w_blk_bytes):
    """Order the grid so the larger operand stays VMEM-resident."""
    c_inner_traffic = N * n_m * (x_blk_bytes + n_c * w_blk_bytes)
    c_outer_traffic = n_c * (w_blk_bytes + N * n_m * x_blk_bytes)
    if c_outer_traffic < c_inner_traffic:     # weight-heavy late stages
        grid = (n_c, N, n_m)
        sel = lambda c, n, m: (n, m, c)
    else:                                     # activation-heavy early stages
        grid = (N, n_m, n_c)
        sel = lambda n, m, c: (n, m, c)
    return grid, sel


# ----------------------------------------------------------------------------
# Pallas kernels.
# ----------------------------------------------------------------------------
def _tap_gemm_kernel(x_ref, w_ref, b_ref, o_ref, acc_ref, *, wh, tm, tm_in):
    # x_ref: (1, 1, 4*tm_in, Cin) bf16  phase-split row window (+halo)
    # w_ref: (9, Cin, tc)         bf16  BN-scale-folded conv weight tile
    # b_ref: (1, tc)              f32   folded BN bias
    # o_ref: (1, tm, tc)          bf16  flattened (Ho, Wo+1) x Cout tile
    # acc_ref: (tm, tc)           f32   VMEM scratch accumulator
    acc_ref[...] = jnp.zeros_like(acc_ref)
    for kh in range(3):
        for kw in range(3):
            phase = (kh % 2) * 2 + (kw % 2)
            off = phase * tm_in + (kh // 2) * wh + (kw // 2)   # static
            acc_ref[...] += jnp.dot(x_ref[0, 0, off:off + tm, :],
                                    w_ref[kh * 3 + kw],
                                    preferred_element_type=jnp.float32)
    o_ref[0] = jnp.maximum(acc_ref[...] + b_ref[...], 0.0).astype(o_ref.dtype)


def _stem_gemm_kernel(x_ref, w_ref, b_ref, o_ref):
    # Cin=3 stem: taps packed along K in the wrapper -> single MXU matmul.
    # x_ref: (1, tm, Kp) bf16, w_ref: (Kp, tc) bf16, b_ref: (1, tc) f32.
    acc = jnp.dot(x_ref[0], w_ref[...], preferred_element_type=jnp.float32)
    o_ref[0] = jnp.maximum(acc + b_ref[...], 0.0).astype(o_ref.dtype)


# ----------------------------------------------------------------------------
# Wrapper-side parameter folding (FrozenBatchNorm2d -> affine into weight).
# ----------------------------------------------------------------------------
def _fold_params(p, cin_pad):
    scale = p["bn_weight"] * jax.lax.rsqrt(p["bn_running_var"] + _BN_EPS)
    bias = p["bn_bias"] - p["bn_running_mean"] * scale
    w = p["conv_weight"] * scale                      # (3,3,Cin,Cout) * (Cout,)
    _, _, cin, cout = w.shape
    cp = _round_up(cout, LANE)                        # lane-dense Cout
    w = jnp.pad(w, ((0, 0), (0, 0), (0, cin_pad - cin), (0, cp - cout)))
    bias = jnp.pad(bias, (0, cp - cout))
    return (w.reshape(9, cin_pad, cp).astype(jnp.bfloat16),
            bias.reshape(1, cp).astype(jnp.float32), cout, cp)


# ----------------------------------------------------------------------------
# Generic stage (Cin already lane-padded): 3x3 s2 conv + FrozenBN + ReLU.
# ----------------------------------------------------------------------------
def _conv_bn_relu_stage(x, H, W, p, *, tm_target):
    """x: (N, H_buf>=H, W_buf>=W, Cin_pad) bf16; only [:, :H, :W, :] is valid.

    Returns (y, Ho, Wo, Cout) with y: (N, Ho, Wo+1, Cout_pad) bf16; column Wo
    and channels >= Cout of y are padding (channel padding is exactly zero).
    """
    N, _, _, cin_pad = x.shape
    w9, bias, cout, cp = _fold_params(p, cin_pad)

    Ho, Wo = (H + 1) // 2, (W + 1) // 2               # PyTorch conv output size
    Hh, Wh = Ho + 1, Wo + 1
    L = Hh * Wh
    Mq = Ho * Wh                                      # flattened rows incl. garbage col

    # Spatial M tiling (16-aligned for bf16 sublanes) + halo'd input windows.
    tm = min(_round_up(tm_target, 16), _round_up(Mq, 16))
    n_m = pl.cdiv(Mq, tm)
    m_pad = n_m * tm
    tm_in = _round_up(tm + Wh + 1, 16)                # window rows incl. halo
    l_pad = (n_m - 1) * tm + tm_in                    # always >= L

    # Phase split: phase[(r,c)][i, j] = x_padded[2i+r, 2j+c].
    xv = x[:, :H, :W, :]
    xp = jnp.pad(xv, ((0, 0), (1, 2 * Hh - 1 - H), (1, 2 * Wh - 1 - W), (0, 0)))
    xp = xp.reshape(N, Hh, 2, Wh, 2, cin_pad)
    xp = jnp.transpose(xp, (0, 2, 4, 1, 3, 5)).reshape(N, 4, L, cin_pad)
    xp = jnp.pad(xp, ((0, 0), (0, 0), (0, l_pad - L), (0, 0)))

    if n_m == 1:                                      # window == whole map (free)
        xw = xp.reshape(N, 1, 4 * l_pad, cin_pad)
    else:                                             # halo windows (tiny overlap)
        idx = ((jnp.arange(4) * l_pad)[None, :, None]
               + (jnp.arange(n_m) * tm)[:, None, None]
               + jnp.arange(tm_in)[None, None, :]).reshape(n_m, 4 * tm_in)
        xw = jnp.take(xp.reshape(N, 4 * l_pad, cin_pad), idx, axis=1)
        xw = xw.reshape(N, n_m, 4 * tm_in, cin_pad)

    tc = _pick_tc(cp)
    n_c = cp // tc

    x_blk = 4 * tm_in * cin_pad * 2
    w_blk = 9 * cin_pad * tc * 2
    grid, sel = _grid_and_maps(N, n_m, n_c, x_blk, w_blk)
    x_map = lambda *g: (sel(*g)[0], sel(*g)[1], 0, 0)
    w_map = lambda *g: (0, 0, sel(*g)[2])
    b_map = lambda *g: (0, sel(*g)[2])
    o_map = lambda *g: sel(*g)

    kernel = functools.partial(_tap_gemm_kernel, wh=Wh, tm=tm, tm_in=tm_in)
    y = pl.pallas_call(
        kernel,
        out_shape=jax.ShapeDtypeStruct((N, m_pad, cp), jnp.bfloat16),
        grid_spec=pltpu.PrefetchScalarGridSpec(
            num_scalar_prefetch=0,
            grid=grid,
            in_specs=[
                pl.BlockSpec((1, 1, 4 * tm_in, cin_pad), x_map),
                pl.BlockSpec((9, cin_pad, tc), w_map),
                pl.BlockSpec((1, tc), b_map),
            ],
            out_specs=pl.BlockSpec((1, tm, tc), o_map),
            scratch_shapes=[pltpu.VMEM((tm, tc), jnp.float32)],
        ),
        compiler_params=pltpu.CompilerParams(
            dimension_semantics=("parallel", "parallel", "parallel"),
            vmem_limit_bytes=_vmem_limit_bytes(),
        ),
    )(xw, w9, bias)

    y = y[:, :Mq, :].reshape(N, Ho, Wh, cp)
    return y, Ho, Wo, cout


# ----------------------------------------------------------------------------
# Stem stage (Cin=3): taps packed along K -> one matmul per tile.
# ----------------------------------------------------------------------------
def _stem_conv_bn_relu_stage(x, H, W, p, *, tm_target):
    N = x.shape[0]
    cin = p["conv_weight"].shape[2]
    cout = p["conv_weight"].shape[3]

    scale = p["bn_weight"] * jax.lax.rsqrt(p["bn_running_var"] + _BN_EPS)
    bias = p["bn_bias"] - p["bn_running_mean"] * scale
    w = (p["conv_weight"] * scale).reshape(9 * cin, cout)   # (kh,kw,cin) major
    K = 9 * cin
    Kp = _round_up(K, 32)
    cp = _round_up(cout, LANE)
    w = jnp.pad(w, ((0, Kp - K), (0, cp - cout))).astype(jnp.bfloat16)
    b = jnp.pad(bias, (0, cp - cout)).reshape(1, cp).astype(jnp.float32)

    Ho, Wo = (H + 1) // 2, (W + 1) // 2
    Mq = Ho * Wo
    tm = min(_round_up(tm_target, 16), _round_up(Mq, 16))
    n_m = pl.cdiv(Mq, tm)
    m_pad = n_m * tm

    # K-packed im2col (cheap: 3 input channels).
    xv = x[:, :H, :W, :cin].astype(jnp.bfloat16)
    xpd = jnp.pad(xv, ((0, 0), (1, 2 * Ho - H), (1, 2 * Wo - W), (0, 0)))
    taps = [xpd[:, kh:kh + 2 * Ho:2, kw:kw + 2 * Wo:2, :]
            for kh in range(3) for kw in range(3)]
    xi = jnp.concatenate(taps, axis=-1).reshape(N, Mq, K)
    xi = jnp.pad(xi, ((0, 0), (0, m_pad - Mq), (0, Kp - K)))

    tc = _pick_tc(cp)
    n_c = cp // tc
    grid, sel = _grid_and_maps(N, n_m, n_c, tm * Kp * 2, Kp * tc * 2)
    x_map = lambda *g: (sel(*g)[0], sel(*g)[1], 0)
    w_map = lambda *g: (0, sel(*g)[2])
    b_map = lambda *g: (0, sel(*g)[2])
    o_map = lambda *g: sel(*g)

    y = pl.pallas_call(
        _stem_gemm_kernel,
        out_shape=jax.ShapeDtypeStruct((N, m_pad, cp), jnp.bfloat16),
        grid_spec=pltpu.PrefetchScalarGridSpec(
            num_scalar_prefetch=0,
            grid=grid,
            in_specs=[
                pl.BlockSpec((1, tm, Kp), x_map),
                pl.BlockSpec((Kp, tc), w_map),
                pl.BlockSpec((1, tc), b_map),
            ],
            out_specs=pl.BlockSpec((1, tm, tc), o_map),
        ),
        compiler_params=pltpu.CompilerParams(
            dimension_semantics=("parallel", "parallel", "parallel"),
            vmem_limit_bytes=_vmem_limit_bytes(),
        ),
    )(xi, w, b)

    y = y[:, :Mq, :].reshape(N, Ho, Wo, cp)
    return y, Ho, Wo, cout


# ----------------------------------------------------------------------------
# Glue: F.interpolate(mask[None].float(), size=(h,w)).bool()[0] (mode='nearest')
# ----------------------------------------------------------------------------
def _interpolate_mask_nearest(mask_bool, size):
    n, h, w = mask_bool.shape
    ho, wo = size
    rows = (jnp.arange(ho) * h) // ho
    cols = (jnp.arange(wo) * w) // wo
    return mask_bool[:, rows][:, :, cols].astype(jnp.bool_)


# ----------------------------------------------------------------------------
# Parameter init (deterministic, synthetic — shapes mirror a small
# features_only backbone with out_indices=(1, 2, 3, 4)).
# TODO(synk): real timm `create_model(..., pretrained=True)` weights/topology
# are not reproducible in-script; synthetic conv-bn-relu stages stand in.
# ----------------------------------------------------------------------------
STAGE_CHANNELS = (8, 16, 32, 64, 128)   # stem + 4 output stages (stride 2 each)


def init_params(key):
    params = []
    cin = 3
    for cout in STAGE_CHANNELS:
        key, kw, kg, kb, km, kv = jax.random.split(key, 6)
        params.append({
            "conv_weight": 0.05 * jax.random.normal(kw, (3, 3, cin, cout), jnp.float32),
            "bn_weight": 1.0 + 0.1 * jax.random.normal(kg, (cout,), jnp.float32),
            "bn_bias": 0.1 * jax.random.normal(kb, (cout,), jnp.float32),
            "bn_running_mean": 0.1 * jax.random.normal(km, (cout,), jnp.float32),
            "bn_running_var": 1.0 + 0.1 * jax.random.uniform(kv, (cout,), jnp.float32),
        })
        cin = cout
    return params


# ----------------------------------------------------------------------------
# TimmBackbone.forward equivalent.
# ----------------------------------------------------------------------------
def timm_backbone_forward(tensors_nchw, mask_nhw, params,
                          return_interm_layers=True, main_layer=-1,
                          tm_target=512):
    """Returns {layer{i}: (feature NCHW f32, mask NHW bool)} (NestedTensor-like)."""
    x = jnp.transpose(tensors_nchw, (0, 2, 3, 1)).astype(jnp.bfloat16)  # NCHW->NHWC
    H, W = x.shape[1], x.shape[2]
    feats = []
    for i, p in enumerate(params):
        if i == 0:                                     # Cin=3 stem, K-packed taps
            x, Ho, Wo, cout = _stem_conv_bn_relu_stage(x, H, W, p, tm_target=tm_target)
        else:
            x, Ho, Wo, cout = _conv_bn_relu_stage(x, H, W, p, tm_target=tm_target)
        H, W = Ho, Wo
        if i >= 1:                                     # out_indices=(1,2,3,4)
            feats.append((x, Ho, Wo, cout))

    xs = feats if return_interm_layers else [feats[main_layer]]

    out = {}
    for i, (f, h, w, c) in enumerate(xs):
        f_valid = f[:, :, :w, :c].astype(jnp.float32)  # drop lane/col padding
        f_nchw = jnp.transpose(f_valid, (0, 3, 1, 2))
        m = _interpolate_mask_nearest(mask_nhw, (h, w))
        out[f"layer{i}"] = (f_nchw, m)
    return out


# ----------------------------------------------------------------------------
# Pure-JAX reference (lax.conv) for correctness checking.
# ----------------------------------------------------------------------------
def _reference_forward(tensors_nchw, mask_nhw, params):
    x = jnp.transpose(tensors_nchw, (0, 2, 3, 1)).astype(jnp.bfloat16)
    feats = []
    for i, p in enumerate(params):
        scale = p["bn_weight"] * jax.lax.rsqrt(p["bn_running_var"] + _BN_EPS)
        bias = p["bn_bias"] - p["bn_running_mean"] * scale
        w = (p["conv_weight"] * scale).astype(jnp.bfloat16)
        y = jax.lax.conv_general_dilated(
            x, w, window_strides=(2, 2), padding=((1, 1), (1, 1)),
            dimension_numbers=("NHWC", "HWIO", "NHWC"),
            preferred_element_type=jnp.float32)
        x = jnp.maximum(y + bias, 0.0).astype(jnp.bfloat16)
        if i >= 1:
            feats.append(x)
    out = {}
    for i, f in enumerate(feats):
        fn = jnp.transpose(f.astype(jnp.float32), (0, 3, 1, 2))
        m = _interpolate_mask_nearest(mask_nhw, fn.shape[-2:])
        out[f"layer{i}"] = (fn, m)
    return out


if __name__ == "__main__":
    key = jax.random.PRNGKey(0)
    k_param, k_x = jax.random.split(key)

    params = init_params(k_param)

    # Small shapes consistent with the module: NCHW images + boolean padding mask.
    x = jax.random.normal(k_x, (2, 3, 32, 32), jnp.float32)
    mask = jnp.zeros((2, 32, 32), jnp.bool_)
    mask = mask.at[0, :, 24:].set(True)                 # image 0 padded on right
    mask = mask.at[1, 28:, :].set(True)                 # image 1 padded on bottom

    ref = _reference_forward(x, mask, params)

    # Sanity: 4 output layers with halving spatial sizes and growing channels.
    expected = {
        "layer0": ((2, 16, 8, 8), (2, 8, 8)),
        "layer1": ((2, 32, 4, 4), (2, 4, 4)),
        "layer2": ((2, 64, 2, 2), (2, 2, 2)),
        "layer3": ((2, 128, 1, 1), (2, 1, 1)),
    }

    # tm_target=512 is the production tile; tm_target=48 exercises the
    # multi-M-tile (halo-window) path at these small shapes.
    for tm_target in (512, 48):
        fwd = jax.jit(functools.partial(timm_backbone_forward,
                                        return_interm_layers=True,
                                        main_layer=-1, tm_target=tm_target))
        out = fwd(x, mask, params)
        out = jax.tree_util.tree_map(jax.block_until_ready, out)

        for name, (fshape, mshape) in expected.items():
            f, m = out[name]
            fr, mr = ref[name]
            assert f.shape == fshape, (name, f.shape)
            assert m.shape == mshape and m.dtype == jnp.bool_, (name, m.shape, m.dtype)
            assert bool(jnp.all(jnp.isfinite(f))), name
            assert bool(jnp.array_equal(m, mr)), name
            err = float(jnp.max(jnp.abs(f - fr)))
            assert err < 2e-2, (name, tm_target, err)

    print("KERNEL_OK")
</pallas_src>

<mosaic_0001>
module attributes {stable_mosaic.version = 11 : i64} {
  func.func @_stem_gemm_kernel(%arg0: i32, %arg1: i32, %arg2: i32, %arg3: memref<1x256x32xbf16, #tpu.memory_space<vmem>>, %arg4: memref<32x128xbf16, #tpu.memory_space<vmem>>, %arg5: memref<1x128xf32, #tpu.memory_space<vmem>>, %arg6: memref<1x256x128xbf16, #tpu.memory_space<vmem>>) attributes {dimension_semantics = [#tpu.dimension_semantics<parallel>, #tpu.dimension_semantics<parallel>, #tpu.dimension_semantics<parallel>], iteration_bounds = array<i64: 1, 2, 1>, scalar_prefetch = 0 : i64, scratch_operands = 0 : i64, tpu.core_type = #tpu.core_type<tc>, window_params = [{transform_indices = @transform_0, window_bounds = array<i64: 1, 256, 32>}, {transform_indices = @transform_1, window_bounds = array<i64: 32, 128>}, {transform_indices = @transform_2, window_bounds = array<i64: 1, 128>}, {transform_indices = @transform_3, window_bounds = array<i64: 1, 256, 128>}]} {
    %c0 = arith.constant 0 : index
    %c0_0 = arith.constant 0 : index
    %c0_1 = arith.constant 0 : index
    %0 = vector.load %arg3[%c0, %c0_0, %c0_1] : memref<1x256x32xbf16, #tpu.memory_space<vmem>>, vector<1x256x32xbf16>
    %1 = vector.shape_cast %0 : vector<1x256x32xbf16> to vector<256x32xbf16>
    %c0_2 = arith.constant 0 : index
    %c0_3 = arith.constant 0 : index
    %2 = vector.load %arg4[%c0_2, %c0_3] : memref<32x128xbf16, #tpu.memory_space<vmem>>, vector<32x128xbf16>
    %cst = arith.constant dense<0.000000e+00> : vector<256x128xf32>
    %3 = tpu.matmul %1, %2, %cst {dimension_numbers = #tpu.dot_dimension_numbers<[1], [0], [0], [1], [0, 0, 1, 1], [], []>} : vector<256x32xbf16>, vector<32x128xbf16>, vector<256x128xf32> -> vector<256x128xf32>
    %c0_4 = arith.constant 0 : index
    %c0_5 = arith.constant 0 : index
    %4 = vector.load %arg5[%c0_4, %c0_5] : memref<1x128xf32, #tpu.memory_space<vmem>>, vector<1x128xf32>
    %5 = vector.broadcast %4 : vector<1x128xf32> to vector<256x128xf32>
    %6 = arith.addf %3, %5 : vector<256x128xf32>
    %cst_6 = arith.constant 0.000000e+00 : f32
    %7 = vector.broadcast %cst_6 : f32 to vector<256x128xf32>
    %8 = arith.maximumf %6, %7 : vector<256x128xf32>
    %9 = arith.truncf %8 : vector<256x128xf32> to vector<256x128xbf16>
    %c0_7 = arith.constant 0 : index
    %c0_8 = arith.constant 0 : index
    %c0_9 = arith.constant 0 : index
    %10 = vector.load %arg6[%c0_7, %c0_8, %c0_9] : memref<1x256x128xbf16, #tpu.memory_space<vmem>>, vector<1x256x128xbf16>
    %11 = vector.shape_cast %10 : vector<1x256x128xbf16> to vector<256x128xbf16>
    %12 = vector.shape_cast %9 : vector<256x128xbf16> to vector<1x256x128xbf16>
    tpu.vector_store %arg6[%c0_7, %c0_8, %c0_9], %12 {strides = array<i32>} : memref<1x256x128xbf16, #tpu.memory_space<vmem>>, vector<1x256x128xbf16>,
    return
  }
  func.func @transform_0(%arg0: i32, %arg1: i32, %arg2: i32) -> (i32, i32, i32) {
    %c0_i32 = arith.constant 0 : i32
    %c0_i32_0 = arith.constant 0 : i32
    return %arg1, %arg2, %c0_i32 : i32, i32, i32
  }
  func.func @transform_1(%arg0: i32, %arg1: i32, %arg2: i32) -> (i32, i32) {
    %c0_i32 = arith.constant 0 : i32
    %c0_i32_0 = arith.constant 0 : i32
    return %c0_i32, %arg0 : i32, i32
  }
  func.func @transform_2(%arg0: i32, %arg1: i32, %arg2: i32) -> (i32, i32) {
    %c0_i32 = arith.constant 0 : i32
    %c0_i32_0 = arith.constant 0 : i32
    return %c0_i32, %arg0 : i32, i32
  }
  func.func @transform_3(%arg0: i32, %arg1: i32, %arg2: i32) -> (i32, i32, i32) {
    %c0_i32 = arith.constant 0 : i32
    return %arg1, %arg2, %arg0 : i32, i32, i32
  }
}

module attributes {stable_mosaic.version = 11 : i64} {
  func.func @_tap_gemm_kernel(%arg0: i32, %arg1: i32, %arg2: i32, %arg3: memref<1x1x384x128xbf16, #tpu.memory_space<vmem>>, %arg4: memref<9x128x128xbf16, #tpu.memory_space<vmem>>, %arg5: memref<1x128xf32, #tpu.memory_space<vmem>>, %arg6: memref<1x80x128xbf16, #tpu.memory_space<vmem>>, %arg7: memref<80x128xf32, #tpu.memory_space<vmem>>) attributes {dimension_semantics = [#tpu.dimension_semantics<parallel>, #tpu.dimension_semantics<parallel>, #tpu.dimension_semantics<parallel>], iteration_bounds = array<i64: 1, 2, 1>, scalar_prefetch = 0 : i64, scratch_operands = 1 : i64, tpu.core_type = #tpu.core_type<tc>, window_params = [{transform_indices = @transform_0, window_bounds = array<i64: 1, 1, 384, 128>}, {transform_indices = @transform_1, window_bounds = array<i64: 9, 128, 128>}, {transform_indices = @transform_2, window_bounds = array<i64: 1, 128>}, {transform_indices = @transform_3, window_bounds = array<i64: 1, 80, 128>}]} {
    %cst = arith.constant 0.000000e+00 : f32
    %0 = vector.broadcast %cst : f32 to vector<80x128xf32>
    %c0 = arith.constant 0 : index
    %c0_0 = arith.constant 0 : index
    %1 = vector.load %arg7[%c0, %c0_0] : memref<80x128xf32, #tpu.memory_space<vmem>>, vector<80x128xf32>
    tpu.vector_store %arg7[%c0, %c0_0], %0 {strides = array<i32>} : memref<80x128xf32, #tpu.memory_space<vmem>>, vector<80x128xf32>,
    %c0_1 = arith.constant 0 : index
    %c0_2 = arith.constant 0 : index
    %2 = vector.load %arg7[%c0_1, %c0_2] : memref<80x128xf32, #tpu.memory_space<vmem>>, vector<80x128xf32>
    %c0_3 = arith.constant 0 : index
    %c0_4 = arith.constant 0 : index
    %c0_5 = arith.constant 0 : index
    %c0_6 = arith.constant 0 : index
    %3 = vector.load %arg3[%c0_3, %c0_4, %c0_5, %c0_6] : memref<1x1x384x128xbf16, #tpu.memory_space<vmem>>, vector<1x1x80x128xbf16>
    %4 = vector.shape_cast %3 : vector<1x1x80x128xbf16> to vector<80x128xbf16>
    %c0_7 = arith.constant 0 : index
    %c0_8 = arith.constant 0 : index
    %c0_9 = arith.constant 0 : index
    %5 = vector.load %arg4[%c0_7, %c0_8, %c0_9] : memref<9x128x128xbf16, #tpu.memory_space<vmem>>, vector<1x128x128xbf16>
    %6 = vector.shape_cast %5 : vector<1x128x128xbf16> to vector<128x128xbf16>
    %cst_10 = arith.constant dense<0.000000e+00> : vector<80x128xf32>
    %7 = tpu.matmul %4, %6, %cst_10 {dimension_numbers = #tpu.dot_dimension_numbers<[1], [0], [0], [1], [0, 0, 1, 1], [], []>} : vector<80x128xbf16>, vector<128x128xbf16>, vector<80x128xf32> -> vector<80x128xf32>
    %8 = arith.addf %2, %7 : vector<80x128xf32>
    %c0_11 = arith.constant 0 : index
    %c0_12 = arith.constant 0 : index
    %9 = vector.load %arg7[%c0_11, %c0_12] : memref<80x128xf32, #tpu.memory_space<vmem>>, vector<80x128xf32>
    tpu.vector_store %arg7[%c0_11, %c0_12], %8 {strides = array<i32>} : memref<80x128xf32, #tpu.memory_space<vmem>>, vector<80x128xf32>,
    %c0_13 = arith.constant 0 : index
    %c0_14 = arith.constant 0 : index
    %10 = vector.load %arg7[%c0_13, %c0_14] : memref<80x128xf32, #tpu.memory_space<vmem>>, vector<80x128xf32>
    %c0_15 = arith.constant 0 : index
    %c0_16 = arith.constant 0 : index
    %c96 = arith.constant 96 : index
    %c0_17 = arith.constant 0 : index
    %11 = vector.load %arg3[%c0_15, %c0_16, %c96, %c0_17] : memref<1x1x384x128xbf16, #tpu.memory_space<vmem>>, vector<1x1x80x128xbf16>
    %12 = vector.shape_cast %11 : vector<1x1x80x128xbf16> to vector<80x128xbf16>
    %c1 = arith.constant 1 : index
    %c0_18 = arith.constant 0 : index
    %c0_19 = arith.constant 0 : index
    %13 = vector.load %arg4[%c1, %c0_18, %c0_19] : memref<9x128x128xbf16, #tpu.memory_space<vmem>>, vector<1x128x128xbf16>
    %14 = vector.shape_cast %13 : vector<1x128x128xbf16> to vector<128x128xbf16>
    %cst_20 = arith.constant dense<0.000000e+00> : vector<80x128xf32>
    %15 = tpu.matmul %12, %14, %cst_20 {dimension_numbers = #tpu.dot_dimension_numbers<[1], [0], [0], [1], [0, 0, 1, 1], [], []>} : vector<80x128xbf16>, vector<128x128xbf16>, vector<80x128xf32> -> vector<80x128xf32>
    %16 = arith.addf %10, %15 : vector<80x128xf32>
    %c0_21 = arith.constant 0 : index
    %c0_22 = arith.constant 0 : index
    %17 = vector.load %arg7[%c0_21, %c0_22] : memref<80x128xf32, #tpu.memory_space<vmem>>, vector<80x128xf32>
    tpu.vector_store %arg7[%c0_21, %c0_22], %16 {strides = array<i32>} : memref<80x128xf32, #tpu.memory_space<vmem>>, vector<80x128xf32>,
    %c0_23 = arith.constant 0 : index
    %c0_24 = arith.constant 0 : index
    %18 = vector.load %arg7[%c0_23, %c0_24] : memref<80x128xf32, #tpu.memory_space<vmem>>, vector<80x128xf32>
    %c0_25 = arith.constant 0 : index
    %c0_26 = arith.constant 0 : index
    %c1_27 = arith.constant 1 : index
    %c0_28 = arith.constant 0 : index
    %19 = vector.load %arg3[%c0_25, %c0_26, %c1_27, %c0_28] : memref<1x1x384x128xbf16, #tpu.memory_space<vmem>>, vector<1x1x80x128xbf16>
    %20 = vector.shape_cast %19 : vector<1x1x80x128xbf16> to vector<80x128xbf16>
    %c2 = arith.constant 2 : index
    %c0_29 = arith.constant 0 : index
    %c0_30 = arith.constant 0 : index
    %21 = vector.load %arg4[%c2, %c0_29, %c0_30] : memref<9x128x128xbf16, #tpu.memory_space<vmem>>, vector<1x128x128xbf16>
    %22 = vector.shape_cast %21 : vector<1x128x128xbf16> to vector<128x128xbf16>
    %cst_31 = arith.constant dense<0.000000e+00> : vector<80x128xf32>
    %23 = tpu.matmul %20, %22, %cst_31 {dimension_numbers = #tpu.dot_dimension_numbers<[1], [0], [0], [1], [0, 0, 1, 1], [], []>} : vector<80x128xbf16>, vector<128x128xbf16>, vector<80x128xf32> -> vector<80x128xf32>
    %24 = arith.addf %18, %23 : vector<80x128xf32>
    %c0_32 = arith.constant 0 : index
    %c0_33 = arith.constant 0 : index
    %25 = vector.load %arg7[%c0_32, %c0_33] : memref<80x128xf32, #tpu.memory_space<vmem>>, vector<80x128xf32>
    tpu.vector_store %arg7[%c0_32, %c0_33], %24 {strides = array<i32>} : memref<80x128xf32, #tpu.memory_space<vmem>>, vector<80x128xf32>,
    %c0_34 = arith.constant 0 : index
    %c0_35 = arith.constant 0 : index
    %26 = vector.load %arg7[%c0_34, %c0_35] : memref<80x128xf32, #tpu.memory_space<vmem>>, vector<80x128xf32>
    %c0_36 = arith.constant 0 : index
    %c0_37 = arith.constant 0 : index
    %c192 = arith.constant 192 : index
    %c0_38 = arith.constant 0 : index
    %27 = vector.load %arg3[%c0_36, %c0_37, %c192, %c0_38] : memref<1x1x384x128xbf16, #tpu.memory_space<vmem>>, vector<1x1x80x128xbf16>
    %28 = vector.shape_cast %27 : vector<1x1x80x128xbf16> to vector<80x128xbf16>
    %c3 = arith.constant 3 : index
    %c0_39 = arith.constant 0 : index
    %c0_40 = arith.constant 0 : index
    %29 = vector.load %arg4[%c3, %c0_39, %c0_40] : memref<9x128x128xbf16, #tpu.memory_space<vmem>>, vector<1x128x128xbf16>
    %30 = vector.shape_cast %29 : vector<1x128x128xbf16> to vector<128x128xbf16>
    %cst_41 = arith.constant dense<0.000000e+00> : vector<80x128xf32>
    %31 = tpu.matmul %28, %30, %cst_41 {dimension_numbers = #tpu.dot_dimension_numbers<[1], [0], [0], [1], [0, 0, 1, 1], [], []>} : vector<80x128xbf16>, vector<128x128xbf16>, vector<80x128xf32> -> vector<80x128xf32>
    %32 = arith.addf %26, %31 : vector<80x128xf32>
    %c0_42 = arith.constant 0 : index
    %c0_43 = arith.constant 0 : index
    %33 = vector.load %arg7[%c0_42, %c0_43] : memref<80x128xf32, #tpu.memory_space<vmem>>, vector<80x128xf32>
    tpu.vector_store %arg7[%c0_42, %c0_43], %32 {strides = array<i32>} : memref<80x128xf32, #tpu.memory_space<vmem>>, vector<80x128xf32>,
    %c0_44 = arith.constant 0 : index
    %c0_45 = arith.constant 0 : index
    %34 = vector.load %arg7[%c0_44, %c0_45] : memref<80x128xf32, #tpu.memory_space<vmem>>, vector<80x128xf32>
    %c0_46 = arith.constant 0 : index
    %c0_47 = arith.constant 0 : index
    %c288 = arith.constant 288 : index
    %c0_48 = arith.constant 0 : index
    %35 = vector.load %arg3[%c0_46, %c0_47, %c288, %c0_48] : memref<1x1x384x128xbf16, #tpu.memory_space<vmem>>, vector<1x1x80x128xbf16>
    %36 = vector.shape_cast %35 : vector<1x1x80x128xbf16> to vector<80x128xbf16>
    %c4 = arith.constant 4 : index
    %c0_49 = arith.constant 0 : index
    %c0_50 = arith.constant 0 : index
    %37 = vector.load %arg4[%c4, %c0_49, %c0_50] : memref<9x128x128xbf16, #tpu.memory_space<vmem>>, vector<1x128x128xbf16>
    %38 = vector.shape_cast %37 : vector<1x128x128xbf16> to vector<128x128xbf16>
    %cst_51 = arith.constant dense<0.000000e+00> : vector<80x128xf32>
    %39 = tpu.matmul %36, %38, %cst_51 {dimension_numbers = #tpu.dot_dimension_numbers<[1], [0], [0], [1], [0, 0, 1, 1], [], []>} : vector<80x128xbf16>, vector<128x128xbf16>, vector<80x128xf32> -> vector<80x128xf32>
    %40 = arith.addf %34, %39 : vector<80x128xf32>
    %c0_52 = arith.constant 0 : index
    %c0_53 = arith.constant 0 : index
    %41 = vector.load %arg7[%c0_52, %c0_53] : memref<80x128xf32, #tpu.memory_space<vmem>>, vector<80x128xf32>
    tpu.vector_store %arg7[%c0_52, %c0_53], %40 {strides = array<i32>} : memref<80x128xf32, #tpu.memory_space<vmem>>, vector<80x128xf32>,
    %c0_54 = arith.constant 0 : index
    %c0_55 = arith.constant 0 : index
    %42 = vector.load %arg7[%c0_54, %c0_55] : memref<80x128xf32, #tpu.memory_space<vmem>>, vector<80x128xf32>
    %c0_56 = arith.constant 0 : index
    %c0_57 = arith.constant 0 : index
    %c193 = arith.constant 193 : index
    %c0_58 = arith.constant 0 : index
    %43 = vector.load %arg3[%c0_56, %c0_57, %c193, %c0_58] : memref<1x1x384x128xbf16, #tpu.memory_space<vmem>>, vector<1x1x80x128xbf16>
    %44 = vector.shape_cast %43 : vector<1x1x80x128xbf16> to vector<80x128xbf16>
    %c5 = arith.constant 5 : index
    %c0_59 = arith.constant 0 : index
    %c0_60 = arith.constant 0 : index
    %45 = vector.load %arg4[%c5, %c0_59, %c0_60] : memref<9x128x128xbf16, #tpu.memory_space<vmem>>, vector<1x128x128xbf16>
    %46 = vector.shape_cast %45 : vector<1x128x128xbf16> to vector<128x128xbf16>
    %cst_61 = arith.constant dense<0.000000e+00> : vector<80x128xf32>
    %47 = tpu.matmul %44, %46, %cst_61 {dimension_numbers = #tpu.dot_dimension_numbers<[1], [0], [0], [1], [0, 0, 1, 1], [], []>} : vector<80x128xbf16>, vector<128x128xbf16>, vector<80x128xf32> -> vector<80x128xf32>
    %48 = arith.addf %42, %47 : vector<80x128xf32>
    %c0_62 = arith.constant 0 : index
    %c0_63 = arith.constant 0 : index
    %49 = vector.load %arg7[%c0_62, %c0_63] : memref<80x128xf32, #tpu.memory_space<vmem>>, vector<80x128xf32>
    tpu.vector_store %arg7[%c0_62, %c0_63], %48 {strides = array<i32>} : memref<80x128xf32, #tpu.memory_space<vmem>>, vector<80x128xf32>,
    %c0_64 = arith.constant 0 : index
    %c0_65 = arith.constant 0 : index
    %50 = vector.load %arg7[%c0_64, %c0_65] : memref<80x128xf32, #tpu.memory_space<vmem>>, vector<80x128xf32>
    %c0_66 = arith.constant 0 : index
    %c0_67 = arith.constant 0 : index
    %c9 = arith.constant 9 : index
    %c0_68 = arith.constant 0 : index
    %51 = vector.load %arg3[%c0_66, %c0_67, %c9, %c0_68] : memref<1x1x384x128xbf16, #tpu.memory_space<vmem>>, vector<1x1x80x128xbf16>
    %52 = vector.shape_cast %51 : vector<1x1x80x128xbf16> to vector<80x128xbf16>
    %c6 = arith.constant 6 : index
    %c0_69 = arith.constant 0 : index
    %c0_70 = arith.constant 0 : index
    %53 = vector.load %arg4[%c6, %c0_69, %c0_70] : memref<9x128x128xbf16, #tpu.memory_space<vmem>>, vector<1x128x128xbf16>
    %54 = vector.shape_cast %53 : vector<1x128x128xbf16> to vector<128x128xbf16>
    %cst_71 = arith.constant dense<0.000000e+00> : vector<80x128xf32>
    %55 = tpu.matmul %52, %54, %cst_71 {dimension_numbers = #tpu.dot_dimension_numbers<[1], [0], [0], [1], [0, 0, 1, 1], [], []>} : vector<80x128xbf16>, vector<128x128xbf16>, vector<80x128xf32> -> vector<80x128xf32>
    %56 = arith.addf %50, %55 : vector<80x128xf32>
    %c0_72 = arith.constant 0 : index
    %c0_73 = arith.constant 0 : index
    %57 = vector.load %arg7[%c0_72, %c0_73] : memref<80x128xf32, #tpu.memory_space<vmem>>, vector<80x128xf32>
    tpu.vector_store %arg7[%c0_72, %c0_73], %56 {strides = array<i32>} : memref<80x128xf32, #tpu.memory_space<vmem>>, vector<80x128xf32>,
    %c0_74 = arith.constant 0 : index
    %c0_75 = arith.constant 0 : index
    %58 = vector.load %arg7[%c0_74, %c0_75] : memref<80x128xf32, #tpu.memory_space<vmem>>, vector<80x128xf32>
    %c0_76 = arith.constant 0 : index
    %c0_77 = arith.constant 0 : index
    %c105 = arith.constant 105 : index
    %c0_78 = arith.constant 0 : index
    %59 = vector.load %arg3[%c0_76, %c0_77, %c105, %c0_78] : memref<1x1x384x128xbf16, #tpu.memory_space<vmem>>, vector<1x1x80x128xbf16>
    %60 = vector.shape_cast %59 : vector<1x1x80x128xbf16> to vector<80x128xbf16>
    %c7 = arith.constant 7 : index
    %c0_79 = arith.constant 0 : index
    %c0_80 = arith.constant 0 : index
    %61 = vector.load %arg4[%c7, %c0_79, %c0_80] : memref<9x128x128xbf16, #tpu.memory_space<vmem>>, vector<1x128x128xbf16>
    %62 = vector.shape_cast %61 : vector<1x128x128xbf16> to vector<128x128xbf16>
    %cst_81 = arith.constant dense<0.000000e+00> : vector<80x128xf32>
    %63 = tpu.matmul %60, %62, %cst_81 {dimension_numbers = #tpu.dot_dimension_numbers<[1], [0], [0], [1], [0, 0, 1, 1], [], []>} : vector<80x128xbf16>, vector<128x128xbf16>, vector<80x128xf32> -> vector<80x128xf32>
    %64 = arith.addf %58, %63 : vector<80x128xf32>
    %c0_82 = arith.constant 0 : index
    %c0_83 = arith.constant 0 : index
    %65 = vector.load %arg7[%c0_82, %c0_83] : memref<80x128xf32, #tpu.memory_space<vmem>>, vector<80x128xf32>
    tpu.vector_store %arg7[%c0_82, %c0_83], %64 {strides = array<i32>} : memref<80x128xf32, #tpu.memory_space<vmem>>, vector<80x128xf32>,
    %c0_84 = arith.constant 0 : index
    %c0_85 = arith.constant 0 : index
    %66 = vector.load %arg7[%c0_84, %c0_85] : memref<80x128xf32, #tpu.memory_space<vmem>>, vector<80x128xf32>
    %c0_86 = arith.constant 0 : index
    %c0_87 = arith.constant 0 : index
    %c10 = arith.constant 10 : index
    %c0_88 = arith.constant 0 : index
    %67 = vector.load %arg3[%c0_86, %c0_87, %c10, %c0_88] : memref<1x1x384x128xbf16, #tpu.memory_space<vmem>>, vector<1x1x80x128xbf16>
    %68 = vector.shape_cast %67 : vector<1x1x80x128xbf16> to vector<80x128xbf16>
    %c8 = arith.constant 8 : index
    %c0_89 = arith.constant 0 : index
    %c0_90 = arith.constant 0 : index
    %69 = vector.load %arg4[%c8, %c0_89, %c0_90] : memref<9x128x128xbf16, #tpu.memory_space<vmem>>, vector<1x128x128xbf16>
    %70 = vector.shape_cast %69 : vector<1x128x128xbf16> to vector<128x128xbf16>
    %cst_91 = arith.constant dense<0.000000e+00> : vector<80x128xf32>
    %71 = tpu.matmul %68, %70, %cst_91 {dimension_numbers = #tpu.dot_dimension_numbers<[1], [0], [0], [1], [0, 0, 1, 1], [], []>} : vector<80x128xbf16>, vector<128x128xbf16>, vector<80x128xf32> -> vector<80x128xf32>
    %72 = arith.addf %66, %71 : vector<80x128xf32>
    %c0_92 = arith.constant 0 : index
    %c0_93 = arith.constant 0 : index
    %73 = vector.load %arg7[%c0_92, %c0_93] : memref<80x128xf32, #tpu.memory_space<vmem>>, vector<80x128xf32>
    tpu.vector_store %arg7[%c0_92, %c0_93], %72 {strides = array<i32>} : memref<80x128xf32, #tpu.memory_space<vmem>>, vector<80x128xf32>,
    %c0_94 = arith.constant 0 : index
    %c0_95 = arith.constant 0 : index
    %74 = vector.load %arg7[%c0_94, %c0_95] : memref<80x128xf32, #tpu.memory_space<vmem>>, vector<80x128xf32>
    %c0_96 = arith.constant 0 : index
    %c0_97 = arith.constant 0 : index
    %75 = vector.load %arg5[%c0_96, %c0_97] : memref<1x128xf32, #tpu.memory_space<vmem>>, vector<1x128xf32>
    %76 = vector.broadcast %75 : vector<1x128xf32> to vector<80x128xf32>
    %77 = arith.addf %74, %76 : vector<80x128xf32>
    %cst_98 = arith.constant 0.000000e+00 : f32
    %78 = vector.broadcast %cst_98 : f32 to vector<80x128xf32>
    %79 = arith.maximumf %77, %78 : vector<80x128xf32>
    %80 = arith.truncf %79 : vector<80x128xf32> to vector<80x128xbf16>
    %c0_99 = arith.constant 0 : index
    %c0_100 = arith.constant 0 : index
    %c0_101 = arith.constant 0 : index
    %81 = vector.load %arg6[%c0_99, %c0_100, %c0_101] : memref<1x80x128xbf16, #tpu.memory_space<vmem>>, vector<1x80x128xbf16>
    %82 = vector.shape_cast %81 : vector<1x80x128xbf16> to vector<80x128xbf16>
    %83 = vector.shape_cast %80 : vector<80x128xbf16> to vector<1x80x128xbf16>
    tpu.vector_store %arg6[%c0_99, %c0_100, %c0_101], %83 {strides = array<i32>} : memref<1x80x128xbf16, #tpu.memory_space<vmem>>, vector<1x80x128xbf16>,
    return
  }
  func.func @transform_0(%arg0: i32, %arg1: i32, %arg2: i32) -> (i32, i32, i32, i32) {
    %c0_i32 = arith.constant 0 : i32
    %c0_i32_0 = arith.constant 0 : i32
    %c0_i32_1 = arith.constant 0 : i32
    return %arg1, %arg2, %c0_i32, %c0_i32_0 : i32, i32, i32, i32
  }
  func.func @transform_1(%arg0: i32, %arg1: i32, %arg2: i32) -> (i32, i32, i32) {
    %c0_i32 = arith.constant 0 : i32
    %c0_i32_0 = arith.constant 0 : i32
    %c0_i32_1 = arith.constant 0 : i32
    return %c0_i32, %c0_i32_0, %arg0 : i32, i32, i32
  }
  func.func @transform_2(%arg0: i32, %arg1: i32, %arg2: i32) -> (i32, i32) {
    %c0_i32 = arith.constant 0 : i32
    %c0_i32_0 = arith.constant 0 : i32
    return %c0_i32, %arg0 : i32, i32
  }
  func.func @transform_3(%arg0: i32, %arg1: i32, %arg2: i32) -> (i32, i32, i32) {
    %c0_i32 = arith.constant 0 : i32
    return %arg1, %arg2, %arg0 : i32, i32, i32
  }
}

module attributes {stable_mosaic.version = 11 : i64} {
  func.func @_tap_gemm_kernel(%arg0: i32, %arg1: i32, %arg2: i32, %arg3: memref<1x1x192x128xbf16, #tpu.memory_space<vmem>>, %arg4: memref<9x128x128xbf16, #tpu.memory_space<vmem>>, %arg5: memref<1x128xf32, #tpu.memory_space<vmem>>, %arg6: memref<1x32x128xbf16, #tpu.memory_space<vmem>>, %arg7: memref<32x128xf32, #tpu.memory_space<vmem>>) attributes {dimension_semantics = [#tpu.dimension_semantics<parallel>, #tpu.dimension_semantics<parallel>, #tpu.dimension_semantics<parallel>], iteration_bounds = array<i64: 1, 2, 1>, scalar_prefetch = 0 : i64, scratch_operands = 1 : i64, tpu.core_type = #tpu.core_type<tc>, window_params = [{transform_indices = @transform_0, window_bounds = array<i64: 1, 1, 192, 128>}, {transform_indices = @transform_1, window_bounds = array<i64: 9, 128, 128>}, {transform_indices = @transform_2, window_bounds = array<i64: 1, 128>}, {transform_indices = @transform_3, window_bounds = array<i64: 1, 32, 128>}]} {
    %cst = arith.constant 0.000000e+00 : f32
    %0 = vector.broadcast %cst : f32 to vector<32x128xf32>
    %c0 = arith.constant 0 : index
    %c0_0 = arith.constant 0 : index
    %1 = vector.load %arg7[%c0, %c0_0] : memref<32x128xf32, #tpu.memory_space<vmem>>, vector<32x128xf32>
    tpu.vector_store %arg7[%c0, %c0_0], %0 {strides = array<i32>} : memref<32x128xf32, #tpu.memory_space<vmem>>, vector<32x128xf32>,
    %c0_1 = arith.constant 0 : index
    %c0_2 = arith.constant 0 : index
    %2 = vector.load %arg7[%c0_1, %c0_2] : memref<32x128xf32, #tpu.memory_space<vmem>>, vector<32x128xf32>
    %c0_3 = arith.constant 0 : index
    %c0_4 = arith.constant 0 : index
    %c0_5 = arith.constant 0 : index
    %c0_6 = arith.constant 0 : index
    %3 = vector.load %arg3[%c0_3, %c0_4, %c0_5, %c0_6] : memref<1x1x192x128xbf16, #tpu.memory_space<vmem>>, vector<1x1x32x128xbf16>
    %4 = vector.shape_cast %3 : vector<1x1x32x128xbf16> to vector<32x128xbf16>
    %c0_7 = arith.constant 0 : index
    %c0_8 = arith.constant 0 : index
    %c0_9 = arith.constant 0 : index
    %5 = vector.load %arg4[%c0_7, %c0_8, %c0_9] : memref<9x128x128xbf16, #tpu.memory_space<vmem>>, vector<1x128x128xbf16>
    %6 = vector.shape_cast %5 : vector<1x128x128xbf16> to vector<128x128xbf16>
    %cst_10 = arith.constant dense<0.000000e+00> : vector<32x128xf32>
    %7 = tpu.matmul %4, %6, %cst_10 {dimension_numbers = #tpu.dot_dimension_numbers<[1], [0], [0], [1], [0, 0, 1, 1], [], []>} : vector<32x128xbf16>, vector<128x128xbf16>, vector<32x128xf32> -> vector<32x128xf32>
    %8 = arith.addf %2, %7 : vector<32x128xf32>
    %c0_11 = arith.constant 0 : index
    %c0_12 = arith.constant 0 : index
    %9 = vector.load %arg7[%c0_11, %c0_12] : memref<32x128xf32, #tpu.memory_space<vmem>>, vector<32x128xf32>
    tpu.vector_store %arg7[%c0_11, %c0_12], %8 {strides = array<i32>} : memref<32x128xf32, #tpu.memory_space<vmem>>, vector<32x128xf32>,
    %c0_13 = arith.constant 0 : index
    %c0_14 = arith.constant 0 : index
    %10 = vector.load %arg7[%c0_13, %c0_14] : memref<32x128xf32, #tpu.memory_space<vmem>>, vector<32x128xf32>
    %c0_15 = arith.constant 0 : index
    %c0_16 = arith.constant 0 : index
    %c48 = arith.constant 48 : index
    %c0_17 = arith.constant 0 : index
    %11 = vector.load %arg3[%c0_15, %c0_16, %c48, %c0_17] : memref<1x1x192x128xbf16, #tpu.memory_space<vmem>>, vector<1x1x32x128xbf16>
    %12 = vector.shape_cast %11 : vector<1x1x32x128xbf16> to vector<32x128xbf16>
    %c1 = arith.constant 1 : index
    %c0_18 = arith.constant 0 : index
    %c0_19 = arith.constant 0 : index
    %13 = vector.load %arg4[%c1, %c0_18, %c0_19] : memref<9x128x128xbf16, #tpu.memory_space<vmem>>, vector<1x128x128xbf16>
    %14 = vector.shape_cast %13 : vector<1x128x128xbf16> to vector<128x128xbf16>
    %cst_20 = arith.constant dense<0.000000e+00> : vector<32x128xf32>
    %15 = tpu.matmul %12, %14, %cst_20 {dimension_numbers = #tpu.dot_dimension_numbers<[1], [0], [0], [1], [0, 0, 1, 1], [], []>} : vector<32x128xbf16>, vector<128x128xbf16>, vector<32x128xf32> -> vector<32x128xf32>
    %16 = arith.addf %10, %15 : vector<32x128xf32>
    %c0_21 = arith.constant 0 : index
    %c0_22 = arith.constant 0 : index
    %17 = vector.load %arg7[%c0_21, %c0_22] : memref<32x128xf32, #tpu.memory_space<vmem>>, vector<32x128xf32>
    tpu.vector_store %arg7[%c0_21, %c0_22], %16 {strides = array<i32>} : memref<32x128xf32, #tpu.memory_space<vmem>>, vector<32x128xf32>,
    %c0_23 = arith.constant 0 : index
    %c0_24 = arith.constant 0 : index
    %18 = vector.load %arg7[%c0_23, %c0_24] : memref<32x128xf32, #tpu.memory_space<vmem>>, vector<32x128xf32>
    %c0_25 = arith.constant 0 : index
    %c0_26 = arith.constant 0 : index
    %c1_27 = arith.constant 1 : index
    %c0_28 = arith.constant 0 : index
    %19 = vector.load %arg3[%c0_25, %c0_26, %c1_27, %c0_28] : memref<1x1x192x128xbf16, #tpu.memory_space<vmem>>, vector<1x1x32x128xbf16>
    %20 = vector.shape_cast %19 : vector<1x1x32x128xbf16> to vector<32x128xbf16>
    %c2 = arith.constant 2 : index
    %c0_29 = arith.constant 0 : index
    %c0_30 = arith.constant 0 : index
    %21 = vector.load %arg4[%c2, %c0_29, %c0_30] : memref<9x128x128xbf16, #tpu.memory_space<vmem>>, vector<1x128x128xbf16>
    %22 = vector.shape_cast %21 : vector<1x128x128xbf16> to vector<128x128xbf16>
    %cst_31 = arith.constant dense<0.000000e+00> : vector<32x128xf32>
    %23 = tpu.matmul %20, %22, %cst_31 {dimension_numbers = #tpu.dot_dimension_numbers<[1], [0], [0], [1], [0, 0, 1, 1], [], []>} : vector<32x128xbf16>, vector<128x128xbf16>, vector<32x128xf32> -> vector<32x128xf32>
    %24 = arith.addf %18, %23 : vector<32x128xf32>
    %c0_32 = arith.constant 0 : index
    %c0_33 = arith.constant 0 : index
    %25 = vector.load %arg7[%c0_32, %c0_33] : memref<32x128xf32, #tpu.memory_space<vmem>>, vector<32x128xf32>
    tpu.vector_store %arg7[%c0_32, %c0_33], %24 {strides = array<i32>} : memref<32x128xf32, #tpu.memory_space<vmem>>, vector<32x128xf32>,
    %c0_34 = arith.constant 0 : index
    %c0_35 = arith.constant 0 : index
    %26 = vector.load %arg7[%c0_34, %c0_35] : memref<32x128xf32, #tpu.memory_space<vmem>>, vector<32x128xf32>
    %c0_36 = arith.constant 0 : index
    %c0_37 = arith.constant 0 : index
    %c96 = arith.constant 96 : index
    %c0_38 = arith.constant 0 : index
    %27 = vector.load %arg3[%c0_36, %c0_37, %c96, %c0_38] : memref<1x1x192x128xbf16, #tpu.memory_space<vmem>>, vector<1x1x32x128xbf16>
    %28 = vector.shape_cast %27 : vector<1x1x32x128xbf16> to vector<32x128xbf16>
    %c3 = arith.constant 3 : index
    %c0_39 = arith.constant 0 : index
    %c0_40 = arith.constant 0 : index
    %29 = vector.load %arg4[%c3, %c0_39, %c0_40] : memref<9x128x128xbf16, #tpu.memory_space<vmem>>, vector<1x128x128xbf16>
    %30 = vector.shape_cast %29 : vector<1x128x128xbf16> to vector<128x128xbf16>
    %cst_41 = arith.constant dense<0.000000e+00> : vector<32x128xf32>
    %31 = tpu.matmul %28, %30, %cst_41 {dimension_numbers = #tpu.dot_dimension_numbers<[1], [0], [0], [1], [0, 0, 1, 1], [], []>} : vector<32x128xbf16>, vector<128x128xbf16>, vector<32x128xf32> -> vector<32x128xf32>
    %32 = arith.addf %26, %31 : vector<32x128xf32>
    %c0_42 = arith.constant 0 : index
    %c0_43 = arith.constant 0 : index
    %33 = vector.load %arg7[%c0_42, %c0_43] : memref<32x128xf32, #tpu.memory_space<vmem>>, vector<32x128xf32>
    tpu.vector_store %arg7[%c0_42, %c0_43], %32 {strides = array<i32>} : memref<32x128xf32, #tpu.memory_space<vmem>>, vector<32x128xf32>,
    %c0_44 = arith.constant 0 : index
    %c0_45 = arith.constant 0 : index
    %34 = vector.load %arg7[%c0_44, %c0_45] : memref<32x128xf32, #tpu.memory_space<vmem>>, vector<32x128xf32>
    %c0_46 = arith.constant 0 : index
    %c0_47 = arith.constant 0 : index
    %c144 = arith.constant 144 : index
    %c0_48 = arith.constant 0 : index
    %35 = vector.load %arg3[%c0_46, %c0_47, %c144, %c0_48] : memref<1x1x192x128xbf16, #tpu.memory_space<vmem>>, vector<1x1x32x128xbf16>
    %36 = vector.shape_cast %35 : vector<1x1x32x128xbf16> to vector<32x128xbf16>
    %c4 = arith.constant 4 : index
    %c0_49 = arith.constant 0 : index
    %c0_50 = arith.constant 0 : index
    %37 = vector.load %arg4[%c4, %c0_49, %c0_50] : memref<9x128x128xbf16, #tpu.memory_space<vmem>>, vector<1x128x128xbf16>
    %38 = vector.shape_cast %37 : vector<1x128x128xbf16> to vector<128x128xbf16>
    %cst_51 = arith.constant dense<0.000000e+00> : vector<32x128xf32>
    %39 = tpu.matmul %36, %38, %cst_51 {dimension_numbers = #tpu.dot_dimension_numbers<[1], [0], [0], [1], [0, 0, 1, 1], [], []>} : vector<32x128xbf16>, vector<128x128xbf16>, vector<32x128xf32> -> vector<32x128xf32>
    %40 = arith.addf %34, %39 : vector<32x128xf32>
    %c0_52 = arith.constant 0 : index
    %c0_53 = arith.constant 0 : index
    %41 = vector.load %arg7[%c0_52, %c0_53] : memref<32x128xf32, #tpu.memory_space<vmem>>, vector<32x128xf32>
    tpu.vector_store %arg7[%c0_52, %c0_53], %40 {strides = array<i32>} : memref<32x128xf32, #tpu.memory_space<vmem>>, vector<32x128xf32>,
    %c0_54 = arith.constant 0 : index
    %c0_55 = arith.constant 0 : index
    %42 = vector.load %arg7[%c0_54, %c0_55] : memref<32x128xf32, #tpu.memory_space<vmem>>, vector<32x128xf32>
    %c0_56 = arith.constant 0 : index
    %c0_57 = arith.constant 0 : index
    %c97 = arith.constant 97 : index
    %c0_58 = arith.constant 0 : index
    %43 = vector.load %arg3[%c0_56, %c0_57, %c97, %c0_58] : memref<1x1x192x128xbf16, #tpu.memory_space<vmem>>, vector<1x1x32x128xbf16>
    %44 = vector.shape_cast %43 : vector<1x1x32x128xbf16> to vector<32x128xbf16>
    %c5 = arith.constant 5 : index
    %c0_59 = arith.constant 0 : index
    %c0_60 = arith.constant 0 : index
    %45 = vector.load %arg4[%c5, %c0_59, %c0_60] : memref<9x128x128xbf16, #tpu.memory_space<vmem>>, vector<1x128x128xbf16>
    %46 = vector.shape_cast %45 : vector<1x128x128xbf16> to vector<128x128xbf16>
    %cst_61 = arith.constant dense<0.000000e+00> : vector<32x128xf32>
    %47 = tpu.matmul %44, %46, %cst_61 {dimension_numbers = #tpu.dot_dimension_numbers<[1], [0], [0], [1], [0, 0, 1, 1], [], []>} : vector<32x128xbf16>, vector<128x128xbf16>, vector<32x128xf32> -> vector<32x128xf32>
    %48 = arith.addf %42, %47 : vector<32x128xf32>
    %c0_62 = arith.constant 0 : index
    %c0_63 = arith.constant 0 : index
    %49 = vector.load %arg7[%c0_62, %c0_63] : memref<32x128xf32, #tpu.memory_space<vmem>>, vector<32x128xf32>
    tpu.vector_store %arg7[%c0_62, %c0_63], %48 {strides = array<i32>} : memref<32x128xf32, #tpu.memory_space<vmem>>, vector<32x128xf32>,
    %c0_64 = arith.constant 0 : index
    %c0_65 = arith.constant 0 : index
    %50 = vector.load %arg7[%c0_64, %c0_65] : memref<32x128xf32, #tpu.memory_space<vmem>>, vector<32x128xf32>
    %c0_66 = arith.constant 0 : index
    %c0_67 = arith.constant 0 : index
    %c5_68 = arith.constant 5 : index
    %c0_69 = arith.constant 0 : index
    %51 = vector.load %arg3[%c0_66, %c0_67, %c5_68, %c0_69] : memref<1x1x192x128xbf16, #tpu.memory_space<vmem>>, vector<1x1x32x128xbf16>
    %52 = vector.shape_cast %51 : vector<1x1x32x128xbf16> to vector<32x128xbf16>
    %c6 = arith.constant 6 : index
    %c0_70 = arith.constant 0 : index
    %c0_71 = arith.constant 0 : index
    %53 = vector.load %arg4[%c6, %c0_70, %c0_71] : memref<9x128x128xbf16, #tpu.memory_space<vmem>>, vector<1x128x128xbf16>
    %54 = vector.shape_cast %53 : vector<1x128x128xbf16> to vector<128x128xbf16>
    %cst_72 = arith.constant dense<0.000000e+00> : vector<32x128xf32>
    %55 = tpu.matmul %52, %54, %cst_72 {dimension_numbers = #tpu.dot_dimension_numbers<[1], [0], [0], [1], [0, 0, 1, 1], [], []>} : vector<32x128xbf16>, vector<128x128xbf16>, vector<32x128xf32> -> vector<32x128xf32>
    %56 = arith.addf %50, %55 : vector<32x128xf32>
    %c0_73 = arith.constant 0 : index
    %c0_74 = arith.constant 0 : index
    %57 = vector.load %arg7[%c0_73, %c0_74] : memref<32x128xf32, #tpu.memory_space<vmem>>, vector<32x128xf32>
    tpu.vector_store %arg7[%c0_73, %c0_74], %56 {strides = array<i32>} : memref<32x128xf32, #tpu.memory_space<vmem>>, vector<32x128xf32>,
    %c0_75 = arith.constant 0 : index
    %c0_76 = arith.constant 0 : index
    %58 = vector.load %arg7[%c0_75, %c0_76] : memref<32x128xf32, #tpu.memory_space<vmem>>, vector<32x128xf32>
    %c0_77 = arith.constant 0 : index
    %c0_78 = arith.constant 0 : index
    %c53 = arith.constant 53 : index
    %c0_79 = arith.constant 0 : index
    %59 = vector.load %arg3[%c0_77, %c0_78, %c53, %c0_79] : memref<1x1x192x128xbf16, #tpu.memory_space<vmem>>, vector<1x1x32x128xbf16>
    %60 = vector.shape_cast %59 : vector<1x1x32x128xbf16> to vector<32x128xbf16>
    %c7 = arith.constant 7 : index
    %c0_80 = arith.constant 0 : index
    %c0_81 = arith.constant 0 : index
    %61 = vector.load %arg4[%c7, %c0_80, %c0_81] : memref<9x128x128xbf16, #tpu.memory_space<vmem>>, vector<1x128x128xbf16>
    %62 = vector.shape_cast %61 : vector<1x128x128xbf16> to vector<128x128xbf16>
    %cst_82 = arith.constant dense<0.000000e+00> : vector<32x128xf32>
    %63 = tpu.matmul %60, %62, %cst_82 {dimension_numbers = #tpu.dot_dimension_numbers<[1], [0], [0], [1], [0, 0, 1, 1], [], []>} : vector<32x128xbf16>, vector<128x128xbf16>, vector<32x128xf32> -> vector<32x128xf32>
    %64 = arith.addf %58, %63 : vector<32x128xf32>
    %c0_83 = arith.constant 0 : index
    %c0_84 = arith.constant 0 : index
    %65 = vector.load %arg7[%c0_83, %c0_84] : memref<32x128xf32, #tpu.memory_space<vmem>>, vector<32x128xf32>
    tpu.vector_store %arg7[%c0_83, %c0_84], %64 {strides = array<i32>} : memref<32x128xf32, #tpu.memory_space<vmem>>, vector<32x128xf32>,
    %c0_85 = arith.constant 0 : index
    %c0_86 = arith.constant 0 : index
    %66 = vector.load %arg7[%c0_85, %c0_86] : memref<32x128xf32, #tpu.memory_space<vmem>>, vector<32x128xf32>
    %c0_87 = arith.constant 0 : index
    %c0_88 = arith.constant 0 : index
    %c6_89 = arith.constant 6 : index
    %c0_90 = arith.constant 0 : index
    %67 = vector.load %arg3[%c0_87, %c0_88, %c6_89, %c0_90] : memref<1x1x192x128xbf16, #tpu.memory_space<vmem>>, vector<1x1x32x128xbf16>
    %68 = vector.shape_cast %67 : vector<1x1x32x128xbf16> to vector<32x128xbf16>
    %c8 = arith.constant 8 : index
    %c0_91 = arith.constant 0 : index
    %c0_92 = arith.constant 0 : index
    %69 = vector.load %arg4[%c8, %c0_91, %c0_92] : memref<9x128x128xbf16, #tpu.memory_space<vmem>>, vector<1x128x128xbf16>
    %70 = vector.shape_cast %69 : vector<1x128x128xbf16> to vector<128x128xbf16>
    %cst_93 = arith.constant dense<0.000000e+00> : vector<32x128xf32>
    %71 = tpu.matmul %68, %70, %cst_93 {dimension_numbers = #tpu.dot_dimension_numbers<[1], [0], [0], [1], [0, 0, 1, 1], [], []>} : vector<32x128xbf16>, vector<128x128xbf16>, vector<32x128xf32> -> vector<32x128xf32>
    %72 = arith.addf %66, %71 : vector<32x128xf32>
    %c0_94 = arith.constant 0 : index
    %c0_95 = arith.constant 0 : index
    %73 = vector.load %arg7[%c0_94, %c0_95] : memref<32x128xf32, #tpu.memory_space<vmem>>, vector<32x128xf32>
    tpu.vector_store %arg7[%c0_94, %c0_95], %72 {strides = array<i32>} : memref<32x128xf32, #tpu.memory_space<vmem>>, vector<32x128xf32>,
    %c0_96 = arith.constant 0 : index
    %c0_97 = arith.constant 0 : index
    %74 = vector.load %arg7[%c0_96, %c0_97] : memref<32x128xf32, #tpu.memory_space<vmem>>, vector<32x128xf32>
    %c0_98 = arith.constant 0 : index
    %c0_99 = arith.constant 0 : index
    %75 = vector.load %arg5[%c0_98, %c0_99] : memref<1x128xf32, #tpu.memory_space<vmem>>, vector<1x128xf32>
    %76 = vector.broadcast %75 : vector<1x128xf32> to vector<32x128xf32>
    %77 = arith.addf %74, %76 : vector<32x128xf32>
    %cst_100 = arith.constant 0.000000e+00 : f32
    %78 = vector.broadcast %cst_100 : f32 to vector<32x128xf32>
    %79 = arith.maximumf %77, %78 : vector<32x128xf32>
    %80 = arith.truncf %79 : vector<32x128xf32> to vector<32x128xbf16>
    %c0_101 = arith.constant 0 : index
    %c0_102 = arith.constant 0 : index
    %c0_103 = arith.constant 0 : index
    %81 = vector.load %arg6[%c0_101, %c0_102, %c0_103] : memref<1x32x128xbf16, #tpu.memory_space<vmem>>, vector<1x32x128xbf16>
    %82 = vector.shape_cast %81 : vector<1x32x128xbf16> to vector<32x128xbf16>
    %83 = vector.shape_cast %80 : vector<32x128xbf16> to vector<1x32x128xbf16>
    tpu.vector_store %arg6[%c0_101, %c0_102, %c0_103], %83 {strides = array<i32>} : memref<1x32x128xbf16, #tpu.memory_space<vmem>>, vector<1x32x128xbf16>,
    return
  }
  func.func @transform_0(%arg0: i32, %arg1: i32, %arg2: i32) -> (i32, i32, i32, i32) {
    %c0_i32 = arith.constant 0 : i32
    %c0_i32_0 = arith.constant 0 : i32
    %c0_i32_1 = arith.constant 0 : i32
    return %arg1, %arg2, %c0_i32, %c0_i32_0 : i32, i32, i32, i32
  }
  func.func @transform_1(%arg0: i32, %arg1: i32, %arg2: i32) -> (i32, i32, i32) {
    %c0_i32 = arith.constant 0 : i32
    %c0_i32_0 = arith.constant 0 : i32
    %c0_i32_1 = arith.constant 0 : i32
    return %c0_i32, %c0_i32_0, %arg0 : i32, i32, i32
  }
  func.func @transform_2(%arg0: i32, %arg1: i32, %arg2: i32) -> (i32, i32) {
    %c0_i32 = arith.constant 0 : i32
    %c0_i32_0 = arith.constant 0 : i32
    return %c0_i32, %arg0 : i32, i32
  }
  func.func @transform_3(%arg0: i32, %arg1: i32, %arg2: i32) -> (i32, i32, i32) {
    %c0_i32 = arith.constant 0 : i32
    return %arg1, %arg2, %arg0 : i32, i32, i32
  }
}

module attributes {stable_mosaic.version = 11 : i64} {
  func.func @_tap_gemm_kernel(%arg0: i32, %arg1: i32, %arg2: i32, %arg3: memref<1x1x128x128xbf16, #tpu.memory_space<vmem>>, %arg4: memref<9x128x128xbf16, #tpu.memory_space<vmem>>, %arg5: memref<1x128xf32, #tpu.memory_space<vmem>>, %arg6: memref<1x16x128xbf16, #tpu.memory_space<vmem>>, %arg7: memref<16x128xf32, #tpu.memory_space<vmem>>) attributes {dimension_semantics = [#tpu.dimension_semantics<parallel>, #tpu.dimension_semantics<parallel>, #tpu.dimension_semantics<parallel>], iteration_bounds = array<i64: 1, 2, 1>, scalar_prefetch = 0 : i64, scratch_operands = 1 : i64, tpu.core_type = #tpu.core_type<tc>, window_params = [{transform_indices = @transform_0, window_bounds = array<i64: 1, 1, 128, 128>}, {transform_indices = @transform_1, window_bounds = array<i64: 9, 128, 128>}, {transform_indices = @transform_2, window_bounds = array<i64: 1, 128>}, {transform_indices = @transform_3, window_bounds = array<i64: 1, 16, 128>}]} {
    %cst = arith.constant 0.000000e+00 : f32
    %0 = vector.broadcast %cst : f32 to vector<16x128xf32>
    %c0 = arith.constant 0 : index
    %c0_0 = arith.constant 0 : index
    %1 = vector.load %arg7[%c0, %c0_0] : memref<16x128xf32, #tpu.memory_space<vmem>>, vector<16x128xf32>
    tpu.vector_store %arg7[%c0, %c0_0], %0 {strides = array<i32>} : memref<16x128xf32, #tpu.memory_space<vmem>>, vector<16x128xf32>,
    %c0_1 = arith.constant 0 : index
    %c0_2 = arith.constant 0 : index
    %2 = vector.load %arg7[%c0_1, %c0_2] : memref<16x128xf32, #tpu.memory_space<vmem>>, vector<16x128xf32>
    %c0_3 = arith.constant 0 : index
    %c0_4 = arith.constant 0 : index
    %c0_5 = arith.constant 0 : index
    %c0_6 = arith.constant 0 : index
    %3 = vector.load %arg3[%c0_3, %c0_4, %c0_5, %c0_6] : memref<1x1x128x128xbf16, #tpu.memory_space<vmem>>, vector<1x1x16x128xbf16>
    %4 = vector.shape_cast %3 : vector<1x1x16x128xbf16> to vector<16x128xbf16>
    %c0_7 = arith.constant 0 : index
    %c0_8 = arith.constant 0 : index
    %c0_9 = arith.constant 0 : index
    %5 = vector.load %arg4[%c0_7, %c0_8, %c0_9] : memref<9x128x128xbf16, #tpu.memory_space<vmem>>, vector<1x128x128xbf16>
    %6 = vector.shape_cast %5 : vector<1x128x128xbf16> to vector<128x128xbf16>
    %cst_10 = arith.constant dense<0.000000e+00> : vector<16x128xf32>
    %7 = tpu.matmul %4, %6, %cst_10 {dimension_numbers = #tpu.dot_dimension_numbers<[1], [0], [0], [1], [0, 0, 1, 1], [], []>} : vector<16x128xbf16>, vector<128x128xbf16>, vector<16x128xf32> -> vector<16x128xf32>
    %8 = arith.addf %2, %7 : vector<16x128xf32>
    %c0_11 = arith.constant 0 : index
    %c0_12 = arith.constant 0 : index
    %9 = vector.load %arg7[%c0_11, %c0_12] : memref<16x128xf32, #tpu.memory_space<vmem>>, vector<16x128xf32>
    tpu.vector_store %arg7[%c0_11, %c0_12], %8 {strides = array<i32>} : memref<16x128xf32, #tpu.memory_space<vmem>>, vector<16x128xf32>,
    %c0_13 = arith.constant 0 : index
    %c0_14 = arith.constant 0 : index
    %10 = vector.load %arg7[%c0_13, %c0_14] : memref<16x128xf32, #tpu.memory_space<vmem>>, vector<16x128xf32>
    %c0_15 = arith.constant 0 : index
    %c0_16 = arith.constant 0 : index
    %c32 = arith.constant 32 : index
    %c0_17 = arith.constant 0 : index
    %11 = vector.load %arg3[%c0_15, %c0_16, %c32, %c0_17] : memref<1x1x128x128xbf16, #tpu.memory_space<vmem>>, vector<1x1x16x128xbf16>
    %12 = vector.shape_cast %11 : vector<1x1x16x128xbf16> to vector<16x128xbf16>
    %c1 = arith.constant 1 : index
    %c0_18 = arith.constant 0 : index
    %c0_19 = arith.constant 0 : index
    %13 = vector.load %arg4[%c1, %c0_18, %c0_19] : memref<9x128x128xbf16, #tpu.memory_space<vmem>>, vector<1x128x128xbf16>
    %14 = vector.shape_cast %13 : vector<1x128x128xbf16> to vector<128x128xbf16>
    %cst_20 = arith.constant dense<0.000000e+00> : vector<16x128xf32>
    %15 = tpu.matmul %12, %14, %cst_20 {dimension_numbers = #tpu.dot_dimension_numbers<[1], [0], [0], [1], [0, 0, 1, 1], [], []>} : vector<16x128xbf16>, vector<128x128xbf16>, vector<16x128xf32> -> vector<16x128xf32>
    %16 = arith.addf %10, %15 : vector<16x128xf32>
    %c0_21 = arith.constant 0 : index
    %c0_22 = arith.constant 0 : index
    %17 = vector.load %arg7[%c0_21, %c0_22] : memref<16x128xf32, #tpu.memory_space<vmem>>, vector<16x128xf32>
    tpu.vector_store %arg7[%c0_21, %c0_22], %16 {strides = array<i32>} : memref<16x128xf32, #tpu.memory_space<vmem>>, vector<16x128xf32>,
    %c0_23 = arith.constant 0 : index
    %c0_24 = arith.constant 0 : index
    %18 = vector.load %arg7[%c0_23, %c0_24] : memref<16x128xf32, #tpu.memory_space<vmem>>, vector<16x128xf32>
    %c0_25 = arith.constant 0 : index
    %c0_26 = arith.constant 0 : index
    %c1_27 = arith.constant 1 : index
    %c0_28 = arith.constant 0 : index
    %19 = vector.load %arg3[%c0_25, %c0_26, %c1_27, %c0_28] : memref<1x1x128x128xbf16, #tpu.memory_space<vmem>>, vector<1x1x16x128xbf16>
    %20 = vector.shape_cast %19 : vector<1x1x16x128xbf16> to vector<16x128xbf16>
    %c2 = arith.constant 2 : index
    %c0_29 = arith.constant 0 : index
    %c0_30 = arith.constant 0 : index
    %21 = vector.load %arg4[%c2, %c0_29, %c0_30] : memref<9x128x128xbf16, #tpu.memory_space<vmem>>, vector<1x128x128xbf16>
    %22 = vector.shape_cast %21 : vector<1x128x128xbf16> to vector<128x128xbf16>
    %cst_31 = arith.constant dense<0.000000e+00> : vector<16x128xf32>
    %23 = tpu.matmul %20, %22, %cst_31 {dimension_numbers = #tpu.dot_dimension_numbers<[1], [0], [0], [1], [0, 0, 1, 1], [], []>} : vector<16x128xbf16>, vector<128x128xbf16>, vector<16x128xf32> -> vector<16x128xf32>
    %24 = arith.addf %18, %23 : vector<16x128xf32>
    %c0_32 = arith.constant 0 : index
    %c0_33 = arith.constant 0 : index
    %25 = vector.load %arg7[%c0_32, %c0_33] : memref<16x128xf32, #tpu.memory_space<vmem>>, vector<16x128xf32>
    tpu.vector_store %arg7[%c0_32, %c0_33], %24 {strides = array<i32>} : memref<16x128xf32, #tpu.memory_space<vmem>>, vector<16x128xf32>,
    %c0_34 = arith.constant 0 : index
    %c0_35 = arith.constant 0 : index
    %26 = vector.load %arg7[%c0_34, %c0_35] : memref<16x128xf32, #tpu.memory_space<vmem>>, vector<16x128xf32>
    %c0_36 = arith.constant 0 : index
    %c0_37 = arith.constant 0 : index
    %c64 = arith.constant 64 : index
    %c0_38 = arith.constant 0 : index
    %27 = vector.load %arg3[%c0_36, %c0_37, %c64, %c0_38] : memref<1x1x128x128xbf16, #tpu.memory_space<vmem>>, vector<1x1x16x128xbf16>
    %28 = vector.shape_cast %27 : vector<1x1x16x128xbf16> to vector<16x128xbf16>
    %c3 = arith.constant 3 : index
    %c0_39 = arith.constant 0 : index
    %c0_40 = arith.constant 0 : index
    %29 = vector.load %arg4[%c3, %c0_39, %c0_40] : memref<9x128x128xbf16, #tpu.memory_space<vmem>>, vector<1x128x128xbf16>
    %30 = vector.shape_cast %29 : vector<1x128x128xbf16> to vector<128x128xbf16>
    %cst_41 = arith.constant dense<0.000000e+00> : vector<16x128xf32>
    %31 = tpu.matmul %28, %30, %cst_41 {dimension_numbers = #tpu.dot_dimension_numbers<[1], [0], [0], [1], [0, 0, 1, 1], [], []>} : vector<16x128xbf16>, vector<128x128xbf16>, vector<16x128xf32> -> vector<16x128xf32>
    %32 = arith.addf %26, %31 : vector<16x128xf32>
    %c0_42 = arith.constant 0 : index
    %c0_43 = arith.constant 0 : index
    %33 = vector.load %arg7[%c0_42, %c0_43] : memref<16x128xf32, #tpu.memory_space<vmem>>, vector<16x128xf32>
    tpu.vector_store %arg7[%c0_42, %c0_43], %32 {strides = array<i32>} : memref<16x128xf32, #tpu.memory_space<vmem>>, vector<16x128xf32>,
    %c0_44 = arith.constant 0 : index
    %c0_45 = arith.constant 0 : index
    %34 = vector.load %arg7[%c0_44, %c0_45] : memref<16x128xf32, #tpu.memory_space<vmem>>, vector<16x128xf32>
    %c0_46 = arith.constant 0 : index
    %c0_47 = arith.constant 0 : index
    %c96 = arith.constant 96 : index
    %c0_48 = arith.constant 0 : index
    %35 = vector.load %arg3[%c0_46, %c0_47, %c96, %c0_48] : memref<1x1x128x128xbf16, #tpu.memory_space<vmem>>, vector<1x1x16x128xbf16>
    %36 = vector.shape_cast %35 : vector<1x1x16x128xbf16> to vector<16x128xbf16>
    %c4 = arith.constant 4 : index
    %c0_49 = arith.constant 0 : index
    %c0_50 = arith.constant 0 : index
    %37 = vector.load %arg4[%c4, %c0_49, %c0_50] : memref<9x128x128xbf16, #tpu.memory_space<vmem>>, vector<1x128x128xbf16>
    %38 = vector.shape_cast %37 : vector<1x128x128xbf16> to vector<128x128xbf16>
    %cst_51 = arith.constant dense<0.000000e+00> : vector<16x128xf32>
    %39 = tpu.matmul %36, %38, %cst_51 {dimension_numbers = #tpu.dot_dimension_numbers<[1], [0], [0], [1], [0, 0, 1, 1], [], []>} : vector<16x128xbf16>, vector<128x128xbf16>, vector<16x128xf32> -> vector<16x128xf32>
    %40 = arith.addf %34, %39 : vector<16x128xf32>
    %c0_52 = arith.constant 0 : index
    %c0_53 = arith.constant 0 : index
    %41 = vector.load %arg7[%c0_52, %c0_53] : memref<16x128xf32, #tpu.memory_space<vmem>>, vector<16x128xf32>
    tpu.vector_store %arg7[%c0_52, %c0_53], %40 {strides = array<i32>} : memref<16x128xf32, #tpu.memory_space<vmem>>, vector<16x128xf32>,
    %c0_54 = arith.constant 0 : index
    %c0_55 = arith.constant 0 : index
    %42 = vector.load %arg7[%c0_54, %c0_55] : memref<16x128xf32, #tpu.memory_space<vmem>>, vector<16x128xf32>
    %c0_56 = arith.constant 0 : index
    %c0_57 = arith.constant 0 : index
    %c65 = arith.constant 65 : index
    %c0_58 = arith.constant 0 : index
    %43 = vector.load %arg3[%c0_56, %c0_57, %c65, %c0_58] : memref<1x1x128x128xbf16, #tpu.memory_space<vmem>>, vector<1x1x16x128xbf16>
    %44 = vector.shape_cast %43 : vector<1x1x16x128xbf16> to vector<16x128xbf16>
    %c5 = arith.constant 5 : index
    %c0_59 = arith.constant 0 : index
    %c0_60 = arith.constant 0 : index
    %45 = vector.load %arg4[%c5, %c0_59, %c0_60] : memref<9x128x128xbf16, #tpu.memory_space<vmem>>, vector<1x128x128xbf16>
    %46 = vector.shape_cast %45 : vector<1x128x128xbf16> to vector<128x128xbf16>
    %cst_61 = arith.constant dense<0.000000e+00> : vector<16x128xf32>
    %47 = tpu.matmul %44, %46, %cst_61 {dimension_numbers = #tpu.dot_dimension_numbers<[1], [0], [0], [1], [0, 0, 1, 1], [], []>} : vector<16x128xbf16>, vector<128x128xbf16>, vector<16x128xf32> -> vector<16x128xf32>
    %48 = arith.addf %42, %47 : vector<16x128xf32>
    %c0_62 = arith.constant 0 : index
    %c0_63 = arith.constant 0 : index
    %49 = vector.load %arg7[%c0_62, %c0_63] : memref<16x128xf32, #tpu.memory_space<vmem>>, vector<16x128xf32>
    tpu.vector_store %arg7[%c0_62, %c0_63], %48 {strides = array<i32>} : memref<16x128xf32, #tpu.memory_space<vmem>>, vector<16x128xf32>,
    %c0_64 = arith.constant 0 : index
    %c0_65 = arith.constant 0 : index
    %50 = vector.load %arg7[%c0_64, %c0_65] : memref<16x128xf32, #tpu.memory_space<vmem>>, vector<16x128xf32>
    %c0_66 = arith.constant 0 : index
    %c0_67 = arith.constant 0 : index
    %c3_68 = arith.constant 3 : index
    %c0_69 = arith.constant 0 : index
    %51 = vector.load %arg3[%c0_66, %c0_67, %c3_68, %c0_69] : memref<1x1x128x128xbf16, #tpu.memory_space<vmem>>, vector<1x1x16x128xbf16>
    %52 = vector.shape_cast %51 : vector<1x1x16x128xbf16> to vector<16x128xbf16>
    %c6 = arith.constant 6 : index
    %c0_70 = arith.constant 0 : index
    %c0_71 = arith.constant 0 : index
    %53 = vector.load %arg4[%c6, %c0_70, %c0_71] : memref<9x128x128xbf16, #tpu.memory_space<vmem>>, vector<1x128x128xbf16>
    %54 = vector.shape_cast %53 : vector<1x128x128xbf16> to vector<128x128xbf16>
    %cst_72 = arith.constant dense<0.000000e+00> : vector<16x128xf32>
    %55 = tpu.matmul %52, %54, %cst_72 {dimension_numbers = #tpu.dot_dimension_numbers<[1], [0], [0], [1], [0, 0, 1, 1], [], []>} : vector<16x128xbf16>, vector<128x128xbf16>, vector<16x128xf32> -> vector<16x128xf32>
    %56 = arith.addf %50, %55 : vector<16x128xf32>
    %c0_73 = arith.constant 0 : index
    %c0_74 = arith.constant 0 : index
    %57 = vector.load %arg7[%c0_73, %c0_74] : memref<16x128xf32, #tpu.memory_space<vmem>>, vector<16x128xf32>
    tpu.vector_store %arg7[%c0_73, %c0_74], %56 {strides = array<i32>} : memref<16x128xf32, #tpu.memory_space<vmem>>, vector<16x128xf32>,
    %c0_75 = arith.constant 0 : index
    %c0_76 = arith.constant 0 : index
    %58 = vector.load %arg7[%c0_75, %c0_76] : memref<16x128xf32, #tpu.memory_space<vmem>>, vector<16x128xf32>
    %c0_77 = arith.constant 0 : index
    %c0_78 = arith.constant 0 : index
    %c35 = arith.constant 35 : index
    %c0_79 = arith.constant 0 : index
    %59 = vector.load %arg3[%c0_77, %c0_78, %c35, %c0_79] : memref<1x1x128x128xbf16, #tpu.memory_space<vmem>>, vector<1x1x16x128xbf16>
    %60 = vector.shape_cast %59 : vector<1x1x16x128xbf16> to vector<16x128xbf16>
    %c7 = arith.constant 7 : index
    %c0_80 = arith.constant 0 : index
    %c0_81 = arith.constant 0 : index
    %61 = vector.load %arg4[%c7, %c0_80, %c0_81] : memref<9x128x128xbf16, #tpu.memory_space<vmem>>, vector<1x128x128xbf16>
    %62 = vector.shape_cast %61 : vector<1x128x128xbf16> to vector<128x128xbf16>
    %cst_82 = arith.constant dense<0.000000e+00> : vector<16x128xf32>
    %63 = tpu.matmul %60, %62, %cst_82 {dimension_numbers = #tpu.dot_dimension_numbers<[1], [0], [0], [1], [0, 0, 1, 1], [], []>} : vector<16x128xbf16>, vector<128x128xbf16>, vector<16x128xf32> -> vector<16x128xf32>
    %64 = arith.addf %58, %63 : vector<16x128xf32>
    %c0_83 = arith.constant 0 : index
    %c0_84 = arith.constant 0 : index
    %65 = vector.load %arg7[%c0_83, %c0_84] : memref<16x128xf32, #tpu.memory_space<vmem>>, vector<16x128xf32>
    tpu.vector_store %arg7[%c0_83, %c0_84], %64 {strides = array<i32>} : memref<16x128xf32, #tpu.memory_space<vmem>>, vector<16x128xf32>,
    %c0_85 = arith.constant 0 : index
    %c0_86 = arith.constant 0 : index
    %66 = vector.load %arg7[%c0_85, %c0_86] : memref<16x128xf32, #tpu.memory_space<vmem>>, vector<16x128xf32>
    %c0_87 = arith.constant 0 : index
    %c0_88 = arith.constant 0 : index
    %c4_89 = arith.constant 4 : index
    %c0_90 = arith.constant 0 : index
    %67 = vector.load %arg3[%c0_87, %c0_88, %c4_89, %c0_90] : memref<1x1x128x128xbf16, #tpu.memory_space<vmem>>, vector<1x1x16x128xbf16>
    %68 = vector.shape_cast %67 : vector<1x1x16x128xbf16> to vector<16x128xbf16>
    %c8 = arith.constant 8 : index
    %c0_91 = arith.constant 0 : index
    %c0_92 = arith.constant 0 : index
    %69 = vector.load %arg4[%c8, %c0_91, %c0_92] : memref<9x128x128xbf16, #tpu.memory_space<vmem>>, vector<1x128x128xbf16>
    %70 = vector.shape_cast %69 : vector<1x128x128xbf16> to vector<128x128xbf16>
    %cst_93 = arith.constant dense<0.000000e+00> : vector<16x128xf32>
    %71 = tpu.matmul %68, %70, %cst_93 {dimension_numbers = #tpu.dot_dimension_numbers<[1], [0], [0], [1], [0, 0, 1, 1], [], []>} : vector<16x128xbf16>, vector<128x128xbf16>, vector<16x128xf32> -> vector<16x128xf32>
    %72 = arith.addf %66, %71 : vector<16x128xf32>
    %c0_94 = arith.constant 0 : index
    %c0_95 = arith.constant 0 : index
    %73 = vector.load %arg7[%c0_94, %c0_95] : memref<16x128xf32, #tpu.memory_space<vmem>>, vector<16x128xf32>
    tpu.vector_store %arg7[%c0_94, %c0_95], %72 {strides = array<i32>} : memref<16x128xf32, #tpu.memory_space<vmem>>, vector<16x128xf32>,
    %c0_96 = arith.constant 0 : index
    %c0_97 = arith.constant 0 : index
    %74 = vector.load %arg7[%c0_96, %c0_97] : memref<16x128xf32, #tpu.memory_space<vmem>>, vector<16x128xf32>
    %c0_98 = arith.constant 0 : index
    %c0_99 = arith.constant 0 : index
    %75 = vector.load %arg5[%c0_98, %c0_99] : memref<1x128xf32, #tpu.memory_space<vmem>>, vector<1x128xf32>
    %76 = vector.broadcast %75 : vector<1x128xf32> to vector<16x128xf32>
    %77 = arith.addf %74, %76 : vector<16x128xf32>
    %cst_100 = arith.constant 0.000000e+00 : f32
    %78 = vector.broadcast %cst_100 : f32 to vector<16x128xf32>
    %79 = arith.maximumf %77, %78 : vector<16x128xf32>
    %80 = arith.truncf %79 : vector<16x128xf32> to vector<16x128xbf16>
    %c0_101 = arith.constant 0 : index
    %c0_102 = arith.constant 0 : index
    %c0_103 = arith.constant 0 : index
    %81 = vector.load %arg6[%c0_101, %c0_102, %c0_103] : memref<1x16x128xbf16, #tpu.memory_space<vmem>>, vector<1x16x128xbf16>
    %82 = vector.shape_cast %81 : vector<1x16x128xbf16> to vector<16x128xbf16>
    %83 = vector.shape_cast %80 : vector<16x128xbf16> to vector<1x16x128xbf16>
    tpu.vector_store %arg6[%c0_101, %c0_102, %c0_103], %83 {strides = array<i32>} : memref<1x16x128xbf16, #tpu.memory_space<vmem>>, vector<1x16x128xbf16>,
    return
  }
  func.func @transform_0(%arg0: i32, %arg1: i32, %arg2: i32) -> (i32, i32, i32, i32) {
    %c0_i32 = arith.constant 0 : i32
    %c0_i32_0 = arith.constant 0 : i32
    %c0_i32_1 = arith.constant 0 : i32
    return %arg1, %arg2, %c0_i32, %c0_i32_0 : i32, i32, i32, i32
  }
  func.func @transform_1(%arg0: i32, %arg1: i32, %arg2: i32) -> (i32, i32, i32) {
    %c0_i32 = arith.constant 0 : i32
    %c0_i32_0 = arith.constant 0 : i32
    %c0_i32_1 = arith.constant 0 : i32
    return %c0_i32, %c0_i32_0, %arg0 : i32, i32, i32
  }
  func.func @transform_2(%arg0: i32, %arg1: i32, %arg2: i32) -> (i32, i32) {
    %c0_i32 = arith.constant 0 : i32
    %c0_i32_0 = arith.constant 0 : i32
    return %c0_i32, %arg0 : i32, i32
  }
  func.func @transform_3(%arg0: i32, %arg1: i32, %arg2: i32) -> (i32, i32, i32) {
    %c0_i32 = arith.constant 0 : i32
    return %arg1, %arg2, %arg0 : i32, i32, i32
  }
}

module attributes {stable_mosaic.version = 11 : i64} {
  func.func @_tap_gemm_kernel(%arg0: i32, %arg1: i32, %arg2: i32, %arg3: memref<1x1x128x128xbf16, #tpu.memory_space<vmem>>, %arg4: memref<9x128x128xbf16, #tpu.memory_space<vmem>>, %arg5: memref<1x128xf32, #tpu.memory_space<vmem>>, %arg6: memref<1x16x128xbf16, #tpu.memory_space<vmem>>, %arg7: memref<16x128xf32, #tpu.memory_space<vmem>>) attributes {dimension_semantics = [#tpu.dimension_semantics<parallel>, #tpu.dimension_semantics<parallel>, #tpu.dimension_semantics<parallel>], iteration_bounds = array<i64: 1, 2, 1>, scalar_prefetch = 0 : i64, scratch_operands = 1 : i64, tpu.core_type = #tpu.core_type<tc>, window_params = [{transform_indices = @transform_0, window_bounds = array<i64: 1, 1, 128, 128>}, {transform_indices = @transform_1, window_bounds = array<i64: 9, 128, 128>}, {transform_indices = @transform_2, window_bounds = array<i64: 1, 128>}, {transform_indices = @transform_3, window_bounds = array<i64: 1, 16, 128>}]} {
    %cst = arith.constant 0.000000e+00 : f32
    %0 = vector.broadcast %cst : f32 to vector<16x128xf32>
    %c0 = arith.constant 0 : index
    %c0_0 = arith.constant 0 : index
    %1 = vector.load %arg7[%c0, %c0_0] : memref<16x128xf32, #tpu.memory_space<vmem>>, vector<16x128xf32>
    tpu.vector_store %arg7[%c0, %c0_0], %0 {strides = array<i32>} : memref<16x128xf32, #tpu.memory_space<vmem>>, vector<16x128xf32>,
    %c0_1 = arith.constant 0 : index
    %c0_2 = arith.constant 0 : index
    %2 = vector.load %arg7[%c0_1, %c0_2] : memref<16x128xf32, #tpu.memory_space<vmem>>, vector<16x128xf32>
    %c0_3 = arith.constant 0 : index
    %c0_4 = arith.constant 0 : index
    %c0_5 = arith.constant 0 : index
    %c0_6 = arith.constant 0 : index
    %3 = vector.load %arg3[%c0_3, %c0_4, %c0_5, %c0_6] : memref<1x1x128x128xbf16, #tpu.memory_space<vmem>>, vector<1x1x16x128xbf16>
    %4 = vector.shape_cast %3 : vector<1x1x16x128xbf16> to vector<16x128xbf16>
    %c0_7 = arith.constant 0 : index
    %c0_8 = arith.constant 0 : index
    %c0_9 = arith.constant 0 : index
    %5 = vector.load %arg4[%c0_7, %c0_8, %c0_9] : memref<9x128x128xbf16, #tpu.memory_space<vmem>>, vector<1x128x128xbf16>
    %6 = vector.shape_cast %5 : vector<1x128x128xbf16> to vector<128x128xbf16>
    %cst_10 = arith.constant dense<0.000000e+00> : vector<16x128xf32>
    %7 = tpu.matmul %4, %6, %cst_10 {dimension_numbers = #tpu.dot_dimension_numbers<[1], [0], [0], [1], [0, 0, 1, 1], [], []>} : vector<16x128xbf16>, vector<128x128xbf16>, vector<16x128xf32> -> vector<16x128xf32>
    %8 = arith.addf %2, %7 : vector<16x128xf32>
    %c0_11 = arith.constant 0 : index
    %c0_12 = arith.constant 0 : index
    %9 = vector.load %arg7[%c0_11, %c0_12] : memref<16x128xf32, #tpu.memory_space<vmem>>, vector<16x128xf32>
    tpu.vector_store %arg7[%c0_11, %c0_12], %8 {strides = array<i32>} : memref<16x128xf32, #tpu.memory_space<vmem>>, vector<16x128xf32>,
    %c0_13 = arith.constant 0 : index
    %c0_14 = arith.constant 0 : index
    %10 = vector.load %arg7[%c0_13, %c0_14] : memref<16x128xf32, #tpu.memory_space<vmem>>, vector<16x128xf32>
    %c0_15 = arith.constant 0 : index
    %c0_16 = arith.constant 0 : index
    %c32 = arith.constant 32 : index
    %c0_17 = arith.constant 0 : index
    %11 = vector.load %arg3[%c0_15, %c0_16, %c32, %c0_17] : memref<1x1x128x128xbf16, #tpu.memory_space<vmem>>, vector<1x1x16x128xbf16>
    %12 = vector.shape_cast %11 : vector<1x1x16x128xbf16> to vector<16x128xbf16>
    %c1 = arith.constant 1 : index
    %c0_18 = arith.constant 0 : index
    %c0_19 = arith.constant 0 : index
    %13 = vector.load %arg4[%c1, %c0_18, %c0_19] : memref<9x128x128xbf16, #tpu.memory_space<vmem>>, vector<1x128x128xbf16>
    %14 = vector.shape_cast %13 : vector<1x128x128xbf16> to vector<128x128xbf16>
    %cst_20 = arith.constant dense<0.000000e+00> : vector<16x128xf32>
    %15 = tpu.matmul %12, %14, %cst_20 {dimension_numbers = #tpu.dot_dimension_numbers<[1], [0], [0], [1], [0, 0, 1, 1], [], []>} : vector<16x128xbf16>, vector<128x128xbf16>, vector<16x128xf32> -> vector<16x128xf32>
    %16 = arith.addf %10, %15 : vector<16x128xf32>
    %c0_21 = arith.constant 0 : index
    %c0_22 = arith.constant 0 : index
    %17 = vector.load %arg7[%c0_21, %c0_22] : memref<16x128xf32, #tpu.memory_space<vmem>>, vector<16x128xf32>
    tpu.vector_store %arg7[%c0_21, %c0_22], %16 {strides = array<i32>} : memref<16x128xf32, #tpu.memory_space<vmem>>, vector<16x128xf32>,
    %c0_23 = arith.constant 0 : index
    %c0_24 = arith.constant 0 : index
    %18 = vector.load %arg7[%c0_23, %c0_24] : memref<16x128xf32, #tpu.memory_space<vmem>>, vector<16x128xf32>
    %c0_25 = arith.constant 0 : index
    %c0_26 = arith.constant 0 : index
    %c1_27 = arith.constant 1 : index
    %c0_28 = arith.constant 0 : index
    %19 = vector.load %arg3[%c0_25, %c0_26, %c1_27, %c0_28] : memref<1x1x128x128xbf16, #tpu.memory_space<vmem>>, vector<1x1x16x128xbf16>
    %20 = vector.shape_cast %19 : vector<1x1x16x128xbf16> to vector<16x128xbf16>
    %c2 = arith.constant 2 : index
    %c0_29 = arith.constant 0 : index
    %c0_30 = arith.constant 0 : index
    %21 = vector.load %arg4[%c2, %c0_29, %c0_30] : memref<9x128x128xbf16, #tpu.memory_space<vmem>>, vector<1x128x128xbf16>
    %22 = vector.shape_cast %21 : vector<1x128x128xbf16> to vector<128x128xbf16>
    %cst_31 = arith.constant dense<0.000000e+00> : vector<16x128xf32>
    %23 = tpu.matmul %20, %22, %cst_31 {dimension_numbers = #tpu.dot_dimension_numbers<[1], [0], [0], [1], [0, 0, 1, 1], [], []>} : vector<16x128xbf16>, vector<128x128xbf16>, vector<16x128xf32> -> vector<16x128xf32>
    %24 = arith.addf %18, %23 : vector<16x128xf32>
    %c0_32 = arith.constant 0 : index
    %c0_33 = arith.constant 0 : index
    %25 = vector.load %arg7[%c0_32, %c0_33] : memref<16x128xf32, #tpu.memory_space<vmem>>, vector<16x128xf32>
    tpu.vector_store %arg7[%c0_32, %c0_33], %24 {strides = array<i32>} : memref<16x128xf32, #tpu.memory_space<vmem>>, vector<16x128xf32>,
    %c0_34 = arith.constant 0 : index
    %c0_35 = arith.constant 0 : index
    %26 = vector.load %arg7[%c0_34, %c0_35] : memref<16x128xf32, #tpu.memory_space<vmem>>, vector<16x128xf32>
    %c0_36 = arith.constant 0 : index
    %c0_37 = arith.constant 0 : index
    %c64 = arith.constant 64 : index
    %c0_38 = arith.constant 0 : index
    %27 = vector.load %arg3[%c0_36, %c0_37, %c64, %c0_38] : memref<1x1x128x128xbf16, #tpu.memory_space<vmem>>, vector<1x1x16x128xbf16>
    %28 = vector.shape_cast %27 : vector<1x1x16x128xbf16> to vector<16x128xbf16>
    %c3 = arith.constant 3 : index
    %c0_39 = arith.constant 0 : index
    %c0_40 = arith.constant 0 : index
    %29 = vector.load %arg4[%c3, %c0_39, %c0_40] : memref<9x128x128xbf16, #tpu.memory_space<vmem>>, vector<1x128x128xbf16>
    %30 = vector.shape_cast %29 : vector<1x128x128xbf16> to vector<128x128xbf16>
    %cst_41 = arith.constant dense<0.000000e+00> : vector<16x128xf32>
    %31 = tpu.matmul %28, %30, %cst_41 {dimension_numbers = #tpu.dot_dimension_numbers<[1], [0], [0], [1], [0, 0, 1, 1], [], []>} : vector<16x128xbf16>, vector<128x128xbf16>, vector<16x128xf32> -> vector<16x128xf32>
    %32 = arith.addf %26, %31 : vector<16x128xf32>
    %c0_42 = arith.constant 0 : index
    %c0_43 = arith.constant 0 : index
    %33 = vector.load %arg7[%c0_42, %c0_43] : memref<16x128xf32, #tpu.memory_space<vmem>>, vector<16x128xf32>
    tpu.vector_store %arg7[%c0_42, %c0_43], %32 {strides = array<i32>} : memref<16x128xf32, #tpu.memory_space<vmem>>, vector<16x128xf32>,
    %c0_44 = arith.constant 0 : index
    %c0_45 = arith.constant 0 : index
    %34 = vector.load %arg7[%c0_44, %c0_45] : memref<16x128xf32, #tpu.memory_space<vmem>>, vector<16x128xf32>
    %c0_46 = arith.constant 0 : index
    %c0_47 = arith.constant 0 : index
    %c96 = arith.constant 96 : index
    %c0_48 = arith.constant 0 : index
    %35 = vector.load %arg3[%c0_46, %c0_47, %c96, %c0_48] : memref<1x1x128x128xbf16, #tpu.memory_space<vmem>>, vector<1x1x16x128xbf16>
    %36 = vector.shape_cast %35 : vector<1x1x16x128xbf16> to vector<16x128xbf16>
    %c4 = arith.constant 4 : index
    %c0_49 = arith.constant 0 : index
    %c0_50 = arith.constant 0 : index
    %37 = vector.load %arg4[%c4, %c0_49, %c0_50] : memref<9x128x128xbf16, #tpu.memory_space<vmem>>, vector<1x128x128xbf16>
    %38 = vector.shape_cast %37 : vector<1x128x128xbf16> to vector<128x128xbf16>
    %cst_51 = arith.constant dense<0.000000e+00> : vector<16x128xf32>
    %39 = tpu.matmul %36, %38, %cst_51 {dimension_numbers = #tpu.dot_dimension_numbers<[1], [0], [0], [1], [0, 0, 1, 1], [], []>} : vector<16x128xbf16>, vector<128x128xbf16>, vector<16x128xf32> -> vector<16x128xf32>
    %40 = arith.addf %34, %39 : vector<16x128xf32>
    %c0_52 = arith.constant 0 : index
    %c0_53 = arith.constant 0 : index
    %41 = vector.load %arg7[%c0_52, %c0_53] : memref<16x128xf32, #tpu.memory_space<vmem>>, vector<16x128xf32>
    tpu.vector_store %arg7[%c0_52, %c0_53], %40 {strides = array<i32>} : memref<16x128xf32, #tpu.memory_space<vmem>>, vector<16x128xf32>,
    %c0_54 = arith.constant 0 : index
    %c0_55 = arith.constant 0 : index
    %42 = vector.load %arg7[%c0_54, %c0_55] : memref<16x128xf32, #tpu.memory_space<vmem>>, vector<16x128xf32>
    %c0_56 = arith.constant 0 : index
    %c0_57 = arith.constant 0 : index
    %c65 = arith.constant 65 : index
    %c0_58 = arith.constant 0 : index
    %43 = vector.load %arg3[%c0_56, %c0_57, %c65, %c0_58] : memref<1x1x128x128xbf16, #tpu.memory_space<vmem>>, vector<1x1x16x128xbf16>
    %44 = vector.shape_cast %43 : vector<1x1x16x128xbf16> to vector<16x128xbf16>
    %c5 = arith.constant 5 : index
    %c0_59 = arith.constant 0 : index
    %c0_60 = arith.constant 0 : index
    %45 = vector.load %arg4[%c5, %c0_59, %c0_60] : memref<9x128x128xbf16, #tpu.memory_space<vmem>>, vector<1x128x128xbf16>
    %46 = vector.shape_cast %45 : vector<1x128x128xbf16> to vector<128x128xbf16>
    %cst_61 = arith.constant dense<0.000000e+00> : vector<16x128xf32>
    %47 = tpu.matmul %44, %46, %cst_61 {dimension_numbers = #tpu.dot_dimension_numbers<[1], [0], [0], [1], [0, 0, 1, 1], [], []>} : vector<16x128xbf16>, vector<128x128xbf16>, vector<16x128xf32> -> vector<16x128xf32>
    %48 = arith.addf %42, %47 : vector<16x128xf32>
    %c0_62 = arith.constant 0 : index
    %c0_63 = arith.constant 0 : index
    %49 = vector.load %arg7[%c0_62, %c0_63] : memref<16x128xf32, #tpu.memory_space<vmem>>, vector<16x128xf32>
    tpu.vector_store %arg7[%c0_62, %c0_63], %48 {strides = array<i32>} : memref<16x128xf32, #tpu.memory_space<vmem>>, vector<16x128xf32>,
    %c0_64 = arith.constant 0 : index
    %c0_65 = arith.constant 0 : index
    %50 = vector.load %arg7[%c0_64, %c0_65] : memref<16x128xf32, #tpu.memory_space<vmem>>, vector<16x128xf32>
    %c0_66 = arith.constant 0 : index
    %c0_67 = arith.constant 0 : index
    %c2_68 = arith.constant 2 : index
    %c0_69 = arith.constant 0 : index
    %51 = vector.load %arg3[%c0_66, %c0_67, %c2_68, %c0_69] : memref<1x1x128x128xbf16, #tpu.memory_space<vmem>>, vector<1x1x16x128xbf16>
    %52 = vector.shape_cast %51 : vector<1x1x16x128xbf16> to vector<16x128xbf16>
    %c6 = arith.constant 6 : index
    %c0_70 = arith.constant 0 : index
    %c0_71 = arith.constant 0 : index
    %53 = vector.load %arg4[%c6, %c0_70, %c0_71] : memref<9x128x128xbf16, #tpu.memory_space<vmem>>, vector<1x128x128xbf16>
    %54 = vector.shape_cast %53 : vector<1x128x128xbf16> to vector<128x128xbf16>
    %cst_72 = arith.constant dense<0.000000e+00> : vector<16x128xf32>
    %55 = tpu.matmul %52, %54, %cst_72 {dimension_numbers = #tpu.dot_dimension_numbers<[1], [0], [0], [1], [0, 0, 1, 1], [], []>} : vector<16x128xbf16>, vector<128x128xbf16>, vector<16x128xf32> -> vector<16x128xf32>
    %56 = arith.addf %50, %55 : vector<16x128xf32>
    %c0_73 = arith.constant 0 : index
    %c0_74 = arith.constant 0 : index
    %57 = vector.load %arg7[%c0_73, %c0_74] : memref<16x128xf32, #tpu.memory_space<vmem>>, vector<16x128xf32>
    tpu.vector_store %arg7[%c0_73, %c0_74], %56 {strides = array<i32>} : memref<16x128xf32, #tpu.memory_space<vmem>>, vector<16x128xf32>,
    %c0_75 = arith.constant 0 : index
    %c0_76 = arith.constant 0 : index
    %58 = vector.load %arg7[%c0_75, %c0_76] : memref<16x128xf32, #tpu.memory_space<vmem>>, vector<16x128xf32>
    %c0_77 = arith.constant 0 : index
    %c0_78 = arith.constant 0 : index
    %c34 = arith.constant 34 : index
    %c0_79 = arith.constant 0 : index
    %59 = vector.load %arg3[%c0_77, %c0_78, %c34, %c0_79] : memref<1x1x128x128xbf16, #tpu.memory_space<vmem>>, vector<1x1x16x128xbf16>
    %60 = vector.shape_cast %59 : vector<1x1x16x128xbf16> to vector<16x128xbf16>
    %c7 = arith.constant 7 : index
    %c0_80 = arith.constant 0 : index
    %c0_81 = arith.constant 0 : index
    %61 = vector.load %arg4[%c7, %c0_80, %c0_81] : memref<9x128x128xbf16, #tpu.memory_space<vmem>>, vector<1x128x128xbf16>
    %62 = vector.shape_cast %61 : vector<1x128x128xbf16> to vector<128x128xbf16>
    %cst_82 = arith.constant dense<0.000000e+00> : vector<16x128xf32>
    %63 = tpu.matmul %60, %62, %cst_82 {dimension_numbers = #tpu.dot_dimension_numbers<[1], [0], [0], [1], [0, 0, 1, 1], [], []>} : vector<16x128xbf16>, vector<128x128xbf16>, vector<16x128xf32> -> vector<16x128xf32>
    %64 = arith.addf %58, %63 : vector<16x128xf32>
    %c0_83 = arith.constant 0 : index
    %c0_84 = arith.constant 0 : index
    %65 = vector.load %arg7[%c0_83, %c0_84] : memref<16x128xf32, #tpu.memory_space<vmem>>, vector<16x128xf32>
    tpu.vector_store %arg7[%c0_83, %c0_84], %64 {strides = array<i32>} : memref<16x128xf32, #tpu.memory_space<vmem>>, vector<16x128xf32>,
    %c0_85 = arith.constant 0 : index
    %c0_86 = arith.constant 0 : index
    %66 = vector.load %arg7[%c0_85, %c0_86] : memref<16x128xf32, #tpu.memory_space<vmem>>, vector<16x128xf32>
    %c0_87 = arith.constant 0 : index
    %c0_88 = arith.constant 0 : index
    %c3_89 = arith.constant 3 : index
    %c0_90 = arith.constant 0 : index
    %67 = vector.load %arg3[%c0_87, %c0_88, %c3_89, %c0_90] : memref<1x1x128x128xbf16, #tpu.memory_space<vmem>>, vector<1x1x16x128xbf16>
    %68 = vector.shape_cast %67 : vector<1x1x16x128xbf16> to vector<16x128xbf16>
    %c8 = arith.constant 8 : index
    %c0_91 = arith.constant 0 : index
    %c0_92 = arith.constant 0 : index
    %69 = vector.load %arg4[%c8, %c0_91, %c0_92] : memref<9x128x128xbf16, #tpu.memory_space<vmem>>, vector<1x128x128xbf16>
    %70 = vector.shape_cast %69 : vector<1x128x128xbf16> to vector<128x128xbf16>
    %cst_93 = arith.constant dense<0.000000e+00> : vector<16x128xf32>
    %71 = tpu.matmul %68, %70, %cst_93 {dimension_numbers = #tpu.dot_dimension_numbers<[1], [0], [0], [1], [0, 0, 1, 1], [], []>} : vector<16x128xbf16>, vector<128x128xbf16>, vector<16x128xf32> -> vector<16x128xf32>
    %72 = arith.addf %66, %71 : vector<16x128xf32>
    %c0_94 = arith.constant 0 : index
    %c0_95 = arith.constant 0 : index
    %73 = vector.load %arg7[%c0_94, %c0_95] : memref<16x128xf32, #tpu.memory_space<vmem>>, vector<16x128xf32>
    tpu.vector_store %arg7[%c0_94, %c0_95], %72 {strides = array<i32>} : memref<16x128xf32, #tpu.memory_space<vmem>>, vector<16x128xf32>,
    %c0_96 = arith.constant 0 : index
    %c0_97 = arith.constant 0 : index
    %74 = vector.load %arg7[%c0_96, %c0_97] : memref<16x128xf32, #tpu.memory_space<vmem>>, vector<16x128xf32>
    %c0_98 = arith.constant 0 : index
    %c0_99 = arith.constant 0 : index
    %75 = vector.load %arg5[%c0_98, %c0_99] : memref<1x128xf32, #tpu.memory_space<vmem>>, vector<1x128xf32>
    %76 = vector.broadcast %75 : vector<1x128xf32> to vector<16x128xf32>
    %77 = arith.addf %74, %76 : vector<16x128xf32>
    %cst_100 = arith.constant 0.000000e+00 : f32
    %78 = vector.broadcast %cst_100 : f32 to vector<16x128xf32>
    %79 = arith.maximumf %77, %78 : vector<16x128xf32>
    %80 = arith.truncf %79 : vector<16x128xf32> to vector<16x128xbf16>
    %c0_101 = arith.constant 0 : index
    %c0_102 = arith.constant 0 : index
    %c0_103 = arith.constant 0 : index
    %81 = vector.load %arg6[%c0_101, %c0_102, %c0_103] : memref<1x16x128xbf16, #tpu.memory_space<vmem>>, vector<1x16x128xbf16>
    %82 = vector.shape_cast %81 : vector<1x16x128xbf16> to vector<16x128xbf16>
    %83 = vector.shape_cast %80 : vector<16x128xbf16> to vector<1x16x128xbf16>
    tpu.vector_store %arg6[%c0_101, %c0_102, %c0_103], %83 {strides = array<i32>} : memref<1x16x128xbf16, #tpu.memory_space<vmem>>, vector<1x16x128xbf16>,
    return
  }
  func.func @transform_0(%arg0: i32, %arg1: i32, %arg2: i32) -> (i32, i32, i32, i32) {
    %c0_i32 = arith.constant 0 : i32
    %c0_i32_0 = arith.constant 0 : i32
    %c0_i32_1 = arith.constant 0 : i32
    return %arg1, %arg2, %c0_i32, %c0_i32_0 : i32, i32, i32, i32
  }
  func.func @transform_1(%arg0: i32, %arg1: i32, %arg2: i32) -> (i32, i32, i32) {
    %c0_i32 = arith.constant 0 : i32
    %c0_i32_0 = arith.constant 0 : i32
    %c0_i32_1 = arith.constant 0 : i32
    return %c0_i32, %c0_i32_0, %arg0 : i32, i32, i32
  }
  func.func @transform_2(%arg0: i32, %arg1: i32, %arg2: i32) -> (i32, i32) {
    %c0_i32 = arith.constant 0 : i32
    %c0_i32_0 = arith.constant 0 : i32
    return %c0_i32, %arg0 : i32, i32
  }
  func.func @transform_3(%arg0: i32, %arg1: i32, %arg2: i32) -> (i32, i32, i32) {
    %c0_i32 = arith.constant 0 : i32
    return %arg1, %arg2, %arg0 : i32, i32, i32
  }
}

</mosaic_0001>

<llo_original>
// kernel: timm_backbone_forward.5
$region0: #{timm_backbone_forward.5}
  #allocation0 [shape = 'u32[]', space=smem, size = 0x4, offset = 0x4, fixed_abs, tag = 'smem constant byte address 0x4 - core index']
  #allocation1 [shape = 'u32[144,128]{1,0:T(1,128)}', space=vmem, size = 0x12000, scoped, tag = 'internal scratch']
  %s0 = inlined_call_operand.vmem [shape: bf16[2,256,32], index: 0, kind: input, shape index: {}]
  %s1 = inlined_call_operand.vmem [shape: bf16[32,128], index: 1, kind: input, shape index: {}]
  %s2 = inlined_call_operand.vmem [shape: f32[1,128], index: 2, kind: input, shape index: {}]
  %s3 = inlined_call_operand.vmem [shape: bf16[2,256,128], index: 3, kind: output, shape index: {}]
  %s4 = sld [smem:[#allocation0]]
  $region45: #{timm_backbone_forward.5} parent=0
    _
  %s6 = ssub.s32 1, %s4
  %s7 = scalar_select 0, %s6, %s4
  loop: start=0, step=1, limit=4
  $region2: #{timm_backbone_forward.5} parent=0 // loop_pre_header
    _
  $region3: #{timm_backbone_forward.5} parent=0 // loop_header
    %s9 = sphi 0, %s13
    %p10 = scmp.ge.s32.totalorder %s9, 4
    %s16 = sphi 0, %s35
    %s17 = sphi 0, %s31
    %s18 = sphi 0, %s27
    %s19 = sphi 0, %s16
    %s20 = sphi 0, %s17
    %s21 = sphi 0, %s18
    %s22 = sphi 0, %s19
    %s23 = sphi 0, %s20
    %s24 = sphi 0, %s21
    %s40 = sphi 0, %s42
    %s43 = sphi 0, %s40
    %s44 = sphi 0, %s43
    %s60 = sphi 0, %s44
    %s66 = sphi 0, %s68
    %s69 = sphi 0, %s66
    %s70 = sphi 0, %s69
    %s86 = sphi 0, %s70
    %s92 = sphi 0, %s94
    %s95 = sphi 0, %s92
    %s96 = sphi 0, %s95
    %s112 = sphi 0, %s96
    %s122 = sphi 0, %s124
    %s125 = sphi 0, %s122
    %s126 = sphi 0, %s125
    %s142 = sphi 0, %s126
  $region4: #{timm_backbone_forward.5} parent=0 // loop_header_branch
    %12 = sbr.rel (%p10) target = $region8
  $region5: #{timm_backbone_forward.5} parent=0 // loop_body
    %s14 = ssub.s32 %s9, 1
    %s15 = ssub.s32 %s9, 2
    %s25 = sadd.s32 1, %s18
    %p26 = scmp.ge.s32.totalorder %s25, 1
    %s27 = scalar_select %p26, 0, %s25
    %s28 = sadd.s32 1, %s17
    %s29 = scalar_select %p26, %s28, %s17
    %p30 = scmp.ge.s32.totalorder %s29, 2
    %s31 = scalar_select %p30, 0, %s29
    %s32 = sadd.s32 1, %s16
    %s33 = scalar_select %p30, %s32, %s16
    %p34 = scmp.ge.s32.totalorder %s33, 1
    %s35 = scalar_select %p34, 0, %s33
    %s36 = ssub.s32 %s17, %s31
    %s37 = ssub.s32 %s18, %s27
    %s38 = sor.u32 %s36, %s37
    %p39 = scmp.eq.s32.totalorder %s38, 0
    %s41 = sadd.s32 %s40, 1
    %s42 = scalar_select %p39, %s40, %s41
    %p45 = pneg %p39
    %p46 = scmp.eq.s32.totalorder %s9, 1
    %p47 = por %p45, %p46
    %p48 = scmp.ne.s32.totalorder %s40, %s43
    %p49 = scmp.eq.s32.totalorder %s9, 0
    %p50 = por %p48, %p49
    %p51 = scmp.ne.s32.totalorder %s40, %s43
    %p52 = scmp.eq.s32.totalorder %s14, 1
    %p53 = por %p51, %p52
    %p54 = scmp.ne.s32.totalorder %s43, %s44
    %p55 = scmp.eq.s32.totalorder %s14, 0
    %p56 = por %p54, %p55
    %p57 = scmp.ne.s32.totalorder %s43, %s44
    %p58 = scmp.eq.s32.totalorder %s15, 1
    %p59 = por %p57, %p58
    %p61 = scmp.ne.s32.totalorder %s44, %s60
    %p62 = scmp.eq.s32.totalorder %s15, 0
    %p63 = por %p61, %p62
    %s64 = ssub.s32 %s16, %s35
    %p65 = scmp.eq.s32.totalorder %s64, 0
    %s67 = sadd.s32 %s66, 1
    %s68 = scalar_select %p65, %s66, %s67
    %p71 = pneg %p65
    %p72 = scmp.eq.s32.totalorder %s9, 1
    %p73 = por %p71, %p72
    %p74 = scmp.ne.s32.totalorder %s66, %s69
    %p75 = scmp.eq.s32.totalorder %s9, 0
    %p76 = por %p74, %p75
    %p77 = scmp.ne.s32.totalorder %s66, %s69
    %p78 = scmp.eq.s32.totalorder %s14, 1
    %p79 = por %p77, %p78
    %p80 = scmp.ne.s32.totalorder %s69, %s70
    %p81 = scmp.eq.s32.totalorder %s14, 0
    %p82 = por %p80, %p81
    %p83 = scmp.ne.s32.totalorder %s69, %s70
    %p84 = scmp.eq.s32.totalorder %s15, 1
    %p85 = por %p83, %p84
    %p87 = scmp.ne.s32.totalorder %s70, %s86
    %p88 = scmp.eq.s32.totalorder %s15, 0
    %p89 = por %p87, %p88
    %s90 = ssub.s32 %s16, %s35
    %p91 = scmp.eq.s32.totalorder %s90, 0
    %s93 = sadd.s32 %s92, 1
    %s94 = scalar_select %p91, %s92, %s93
    %p97 = pneg %p91
    %p98 = scmp.eq.s32.totalorder %s9, 1
    %p99 = por %p97, %p98
    %p100 = scmp.ne.s32.totalorder %s92, %s95
    %p101 = scmp.eq.s32.totalorder %s9, 0
    %p102 = por %p100, %p101
    %p103 = scmp.ne.s32.totalorder %s92, %s95
    %p104 = scmp.eq.s32.totalorder %s14, 1
    %p105 = por %p103, %p104
    %p106 = scmp.ne.s32.totalorder %s95, %s96
    %p107 = scmp.eq.s32.totalorder %s14, 0
    %p108 = por %p106, %p107
    %p109 = scmp.ne.s32.totalorder %s95, %s96
    %p110 = scmp.eq.s32.totalorder %s15, 1
    %p111 = por %p109, %p110
    %p113 = scmp.ne.s32.totalorder %s96, %s112
    %p114 = scmp.eq.s32.totalorder %s15, 0
    %p115 = por %p113, %p114
    %s116 = ssub.s32 %s17, %s31
    %s117 = ssub.s32 %s18, %s27
    %s118 = sor.u32 %s116, %s117
    %s119 = ssub.s32 %s16, %s35
    %s120 = sor.u32 %s118, %s119
    %p121 = scmp.eq.s32.totalorder %s120, 0
    %s123 = sadd.s32 %s122, 1
    %s124 = scalar_select %p121, %s122, %s123
    %p127 = pneg %p121
    %p128 = scmp.eq.s32.totalorder %s9, 1
    %p129 = por %p127, %p128
    %p130 = scmp.ne.s32.totalorder %s122, %s125
    %p131 = scmp.eq.s32.totalorder %s9, 0
    %p132 = por %p130, %p131
    %p133 = scmp.ne.s32.totalorder %s122, %s125
    %p134 = scmp.eq.s32.totalorder %s14, 1
    %p135 = por %p133, %p134
    %p136 = scmp.ne.s32.totalorder %s125, %s126
    %p137 = scmp.eq.s32.totalorder %s14, 0
    %p138 = por %p136, %p137
    %p139 = scmp.ne.s32.totalorder %s125, %s126
    %p140 = scmp.eq.s32.totalorder %s15, 1
    %p141 = por %p139, %p140
    %p143 = scmp.ne.s32.totalorder %s126, %s142
    %p144 = scmp.eq.s32.totalorder %s15, 0
    %p145 = por %p143, %p144
    %p146 = scmp.le.s32.totalorder 1, %s9
    %p147 = scmp.lt.s32.totalorder %s9, 3
    %p148 = pnand %p146, %p147
    %p149 = pneg %p148
    // Predicated region
    $region9: #{timm_backbone_forward.5} parent=5 // pred_check
      _
    $region10: #{timm_backbone_forward.5} parent=5 // pred_check_branch
      %151 = sbr.rel (%p148) target = $region12
    $region11: #{timm_backbone_forward.5} parent=5 // pred_region
      %s152 = ssub.s32 %s9, 1
      // Predicated region
      $region13: #{timm_backbone_forward.5} parent=11 // pred_check
        %p153 = pneg %p82
      $region14: #{timm_backbone_forward.5} parent=11 // pred_check_branch
        %155 = sbr.rel (%p153) target = $region16
      $region15: #{timm_backbone_forward.5} parent=11 // pred_region
        %p156 = scmp.lt.s32.totalorder %s19, 0
        %s157 = scalar_select %p156, %s19, 0
        %s158 = smul.addr %s157, 4
        %s159 = scalar_lea.vmem %s1, %s158
      $region16: #{timm_backbone_forward.5} parent=11 // pred_fallthru
        _
      // Predicated region
      $region17: #{timm_backbone_forward.5} parent=11 // pred_check
        %p160 = pneg %p108
      $region18: #{timm_backbone_forward.5} parent=11 // pred_check_branch
        %162 = sbr.rel (%p160) target = $region20
      $region19: #{timm_backbone_forward.5} parent=11 // pred_region
        %p163 = scmp.lt.s32.totalorder %s19, 0
        %s164 = scalar_select %p163, %s19, 0
        %s165 = scalar_lea.vmem %s2, %s164
      $region20: #{timm_backbone_forward.5} parent=11 // pred_fallthru
        _
    $region12: #{timm_backbone_forward.5} parent=5 // pred_fallthru
      _
    %p166 = scmp.lt.s32.totalorder %s9, 2
    // Predicated region
    $region21: #{timm_backbone_forward.5} parent=5 // pred_check
      %p167 = pneg %p166
    $region22: #{timm_backbone_forward.5} parent=5 // pred_check_branch
      %169 = sbr.rel (%p167) target = $region24
    $region23: #{timm_backbone_forward.5} parent=5 // pred_region
      // Predicated region
      $region25: #{timm_backbone_forward.5} parent=23 // pred_check
        %p170 = pneg %p50
      $region26: #{timm_backbone_forward.5} parent=23 // pred_check_branch
        %172 = sbr.rel (%p170) target = $region28
      $region27: #{timm_backbone_forward.5} parent=23 // pred_region
        %s173 = smul.u32 32, %s18
        %p174 = scmp.lt.s32.totalorder %s17, 1
        %s175 = scalar_select %p174, %s17, 1
        %p176 = scmp.lt.s32.totalorder %s173, 31
        %s177 = scalar_select %p176, %s173, 31
        %s178 = smul.addr %s175, 32
        %s179 = sadd.s32 %s177, %s178
        %s180 = smul.addr %s179, 4
        %s181 = scalar_lea.vmem %s0, %s180
        %s182 = smul.u32 32, %s18
      $region28: #{timm_backbone_forward.5} parent=23 // pred_fallthru
        _
    $region24: #{timm_backbone_forward.5} parent=5 // pred_fallthru
      _
    %p183 = scmp.le.s32.totalorder 1, %s9
    %p184 = scmp.lt.s32.totalorder %s9, 3
    %p185 = pnand %p183, %p184
    %p186 = pneg %p185
    // Predicated region
    $region29: #{timm_backbone_forward.5} parent=5 // pred_check
      _
    $region30: #{timm_backbone_forward.5} parent=5 // pred_check_branch
      %188 = sbr.rel (%p185) target = $region32
    $region31: #{timm_backbone_forward.5} parent=5 // pred_region
      %s189 = ssub.s32 %s9, 1
      %s190 = smul.u32 32, %s21
      %p191 = scmp.lt.s32.totalorder %s20, 1
      %s192 = scalar_select %p191, %s20, 1
      %p193 = scmp.lt.s32.totalorder %s190, 31
      %s194 = scalar_select %p193, %s190, 31
      %s195 = smul.addr %s192, 32
      %s196 = sadd.s32 %s194, %s195
      %s197 = smul.addr %s196, 4
      %s198 = scalar_lea.vmem %s0, %s197
      %p199 = pneg %p56
      %p200 = pneg %p53
      %p201 = scmp.lt.s32.totalorder %s19, 0
      %s202 = scalar_select %p201, %s19, 0
      %s203 = smul.addr %s202, 4
      %s204 = scalar_lea.vmem %s1, %s203
      %p205 = pneg %p82
      %p206 = pneg %p79
      %p207 = scmp.lt.s32.totalorder %s19, 0
      %s208 = scalar_select %p207, %s19, 0
      %s209 = scalar_lea.vmem %s2, %s208
      %p210 = pneg %p108
      %p211 = pneg %p105
      %p212 = pneg %p138
      %p213 = pneg %p135
      %s214 = smul.u32 32, %s21
      %p215 = scmp.lt.s32.totalorder %s20, 1
      %s216 = scalar_select %p215, %s20, 1
      %p217 = scmp.lt.s32.totalorder %s214, 31
      %s218 = scalar_select %p217, %s214, 31
      %p219 = scmp.lt.s32.totalorder %s19, 0
      %s220 = scalar_select %p219, %s19, 0
      %s221 = sadd.s32 %s220, %s218
      %s222 = smul.addr %s216, 32
      %s223 = sadd.s32 %s221, %s222
      %s224 = smul.addr %s223, 4
      %s225 = scalar_lea.vmem %s3, %s224
      %s226 = smul.u32 32, %s21
      %p227 = scmp.lt.s32.totalorder %s20, 1
      %s228 = scalar_select %p227, %s20, 1
      %p229 = scmp.lt.s32.totalorder %s226, 31
      %s230 = scalar_select %p229, %s226, 31
      %s231 = smul.addr %s228, 32
      %s232 = sadd.s32 %s230, %s231
      %s233 = smul.addr %s232, 4
      %s234 = scalar_lea.vmem %s0, %s233
      %s235 = smul.u32 32, %s21
      %p236 = scmp.lt.s32.totalorder %s19, 0
      %s237 = scalar_select %p236, %s19, 0
      %s238 = smul.addr %s237, 4
      %s239 = scalar_lea.vmem %s1, %s238
      %p240 = scmp.lt.s32.totalorder %s19, 0
      %s241 = scalar_select %p240, %s19, 0
      %s242 = scalar_lea.vmem %s2, %s241
      %s243 = smul.u32 32, %s21
      %p244 = scmp.lt.s32.totalorder %s20, 1
      %s245 = scalar_select %p244, %s20, 1
      %p246 = scmp.lt.s32.totalorder %s243, 31
      %s247 = scalar_select %p246, %s243, 31
      %p248 = scmp.lt.s32.totalorder %s19, 0
      %s249 = scalar_select %p248, %s19, 0
      %s250 = sadd.s32 %s249, %s247
      %s251 = smul.addr %s245, 32
      %s252 = sadd.s32 %s250, %s251
      %s253 = smul.addr %s252, 4
      %s254 = scalar_lea.vmem %s3, %s253
      %s255 = smul.u32 32, %s21
      %v257 = vld [vmem:[%s234] sm:$0xf]
      %v258 = vld [vmem:[%s234 + $0x4] sm:$0xf]
      %v259 = vld [vmem:[%s234 + $0x8] sm:$0xf]
      %v260 = vld [vmem:[%s234 + $0xc] sm:$0xf]
      %v261 = vld [vmem:[%s234 + $0x10] sm:$0xf]
      %v262 = vld [vmem:[%s234 + $0x14] sm:$0xf]
      %v263 = vld [vmem:[%s234 + $0x18] sm:$0xf]
      %v264 = vld [vmem:[%s234 + $0x1c] sm:$0xf]
      %v265 = vld [vmem:[%s234 + $0x20] sm:$0xf]
      %v266 = vld [vmem:[%s234 + $0x24] sm:$0xf]
      %v267 = vld [vmem:[%s234 + $0x28] sm:$0xf]
      %v268 = vld [vmem:[%s234 + $0x2c] sm:$0xf]
      %v269 = vld [vmem:[%s234 + $0x30] sm:$0xf]
      %v270 = vld [vmem:[%s234 + $0x34] sm:$0xf]
      %v271 = vld [vmem:[%s234 + $0x38] sm:$0xf]
      %v272 = vld [vmem:[%s234 + $0x3c] sm:$0xf]
      %v273 = vld [vmem:[%s234 + $0x40] sm:$0xf]
      %v274 = vld [vmem:[%s234 + $0x44] sm:$0xf]
      %v275 = vld [vmem:[%s234 + $0x48] sm:$0xf]
      %v276 = vld [vmem:[%s234 + $0x4c] sm:$0xf]
      %v277 = vld [vmem:[%s234 + $0x50] sm:$0xf]
      %v278 = vld [vmem:[%s234 + $0x54] sm:$0xf]
      %v279 = vld [vmem:[%s234 + $0x58] sm:$0xf]
      %v280 = vld [vmem:[%s234 + $0x5c] sm:$0xf]
      %v281 = vld [vmem:[%s234 + $0x60] sm:$0xf]
      %v282 = vld [vmem:[%s234 + $0x64] sm:$0xf]
      %v283 = vld [vmem:[%s234 + $0x68] sm:$0xf]
      %v284 = vld [vmem:[%s234 + $0x6c] sm:$0xf]
      %v285 = vld [vmem:[%s234 + $0x70] sm:$0xf]
      %v286 = vld [vmem:[%s234 + $0x74] sm:$0xf]
      %v287 = vld [vmem:[%s234 + $0x78] sm:$0xf]
      %v288 = vld [vmem:[%s234 + $0x7c] sm:$0xf]
      %v289 = vld [vmem:[%s239] sm:$0xf]
      %v290 = vld [vmem:[%s239 + $0x4] sm:$0xf]
      %v291 = vld [vmem:[%s239 + $0x8] sm:$0xf]
      %v292 = vld [vmem:[%s239 + $0xc] sm:$0xf]
      %v293 = vld [vmem:[%s242] sm:$0x1]
      %v295 = vlaneseq
      %v296 = vshrl.u32 %v295, 7
      %v297 = vsub.s32 0, %v296
      %v298 = vrot.slane %v293, %v297
      %v332 = vunpack.c.l.b16 %v257
      %v333 = vunpack.c.l.b16 %v258
      %v334 = vunpack.c.l.b16 %v259
      %v335 = vunpack.c.l.b16 %v260
      %v336 = vunpack.c.l.b16 %v261
      %v337 = vunpack.c.l.b16 %v262
      %v338 = vunpack.c.l.b16 %v263
      %v339 = vunpack.c.l.b16 %v264
      %v340 = vunpack.c.l.b16 %v265
      %v341 = vunpack.c.l.b16 %v266
      %v342 = vunpack.c.l.b16 %v267
      %v343 = vunpack.c.l.b16 %v268
      %v344 = vunpack.c.l.b16 %v269
      %v345 = vunpack.c.l.b16 %v270
      %v346 = vunpack.c.l.b16 %v271
      %v347 = vunpack.c.l.b16 %v272
      %v348 = vunpack.c.l.b16 %v273
      %v349 = vunpack.c.l.b16 %v274
      %v350 = vunpack.c.l.b16 %v275
      %v351 = vunpack.c.l.b16 %v276
      %v352 = vunpack.c.l.b16 %v277
      %v353 = vunpack.c.l.b16 %v278
      %v354 = vunpack.c.l.b16 %v279
      %v355 = vunpack.c.l.b16 %v280
      %v356 = vunpack.c.l.b16 %v281
      %v357 = vunpack.c.l.b16 %v282
      %v358 = vunpack.c.l.b16 %v283
      %v359 = vunpack.c.l.b16 %v284
      %v360 = vunpack.c.l.b16 %v285
      %v361 = vunpack.c.l.b16 %v286
      %v362 = vunpack.c.l.b16 %v287
      %v363 = vunpack.c.l.b16 %v288
      %v364 = vpack.c.b16 %v333, %v332
      %v365 = vpack.c.b16 %v335, %v334
      %v366 = vpack.c.b16 %v337, %v336
      %v367 = vpack.c.b16 %v339, %v338
      %v368 = vpack.c.b16 %v341, %v340
      %v369 = vpack.c.b16 %v343, %v342
      %v370 = vpack.c.b16 %v345, %v344
      %v371 = vpack.c.b16 %v347, %v346
      %v372 = vpack.c.b16 %v349, %v348
      %v373 = vpack.c.b16 %v351, %v350
      %v374 = vpack.c.b16 %v353, %v352
      %v375 = vpack.c.b16 %v355, %v354
      %v376 = vpack.c.b16 %v357, %v356
      %v377 = vpack.c.b16 %v359, %v358
      %v378 = vpack.c.b16 %v361, %v360
      %v379 = vpack.c.b16 %v363, %v362
      %v384 = vunpack.c.l.b16 %v289
      %v385 = vunpack.c.l.b16 %v290
      %v386 = vunpack.c.l.b16 %v291
      %v387 = vunpack.c.l.b16 %v292
      %v388 = vpack.c.b16 %v385, %v384
      %v389 = vpack.c.b16 %v387, %v386
      %vm392 = vcmask 261120
      %v394 = vsel %vm392, %v364, 0
      %v397 = vsel %vm392, %v365, 0
      %v400 = vsel %vm392, %v366, 0
      %v403 = vsel %vm392, %v367, 0
      %v406 = vsel %vm392, %v368, 0
      %v409 = vsel %vm392, %v369, 0
      %v412 = vsel %vm392, %v370, 0
      %v415 = vsel %vm392, %v371, 0
      %v418 = vsel %vm392, %v372, 0
      %v421 = vsel %vm392, %v373, 0
      %v424 = vsel %vm392, %v374, 0
      %v427 = vsel %vm392, %v375, 0
      %v430 = vsel %vm392, %v376, 0
      %v433 = vsel %vm392, %v377, 0
      %v436 = vsel %vm392, %v378, 0
      %v439 = vsel %vm392, %v379, 0
      %441 = vmatprep.subr.bf16.mxu0 0
      %442 = vmatpush1.bf16.msra.mxu0 0
      %443 = vmatprep.subr.bf16.mxu0 0
      %444 = vmatpush1.bf16.msra.mxu0 0
      %445 = vmatprep.subr.bf16.mxu0 0
      %446 = vmatpush1.bf16.msra.mxu0 0
      %447 = vmatprep.subr.bf16.mxu0 0
      %448 = vmatpush1.bf16.msra.mxu0 0
      %449 = vmatprep.subr.bf16.mxu0 0
      %450 = vmatpush1.bf16.msra.mxu0 0
      %451 = vmatprep.subr.bf16.mxu0 0
      %452 = vmatpush1.bf16.msra.mxu0 0
      %453 = vmatprep.subr.bf16.mxu0 0
      %454 = vmatpush1.bf16.msra.mxu0 %v389
      %455 = vmatprep.subr.bf16.mxu0 0
      %456 = vmatpush1.bf16.msra.mxu0 %v388
      %457 = vmatprep.subr.bf16.mxu0 0
      %458 = vmatpush2.bf16.msra.mxu0 0
      %459 = vmatprep.subr.bf16.mxu0 0
      %460 = vmatpush2.bf16.msra.mxu0 0
      %461 = vmatprep.subr.bf16.mxu0 0
      %462 = vmatpush2.bf16.msra.mxu0 0
      %463 = vmatprep.subr.bf16.mxu0 0
      %464 = vmatpush2.bf16.msra.mxu0 0
      %465 = vmatprep.subr.bf16.mxu0 0
      %466 = vmatpush2.bf16.msra.mxu0 0
      %467 = vmatprep.subr.bf16.mxu0 0
      %468 = vmatpush2.bf16.msra.mxu0 0
      %469 = vmatprep.subr.bf16.mxu0 0
      %470 = vmatpush2.bf16.msra.mxu0 0
      %471 = vmatprep.subr.bf16.mxu0 0
      %472 = vmatpush2.bf16.msra.mxu0 0
      %473 = vmatprep.mubr.bf16.mxu0 0
      %474 = vmatmul.mubr.bf16.gmra.mxu0 %v394
      %v475 = vpop.f32.mrf.mxu0
      %v476 = vadd.f32 %v298, %v475
      %v477 = vpop.f32.mrf.mxu0
      %v478 = vpop.f32.mrf.mxu0
      %v479 = vadd.f32 %v298, %v478
      %v480 = vpop.f32.mrf.mxu0
      %481 = vmatprep.mubr.bf16.mxu0 0
      %482 = vmatmul.mubr.bf16.gmra.mxu0 %v397
      %v483 = vpop.f32.mrf.mxu0
      %v484 = vadd.f32 %v298, %v483
      %v485 = vpop.f32.mrf.mxu0
      %v486 = vpop.f32.mrf.mxu0
      %v487 = vadd.f32 %v298, %v486
      %v488 = vpop.f32.mrf.mxu0
      %489 = vmatprep.mubr.bf16.mxu0 0
      %490 = vmatmul.mubr.bf16.gmra.mxu0 %v400
      %v491 = vpop.f32.mrf.mxu0
      %v492 = vadd.f32 %v298, %v491
      %v493 = vpop.f32.mrf.mxu0
      %v494 = vpop.f32.mrf.mxu0
      %v495 = vadd.f32 %v298, %v494
      %v496 = vpop.f32.mrf.mxu0
      %497 = vmatprep.mubr.bf16.mxu0 0
      %498 = vmatmul.mubr.bf16.gmra.mxu0 %v403
      %v499 = vpop.f32.mrf.mxu0
      %v500 = vadd.f32 %v298, %v499
      %v501 = vpop.f32.mrf.mxu0
      %v502 = vpop.f32.mrf.mxu0
      %v503 = vadd.f32 %v298, %v502
      %v504 = vpop.f32.mrf.mxu0
      %505 = vmatprep.mubr.bf16.mxu0 0
      %506 = vmatmul.mubr.bf16.gmra.mxu0 %v406
      %v507 = vpop.f32.mrf.mxu0
      %v508 = vadd.f32 %v298, %v507
      %v509 = vpop.f32.mrf.mxu0
      %v510 = vpop.f32.mrf.mxu0
      %v511 = vadd.f32 %v298, %v510
      %v512 = vpop.f32.mrf.mxu0
      %513 = vmatprep.mubr.bf16.mxu0 0
      %514 = vmatmul.mubr.bf16.gmra.mxu0 %v409
      %v515 = vpop.f32.mrf.mxu0
      %v516 = vadd.f32 %v298, %v515
      %v517 = vpop.f32.mrf.mxu0
      %v518 = vpop.f32.mrf.mxu0
      %v519 = vadd.f32 %v298, %v518
      %v520 = vpop.f32.mrf.mxu0
      %521 = vmatprep.mubr.bf16.mxu0 0
      %522 = vmatmul.mubr.bf16.gmra.mxu0 %v412
      %v523 = vpop.f32.mrf.mxu0
      %v524 = vadd.f32 %v298, %v523
      %v525 = vpop.f32.mrf.mxu0
      %v526 = vpop.f32.mrf.mxu0
      %v527 = vadd.f32 %v298, %v526
      %v528 = vpop.f32.mrf.mxu0
      %529 = vmatprep.mubr.bf16.mxu0 0
      %530 = vmatmul.mubr.bf16.gmra.mxu0 %v415
      %v531 = vpop.f32.mrf.mxu0
      %v532 = vadd.f32 %v298, %v531
      %v533 = vpop.f32.mrf.mxu0
      %v534 = vpop.f32.mrf.mxu0
      %v535 = vadd.f32 %v298, %v534
      %v536 = vpop.f32.mrf.mxu0
      %537 = vmatprep.mubr.bf16.mxu0 0
      %538 = vmatmul.mubr.bf16.gmra.mxu0 %v418
      %v539 = vpop.f32.mrf.mxu0
      %v540 = vadd.f32 %v298, %v539
      %v541 = vpop.f32.mrf.mxu0
      %v542 = vpop.f32.mrf.mxu0
      %v543 = vadd.f32 %v298, %v542
      %v544 = vpop.f32.mrf.mxu0
      %545 = vmatprep.mubr.bf16.mxu0 0
      %546 = vmatmul.mubr.bf16.gmra.mxu0 %v421
      %v547 = vpop.f32.mrf.mxu0
      %v548 = vadd.f32 %v298, %v547
      %v549 = vpop.f32.mrf.mxu0
      %v550 = vpop.f32.mrf.mxu0
      %v551 = vadd.f32 %v298, %v550
      %v552 = vpop.f32.mrf.mxu0
      %553 = vmatprep.mubr.bf16.mxu0 0
      %554 = vmatmul.mubr.bf16.gmra.mxu0 %v424
      %v555 = vpop.f32.mrf.mxu0
      %v556 = vadd.f32 %v298, %v555
      %v557 = vpop.f32.mrf.mxu0
      %v558 = vpop.f32.mrf.mxu0
      %v559 = vadd.f32 %v298, %v558
      %v560 = vpop.f32.mrf.mxu0
      %561 = vmatprep.mubr.bf16.mxu0 0
      %562 = vmatmul.mubr.bf16.gmra.mxu0 %v427
      %v563 = vpop.f32.mrf.mxu0
      %v564 = vadd.f32 %v298, %v563
      %v565 = vpop.f32.mrf.mxu0
      %v566 = vpop.f32.mrf.mxu0
      %v567 = vadd.f32 %v298, %v566
      %v568 = vpop.f32.mrf.mxu0
      %569 = vmatprep.mubr.bf16.mxu0 0
      %570 = vmatmul.mubr.bf16.gmra.mxu0 %v430
      %v571 = vpop.f32.mrf.mxu0
      %v572 = vadd.f32 %v298, %v571
      %v573 = vpop.f32.mrf.mxu0
      %v574 = vpop.f32.mrf.mxu0
      %v575 = vadd.f32 %v298, %v574
      %v576 = vpop.f32.mrf.mxu0
      %577 = vmatprep.mubr.bf16.mxu0 0
      %578 = vmatmul.mubr.bf16.gmra.mxu0 %v433
      %v579 = vpop.f32.mrf.mxu0
      %v580 = vadd.f32 %v298, %v579
      %v581 = vpop.f32.mrf.mxu0
      %v582 = vpop.f32.mrf.mxu0
      %v583 = vadd.f32 %v298, %v582
      %v584 = vpop.f32.mrf.mxu0
      %585 = vmatprep.mubr.bf16.mxu0 0
      %586 = vmatmul.mubr.bf16.gmra.mxu0 %v436
      %v587 = vpop.f32.mrf.mxu0
      %v588 = vadd.f32 %v298, %v587
      %v589 = vpop.f32.mrf.mxu0
      %v590 = vpop.f32.mrf.mxu0
      %v591 = vadd.f32 %v298, %v590
      %v592 = vpop.f32.mrf.mxu0
      %593 = vmatprep.mubr.bf16.mxu0 0
      %594 = vmatmul.mubr.bf16.gmra.mxu0 %v439
      %v595 = vpop.f32.mrf.mxu0
      %v596 = vadd.f32 %v298, %v595
      %v597 = vpop.f32.mrf.mxu0
      %v598 = vpop.f32.mrf.mxu0
      %v599 = vadd.f32 %v298, %v598
      %v600 = vpop.f32.mrf.mxu0
      %601 = vdwg.mxu0
      %v602 = vmax.f32 %v476, 0.0
      %v603 = vmax.f32 %v479, 0.0
      %v604 = vmax.f32 %v484, 0.0
      %v605 = vmax.f32 %v487, 0.0
      %v606 = vmax.f32 %v492, 0.0
      %v607 = vmax.f32 %v495, 0.0
      %v608 = vmax.f32 %v500, 0.0
      %v609 = vmax.f32 %v503, 0.0
      %v610 = vmax.f32 %v508, 0.0
      %v611 = vmax.f32 %v511, 0.0
      %v612 = vmax.f32 %v516, 0.0
      %v613 = vmax.f32 %v519, 0.0
      %v614 = vmax.f32 %v524, 0.0
      %v615 = vmax.f32 %v527, 0.0
      %v616 = vmax.f32 %v532, 0.0
      %v617 = vmax.f32 %v535, 0.0
      %v618 = vmax.f32 %v540, 0.0
      %v619 = vmax.f32 %v543, 0.0
      %v620 = vmax.f32 %v548, 0.0
      %v621 = vmax.f32 %v551, 0.0
      %v622 = vmax.f32 %v556, 0.0
      %v623 = vmax.f32 %v559, 0.0
      %v624 = vmax.f32 %v564, 0.0
      %v625 = vmax.f32 %v567, 0.0
      %v626 = vmax.f32 %v572, 0.0
      %v627 = vmax.f32 %v575, 0.0
      %v628 = vmax.f32 %v580, 0.0
      %v629 = vmax.f32 %v583, 0.0
      %v630 = vmax.f32 %v588, 0.0
      %v631 = vmax.f32 %v591, 0.0
      %v632 = vmax.f32 %v596, 0.0
      %v633 = vmax.f32 %v599, 0.0
      %v634 = vpack.c.bf16 %v603, %v602
      %v635 = vpack.c.bf16 %v605, %v604
      %v636 = vpack.c.bf16 %v607, %v606
      %v637 = vpack.c.bf16 %v609, %v608
      %v638 = vpack.c.bf16 %v611, %v610
      %v639 = vpack.c.bf16 %v613, %v612
      %v640 = vpack.c.bf16 %v615, %v614
      %v641 = vpack.c.bf16 %v617, %v616
      %v642 = vpack.c.bf16 %v619, %v618
      %v643 = vpack.c.bf16 %v621, %v620
      %v644 = vpack.c.bf16 %v623, %v622
      %v645 = vpack.c.bf16 %v625, %v624
      %v646 = vpack.c.bf16 %v627, %v626
      %v647 = vpack.c.bf16 %v629, %v628
      %v648 = vpack.c.bf16 %v631, %v630
      %v649 = vpack.c.bf16 %v633, %v632
      %v666 = vunpack.c.l.b16 %v634
      %v667 = vunpack.c.h.b16 %v634
      %v668 = vunpack.c.l.b16 %v635
      %v669 = vunpack.c.h.b16 %v635
      %v670 = vunpack.c.l.b16 %v636
      %v671 = vunpack.c.h.b16 %v636
      %v672 = vunpack.c.l.b16 %v637
      %v673 = vunpack.c.h.b16 %v637
      %v674 = vunpack.c.l.b16 %v638
      %v675 = vunpack.c.h.b16 %v638
      %v676 = vunpack.c.l.b16 %v639
      %v677 = vunpack.c.h.b16 %v639
      %v678 = vunpack.c.l.b16 %v640
      %v679 = vunpack.c.h.b16 %v640
      %v680 = vunpack.c.l.b16 %v641
      %v681 = vunpack.c.h.b16 %v641
      %v682 = vunpack.c.l.b16 %v642
      %v683 = vunpack.c.h.b16 %v642
      %v684 = vunpack.c.l.b16 %v643
      %v685 = vunpack.c.h.b16 %v643
      %v686 = vunpack.c.l.b16 %v644
      %v687 = vunpack.c.h.b16 %v644
      %v688 = vunpack.c.l.b16 %v645
      %v689 = vunpack.c.h.b16 %v645
      %v690 = vunpack.c.l.b16 %v646
      %v691 = vunpack.c.h.b16 %v646
      %v692 = vunpack.c.l.b16 %v647
      %v693 = vunpack.c.h.b16 %v647
      %v694 = vunpack.c.l.b16 %v648
      %v695 = vunpack.c.h.b16 %v648
      %v696 = vunpack.c.l.b16 %v649
      %v697 = vunpack.c.h.b16 %v649
      %v698 = vpack.c.b16 %v666, %v666
      %v699 = vpack.c.b16 %v667, %v667
      %v700 = vpack.c.b16 %v668, %v668
      %v701 = vpack.c.b16 %v669, %v669
      %v702 = vpack.c.b16 %v670, %v670
      %v703 = vpack.c.b16 %v671, %v671
      %v704 = vpack.c.b16 %v672, %v672
      %v705 = vpack.c.b16 %v673, %v673
      %v706 = vpack.c.b16 %v674, %v674
      %v707 = vpack.c.b16 %v675, %v675
      %v708 = vpack.c.b16 %v676, %v676
      %v709 = vpack.c.b16 %v677, %v677
      %v710 = vpack.c.b16 %v678, %v678
      %v711 = vpack.c.b16 %v679, %v679
      %v712 = vpack.c.b16 %v680, %v680
      %v713 = vpack.c.b16 %v681, %v681
      %v714 = vpack.c.b16 %v682, %v682
      %v715 = vpack.c.b16 %v683, %v683
      %v716 = vpack.c.b16 %v684, %v684
      %v717 = vpack.c.b16 %v685, %v685
      %v718 = vpack.c.b16 %v686, %v686
      %v719 = vpack.c.b16 %v687, %v687
      %v720 = vpack.c.b16 %v688, %v688
      %v721 = vpack.c.b16 %v689, %v689
      %v722 = vpack.c.b16 %v690, %v690
      %v723 = vpack.c.b16 %v691, %v691
      %v724 = vpack.c.b16 %v692, %v692
      %v725 = vpack.c.b16 %v693, %v693
      %v726 = vpack.c.b16 %v694, %v694
      %v727 = vpack.c.b16 %v695, %v695
      %v728 = vpack.c.b16 %v696, %v696
      %v729 = vpack.c.b16 %v697, %v697
      %762 = vst [vmem:[%s254] sm:$0xf] %v698
      %763 = vst [vmem:[%s254 + $0x4] sm:$0xf] %v699
      %764 = vst [vmem:[%s254 + $0x8] sm:$0xf] %v700
      %765 = vst [vmem:[%s254 + $0xc] sm:$0xf] %v701
      %766 = vst [vmem:[%s254 + $0x10] sm:$0xf] %v702
      %767 = vst [vmem:[%s254 + $0x14] sm:$0xf] %v703
      %768 = vst [vmem:[%s254 + $0x18] sm:$0xf] %v704
      %769 = vst [vmem:[%s254 + $0x1c] sm:$0xf] %v705
      %770 = vst [vmem:[%s254 + $0x20] sm:$0xf] %v706
      %771 = vst [vmem:[%s254 + $0x24] sm:$0xf] %v707
      %772 = vst [vmem:[%s254 + $0x28] sm:$0xf] %v708
      %773 = vst [vmem:[%s254 + $0x2c] sm:$0xf] %v709
      %774 = vst [vmem:[%s254 + $0x30] sm:$0xf] %v710
      %775 = vst [vmem:[%s254 + $0x34] sm:$0xf] %v711
      %776 = vst [vmem:[%s254 + $0x38] sm:$0xf] %v712
      %777 = vst [vmem:[%s254 + $0x3c] sm:$0xf] %v713
      %778 = vst [vmem:[%s254 + $0x40] sm:$0xf] %v714
      %779 = vst [vmem:[%s254 + $0x44] sm:$0xf] %v715
      %780 = vst [vmem:[%s254 + $0x48] sm:$0xf] %v716
      %781 = vst [vmem:[%s254 + $0x4c] sm:$0xf] %v717
      %782 = vst [vmem:[%s254 + $0x50] sm:$0xf] %v718
      %783 = vst [vmem:[%s254 + $0x54] sm:$0xf] %v719
      %784 = vst [vmem:[%s254 + $0x58] sm:$0xf] %v720
      %785 = vst [vmem:[%s254 + $0x5c] sm:$0xf] %v721
      %786 = vst [vmem:[%s254 + $0x60] sm:$0xf] %v722
      %787 = vst [vmem:[%s254 + $0x64] sm:$0xf] %v723
      %788 = vst [vmem:[%s254 + $0x68] sm:$0xf] %v724
      %789 = vst [vmem:[%s254 + $0x6c] sm:$0xf] %v725
      %790 = vst [vmem:[%s254 + $0x70] sm:$0xf] %v726
      %791 = vst [vmem:[%s254 + $0x74] sm:$0xf] %v727
      %792 = vst [vmem:[%s254 + $0x78] sm:$0xf] %v728
      %793 = vst [vmem:[%s254 + $0x7c] sm:$0xf] %v729
      %s794 = smul.u32 32, %s21
      %p795 = scmp.lt.s32.totalorder %s20, 1
      %s796 = scalar_select %p795, %s20, 1
      %p797 = scmp.lt.s32.totalorder %s794, 31
      %s798 = scalar_select %p797, %s794, 31
      %p799 = scmp.lt.s32.totalorder %s19, 0
      %s800 = scalar_select %p799, %s19, 0
      %s801 = sadd.s32 %s800, %s798
      %s802 = smul.addr %s796, 32
      %s803 = sadd.s32 %s801, %s802
      %s804 = smul.addr %s803, 4
      %s805 = scalar_lea.vmem %s3, %s804
      // Predicated region
      $region33: #{timm_backbone_forward.5} parent=31 // pred_check
        %p806 = pneg %p135
      $region34: #{timm_backbone_forward.5} parent=31 // pred_check_branch
        %808 = sbr.rel (%p806) target = $region36
      $region35: #{timm_backbone_forward.5} parent=31 // pred_region
        %s809 = smul.u32 32, %s21
      $region36: #{timm_backbone_forward.5} parent=31 // pred_fallthru
        _
    $region32: #{timm_backbone_forward.5} parent=5 // pred_fallthru
      _
    %p810 = scmp.le.s32.totalorder 2, %s9
    // Predicated region
    $region37: #{timm_backbone_forward.5} parent=5 // pred_check
      %p811 = pneg %p810
    $region38: #{timm_backbone_forward.5} parent=5 // pred_check_branch
      %813 = sbr.rel (%p811) target = $region40
    $region39: #{timm_backbone_forward.5} parent=5 // pred_region
      %s814 = ssub.s32 %s9, 2
      // Predicated region
      $region41: #{timm_backbone_forward.5} parent=39 // pred_check
        %p815 = pneg %p141
      $region42: #{timm_backbone_forward.5} parent=39 // pred_check_branch
        %817 = sbr.rel (%p815) target = $region44
      $region43: #{timm_backbone_forward.5} parent=39 // pred_region
        %s818 = smul.u32 32, %s24
        %p819 = scmp.lt.s32.totalorder %s23, 1
        %s820 = scalar_select %p819, %s23, 1
        %p821 = scmp.lt.s32.totalorder %s818, 31
        %s822 = scalar_select %p821, %s818, 31
        %p823 = scmp.lt.s32.totalorder %s22, 0
        %s824 = scalar_select %p823, %s22, 0
        %s825 = sadd.s32 %s824, %s822
        %s826 = smul.addr %s820, 32
        %s827 = sadd.s32 %s825, %s826
        %s828 = smul.addr %s827, 4
        %s829 = scalar_lea.vmem %s3, %s828
      $region44: #{timm_backbone_forward.5} parent=39 // pred_fallthru
        _
    $region40: #{timm_backbone_forward.5} parent=5 // pred_fallthru
      _
  $region6: #{timm_backbone_forward.5} parent=0 // loop_footer
    %s13 = sadd.s32 1, %s9
  $region7: #{timm_backbone_forward.5} parent=0 // loop_footer_branch
    %8 = sbr.rel target = $region3
  $region8: #{timm_backbone_forward.5} parent=0 // loop_exit
    _

// kernel: timm_backbone_forward.6
$region0: #{timm_backbone_forward.6}
  #allocation0 [shape = 'u32[]', space=smem, size = 0x4, offset = 0x4, fixed_abs, tag = 'smem constant byte address 0x4 - core index']
  #allocation1 [shape = 'u32[144,128]{1,0:T(1,128)}', space=vmem, size = 0x12000, scoped, tag = 'internal scratch']
  #allocation2 [shape = 'f32[80,128]{1,0:T(8,128)}', space=vmem, size = 0xa000, scoped, tag = 'scratch operand']
  %s0 = inlined_call_operand.vmem [shape: bf16[2,1,384,128], index: 0, kind: input, shape index: {}]
  %s1 = inlined_call_operand.vmem [shape: bf16[9,128,128], index: 1, kind: input, shape index: {}]
  %s2 = inlined_call_operand.vmem [shape: f32[1,128], index: 2, kind: input, shape index: {}]
  %s3 = inlined_call_operand.vmem [shape: bf16[2,80,128], index: 3, kind: output, shape index: {}]
  %s4 = sld [smem:[#allocation0]]
  $region45: #{timm_backbone_forward.6} parent=0
    _
  %s6 = ssub.s32 1, %s4
  %s7 = scalar_select 0, %s6, %s4
  loop: start=0, step=1, limit=4
  $region2: #{timm_backbone_forward.6} parent=0 // loop_pre_header
    _
  $region3: #{timm_backbone_forward.6} parent=0 // loop_header
    %s9 = sphi 0, %s13
    %p10 = scmp.ge.s32.totalorder %s9, 4
    %s16 = sphi 0, %s35
    %s17 = sphi 0, %s31
    %s18 = sphi 0, %s27
    %s19 = sphi 0, %s16
    %s20 = sphi 0, %s17
    %s21 = sphi 0, %s18
    %s22 = sphi 0, %s19
    %s23 = sphi 0, %s20
    %s24 = sphi 0, %s21
    %s40 = sphi 0, %s42
    %s43 = sphi 0, %s40
    %s44 = sphi 0, %s43
    %s60 = sphi 0, %s44
    %s66 = sphi 0, %s68
    %s69 = sphi 0, %s66
    %s70 = sphi 0, %s69
    %s86 = sphi 0, %s70
    %s92 = sphi 0, %s94
    %s95 = sphi 0, %s92
    %s96 = sphi 0, %s95
    %s112 = sphi 0, %s96
    %s122 = sphi 0, %s124
    %s125 = sphi 0, %s122
    %s126 = sphi 0, %s125
    %s142 = sphi 0, %s126
  $region4: #{timm_backbone_forward.6} parent=0 // loop_header_branch
    %12 = sbr.rel (%p10) target = $region8
  $region5: #{timm_backbone_forward.6} parent=0 // loop_body
    %s14 = ssub.s32 %s9, 1
    %s15 = ssub.s32 %s9, 2
    %s25 = sadd.s32 1, %s18
    %p26 = scmp.ge.s32.totalorder %s25, 1
    %s27 = scalar_select %p26, 0, %s25
    %s28 = sadd.s32 1, %s17
    %s29 = scalar_select %p26, %s28, %s17
    %p30 = scmp.ge.s32.totalorder %s29, 2
    %s31 = scalar_select %p30, 0, %s29
    %s32 = sadd.s32 1, %s16
    %s33 = scalar_select %p30, %s32, %s16
    %p34 = scmp.ge.s32.totalorder %s33, 1
    %s35 = scalar_select %p34, 0, %s33
    %s36 = ssub.s32 %s17, %s31
    %s37 = ssub.s32 %s18, %s27
    %s38 = sor.u32 %s36, %s37
    %p39 = scmp.eq.s32.totalorder %s38, 0
    %s41 = sadd.s32 %s40, 1
    %s42 = scalar_select %p39, %s40, %s41
    %p45 = pneg %p39
    %p46 = scmp.eq.s32.totalorder %s9, 1
    %p47 = por %p45, %p46
    %p48 = scmp.ne.s32.totalorder %s40, %s43
    %p49 = scmp.eq.s32.totalorder %s9, 0
    %p50 = por %p48, %p49
    %p51 = scmp.ne.s32.totalorder %s40, %s43
    %p52 = scmp.eq.s32.totalorder %s14, 1
    %p53 = por %p51, %p52
    %p54 = scmp.ne.s32.totalorder %s43, %s44
    %p55 = scmp.eq.s32.totalorder %s14, 0
    %p56 = por %p54, %p55
    %p57 = scmp.ne.s32.totalorder %s43, %s44
    %p58 = scmp.eq.s32.totalorder %s15, 1
    %p59 = por %p57, %p58
    %p61 = scmp.ne.s32.totalorder %s44, %s60
    %p62 = scmp.eq.s32.totalorder %s15, 0
    %p63 = por %p61, %p62
    %s64 = ssub.s32 %s16, %s35
    %p65 = scmp.eq.s32.totalorder %s64, 0
    %s67 = sadd.s32 %s66, 1
    %s68 = scalar_select %p65, %s66, %s67
    %p71 = pneg %p65
    %p72 = scmp.eq.s32.totalorder %s9, 1
    %p73 = por %p71, %p72
    %p74 = scmp.ne.s32.totalorder %s66, %s69
    %p75 = scmp.eq.s32.totalorder %s9, 0
    %p76 = por %p74, %p75
    %p77 = scmp.ne.s32.totalorder %s66, %s69
    %p78 = scmp.eq.s32.totalorder %s14, 1
    %p79 = por %p77, %p78
    %p80 = scmp.ne.s32.totalorder %s69, %s70
    %p81 = scmp.eq.s32.totalorder %s14, 0
    %p82 = por %p80, %p81
    %p83 = scmp.ne.s32.totalorder %s69, %s70
    %p84 = scmp.eq.s32.totalorder %s15, 1
    %p85 = por %p83, %p84
    %p87 = scmp.ne.s32.totalorder %s70, %s86
    %p88 = scmp.eq.s32.totalorder %s15, 0
    %p89 = por %p87, %p88
    %s90 = ssub.s32 %s16, %s35
    %p91 = scmp.eq.s32.totalorder %s90, 0
    %s93 = sadd.s32 %s92, 1
    %s94 = scalar_select %p91, %s92, %s93
    %p97 = pneg %p91
    %p98 = scmp.eq.s32.totalorder %s9, 1
    %p99 = por %p97, %p98
    %p100 = scmp.ne.s32.totalorder %s92, %s95
    %p101 = scmp.eq.s32.totalorder %s9, 0
    %p102 = por %p100, %p101
    %p103 = scmp.ne.s32.totalorder %s92, %s95
    %p104 = scmp.eq.s32.totalorder %s14, 1
    %p105 = por %p103, %p104
    %p106 = scmp.ne.s32.totalorder %s95, %s96
    %p107 = scmp.eq.s32.totalorder %s14, 0
    %p108 = por %p106, %p107
    %p109 = scmp.ne.s32.totalorder %s95, %s96
    %p110 = scmp.eq.s32.totalorder %s15, 1
    %p111 = por %p109, %p110
    %p113 = scmp.ne.s32.totalorder %s96, %s112
    %p114 = scmp.eq.s32.totalorder %s15, 0
    %p115 = por %p113, %p114
    %s116 = ssub.s32 %s17, %s31
    %s117 = ssub.s32 %s18, %s27
    %s118 = sor.u32 %s116, %s117
    %s119 = ssub.s32 %s16, %s35
    %s120 = sor.u32 %s118, %s119
    %p121 = scmp.eq.s32.totalorder %s120, 0
    %s123 = sadd.s32 %s122, 1
    %s124 = scalar_select %p121, %s122, %s123
    %p127 = pneg %p121
    %p128 = scmp.eq.s32.totalorder %s9, 1
    %p129 = por %p127, %p128
    %p130 = scmp.ne.s32.totalorder %s122, %s125
    %p131 = scmp.eq.s32.totalorder %s9, 0
    %p132 = por %p130, %p131
    %p133 = scmp.ne.s32.totalorder %s122, %s125
    %p134 = scmp.eq.s32.totalorder %s14, 1
    %p135 = por %p133, %p134
    %p136 = scmp.ne.s32.totalorder %s125, %s126
    %p137 = scmp.eq.s32.totalorder %s14, 0
    %p138 = por %p136, %p137
    %p139 = scmp.ne.s32.totalorder %s125, %s126
    %p140 = scmp.eq.s32.totalorder %s15, 1
    %p141 = por %p139, %p140
    %p143 = scmp.ne.s32.totalorder %s126, %s142
    %p144 = scmp.eq.s32.totalorder %s15, 0
    %p145 = por %p143, %p144
    %p146 = scmp.le.s32.totalorder 1, %s9
    %p147 = scmp.lt.s32.totalorder %s9, 3
    %p148 = pnand %p146, %p147
    %p149 = pneg %p148
    // Predicated region
    $region9: #{timm_backbone_forward.6} parent=5 // pred_check
      _
    $region10: #{timm_backbone_forward.6} parent=5 // pred_check_branch
      %151 = sbr.rel (%p148) target = $region12
    $region11: #{timm_backbone_forward.6} parent=5 // pred_region
      %s152 = ssub.s32 %s9, 1
      // Predicated region
      $region13: #{timm_backbone_forward.6} parent=11 // pred_check
        %p153 = pneg %p82
      $region14: #{timm_backbone_forward.6} parent=11 // pred_check_branch
        %155 = sbr.rel (%p153) target = $region16
      $region15: #{timm_backbone_forward.6} parent=11 // pred_region
        %p156 = scmp.lt.s32.totalorder %s19, 0
        %s157 = scalar_select %p156, %s19, 0
        %s158 = smul.addr %s157, 4
        %s159 = scalar_lea.vmem %s1, %s158
      $region16: #{timm_backbone_forward.6} parent=11 // pred_fallthru
        _
      // Predicated region
      $region17: #{timm_backbone_forward.6} parent=11 // pred_check
        %p160 = pneg %p108
      $region18: #{timm_backbone_forward.6} parent=11 // pred_check_branch
        %162 = sbr.rel (%p160) target = $region20
      $region19: #{timm_backbone_forward.6} parent=11 // pred_region
        %p163 = scmp.lt.s32.totalorder %s19, 0
        %s164 = scalar_select %p163, %s19, 0
        %s165 = scalar_lea.vmem %s2, %s164
      $region20: #{timm_backbone_forward.6} parent=11 // pred_fallthru
        _
    $region12: #{timm_backbone_forward.6} parent=5 // pred_fallthru
      _
    %p166 = scmp.lt.s32.totalorder %s9, 2
    // Predicated region
    $region21: #{timm_backbone_forward.6} parent=5 // pred_check
      %p167 = pneg %p166
    $region22: #{timm_backbone_forward.6} parent=5 // pred_check_branch
      %169 = sbr.rel (%p167) target = $region24
    $region23: #{timm_backbone_forward.6} parent=5 // pred_region
      // Predicated region
      $region25: #{timm_backbone_forward.6} parent=23 // pred_check
        %p170 = pneg %p50
      $region26: #{timm_backbone_forward.6} parent=23 // pred_check_branch
        %172 = sbr.rel (%p170) target = $region28
      $region27: #{timm_backbone_forward.6} parent=23 // pred_region
        %p173 = scmp.lt.s32.totalorder %s17, 1
        %s174 = scalar_select %p173, %s17, 1
        %p175 = scmp.lt.s32.totalorder %s18, 0
        %s176 = scalar_select %p175, %s18, 0
        %s177 = smul.addr %s176, 48
        %s178 = smul.addr %s174, 48
        %s179 = sadd.s32 %s177, %s178
        %s180 = smul.addr %s179, 4
        %s181 = scalar_lea.vmem %s0, %s180
      $region28: #{timm_backbone_forward.6} parent=23 // pred_fallthru
        _
    $region24: #{timm_backbone_forward.6} parent=5 // pred_fallthru
      _
    %p182 = scmp.le.s32.totalorder 1, %s9
    %p183 = scmp.lt.s32.totalorder %s9, 3
    %p184 = pnand %p182, %p183
    %p185 = pneg %p184
    // Predicated region
    $region29: #{timm_backbone_forward.6} parent=5 // pred_check
      _
    $region30: #{timm_backbone_forward.6} parent=5 // pred_check_branch
      %187 = sbr.rel (%p184) target = $region32
    $region31: #{timm_backbone_forward.6} parent=5 // pred_region
      %s188 = ssub.s32 %s9, 1
      %p189 = scmp.lt.s32.totalorder %s20, 1
      %s190 = scalar_select %p189, %s20, 1
      %p191 = scmp.lt.s32.totalorder %s21, 0
      %s192 = scalar_select %p191, %s21, 0
      %s193 = smul.addr %s192, 48
      %s194 = smul.addr %s190, 48
      %s195 = sadd.s32 %s193, %s194
      %s196 = smul.addr %s195, 4
      %s197 = scalar_lea.vmem %s0, %s196
      %p198 = pneg %p56
      %p199 = pneg %p53
      %p200 = scmp.lt.s32.totalorder %s19, 0
      %s201 = scalar_select %p200, %s19, 0
      %s202 = smul.addr %s201, 4
      %s203 = scalar_lea.vmem %s1, %s202
      %p204 = pneg %p82
      %p205 = pneg %p79
      %p206 = scmp.lt.s32.totalorder %s19, 0
      %s207 = scalar_select %p206, %s19, 0
      %s208 = scalar_lea.vmem %s2, %s207
      %p209 = pneg %p108
      %p210 = pneg %p105
      %p211 = pneg %p138
      %p212 = pneg %p135
      %s213 = smul.u32 10, %s21
      %p214 = scmp.lt.s32.totalorder %s20, 1
      %s215 = scalar_select %p214, %s20, 1
      %p216 = scmp.lt.s32.totalorder %s213, 9
      %s217 = scalar_select %p216, %s213, 9
      %p218 = scmp.lt.s32.totalorder %s19, 0
      %s219 = scalar_select %p218, %s19, 0
      %s220 = sadd.s32 %s219, %s217
      %s221 = smul.addr %s215, 10
      %s222 = sadd.s32 %s220, %s221
      %s223 = smul.addr %s222, 4
      %s224 = scalar_lea.vmem %s3, %s223
      %p225 = scmp.lt.s32.totalorder %s20, 1
      %s226 = scalar_select %p225, %s20, 1
      %p227 = scmp.lt.s32.totalorder %s21, 0
      %s228 = scalar_select %p227, %s21, 0
      %s229 = smul.addr %s228, 48
      %s230 = smul.addr %s226, 48
      %s231 = sadd.s32 %s229, %s230
      %s232 = smul.addr %s231, 4
      %s233 = scalar_lea.vmem %s0, %s232
      %p234 = scmp.lt.s32.totalorder %s19, 0
      %s235 = scalar_select %p234, %s19, 0
      %s236 = smul.addr %s235, 4
      %s237 = scalar_lea.vmem %s1, %s236
      %p238 = scmp.lt.s32.totalorder %s19, 0
      %s239 = scalar_select %p238, %s19, 0
      %s240 = scalar_lea.vmem %s2, %s239
      %s241 = smul.u32 10, %s21
      %p242 = scmp.lt.s32.totalorder %s20, 1
      %s243 = scalar_select %p242, %s20, 1
      %p244 = scmp.lt.s32.totalorder %s241, 9
      %s245 = scalar_select %p244, %s241, 9
      %p246 = scmp.lt.s32.totalorder %s19, 0
      %s247 = scalar_select %p246, %s19, 0
      %s248 = sadd.s32 %s247, %s245
      %s249 = smul.addr %s243, 10
      %s250 = sadd.s32 %s248, %s249
      %s251 = smul.addr %s250, 4
      %s252 = scalar_lea.vmem %s3, %s251
      %s253 = smul.u32 10, %s21
      %255 = vst [vmem:[#allocation2] sm:$0xff] 0.0
      %256 = vst [vmem:[#allocation2 + $0x8] sm:$0xff] 0.0
      %257 = vst [vmem:[#allocation2 + $0x10] sm:$0xff] 0.0
      %258 = vst [vmem:[#allocation2 + $0x18] sm:$0xff] 0.0
      %259 = vst [vmem:[#allocation2 + $0x20] sm:$0xff] 0.0
      %260 = vst [vmem:[#allocation2 + $0x28] sm:$0xff] 0.0
      %261 = vst [vmem:[#allocation2 + $0x30] sm:$0xff] 0.0
      %262 = vst [vmem:[#allocation2 + $0x38] sm:$0xff] 0.0
      %263 = vst [vmem:[#allocation2 + $0x40] sm:$0xff] 0.0
      %264 = vst [vmem:[#allocation2 + $0x48] sm:$0xff] 0.0
      %v265 = vld [vmem:[#allocation2] sm:$0xff]
      %v266 = vld [vmem:[#allocation2 + $0x8] sm:$0xff]
      %v267 = vld [vmem:[#allocation2 + $0x10] sm:$0xff]
      %v268 = vld [vmem:[#allocation2 + $0x18] sm:$0xff]
      %v269 = vld [vmem:[#allocation2 + $0x20] sm:$0xff]
      %v270 = vld [vmem:[#allocation2 + $0x28] sm:$0xff]
      %v271 = vld [vmem:[#allocation2 + $0x30] sm:$0xff]
      %v272 = vld [vmem:[#allocation2 + $0x38] sm:$0xff]
      %v273 = vld [vmem:[#allocation2 + $0x40] sm:$0xff]
      %v274 = vld [vmem:[#allocation2 + $0x48] sm:$0xff]
      %v275 = vld [vmem:[%s233] sm:$0xf]
      %v276 = vld [vmem:[%s233 + $0x4] sm:$0xf]
      %v277 = vld [vmem:[%s233 + $0x8] sm:$0xf]
      %v278 = vld [vmem:[%s233 + $0xc] sm:$0xf]
      %v279 = vld [vmem:[%s233 + $0x10] sm:$0xf]
      %v280 = vld [vmem:[%s233 + $0x14] sm:$0xf]
      %v281 = vld [vmem:[%s233 + $0x18] sm:$0xf]
      %v282 = vld [vmem:[%s233 + $0x1c] sm:$0xf]
      %v283 = vld [vmem:[%s233 + $0x20] sm:$0xf]
      %v284 = vld [vmem:[%s233 + $0x24] sm:$0xf]
      %v285 = vld [vmem:[%s237] sm:$0xf]
      %v286 = vld [vmem:[%s237 + $0x4] sm:$0xf]
      %v287 = vld [vmem:[%s237 + $0x8] sm:$0xf]
      %v288 = vld [vmem:[%s237 + $0xc] sm:$0xf]
      %v289 = vld [vmem:[%s237 + $0x10] sm:$0xf]
      %v290 = vld [vmem:[%s237 + $0x14] sm:$0xf]
      %v291 = vld [vmem:[%s237 + $0x18] sm:$0xf]
      %v292 = vld [vmem:[%s237 + $0x1c] sm:$0xf]
      %v293 = vld [vmem:[%s237 + $0x20] sm:$0xf]
      %v294 = vld [vmem:[%s237 + $0x24] sm:$0xf]
      %v295 = vld [vmem:[%s237 + $0x28] sm:$0xf]
      %v296 = vld [vmem:[%s237 + $0x2c] sm:$0xf]
      %v297 = vld [vmem:[%s237 + $0x30] sm:$0xf]
      %v298 = vld [vmem:[%s237 + $0x34] sm:$0xf]
      %v299 = vld [vmem:[%s237 + $0x38] sm:$0xf]
      %v300 = vld [vmem:[%s237 + $0x3c] sm:$0xf]
      %v311 = vunpack.c.l.b16 %v275
      %v312 = vunpack.c.l.b16 %v276
      %v313 = vunpack.c.l.b16 %v277
      %v314 = vunpack.c.l.b16 %v278
      %v315 = vunpack.c.l.b16 %v279
      %v316 = vunpack.c.l.b16 %v280
      %v317 = vunpack.c.l.b16 %v281
      %v318 = vunpack.c.l.b16 %v282
      %v319 = vunpack.c.l.b16 %v283
      %v320 = vunpack.c.l.b16 %v284
      %v321 = vpack.c.b16 %v312, %v311
      %v322 = vpack.c.b16 %v314, %v313
      %v323 = vpack.c.b16 %v316, %v315
      %v324 = vpack.c.b16 %v318, %v317
      %v325 = vpack.c.b16 %v320, %v319
      %v347 = vunpack.c.l.b16 %v285
      %v348 = vunpack.c.l.b16 %v286
      %v349 = vunpack.c.l.b16 %v287
      %v350 = vunpack.c.l.b16 %v288
      %v351 = vunpack.c.l.b16 %v289
      %v352 = vunpack.c.l.b16 %v290
      %v353 = vunpack.c.l.b16 %v291
      %v354 = vunpack.c.l.b16 %v292
      %v355 = vunpack.c.l.b16 %v293
      %v356 = vunpack.c.l.b16 %v294
      %v357 = vunpack.c.l.b16 %v295
      %v358 = vunpack.c.l.b16 %v296
      %v359 = vunpack.c.l.b16 %v297
      %v360 = vunpack.c.l.b16 %v298
      %v361 = vunpack.c.l.b16 %v299
      %v362 = vunpack.c.l.b16 %v300
      %v363 = vpack.c.b16 %v348, %v347
      %v364 = vpack.c.b16 %v350, %v349
      %v365 = vpack.c.b16 %v352, %v351
      %v366 = vpack.c.b16 %v354, %v353
      %v367 = vpack.c.b16 %v356, %v355
      %v368 = vpack.c.b16 %v358, %v357
      %v369 = vpack.c.b16 %v360, %v359
      %v370 = vpack.c.b16 %v362, %v361
      %379 = vmatprep.subr.bf16.mxu0 0
      %380 = vmatpush1.bf16.msra.mxu0 %v370
      %381 = vmatprep.subr.bf16.mxu0 0
      %382 = vmatpush1.bf16.msra.mxu0 %v369
      %383 = vmatprep.subr.bf16.mxu0 0
      %384 = vmatpush1.bf16.msra.mxu0 %v368
      %385 = vmatprep.subr.bf16.mxu0 0
      %386 = vmatpush1.bf16.msra.mxu0 %v367
      %387 = vmatprep.subr.bf16.mxu0 0
      %388 = vmatpush1.bf16.msra.mxu0 %v366
      %389 = vmatprep.subr.bf16.mxu0 0
      %390 = vmatpush1.bf16.msra.mxu0 %v365
      %391 = vmatprep.subr.bf16.mxu0 0
      %392 = vmatpush1.bf16.msra.mxu0 %v364
      %393 = vmatprep.subr.bf16.mxu0 0
      %394 = vmatpush1.bf16.msra.mxu0 %v363
      %395 = vmatprep.subr.bf16.mxu0 0
      %396 = vmatpush2.bf16.msra.mxu0 0
      %397 = vmatprep.subr.bf16.mxu0 0
      %398 = vmatpush2.bf16.msra.mxu0 0
      %399 = vmatprep.subr.bf16.mxu0 0
      %400 = vmatpush2.bf16.msra.mxu0 0
      %401 = vmatprep.subr.bf16.mxu0 0
      %402 = vmatpush2.bf16.msra.mxu0 0
      %403 = vmatprep.subr.bf16.mxu0 0
      %404 = vmatpush2.bf16.msra.mxu0 0
      %405 = vmatprep.subr.bf16.mxu0 0
      %406 = vmatpush2.bf16.msra.mxu0 0
      %407 = vmatprep.subr.bf16.mxu0 0
      %408 = vmatpush2.bf16.msra.mxu0 0
      %409 = vmatprep.subr.bf16.mxu0 0
      %410 = vmatpush2.bf16.msra.mxu0 0
      %411 = vmatprep.mubr.bf16.mxu0 0
      %412 = vmatmul.mubr.bf16.gmra.mxu0 %v321
      %v413 = vpop.f32.mrf.mxu0
      %v414 = vadd.f32 0.0, %v413
      %v415 = vpop.f32.mrf.mxu0
      %v416 = vpop.f32.mrf.mxu0
      %v417 = vadd.f32 0.0, %v416
      %v418 = vpop.f32.mrf.mxu0
      %419 = vmatprep.mubr.bf16.mxu0 0
      %420 = vmatmul.mubr.bf16.gmra.mxu0 %v322
      %v421 = vpop.f32.mrf.mxu0
      %v422 = vadd.f32 0.0, %v421
      %v423 = vpop.f32.mrf.mxu0
      %v424 = vpop.f32.mrf.mxu0
      %v425 = vadd.f32 0.0, %v424
      %v426 = vpop.f32.mrf.mxu0
      %427 = vmatprep.mubr.bf16.mxu0 0
      %428 = vmatmul.mubr.bf16.gmra.mxu0 %v323
      %v429 = vpop.f32.mrf.mxu0
      %v430 = vadd.f32 0.0, %v429
      %v431 = vpop.f32.mrf.mxu0
      %v432 = vpop.f32.mrf.mxu0
      %v433 = vadd.f32 0.0, %v432
      %v434 = vpop.f32.mrf.mxu0
      %435 = vmatprep.mubr.bf16.mxu0 0
      %436 = vmatmul.mubr.bf16.gmra.mxu0 %v324
      %v437 = vpop.f32.mrf.mxu0
      %v438 = vadd.f32 0.0, %v437
      %v439 = vpop.f32.mrf.mxu0
      %v440 = vpop.f32.mrf.mxu0
      %v441 = vadd.f32 0.0, %v440
      %v442 = vpop.f32.mrf.mxu0
      %443 = vmatprep.mubr.bf16.mxu0 0
      %444 = vmatmul.mubr.bf16.gmra.mxu0 %v325
      %v445 = vpop.f32.mrf.mxu0
      %v446 = vadd.f32 0.0, %v445
      %v447 = vpop.f32.mrf.mxu0
      %v448 = vpop.f32.mrf.mxu0
      %v449 = vadd.f32 0.0, %v448
      %v450 = vpop.f32.mrf.mxu0
      %451 = vdwg.mxu0
      %v452 = vadd.f32 %v265, %v414
      %v453 = vadd.f32 %v266, %v417
      %v454 = vadd.f32 %v267, %v422
      %v455 = vadd.f32 %v268, %v425
      %v456 = vadd.f32 %v269, %v430
      %v457 = vadd.f32 %v270, %v433
      %v458 = vadd.f32 %v271, %v438
      %v459 = vadd.f32 %v272, %v441
      %v460 = vadd.f32 %v273, %v446
      %v461 = vadd.f32 %v274, %v449
      %462 = vst [vmem:[#allocation2] sm:$0xff] %v452
      %463 = vst [vmem:[#allocation2 + $0x8] sm:$0xff] %v453
      %464 = vst [vmem:[#allocation2 + $0x10] sm:$0xff] %v454
      %465 = vst [vmem:[#allocation2 + $0x18] sm:$0xff] %v455
      %466 = vst [vmem:[#allocation2 + $0x20] sm:$0xff] %v456
      %467 = vst [vmem:[#allocation2 + $0x28] sm:$0xff] %v457
      %468 = vst [vmem:[#allocation2 + $0x30] sm:$0xff] %v458
      %469 = vst [vmem:[#allocation2 + $0x38] sm:$0xff] %v459
      %470 = vst [vmem:[#allocation2 + $0x40] sm:$0xff] %v460
      %471 = vst [vmem:[#allocation2 + $0x48] sm:$0xff] %v461
      %v472 = vld [vmem:[#allocation2] sm:$0xff]
      %v473 = vld [vmem:[#allocation2 + $0x8] sm:$0xff]
      %v474 = vld [vmem:[#allocation2 + $0x10] sm:$0xff]
      %v475 = vld [vmem:[#allocation2 + $0x18] sm:$0xff]
      %v476 = vld [vmem:[#allocation2 + $0x20] sm:$0xff]
      %v477 = vld [vmem:[#allocation2 + $0x28] sm:$0xff]
      %v478 = vld [vmem:[#allocation2 + $0x30] sm:$0xff]
      %v479 = vld [vmem:[#allocation2 + $0x38] sm:$0xff]
      %v480 = vld [vmem:[#allocation2 + $0x40] sm:$0xff]
      %v481 = vld [vmem:[#allocation2 + $0x48] sm:$0xff]
      %v482 = vld [vmem:[%s233 + $0x30] sm:$0xf]
      %v483 = vld [vmem:[%s233 + $0x34] sm:$0xf]
      %v484 = vld [vmem:[%s233 + $0x38] sm:$0xf]
      %v485 = vld [vmem:[%s233 + $0x3c] sm:$0xf]
      %v486 = vld [vmem:[%s233 + $0x40] sm:$0xf]
      %v487 = vld [vmem:[%s233 + $0x44] sm:$0xf]
      %v488 = vld [vmem:[%s233 + $0x48] sm:$0xf]
      %v489 = vld [vmem:[%s233 + $0x4c] sm:$0xf]
      %v490 = vld [vmem:[%s233 + $0x50] sm:$0xf]
      %v491 = vld [vmem:[%s233 + $0x54] sm:$0xf]
      %s492 = scalar_lea.vmem %s237, 64
      %v493 = vld [vmem:[%s492] sm:$0xf]
      %v494 = vld [vmem:[%s492 + $0x4] sm:$0xf]
      %v495 = vld [vmem:[%s492 + $0x8] sm:$0xf]
      %v496 = vld [vmem:[%s492 + $0xc] sm:$0xf]
      %v497 = vld [vmem:[%s492 + $0x10] sm:$0xf]
      %v498 = vld [vmem:[%s492 + $0x14] sm:$0xf]
      %v499 = vld [vmem:[%s492 + $0x18] sm:$0xf]
      %v500 = vld [vmem:[%s492 + $0x1c] sm:$0xf]
      %v501 = vld [vmem:[%s492 + $0x20] sm:$0xf]
      %v502 = vld [vmem:[%s492 + $0x24] sm:$0xf]
      %v503 = vld [vmem:[%s492 + $0x28] sm:$0xf]
      %v504 = vld [vmem:[%s492 + $0x2c] sm:$0xf]
      %v505 = vld [vmem:[%s492 + $0x30] sm:$0xf]
      %v506 = vld [vmem:[%s492 + $0x34] sm:$0xf]
      %v507 = vld [vmem:[%s492 + $0x38] sm:$0xf]
      %v508 = vld [vmem:[%s492 + $0x3c] sm:$0xf]
      %v519 = vunpack.c.l.b16 %v482
      %v520 = vunpack.c.l.b16 %v483
      %v521 = vunpack.c.l.b16 %v484
      %v522 = vunpack.c.l.b16 %v485
      %v523 = vunpack.c.l.b16 %v486
      %v524 = vunpack.c.l.b16 %v487
      %v525 = vunpack.c.l.b16 %v488
      %v526 = vunpack.c.l.b16 %v489
      %v527 = vunpack.c.l.b16 %v490
      %v528 = vunpack.c.l.b16 %v491
      %v529 = vpack.c.b16 %v520, %v519
      %v530 = vpack.c.b16 %v522, %v521
      %v531 = vpack.c.b16 %v524, %v523
      %v532 = vpack.c.b16 %v526, %v525
      %v533 = vpack.c.b16 %v528, %v527
      %v555 = vunpack.c.l.b16 %v493
      %v556 = vunpack.c.l.b16 %v494
      %v557 = vunpack.c.l.b16 %v495
      %v558 = vunpack.c.l.b16 %v496
      %v559 = vunpack.c.l.b16 %v497
      %v560 = vunpack.c.l.b16 %v498
      %v561 = vunpack.c.l.b16 %v499
      %v562 = vunpack.c.l.b16 %v500
      %v563 = vunpack.c.l.b16 %v501
      %v564 = vunpack.c.l.b16 %v502
      %v565 = vunpack.c.l.b16 %v503
      %v566 = vunpack.c.l.b16 %v504
      %v567 = vunpack.c.l.b16 %v505
      %v568 = vunpack.c.l.b16 %v506
      %v569 = vunpack.c.l.b16 %v507
      %v570 = vunpack.c.l.b16 %v508
      %v571 = vpack.c.b16 %v556, %v555
      %v572 = vpack.c.b16 %v558, %v557
      %v573 = vpack.c.b16 %v560, %v559
      %v574 = vpack.c.b16 %v562, %v561
      %v575 = vpack.c.b16 %v564, %v563
      %v576 = vpack.c.b16 %v566, %v565
      %v577 = vpack.c.b16 %v568, %v567
      %v578 = vpack.c.b16 %v570, %v569
      %587 = vmatprep.subr.bf16.mxu0 0
      %588 = vmatpush1.bf16.msra.mxu0 %v578
      %589 = vmatprep.subr.bf16.mxu0 0
      %590 = vmatpush1.bf16.msra.mxu0 %v577
      %591 = vmatprep.subr.bf16.mxu0 0
      %592 = vmatpush1.bf16.msra.mxu0 %v576
      %593 = vmatprep.subr.bf16.mxu0 0
      %594 = vmatpush1.bf16.msra.mxu0 %v575
      %595 = vmatprep.subr.bf16.mxu0 0
      %596 = vmatpush1.bf16.msra.mxu0 %v574
      %597 = vmatprep.subr.bf16.mxu0 0
      %598 = vmatpush1.bf16.msra.mxu0 %v573
      %599 = vmatprep.subr.bf16.mxu0 0
      %600 = vmatpush1.bf16.msra.mxu0 %v572
      %601 = vmatprep.subr.bf16.mxu0 0
      %602 = vmatpush1.bf16.msra.mxu0 %v571
      %603 = vmatprep.subr.bf16.mxu0 0
      %604 = vmatpush2.bf16.msra.mxu0 0
      %605 = vmatprep.subr.bf16.mxu0 0
      %606 = vmatpush2.bf16.msra.mxu0 0
      %607 = vmatprep.subr.bf16.mxu0 0
      %608 = vmatpush2.bf16.msra.mxu0 0
      %609 = vmatprep.subr.bf16.mxu0 0
      %610 = vmatpush2.bf16.msra.mxu0 0
      %611 = vmatprep.subr.bf16.mxu0 0
      %612 = vmatpush2.bf16.msra.mxu0 0
      %613 = vmatprep.subr.bf16.mxu0 0
      %614 = vmatpush2.bf16.msra.mxu0 0
      %615 = vmatprep.subr.bf16.mxu0 0
      %616 = vmatpush2.bf16.msra.mxu0 0
      %617 = vmatprep.subr.bf16.mxu0 0
      %618 = vmatpush2.bf16.msra.mxu0 0
      %619 = vmatprep.mubr.bf16.mxu0 0
      %620 = vmatmul.mubr.bf16.gmra.mxu0 %v529
      %v621 = vpop.f32.mrf.mxu0
      %v622 = vadd.f32 0.0, %v621
      %v623 = vpop.f32.mrf.mxu0
      %v624 = vpop.f32.mrf.mxu0
      %v625 = vadd.f32 0.0, %v624
      %v626 = vpop.f32.mrf.mxu0
      %627 = vmatprep.mubr.bf16.mxu0 0
      %628 = vmatmul.mubr.bf16.gmra.mxu0 %v530
      %v629 = vpop.f32.mrf.mxu0
      %v630 = vadd.f32 0.0, %v629
      %v631 = vpop.f32.mrf.mxu0
      %v632 = vpop.f32.mrf.mxu0
      %v633 = vadd.f32 0.0, %v632
      %v634 = vpop.f32.mrf.mxu0
      %635 = vmatprep.mubr.bf16.mxu0 0
      %636 = vmatmul.mubr.bf16.gmra.mxu0 %v531
      %v637 = vpop.f32.mrf.mxu0
      %v638 = vadd.f32 0.0, %v637
      %v639 = vpop.f32.mrf.mxu0
      %v640 = vpop.f32.mrf.mxu0
      %v641 = vadd.f32 0.0, %v640
      %v642 = vpop.f32.mrf.mxu0
      %643 = vmatprep.mubr.bf16.mxu0 0
      %644 = vmatmul.mubr.bf16.gmra.mxu0 %v532
      %v645 = vpop.f32.mrf.mxu0
      %v646 = vadd.f32 0.0, %v645
      %v647 = vpop.f32.mrf.mxu0
      %v648 = vpop.f32.mrf.mxu0
      %v649 = vadd.f32 0.0, %v648
      %v650 = vpop.f32.mrf.mxu0
      %651 = vmatprep.mubr.bf16.mxu0 0
      %652 = vmatmul.mubr.bf16.gmra.mxu0 %v533
      %v653 = vpop.f32.mrf.mxu0
      %v654 = vadd.f32 0.0, %v653
      %v655 = vpop.f32.mrf.mxu0
      %v656 = vpop.f32.mrf.mxu0
      %v657 = vadd.f32 0.0, %v656
      %v658 = vpop.f32.mrf.mxu0
      %659 = vdwg.mxu0
      %v660 = vadd.f32 %v472, %v622
      %v661 = vadd.f32 %v473, %v625
      %v662 = vadd.f32 %v474, %v630
      %v663 = vadd.f32 %v475, %v633
      %v664 = vadd.f32 %v476, %v638
      %v665 = vadd.f32 %v477, %v641
      %v666 = vadd.f32 %v478, %v646
      %v667 = vadd.f32 %v479, %v649
      %v668 = vadd.f32 %v480, %v654
      %v669 = vadd.f32 %v481, %v657
      %670 = vst [vmem:[#allocation2] sm:$0xff] %v660
      %671 = vst [vmem:[#allocation2 + $0x8] sm:$0xff] %v661
      %672 = vst [vmem:[#allocation2 + $0x10] sm:$0xff] %v662
      %673 = vst [vmem:[#allocation2 + $0x18] sm:$0xff] %v663
      %674 = vst [vmem:[#allocation2 + $0x20] sm:$0xff] %v664
      %675 = vst [vmem:[#allocation2 + $0x28] sm:$0xff] %v665
      %676 = vst [vmem:[#allocation2 + $0x30] sm:$0xff] %v666
      %677 = vst [vmem:[#allocation2 + $0x38] sm:$0xff] %v667
      %678 = vst [vmem:[#allocation2 + $0x40] sm:$0xff] %v668
      %679 = vst [vmem:[#allocation2 + $0x48] sm:$0xff] %v669
      %v680 = vld [vmem:[#allocation2] sm:$0xff]
      %v681 = vld [vmem:[#allocation2 + $0x8] sm:$0xff]
      %v682 = vld [vmem:[#allocation2 + $0x10] sm:$0xff]
      %v683 = vld [vmem:[#allocation2 + $0x18] sm:$0xff]
      %v684 = vld [vmem:[#allocation2 + $0x20] sm:$0xff]
      %v685 = vld [vmem:[#allocation2 + $0x28] sm:$0xff]
      %v686 = vld [vmem:[#allocation2 + $0x30] sm:$0xff]
      %v687 = vld [vmem:[#allocation2 + $0x38] sm:$0xff]
      %v688 = vld [vmem:[#allocation2 + $0x40] sm:$0xff]
      %v689 = vld [vmem:[#allocation2 + $0x48] sm:$0xff]
      %v690 = vld [vmem:[%s233] sm:$0xf]
      %v691 = vld [vmem:[%s233 + $0x4] sm:$0xf]
      %v692 = vld [vmem:[%s233 + $0x8] sm:$0xf]
      %v693 = vld [vmem:[%s233 + $0xc] sm:$0xf]
      %v694 = vld [vmem:[%s233 + $0x10] sm:$0xf]
      %v695 = vld [vmem:[%s233 + $0x14] sm:$0xf]
      %v696 = vld [vmem:[%s233 + $0x18] sm:$0xf]
      %v697 = vld [vmem:[%s233 + $0x1c] sm:$0xf]
      %v698 = vld [vmem:[%s233 + $0x20] sm:$0xf]
      %v699 = vld [vmem:[%s233 + $0x24] sm:$0xf]
      %v700 = vld [vmem:[%s233 + $0x28] sm:$0x1]
      %s701 = scalar_lea.vmem %s237, 128
      %v702 = vld [vmem:[%s701] sm:$0xf]
      %v703 = vld [vmem:[%s701 + $0x4] sm:$0xf]
      %v704 = vld [vmem:[%s701 + $0x8] sm:$0xf]
      %v705 = vld [vmem:[%s701 + $0xc] sm:$0xf]
      %v706 = vld [vmem:[%s701 + $0x10] sm:$0xf]
      %v707 = vld [vmem:[%s701 + $0x14] sm:$0xf]
      %v708 = vld [vmem:[%s701 + $0x18] sm:$0xf]
      %v709 = vld [vmem:[%s701 + $0x1c] sm:$0xf]
      %v710 = vld [vmem:[%s701 + $0x20] sm:$0xf]
      %v711 = vld [vmem:[%s701 + $0x24] sm:$0xf]
      %v712 = vld [vmem:[%s701 + $0x28] sm:$0xf]
      %v713 = vld [vmem:[%s701 + $0x2c] sm:$0xf]
      %v714 = vld [vmem:[%s701 + $0x30] sm:$0xf]
      %v715 = vld [vmem:[%s701 + $0x34] sm:$0xf]
      %v716 = vld [vmem:[%s701 + $0x38] sm:$0xf]
      %v717 = vld [vmem:[%s701 + $0x3c] sm:$0xf]
      %v729 = vunpack.c.l.b16 %v690
      %v730 = vunpack.c.l.b16 %v691
      %v731 = vunpack.c.l.b16 %v692
      %v732 = vunpack.c.l.b16 %v693
      %v733 = vunpack.c.l.b16 %v694
      %v734 = vunpack.c.l.b16 %v695
      %v735 = vunpack.c.l.b16 %v696
      %v736 = vunpack.c.l.b16 %v697
      %v737 = vunpack.c.l.b16 %v698
      %v738 = vunpack.c.l.b16 %v699
      %v739 = vunpack.c.l.b16 %v700
      %v740 = vpack.c.b16 %v730, %v729
      %v741 = vpack.c.b16 %v732, %v731
      %v742 = vpack.c.b16 %v734, %v733
      %v743 = vpack.c.b16 %v736, %v735
      %v744 = vpack.c.b16 %v738, %v737
      %v745 = vpack.c.b16 %v739, %v739
      %vm746 = vsmask.f32 7424
      %v748 = vshrl.u32 %v740, 16
      %v750 = vshll.u32 %v740, 16
      %v752 = vrot.slane %v750, 1
      %v753 = vor.u32 %v748, %v752
      %v755 = vshll.u32 %v741, 16
      %v757 = vrot.slane %v755, 1
      %v758 = vsel %vm746, %v753, %v757
      %v759 = vshrl.u32 %v741, 16
      %v761 = vor.u32 %v759, %v757
      %v763 = vshll.u32 %v742, 16
      %v765 = vrot.slane %v763, 1
      %v766 = vsel %vm746, %v761, %v765
      %v767 = vshrl.u32 %v742, 16
      %v769 = vor.u32 %v767, %v765
      %v771 = vshll.u32 %v743, 16
      %v773 = vrot.slane %v771, 1
      %v774 = vsel %vm746, %v769, %v773
      %v775 = vshrl.u32 %v743, 16
      %v777 = vor.u32 %v775, %v773
      %v779 = vshll.u32 %v744, 16
      %v781 = vrot.slane %v779, 1
      %v782 = vsel %vm746, %v777, %v781
      %v783 = vshrl.u32 %v744, 16
      %v785 = vor.u32 %v783, %v781
      %v787 = vshll.u32 %v745, 16
      %v789 = vrot.slane %v787, 1
      %v790 = vsel %vm746, %v785, %v789
      %v812 = vunpack.c.l.b16 %v702
      %v813 = vunpack.c.l.b16 %v703
      %v814 = vunpack.c.l.b16 %v704
      %v815 = vunpack.c.l.b16 %v705
      %v816 = vunpack.c.l.b16 %v706
      %v817 = vunpack.c.l.b16 %v707
      %v818 = vunpack.c.l.b16 %v708
      %v819 = vunpack.c.l.b16 %v709
      %v820 = vunpack.c.l.b16 %v710
      %v821 = vunpack.c.l.b16 %v711
      %v822 = vunpack.c.l.b16 %v712
      %v823 = vunpack.c.l.b16 %v713
      %v824 = vunpack.c.l.b16 %v714
      %v825 = vunpack.c.l.b16 %v715
      %v826 = vunpack.c.l.b16 %v716
      %v827 = vunpack.c.l.b16 %v717
      %v828 = vpack.c.b16 %v813, %v812
      %v829 = vpack.c.b16 %v815, %v814
      %v830 = vpack.c.b16 %v817, %v816
      %v831 = vpack.c.b16 %v819, %v818
      %v832 = vpack.c.b16 %v821, %v820
      %v833 = vpack.c.b16 %v823, %v822
      %v834 = vpack.c.b16 %v825, %v824
      %v835 = vpack.c.b16 %v827, %v826
      %844 = vmatprep.subr.bf16.mxu0 0
      %845 = vmatpush1.bf16.msra.mxu0 %v835
      %846 = vmatprep.subr.bf16.mxu0 0
      %847 = vmatpush1.bf16.msra.mxu0 %v834
      %848 = vmatprep.subr.bf16.mxu0 0
      %849 = vmatpush1.bf16.msra.mxu0 %v833
      %850 = vmatprep.subr.bf16.mxu0 0
      %851 = vmatpush1.bf16.msra.mxu0 %v832
      %852 = vmatprep.subr.bf16.mxu0 0
      %853 = vmatpush1.bf16.msra.mxu0 %v831
      %854 = vmatprep.subr.bf16.mxu0 0
      %855 = vmatpush1.bf16.msra.mxu0 %v830
      %856 = vmatprep.subr.bf16.mxu0 0
      %857 = vmatpush1.bf16.msra.mxu0 %v829
      %858 = vmatprep.subr.bf16.mxu0 0
      %859 = vmatpush1.bf16.msra.mxu0 %v828
      %860 = vmatprep.subr.bf16.mxu0 0
      %861 = vmatpush2.bf16.msra.mxu0 0
      %862 = vmatprep.subr.bf16.mxu0 0
      %863 = vmatpush2.bf16.msra.mxu0 0
      %864 = vmatprep.subr.bf16.mxu0 0
      %865 = vmatpush2.bf16.msra.mxu0 0
      %866 = vmatprep.subr.bf16.mxu0 0
      %867 = vmatpush2.bf16.msra.mxu0 0
      %868 = vmatprep.subr.bf16.mxu0 0
      %869 = vmatpush2.bf16.msra.mxu0 0
      %870 = vmatprep.subr.bf16.mxu0 0
      %871 = vmatpush2.bf16.msra.mxu0 0
      %872 = vmatprep.subr.bf16.mxu0 0
      %873 = vmatpush2.bf16.msra.mxu0 0
      %874 = vmatprep.subr.bf16.mxu0 0
      %875 = vmatpush2.bf16.msra.mxu0 0
      %876 = vmatprep.mubr.bf16.mxu0 0
      %877 = vmatmul.mubr.bf16.gmra.mxu0 %v758
      %v878 = vpop.f32.mrf.mxu0
      %v879 = vadd.f32 0.0, %v878
      %v880 = vpop.f32.mrf.mxu0
      %v881 = vpop.f32.mrf.mxu0
      %v882 = vadd.f32 0.0, %v881
      %v883 = vpop.f32.mrf.mxu0
      %884 = vmatprep.mubr.bf16.mxu0 0
      %885 = vmatmul.mubr.bf16.gmra.mxu0 %v766
      %v886 = vpop.f32.mrf.mxu0
      %v887 = vadd.f32 0.0, %v886
      %v888 = vpop.f32.mrf.mxu0
      %v889 = vpop.f32.mrf.mxu0
      %v890 = vadd.f32 0.0, %v889
      %v891 = vpop.f32.mrf.mxu0
      %892 = vmatprep.mubr.bf16.mxu0 0
      %893 = vmatmul.mubr.bf16.gmra.mxu0 %v774
      %v894 = vpop.f32.mrf.mxu0
      %v895 = vadd.f32 0.0, %v894
      %v896 = vpop.f32.mrf.mxu0
      %v897 = vpop.f32.mrf.mxu0
      %v898 = vadd.f32 0.0, %v897
      %v899 = vpop.f32.mrf.mxu0
      %900 = vmatprep.mubr.bf16.mxu0 0
      %901 = vmatmul.mubr.bf16.gmra.mxu0 %v782
      %v902 = vpop.f32.mrf.mxu0
      %v903 = vadd.f32 0.0, %v902
      %v904 = vpop.f32.mrf.mxu0
      %v905 = vpop.f32.mrf.mxu0
      %v906 = vadd.f32 0.0, %v905
      %v907 = vpop.f32.mrf.mxu0
      %908 = vmatprep.mubr.bf16.mxu0 0
      %909 = vmatmul.mubr.bf16.gmra.mxu0 %v790
      %v910 = vpop.f32.mrf.mxu0
      %v911 = vadd.f32 0.0, %v910
      %v912 = vpop.f32.mrf.mxu0
      %v913 = vpop.f32.mrf.mxu0
      %v914 = vadd.f32 0.0, %v913
      %v915 = vpop.f32.mrf.mxu0
      %916 = vdwg.mxu0
      %v917 = vadd.f32 %v680, %v879
      %v918 = vadd.f32 %v681, %v882
      %v919 = vadd.f32 %v682, %v887
      %v920 = vadd.f32 %v683, %v890
      %v921 = vadd.f32 %v684, %v895
      %v922 = vadd.f32 %v685, %v898
      %v923 = vadd.f32 %v686, %v903
      %v924 = vadd.f32 %v687, %v906
      %v925 = vadd.f32 %v688, %v911
      %v926 = vadd.f32 %v689, %v914
      %927 = vst [vmem:[#allocation2] sm:$0xff] %v917
      %928 = vst [vmem:[#allocation2 + $0x8] sm:$0xff] %v918
      %929 = vst [vmem:[#allocation2 + $0x10] sm:$0xff] %v919
      %930 = vst [vmem:[#allocation2 + $0x18] sm:$0xff] %v920
      %931 = vst [vmem:[#allocation2 + $0x20] sm:$0xff] %v921
      %932 = vst [vmem:[#allocation2 + $0x28] sm:$0xff] %v922
      %933 = vst [vmem:[#allocation2 + $0x30] sm:$0xff] %v923
      %934 = vst [vmem:[#allocation2 + $0x38] sm:$0xff] %v924
      %935 = vst [vmem:[#allocation2 + $0x40] sm:$0xff] %v925
      %936 = vst [vmem:[#allocation2 + $0x48] sm:$0xff] %v926
      %v937 = vld [vmem:[#allocation2] sm:$0xff]
      %v938 = vld [vmem:[#allocation2 + $0x8] sm:$0xff]
      %v939 = vld [vmem:[#allocation2 + $0x10] sm:$0xff]
      %v940 = vld [vmem:[#allocation2 + $0x18] sm:$0xff]
      %v941 = vld [vmem:[#allocation2 + $0x20] sm:$0xff]
      %v942 = vld [vmem:[#allocation2 + $0x28] sm:$0xff]
      %v943 = vld [vmem:[#allocation2 + $0x30] sm:$0xff]
      %v944 = vld [vmem:[#allocation2 + $0x38] sm:$0xff]
      %v945 = vld [vmem:[#allocation2 + $0x40] sm:$0xff]
      %v946 = vld [vmem:[#allocation2 + $0x48] sm:$0xff]
      %v947 = vld [vmem:[%s233 + $0x60] sm:$0xf]
      %v948 = vld [vmem:[%s233 + $0x64] sm:$0xf]
      %v949 = vld [vmem:[%s233 + $0x68] sm:$0xf]
      %v950 = vld [vmem:[%s233 + $0x6c] sm:$0xf]
      %v951 = vld [vmem:[%s233 + $0x70] sm:$0xf]
      %v952 = vld [vmem:[%s233 + $0x74] sm:$0xf]
      %v953 = vld [vmem:[%s233 + $0x78] sm:$0xf]
      %v954 = vld [vmem:[%s233 + $0x7c] sm:$0xf]
      %v955 = vld [vmem:[%s233 + $0x80] sm:$0xf]
      %v956 = vld [vmem:[%s233 + $0x84] sm:$0xf]
      %s957 = scalar_lea.vmem %s237, 192
      %v958 = vld [vmem:[%s957] sm:$0xf]
      %v959 = vld [vmem:[%s957 + $0x4] sm:$0xf]
      %v960 = vld [vmem:[%s957 + $0x8] sm:$0xf]
      %v961 = vld [vmem:[%s957 + $0xc] sm:$0xf]
      %v962 = vld [vmem:[%s957 + $0x10] sm:$0xf]
      %v963 = vld [vmem:[%s957 + $0x14] sm:$0xf]
      %v964 = vld [vmem:[%s957 + $0x18] sm:$0xf]
      %v965 = vld [vmem:[%s957 + $0x1c] sm:$0xf]
      %v966 = vld [vmem:[%s957 + $0x20] sm:$0xf]
      %v967 = vld [vmem:[%s957 + $0x24] sm:$0xf]
      %v968 = vld [vmem:[%s957 + $0x28] sm:$0xf]
      %v969 = vld [vmem:[%s957 + $0x2c] sm:$0xf]
      %v970 = vld [vmem:[%s957 + $0x30] sm:$0xf]
      %v971 = vld [vmem:[%s957 + $0x34] sm:$0xf]
      %v972 = vld [vmem:[%s957 + $0x38] sm:$0xf]
      %v973 = vld [vmem:[%s957 + $0x3c] sm:$0xf]
      %v984 = vunpack.c.l.b16 %v947
      %v985 = vunpack.c.l.b16 %v948
      %v986 = vunpack.c.l.b16 %v949
      %v987 = vunpack.c.l.b16 %v950
      %v988 = vunpack.c.l.b16 %v951
      %v989 = vunpack.c.l.b16 %v952
      %v990 = vunpack.c.l.b16 %v953
      %v991 = vunpack.c.l.b16 %v954
      %v992 = vunpack.c.l.b16 %v955
      %v993 = vunpack.c.l.b16 %v956
      %v994 = vpack.c.b16 %v985, %v984
      %v995 = vpack.c.b16 %v987, %v986
      %v996 = vpack.c.b16 %v989, %v988
      %v997 = vpack.c.b16 %v991, %v990
      %v998 = vpack.c.b16 %v993, %v992
      %v1020 = vunpack.c.l.b16 %v958
      %v1021 = vunpack.c.l.b16 %v959
      %v1022 = vunpack.c.l.b16 %v960
      %v1023 = vunpack.c.l.b16 %v961
      %v1024 = vunpack.c.l.b16 %v962
      %v1025 = vunpack.c.l.b16 %v963
      %v1026 = vunpack.c.l.b16 %v964
      %v1027 = vunpack.c.l.b16 %v965
      %v1028 = vunpack.c.l.b16 %v966
      %v1029 = vunpack.c.l.b16 %v967
      %v1030 = vunpack.c.l.b16 %v968
      %v1031 = vunpack.c.l.b16 %v969
      %v1032 = vunpack.c.l.b16 %v970
      %v1033 = vunpack.c.l.b16 %v971
      %v1034 = vunpack.c.l.b16 %v972
      %v1035 = vunpack.c.l.b16 %v973
      %v1036 = vpack.c.b16 %v1021, %v1020
      %v1037 = vpack.c.b16 %v1023, %v1022
      %v1038 = vpack.c.b16 %v1025, %v1024
      %v1039 = vpack.c.b16 %v1027, %v1026
      %v1040 = vpack.c.b16 %v1029, %v1028
      %v1041 = vpack.c.b16 %v1031, %v1030
      %v1042 = vpack.c.b16 %v1033, %v1032
      %v1043 = vpack.c.b16 %v1035, %v1034
      %1052 = vmatprep.subr.bf16.mxu0 0
      %1053 = vmatpush1.bf16.msra.mxu0 %v1043
      %1054 = vmatprep.subr.bf16.mxu0 0
      %1055 = vmatpush1.bf16.msra.mxu0 %v1042
      %1056 = vmatprep.subr.bf16.mxu0 0
      %1057 = vmatpush1.bf16.msra.mxu0 %v1041
      %1058 = vmatprep.subr.bf16.mxu0 0
      %1059 = vmatpush1.bf16.msra.mxu0 %v1040
      %1060 = vmatprep.subr.bf16.mxu0 0
      %1061 = vmatpush1.bf16.msra.mxu0 %v1039
      %1062 = vmatprep.subr.bf16.mxu0 0
      %1063 = vmatpush1.bf16.msra.mxu0 %v1038
      %1064 = vmatprep.subr.bf16.mxu0 0
      %1065 = vmatpush1.bf16.msra.mxu0 %v1037
      %1066 = vmatprep.subr.bf16.mxu0 0
      %1067 = vmatpush1.bf16.msra.mxu0 %v1036
      %1068 = vmatprep.subr.bf16.mxu0 0
      %1069 = vmatpush2.bf16.msra.mxu0 0
      %1070 = vmatprep.subr.bf16.mxu0 0
      %1071 = vmatpush2.bf16.msra.mxu0 0
      %1072 = vmatprep.subr.bf16.mxu0 0
      %1073 = vmatpush2.bf16.msra.mxu0 0
      %1074 = vmatprep.subr.bf16.mxu0 0
      %1075 = vmatpush2.bf16.msra.mxu0 0
      %1076 = vmatprep.subr.bf16.mxu0 0
      %1077 = vmatpush2.bf16.msra.mxu0 0
      %1078 = vmatprep.subr.bf16.mxu0 0
      %1079 = vmatpush2.bf16.msra.mxu0 0
      %1080 = vmatprep.subr.bf16.mxu0 0
      %1081 = vmatpush2.bf16.msra.mxu0 0
      %1082 = vmatprep.subr.bf16.mxu0 0
      %1083 = vmatpush2.bf16.msra.mxu0 0
      %1084 = vmatprep.mubr.bf16.mxu0 0
      %1085 = vmatmul.mubr.bf16.gmra.mxu0 %v994
      %v1086 = vpop.f32.mrf.mxu0
      %v1087 = vadd.f32 0.0, %v1086
      %v1088 = vpop.f32.mrf.mxu0
      %v1089 = vpop.f32.mrf.mxu0
      %v1090 = vadd.f32 0.0, %v1089
      %v1091 = vpop.f32.mrf.mxu0
      %1092 = vmatprep.mubr.bf16.mxu0 0
      %1093 = vmatmul.mubr.bf16.gmra.mxu0 %v995
      %v1094 = vpop.f32.mrf.mxu0
      %v1095 = vadd.f32 0.0, %v1094
      %v1096 = vpop.f32.mrf.mxu0
      %v1097 = vpop.f32.mrf.mxu0
      %v1098 = vadd.f32 0.0, %v1097
      %v1099 = vpop.f32.mrf.mxu0
      %1100 = vmatprep.mubr.bf16.mxu0 0
      %1101 = vmatmul.mubr.bf16.gmra.mxu0 %v996
      %v1102 = vpop.f32.mrf.mxu0
      %v1103 = vadd.f32 0.0, %v1102
      %v1104 = vpop.f32.mrf.mxu0
      %v1105 = vpop.f32.mrf.mxu0
      %v1106 = vadd.f32 0.0, %v1105
      %v1107 = vpop.f32.mrf.mxu0
      %1108 = vmatprep.mubr.bf16.mxu0 0
      %1109 = vmatmul.mubr.bf16.gmra.mxu0 %v997
      %v1110 = vpop.f32.mrf.mxu0
      %v1111 = vadd.f32 0.0, %v1110
      %v1112 = vpop.f32.mrf.mxu0
      %v1113 = vpop.f32.mrf.mxu0
      %v1114 = vadd.f32 0.0, %v1113
      %v1115 = vpop.f32.mrf.mxu0
      %1116 = vmatprep.mubr.bf16.mxu0 0
      %1117 = vmatmul.mubr.bf16.gmra.mxu0 %v998
      %v1118 = vpop.f32.mrf.mxu0
      %v1119 = vadd.f32 0.0, %v1118
      %v1120 = vpop.f32.mrf.mxu0
      %v1121 = vpop.f32.mrf.mxu0
      %v1122 = vadd.f32 0.0, %v1121
      %v1123 = vpop.f32.mrf.mxu0
      %1124 = vdwg.mxu0
      %v1125 = vadd.f32 %v937, %v1087
      %v1126 = vadd.f32 %v938, %v1090
      %v1127 = vadd.f32 %v939, %v1095
      %v1128 = vadd.f32 %v940, %v1098
      %v1129 = vadd.f32 %v941, %v1103
      %v1130 = vadd.f32 %v942, %v1106
      %v1131 = vadd.f32 %v943, %v1111
      %v1132 = vadd.f32 %v944, %v1114
      %v1133 = vadd.f32 %v945, %v1119
      %v1134 = vadd.f32 %v946, %v1122
      %1135 = vst [vmem:[#allocation2] sm:$0xff] %v1125
      %1136 = vst [vmem:[#allocation2 + $0x8] sm:$0xff] %v1126
      %1137 = vst [vmem:[#allocation2 + $0x10] sm:$0xff] %v1127
      %1138 = vst [vmem:[#allocation2 + $0x18] sm:$0xff] %v1128
      %1139 = vst [vmem:[#allocation2 + $0x20] sm:$0xff] %v1129
      %1140 = vst [vmem:[#allocation2 + $0x28] sm:$0xff] %v1130
      %1141 = vst [vmem:[#allocation2 + $0x30] sm:$0xff] %v1131
      %1142 = vst [vmem:[#allocation2 + $0x38] sm:$0xff] %v1132
      %1143 = vst [vmem:[#allocation2 + $0x40] sm:$0xff] %v1133
      %1144 = vst [vmem:[#allocation2 + $0x48] sm:$0xff] %v1134
      %v1145 = vld [vmem:[#allocation2] sm:$0xff]
      %v1146 = vld [vmem:[#allocation2 + $0x8] sm:$0xff]
      %v1147 = vld [vmem:[#allocation2 + $0x10] sm:$0xff]
      %v1148 = vld [vmem:[#allocation2 + $0x18] sm:$0xff]
      %v1149 = vld [vmem:[#allocation2 + $0x20] sm:$0xff]
      %v1150 = vld [vmem:[#allocation2 + $0x28] sm:$0xff]
      %v1151 = vld [vmem:[#allocation2 + $0x30] sm:$0xff]
      %v1152 = vld [vmem:[#allocation2 + $0x38] sm:$0xff]
      %v1153 = vld [vmem:[#allocation2 + $0x40] sm:$0xff]
      %v1154 = vld [vmem:[#allocation2 + $0x48] sm:$0xff]
      %v1155 = vld [vmem:[%s233 + $0x90] sm:$0xf]
      %v1156 = vld [vmem:[%s233 + $0x94] sm:$0xf]
      %v1157 = vld [vmem:[%s233 + $0x98] sm:$0xf]
      %v1158 = vld [vmem:[%s233 + $0x9c] sm:$0xf]
      %v1159 = vld [vmem:[%s233 + $0xa0] sm:$0xf]
      %v1160 = vld [vmem:[%s233 + $0xa4] sm:$0xf]
      %v1161 = vld [vmem:[%s233 + $0xa8] sm:$0xf]
      %v1162 = vld [vmem:[%s233 + $0xac] sm:$0xf]
      %v1163 = vld [vmem:[%s233 + $0xb0] sm:$0xf]
      %v1164 = vld [vmem:[%s233 + $0xb4] sm:$0xf]
      %s1165 = scalar_lea.vmem %s237, 256
      %v1166 = vld [vmem:[%s1165] sm:$0xf]
      %v1167 = vld [vmem:[%s1165 + $0x4] sm:$0xf]
      %v1168 = vld [vmem:[%s1165 + $0x8] sm:$0xf]
      %v1169 = vld [vmem:[%s1165 + $0xc] sm:$0xf]
      %v1170 = vld [vmem:[%s1165 + $0x10] sm:$0xf]
      %v1171 = vld [vmem:[%s1165 + $0x14] sm:$0xf]
      %v1172 = vld [vmem:[%s1165 + $0x18] sm:$0xf]
      %v1173 = vld [vmem:[%s1165 + $0x1c] sm:$0xf]
      %v1174 = vld [vmem:[%s1165 + $0x20] sm:$0xf]
      %v1175 = vld [vmem:[%s1165 + $0x24] sm:$0xf]
      %v1176 = vld [vmem:[%s1165 + $0x28] sm:$0xf]
      %v1177 = vld [vmem:[%s1165 + $0x2c] sm:$0xf]
      %v1178 = vld [vmem:[%s1165 + $0x30] sm:$0xf]
      %v1179 = vld [vmem:[%s1165 + $0x34] sm:$0xf]
      %v1180 = vld [vmem:[%s1165 + $0x38] sm:$0xf]
      %v1181 = vld [vmem:[%s1165 + $0x3c] sm:$0xf]
      %v1192 = vunpack.c.l.b16 %v1155
      %v1193 = vunpack.c.l.b16 %v1156
      %v1194 = vunpack.c.l.b16 %v1157
      %v1195 = vunpack.c.l.b16 %v1158
      %v1196 = vunpack.c.l.b16 %v1159
      %v1197 = vunpack.c.l.b16 %v1160
      %v1198 = vunpack.c.l.b16 %v1161
      %v1199 = vunpack.c.l.b16 %v1162
      %v1200 = vunpack.c.l.b16 %v1163
      %v1201 = vunpack.c.l.b16 %v1164
      %v1202 = vpack.c.b16 %v1193, %v1192
      %v1203 = vpack.c.b16 %v1195, %v1194
      %v1204 = vpack.c.b16 %v1197, %v1196
      %v1205 = vpack.c.b16 %v1199, %v1198
      %v1206 = vpack.c.b16 %v1201, %v1200
      %v1228 = vunpack.c.l.b16 %v1166
      %v1229 = vunpack.c.l.b16 %v1167
      %v1230 = vunpack.c.l.b16 %v1168
      %v1231 = vunpack.c.l.b16 %v1169
      %v1232 = vunpack.c.l.b16 %v1170
      %v1233 = vunpack.c.l.b16 %v1171
      %v1234 = vunpack.c.l.b16 %v1172
      %v1235 = vunpack.c.l.b16 %v1173
      %v1236 = vunpack.c.l.b16 %v1174
      %v1237 = vunpack.c.l.b16 %v1175
      %v1238 = vunpack.c.l.b16 %v1176
      %v1239 = vunpack.c.l.b16 %v1177
      %v1240 = vunpack.c.l.b16 %v1178
      %v1241 = vunpack.c.l.b16 %v1179
      %v1242 = vunpack.c.l.b16 %v1180
      %v1243 = vunpack.c.l.b16 %v1181
      %v1244 = vpack.c.b16 %v1229, %v1228
      %v1245 = vpack.c.b16 %v1231, %v1230
      %v1246 = vpack.c.b16 %v1233, %v1232
      %v1247 = vpack.c.b16 %v1235, %v1234
      %v1248 = vpack.c.b16 %v1237, %v1236
      %v1249 = vpack.c.b16 %v1239, %v1238
      %v1250 = vpack.c.b16 %v1241, %v1240
      %v1251 = vpack.c.b16 %v1243, %v1242
      %1260 = vmatprep.subr.bf16.mxu0 0
      %1261 = vmatpush1.bf16.msra.mxu0 %v1251
      %1262 = vmatprep.subr.bf16.mxu0 0
      %1263 = vmatpush1.bf16.msra.mxu0 %v1250
      %1264 = vmatprep.subr.bf16.mxu0 0
      %1265 = vmatpush1.bf16.msra.mxu0 %v1249
      %1266 = vmatprep.subr.bf16.mxu0 0
      %1267 = vmatpush1.bf16.msra.mxu0 %v1248
      %1268 = vmatprep.subr.bf16.mxu0 0
      %1269 = vmatpush1.bf16.msra.mxu0 %v1247
      %1270 = vmatprep.subr.bf16.mxu0 0
      %1271 = vmatpush1.bf16.msra.mxu0 %v1246
      %1272 = vmatprep.subr.bf16.mxu0 0
      %1273 = vmatpush1.bf16.msra.mxu0 %v1245
      %1274 = vmatprep.subr.bf16.mxu0 0
      %1275 = vmatpush1.bf16.msra.mxu0 %v1244
      %1276 = vmatprep.subr.bf16.mxu0 0
      %1277 = vmatpush2.bf16.msra.mxu0 0
      %1278 = vmatprep.subr.bf16.mxu0 0
      %1279 = vmatpush2.bf16.msra.mxu0 0
      %1280 = vmatprep.subr.bf16.mxu0 0
      %1281 = vmatpush2.bf16.msra.mxu0 0
      %1282 = vmatprep.subr.bf16.mxu0 0
      %1283 = vmatpush2.bf16.msra.mxu0 0
      %1284 = vmatprep.subr.bf16.mxu0 0
      %1285 = vmatpush2.bf16.msra.mxu0 0
      %1286 = vmatprep.subr.bf16.mxu0 0
      %1287 = vmatpush2.bf16.msra.mxu0 0
      %1288 = vmatprep.subr.bf16.mxu0 0
      %1289 = vmatpush2.bf16.msra.mxu0 0
      %1290 = vmatprep.subr.bf16.mxu0 0
      %1291 = vmatpush2.bf16.msra.mxu0 0
      %1292 = vmatprep.mubr.bf16.mxu0 0
      %1293 = vmatmul.mubr.bf16.gmra.mxu0 %v1202
      %v1294 = vpop.f32.mrf.mxu0
      %v1295 = vadd.f32 0.0, %v1294
      %v1296 = vpop.f32.mrf.mxu0
      %v1297 = vpop.f32.mrf.mxu0
      %v1298 = vadd.f32 0.0, %v1297
      %v1299 = vpop.f32.mrf.mxu0
      %1300 = vmatprep.mubr.bf16.mxu0 0
      %1301 = vmatmul.mubr.bf16.gmra.mxu0 %v1203
      %v1302 = vpop.f32.mrf.mxu0
      %v1303 = vadd.f32 0.0, %v1302
      %v1304 = vpop.f32.mrf.mxu0
      %v1305 = vpop.f32.mrf.mxu0
      %v1306 = vadd.f32 0.0, %v1305
      %v1307 = vpop.f32.mrf.mxu0
      %1308 = vmatprep.mubr.bf16.mxu0 0
      %1309 = vmatmul.mubr.bf16.gmra.mxu0 %v1204
      %v1310 = vpop.f32.mrf.mxu0
      %v1311 = vadd.f32 0.0, %v1310
      %v1312 = vpop.f32.mrf.mxu0
      %v1313 = vpop.f32.mrf.mxu0
      %v1314 = vadd.f32 0.0, %v1313
      %v1315 = vpop.f32.mrf.mxu0
      %1316 = vmatprep.mubr.bf16.mxu0 0
      %1317 = vmatmul.mubr.bf16.gmra.mxu0 %v1205
      %v1318 = vpop.f32.mrf.mxu0
      %v1319 = vadd.f32 0.0, %v1318
      %v1320 = vpop.f32.mrf.mxu0
      %v1321 = vpop.f32.mrf.mxu0
      %v1322 = vadd.f32 0.0, %v1321
      %v1323 = vpop.f32.mrf.mxu0
      %1324 = vmatprep.mubr.bf16.mxu0 0
      %1325 = vmatmul.mubr.bf16.gmra.mxu0 %v1206
      %v1326 = vpop.f32.mrf.mxu0
      %v1327 = vadd.f32 0.0, %v1326
      %v1328 = vpop.f32.mrf.mxu0
      %v1329 = vpop.f32.mrf.mxu0
      %v1330 = vadd.f32 0.0, %v1329
      %v1331 = vpop.f32.mrf.mxu0
      %1332 = vdwg.mxu0
      %v1333 = vadd.f32 %v1145, %v1295
      %v1334 = vadd.f32 %v1146, %v1298
      %v1335 = vadd.f32 %v1147, %v1303
      %v1336 = vadd.f32 %v1148, %v1306
      %v1337 = vadd.f32 %v1149, %v1311
      %v1338 = vadd.f32 %v1150, %v1314
      %v1339 = vadd.f32 %v1151, %v1319
      %v1340 = vadd.f32 %v1152, %v1322
      %v1341 = vadd.f32 %v1153, %v1327
      %v1342 = vadd.f32 %v1154, %v1330
      %1343 = vst [vmem:[#allocation2] sm:$0xff] %v1333
      %1344 = vst [vmem:[#allocation2 + $0x8] sm:$0xff] %v1334
      %1345 = vst [vmem:[#allocation2 + $0x10] sm:$0xff] %v1335
      %1346 = vst [vmem:[#allocation2 + $0x18] sm:$0xff] %v1336
      %1347 = vst [vmem:[#allocation2 + $0x20] sm:$0xff] %v1337
      %1348 = vst [vmem:[#allocation2 + $0x28] sm:$0xff] %v1338
      %1349 = vst [vmem:[#allocation2 + $0x30] sm:$0xff] %v1339
      %1350 = vst [vmem:[#allocation2 + $0x38] sm:$0xff] %v1340
      %1351 = vst [vmem:[#allocation2 + $0x40] sm:$0xff] %v1341
      %1352 = vst [vmem:[#allocation2 + $0x48] sm:$0xff] %v1342
      %v1353 = vld [vmem:[#allocation2] sm:$0xff]
      %v1354 = vld [vmem:[#allocation2 + $0x8] sm:$0xff]
      %v1355 = vld [vmem:[#allocation2 + $0x10] sm:$0xff]
      %v1356 = vld [vmem:[#allocation2 + $0x18] sm:$0xff]
      %v1357 = vld [vmem:[#allocation2 + $0x20] sm:$0xff]
      %v1358 = vld [vmem:[#allocation2 + $0x28] sm:$0xff]
      %v1359 = vld [vmem:[#allocation2 + $0x30] sm:$0xff]
      %v1360 = vld [vmem:[#allocation2 + $0x38] sm:$0xff]
      %v1361 = vld [vmem:[#allocation2 + $0x40] sm:$0xff]
      %v1362 = vld [vmem:[#allocation2 + $0x48] sm:$0xff]
      %v1363 = vld [vmem:[%s233 + $0x60] sm:$0xf]
      %v1364 = vld [vmem:[%s233 + $0x64] sm:$0xf]
      %v1365 = vld [vmem:[%s233 + $0x68] sm:$0xf]
      %v1366 = vld [vmem:[%s233 + $0x6c] sm:$0xf]
      %v1367 = vld [vmem:[%s233 + $0x70] sm:$0xf]
      %v1368 = vld [vmem:[%s233 + $0x74] sm:$0xf]
      %v1369 = vld [vmem:[%s233 + $0x78] sm:$0xf]
      %v1370 = vld [vmem:[%s233 + $0x7c] sm:$0xf]
      %v1371 = vld [vmem:[%s233 + $0x80] sm:$0xf]
      %v1372 = vld [vmem:[%s233 + $0x84] sm:$0xf]
      %v1373 = vld [vmem:[%s233 + $0x88] sm:$0x1]
      %s1374 = scalar_lea.vmem %s237, 320
      %v1375 = vld [vmem:[%s1374] sm:$0xf]
      %v1376 = vld [vmem:[%s1374 + $0x4] sm:$0xf]
      %v1377 = vld [vmem:[%s1374 + $0x8] sm:$0xf]
      %v1378 = vld [vmem:[%s1374 + $0xc] sm:$0xf]
      %v1379 = vld [vmem:[%s1374 + $0x10] sm:$0xf]
      %v1380 = vld [vmem:[%s1374 + $0x14] sm:$0xf]
      %v1381 = vld [vmem:[%s1374 + $0x18] sm:$0xf]
      %v1382 = vld [vmem:[%s1374 + $0x1c] sm:$0xf]
      %v1383 = vld [vmem:[%s1374 + $0x20] sm:$0xf]
      %v1384 = vld [vmem:[%s1374 + $0x24] sm:$0xf]
      %v1385 = vld [vmem:[%s1374 + $0x28] sm:$0xf]
      %v1386 = vld [vmem:[%s1374 + $0x2c] sm:$0xf]
      %v1387 = vld [vmem:[%s1374 + $0x30] sm:$0xf]
      %v1388 = vld [vmem:[%s1374 + $0x34] sm:$0xf]
      %v1389 = vld [vmem:[%s1374 + $0x38] sm:$0xf]
      %v1390 = vld [vmem:[%s1374 + $0x3c] sm:$0xf]
      %v1402 = vunpack.c.l.b16 %v1363
      %v1403 = vunpack.c.l.b16 %v1364
      %v1404 = vunpack.c.l.b16 %v1365
      %v1405 = vunpack.c.l.b16 %v1366
      %v1406 = vunpack.c.l.b16 %v1367
      %v1407 = vunpack.c.l.b16 %v1368
      %v1408 = vunpack.c.l.b16 %v1369
      %v1409 = vunpack.c.l.b16 %v1370
      %v1410 = vunpack.c.l.b16 %v1371
      %v1411 = vunpack.c.l.b16 %v1372
      %v1412 = vunpack.c.l.b16 %v1373
      %v1413 = vpack.c.b16 %v1403, %v1402
      %v1414 = vpack.c.b16 %v1405, %v1404
      %v1415 = vpack.c.b16 %v1407, %v1406
      %v1416 = vpack.c.b16 %v1409, %v1408
      %v1417 = vpack.c.b16 %v1411, %v1410
      %v1418 = vpack.c.b16 %v1412, %v1412
      %v1420 = vshrl.u32 %v1413, 16
      %v1422 = vshll.u32 %v1413, 16
      %v1424 = vrot.slane %v1422, 1
      %v1425 = vor.u32 %v1420, %v1424
      %v1427 = vshll.u32 %v1414, 16
      %v1429 = vrot.slane %v1427, 1
      %v1430 = vsel %vm746, %v1425, %v1429
      %v1431 = vshrl.u32 %v1414, 16
      %v1433 = vor.u32 %v1431, %v1429
      %v1435 = vshll.u32 %v1415, 16
      %v1437 = vrot.slane %v1435, 1
      %v1438 = vsel %vm746, %v1433, %v1437
      %v1439 = vshrl.u32 %v1415, 16
      %v1441 = vor.u32 %v1439, %v1437
      %v1443 = vshll.u32 %v1416, 16
      %v1445 = vrot.slane %v1443, 1
      %v1446 = vsel %vm746, %v1441, %v1445
      %v1447 = vshrl.u32 %v1416, 16
      %v1449 = vor.u32 %v1447, %v1445
      %v1451 = vshll.u32 %v1417, 16
      %v1453 = vrot.slane %v1451, 1
      %v1454 = vsel %vm746, %v1449, %v1453
      %v1455 = vshrl.u32 %v1417, 16
      %v1457 = vor.u32 %v1455, %v1453
      %v1459 = vshll.u32 %v1418, 16
      %v1461 = vrot.slane %v1459, 1
      %v1462 = vsel %vm746, %v1457, %v1461
      %v1484 = vunpack.c.l.b16 %v1375
      %v1485 = vunpack.c.l.b16 %v1376
      %v1486 = vunpack.c.l.b16 %v1377
      %v1487 = vunpack.c.l.b16 %v1378
      %v1488 = vunpack.c.l.b16 %v1379
      %v1489 = vunpack.c.l.b16 %v1380
      %v1490 = vunpack.c.l.b16 %v1381
      %v1491 = vunpack.c.l.b16 %v1382
      %v1492 = vunpack.c.l.b16 %v1383
      %v1493 = vunpack.c.l.b16 %v1384
      %v1494 = vunpack.c.l.b16 %v1385
      %v1495 = vunpack.c.l.b16 %v1386
      %v1496 = vunpack.c.l.b16 %v1387
      %v1497 = vunpack.c.l.b16 %v1388
      %v1498 = vunpack.c.l.b16 %v1389
      %v1499 = vunpack.c.l.b16 %v1390
      %v1500 = vpack.c.b16 %v1485, %v1484
      %v1501 = vpack.c.b16 %v1487, %v1486
      %v1502 = vpack.c.b16 %v1489, %v1488
      %v1503 = vpack.c.b16 %v1491, %v1490
      %v1504 = vpack.c.b16 %v1493, %v1492
      %v1505 = vpack.c.b16 %v1495, %v1494
      %v1506 = vpack.c.b16 %v1497, %v1496
      %v1507 = vpack.c.b16 %v1499, %v1498
      %1516 = vmatprep.subr.bf16.mxu0 0
      %1517 = vmatpush1.bf16.msra.mxu0 %v1507
      %1518 = vmatprep.subr.bf16.mxu0 0
      %1519 = vmatpush1.bf16.msra.mxu0 %v1506
      %1520 = vmatprep.subr.bf16.mxu0 0
      %1521 = vmatpush1.bf16.msra.mxu0 %v1505
      %1522 = vmatprep.subr.bf16.mxu0 0
      %1523 = vmatpush1.bf16.msra.mxu0 %v1504
      %1524 = vmatprep.subr.bf16.mxu0 0
      %1525 = vmatpush1.bf16.msra.mxu0 %v1503
      %1526 = vmatprep.subr.bf16.mxu0 0
      %1527 = vmatpush1.bf16.msra.mxu0 %v1502
      %1528 = vmatprep.subr.bf16.mxu0 0
      %1529 = vmatpush1.bf16.msra.mxu0 %v1501
      %1530 = vmatprep.subr.bf16.mxu0 0
      %1531 = vmatpush1.bf16.msra.mxu0 %v1500
      %1532 = vmatprep.subr.bf16.mxu0 0
      %1533 = vmatpush2.bf16.msra.mxu0 0
      %1534 = vmatprep.subr.bf16.mxu0 0
      %1535 = vmatpush2.bf16.msra.mxu0 0
      %1536 = vmatprep.subr.bf16.mxu0 0
      %1537 = vmatpush2.bf16.msra.mxu0 0
      %1538 = vmatprep.subr.bf16.mxu0 0
      %1539 = vmatpush2.bf16.msra.mxu0 0
      %1540 = vmatprep.subr.bf16.mxu0 0
      %1541 = vmatpush2.bf16.msra.mxu0 0
      %1542 = vmatprep.subr.bf16.mxu0 0
      %1543 = vmatpush2.bf16.msra.mxu0 0
      %1544 = vmatprep.subr.bf16.mxu0 0
      %1545 = vmatpush2.bf16.msra.mxu0 0
      %1546 = vmatprep.subr.bf16.mxu0 0
      %1547 = vmatpush2.bf16.msra.mxu0 0
      %1548 = vmatprep.mubr.bf16.mxu0 0
      %1549 = vmatmul.mubr.bf16.gmra.mxu0 %v1430
      %v1550 = vpop.f32.mrf.mxu0
      %v1551 = vadd.f32 0.0, %v1550
      %v1552 = vpop.f32.mrf.mxu0
      %v1553 = vpop.f32.mrf.mxu0
      %v1554 = vadd.f32 0.0, %v1553
      %v1555 = vpop.f32.mrf.mxu0
      %1556 = vmatprep.mubr.bf16.mxu0 0
      %1557 = vmatmul.mubr.bf16.gmra.mxu0 %v1438
      %v1558 = vpop.f32.mrf.mxu0
      %v1559 = vadd.f32 0.0, %v1558
      %v1560 = vpop.f32.mrf.mxu0
      %v1561 = vpop.f32.mrf.mxu0
      %v1562 = vadd.f32 0.0, %v1561
      %v1563 = vpop.f32.mrf.mxu0
      %1564 = vmatprep.mubr.bf16.mxu0 0
      %1565 = vmatmul.mubr.bf16.gmra.mxu0 %v1446
      %v1566 = vpop.f32.mrf.mxu0
      %v1567 = vadd.f32 0.0, %v1566
      %v1568 = vpop.f32.mrf.mxu0
      %v1569 = vpop.f32.mrf.mxu0
      %v1570 = vadd.f32 0.0, %v1569
      %v1571 = vpop.f32.mrf.mxu0
      %1572 = vmatprep.mubr.bf16.mxu0 0
      %1573 = vmatmul.mubr.bf16.gmra.mxu0 %v1454
      %v1574 = vpop.f32.mrf.mxu0
      %v1575 = vadd.f32 0.0, %v1574
      %v1576 = vpop.f32.mrf.mxu0
      %v1577 = vpop.f32.mrf.mxu0
      %v1578 = vadd.f32 0.0, %v1577
      %v1579 = vpop.f32.mrf.mxu0
      %1580 = vmatprep.mubr.bf16.mxu0 0
      %1581 = vmatmul.mubr.bf16.gmra.mxu0 %v1462
      %v1582 = vpop.f32.mrf.mxu0
      %v1583 = vadd.f32 0.0, %v1582
      %v1584 = vpop.f32.mrf.mxu0
      %v1585 = vpop.f32.mrf.mxu0
      %v1586 = vadd.f32 0.0, %v1585
      %v1587 = vpop.f32.mrf.mxu0
      %1588 = vdwg.mxu0
      %v1589 = vadd.f32 %v1353, %v1551
      %v1590 = vadd.f32 %v1354, %v1554
      %v1591 = vadd.f32 %v1355, %v1559
      %v1592 = vadd.f32 %v1356, %v1562
      %v1593 = vadd.f32 %v1357, %v1567
      %v1594 = vadd.f32 %v1358, %v1570
      %v1595 = vadd.f32 %v1359, %v1575
      %v1596 = vadd.f32 %v1360, %v1578
      %v1597 = vadd.f32 %v1361, %v1583
      %v1598 = vadd.f32 %v1362, %v1586
      %1599 = vst [vmem:[#allocation2] sm:$0xff] %v1589
      %1600 = vst [vmem:[#allocation2 + $0x8] sm:$0xff] %v1590
      %1601 = vst [vmem:[#allocation2 + $0x10] sm:$0xff] %v1591
      %1602 = vst [vmem:[#allocation2 + $0x18] sm:$0xff] %v1592
      %1603 = vst [vmem:[#allocation2 + $0x20] sm:$0xff] %v1593
      %1604 = vst [vmem:[#allocation2 + $0x28] sm:$0xff] %v1594
      %1605 = vst [vmem:[#allocation2 + $0x30] sm:$0xff] %v1595
      %1606 = vst [vmem:[#allocation2 + $0x38] sm:$0xff] %v1596
      %1607 = vst [vmem:[#allocation2 + $0x40] sm:$0xff] %v1597
      %1608 = vst [vmem:[#allocation2 + $0x48] sm:$0xff] %v1598
      %v1609 = vld [vmem:[#allocation2] sm:$0xff]
      %v1610 = vld [vmem:[#allocation2 + $0x8] sm:$0xff]
      %v1611 = vld [vmem:[#allocation2 + $0x10] sm:$0xff]
      %v1612 = vld [vmem:[#allocation2 + $0x18] sm:$0xff]
      %v1613 = vld [vmem:[#allocation2 + $0x20] sm:$0xff]
      %v1614 = vld [vmem:[#allocation2 + $0x28] sm:$0xff]
      %v1615 = vld [vmem:[#allocation2 + $0x30] sm:$0xff]
      %v1616 = vld [vmem:[#allocation2 + $0x38] sm:$0xff]
      %v1617 = vld [vmem:[#allocation2 + $0x40] sm:$0xff]
      %v1618 = vld [vmem:[#allocation2 + $0x48] sm:$0xff]
      %v1619 = vld [vmem:[%s233 + $0x4] sm:$0xf]
      %v1620 = vld [vmem:[%s233 + $0x8] sm:$0xf]
      %v1621 = vld [vmem:[%s233 + $0xc] sm:$0xf]
      %v1622 = vld [vmem:[%s233 + $0x10] sm:$0xf]
      %v1623 = vld [vmem:[%s233 + $0x14] sm:$0xf]
      %v1624 = vld [vmem:[%s233 + $0x18] sm:$0xf]
      %v1625 = vld [vmem:[%s233 + $0x1c] sm:$0xf]
      %v1626 = vld [vmem:[%s233 + $0x20] sm:$0xf]
      %v1627 = vld [vmem:[%s233 + $0x24] sm:$0xf]
      %v1628 = vld [vmem:[%s233 + $0x28] sm:$0xf]
      %v1629 = vld [vmem:[%s233 + $0x2c] sm:$0x1]
      %s1630 = scalar_lea.vmem %s237, 384
      %v1631 = vld [vmem:[%s1630] sm:$0xf]
      %v1632 = vld [vmem:[%s1630 + $0x4] sm:$0xf]
      %v1633 = vld [vmem:[%s1630 + $0x8] sm:$0xf]
      %v1634 = vld [vmem:[%s1630 + $0xc] sm:$0xf]
      %v1635 = vld [vmem:[%s1630 + $0x10] sm:$0xf]
      %v1636 = vld [vmem:[%s1630 + $0x14] sm:$0xf]
      %v1637 = vld [vmem:[%s1630 + $0x18] sm:$0xf]
      %v1638 = vld [vmem:[%s1630 + $0x1c] sm:$0xf]
      %v1639 = vld [vmem:[%s1630 + $0x20] sm:$0xf]
      %v1640 = vld [vmem:[%s1630 + $0x24] sm:$0xf]
      %v1641 = vld [vmem:[%s1630 + $0x28] sm:$0xf]
      %v1642 = vld [vmem:[%s1630 + $0x2c] sm:$0xf]
      %v1643 = vld [vmem:[%s1630 + $0x30] sm:$0xf]
      %v1644 = vld [vmem:[%s1630 + $0x34] sm:$0xf]
      %v1645 = vld [vmem:[%s1630 + $0x38] sm:$0xf]
      %v1646 = vld [vmem:[%s1630 + $0x3c] sm:$0xf]
      %v1658 = vunpack.c.l.b16 %v1619
      %v1659 = vunpack.c.l.b16 %v1620
      %v1660 = vunpack.c.l.b16 %v1621
      %v1661 = vunpack.c.l.b16 %v1622
      %v1662 = vunpack.c.l.b16 %v1623
      %v1663 = vunpack.c.l.b16 %v1624
      %v1664 = vunpack.c.l.b16 %v1625
      %v1665 = vunpack.c.l.b16 %v1626
      %v1666 = vunpack.c.l.b16 %v1627
      %v1667 = vunpack.c.l.b16 %v1628
      %v1668 = vunpack.c.l.b16 %v1629
      %v1669 = vpack.c.b16 %v1659, %v1658
      %v1670 = vpack.c.b16 %v1661, %v1660
      %v1671 = vpack.c.b16 %v1663, %v1662
      %v1672 = vpack.c.b16 %v1665, %v1664
      %v1673 = vpack.c.b16 %v1667, %v1666
      %v1674 = vpack.c.b16 %v1668, %v1668
      %v1676 = vshrl.u32 %v1669, 16
      %v1678 = vshll.u32 %v1669, 16
      %v1680 = vrot.slane %v1678, 1
      %v1681 = vor.u32 %v1676, %v1680
      %v1683 = vshll.u32 %v1670, 16
      %v1685 = vrot.slane %v1683, 1
      %v1686 = vsel %vm746, %v1681, %v1685
      %v1687 = vshrl.u32 %v1670, 16
      %v1689 = vor.u32 %v1687, %v1685
      %v1691 = vshll.u32 %v1671, 16
      %v1693 = vrot.slane %v1691, 1
      %v1694 = vsel %vm746, %v1689, %v1693
      %v1695 = vshrl.u32 %v1671, 16
      %v1697 = vor.u32 %v1695, %v1693
      %v1699 = vshll.u32 %v1672, 16
      %v1701 = vrot.slane %v1699, 1
      %v1702 = vsel %vm746, %v1697, %v1701
      %v1703 = vshrl.u32 %v1672, 16
      %v1705 = vor.u32 %v1703, %v1701
      %v1707 = vshll.u32 %v1673, 16
      %v1709 = vrot.slane %v1707, 1
      %v1710 = vsel %vm746, %v1705, %v1709
      %v1711 = vshrl.u32 %v1673, 16
      %v1713 = vor.u32 %v1711, %v1709
      %v1715 = vshll.u32 %v1674, 16
      %v1717 = vrot.slane %v1715, 1
      %v1718 = vsel %vm746, %v1713, %v1717
      %v1740 = vunpack.c.l.b16 %v1631
      %v1741 = vunpack.c.l.b16 %v1632
      %v1742 = vunpack.c.l.b16 %v1633
      %v1743 = vunpack.c.l.b16 %v1634
      %v1744 = vunpack.c.l.b16 %v1635
      %v1745 = vunpack.c.l.b16 %v1636
      %v1746 = vunpack.c.l.b16 %v1637
      %v1747 = vunpack.c.l.b16 %v1638
      %v1748 = vunpack.c.l.b16 %v1639
      %v1749 = vunpack.c.l.b16 %v1640
      %v1750 = vunpack.c.l.b16 %v1641
      %v1751 = vunpack.c.l.b16 %v1642
      %v1752 = vunpack.c.l.b16 %v1643
      %v1753 = vunpack.c.l.b16 %v1644
      %v1754 = vunpack.c.l.b16 %v1645
      %v1755 = vunpack.c.l.b16 %v1646
      %v1756 = vpack.c.b16 %v1741, %v1740
      %v1757 = vpack.c.b16 %v1743, %v1742
      %v1758 = vpack.c.b16 %v1745, %v1744
      %v1759 = vpack.c.b16 %v1747, %v1746
      %v1760 = vpack.c.b16 %v1749, %v1748
      %v1761 = vpack.c.b16 %v1751, %v1750
      %v1762 = vpack.c.b16 %v1753, %v1752
      %v1763 = vpack.c.b16 %v1755, %v1754
      %1772 = vmatprep.subr.bf16.mxu0 0
      %1773 = vmatpush1.bf16.msra.mxu0 %v1763
      %1774 = vmatprep.subr.bf16.mxu0 0
      %1775 = vmatpush1.bf16.msra.mxu0 %v1762
      %1776 = vmatprep.subr.bf16.mxu0 0
      %1777 = vmatpush1.bf16.msra.mxu0 %v1761
      %1778 = vmatprep.subr.bf16.mxu0 0
      %1779 = vmatpush1.bf16.msra.mxu0 %v1760
      %1780 = vmatprep.subr.bf16.mxu0 0
      %1781 = vmatpush1.bf16.msra.mxu0 %v1759
      %1782 = vmatprep.subr.bf16.mxu0 0
      %1783 = vmatpush1.bf16.msra.mxu0 %v1758
      %1784 = vmatprep.subr.bf16.mxu0 0
      %1785 = vmatpush1.bf16.msra.mxu0 %v1757
      %1786 = vmatprep.subr.bf16.mxu0 0
      %1787 = vmatpush1.bf16.msra.mxu0 %v1756
      %1788 = vmatprep.subr.bf16.mxu0 0
      %1789 = vmatpush2.bf16.msra.mxu0 0
      %1790 = vmatprep.subr.bf16.mxu0 0
      %1791 = vmatpush2.bf16.msra.mxu0 0
      %1792 = vmatprep.subr.bf16.mxu0 0
      %1793 = vmatpush2.bf16.msra.mxu0 0
      %1794 = vmatprep.subr.bf16.mxu0 0
      %1795 = vmatpush2.bf16.msra.mxu0 0
      %1796 = vmatprep.subr.bf16.mxu0 0
      %1797 = vmatpush2.bf16.msra.mxu0 0
      %1798 = vmatprep.subr.bf16.mxu0 0
      %1799 = vmatpush2.bf16.msra.mxu0 0
      %1800 = vmatprep.subr.bf16.mxu0 0
      %1801 = vmatpush2.bf16.msra.mxu0 0
      %1802 = vmatprep.subr.bf16.mxu0 0
      %1803 = vmatpush2.bf16.msra.mxu0 0
      %1804 = vmatprep.mubr.bf16.mxu0 0
      %1805 = vmatmul.mubr.bf16.gmra.mxu0 %v1686
      %v1806 = vpop.f32.mrf.mxu0
      %v1807 = vadd.f32 0.0, %v1806
      %v1808 = vpop.f32.mrf.mxu0
      %v1809 = vpop.f32.mrf.mxu0
      %v1810 = vadd.f32 0.0, %v1809
      %v1811 = vpop.f32.mrf.mxu0
      %1812 = vmatprep.mubr.bf16.mxu0 0
      %1813 = vmatmul.mubr.bf16.gmra.mxu0 %v1694
      %v1814 = vpop.f32.mrf.mxu0
      %v1815 = vadd.f32 0.0, %v1814
      %v1816 = vpop.f32.mrf.mxu0
      %v1817 = vpop.f32.mrf.mxu0
      %v1818 = vadd.f32 0.0, %v1817
      %v1819 = vpop.f32.mrf.mxu0
      %1820 = vmatprep.mubr.bf16.mxu0 0
      %1821 = vmatmul.mubr.bf16.gmra.mxu0 %v1702
      %v1822 = vpop.f32.mrf.mxu0
      %v1823 = vadd.f32 0.0, %v1822
      %v1824 = vpop.f32.mrf.mxu0
      %v1825 = vpop.f32.mrf.mxu0
      %v1826 = vadd.f32 0.0, %v1825
      %v1827 = vpop.f32.mrf.mxu0
      %1828 = vmatprep.mubr.bf16.mxu0 0
      %1829 = vmatmul.mubr.bf16.gmra.mxu0 %v1710
      %v1830 = vpop.f32.mrf.mxu0
      %v1831 = vadd.f32 0.0, %v1830
      %v1832 = vpop.f32.mrf.mxu0
      %v1833 = vpop.f32.mrf.mxu0
      %v1834 = vadd.f32 0.0, %v1833
      %v1835 = vpop.f32.mrf.mxu0
      %1836 = vmatprep.mubr.bf16.mxu0 0
      %1837 = vmatmul.mubr.bf16.gmra.mxu0 %v1718
      %v1838 = vpop.f32.mrf.mxu0
      %v1839 = vadd.f32 0.0, %v1838
      %v1840 = vpop.f32.mrf.mxu0
      %v1841 = vpop.f32.mrf.mxu0
      %v1842 = vadd.f32 0.0, %v1841
      %v1843 = vpop.f32.mrf.mxu0
      %1844 = vdwg.mxu0
      %v1845 = vadd.f32 %v1609, %v1807
      %v1846 = vadd.f32 %v1610, %v1810
      %v1847 = vadd.f32 %v1611, %v1815
      %v1848 = vadd.f32 %v1612, %v1818
      %v1849 = vadd.f32 %v1613, %v1823
      %v1850 = vadd.f32 %v1614, %v1826
      %v1851 = vadd.f32 %v1615, %v1831
      %v1852 = vadd.f32 %v1616, %v1834
      %v1853 = vadd.f32 %v1617, %v1839
      %v1854 = vadd.f32 %v1618, %v1842
      %1855 = vst [vmem:[#allocation2] sm:$0xff] %v1845
      %1856 = vst [vmem:[#allocation2 + $0x8] sm:$0xff] %v1846
      %1857 = vst [vmem:[#allocation2 + $0x10] sm:$0xff] %v1847
      %1858 = vst [vmem:[#allocation2 + $0x18] sm:$0xff] %v1848
      %1859 = vst [vmem:[#allocation2 + $0x20] sm:$0xff] %v1849
      %1860 = vst [vmem:[#allocation2 + $0x28] sm:$0xff] %v1850
      %1861 = vst [vmem:[#allocation2 + $0x30] sm:$0xff] %v1851
      %1862 = vst [vmem:[#allocation2 + $0x38] sm:$0xff] %v1852
      %1863 = vst [vmem:[#allocation2 + $0x40] sm:$0xff] %v1853
      %1864 = vst [vmem:[#allocation2 + $0x48] sm:$0xff] %v1854
      %v1865 = vld [vmem:[#allocation2] sm:$0xff]
      %v1866 = vld [vmem:[#allocation2 + $0x8] sm:$0xff]
      %v1867 = vld [vmem:[#allocation2 + $0x10] sm:$0xff]
      %v1868 = vld [vmem:[#allocation2 + $0x18] sm:$0xff]
      %v1869 = vld [vmem:[#allocation2 + $0x20] sm:$0xff]
      %v1870 = vld [vmem:[#allocation2 + $0x28] sm:$0xff]
      %v1871 = vld [vmem:[#allocation2 + $0x30] sm:$0xff]
      %v1872 = vld [vmem:[#allocation2 + $0x38] sm:$0xff]
      %v1873 = vld [vmem:[#allocation2 + $0x40] sm:$0xff]
      %v1874 = vld [vmem:[#allocation2 + $0x48] sm:$0xff]
      %v1875 = vld [vmem:[%s233 + $0x34] sm:$0xf]
      %v1876 = vld [vmem:[%s233 + $0x38] sm:$0xf]
      %v1877 = vld [vmem:[%s233 + $0x3c] sm:$0xf]
      %v1878 = vld [vmem:[%s233 + $0x40] sm:$0xf]
      %v1879 = vld [vmem:[%s233 + $0x44] sm:$0xf]
      %v1880 = vld [vmem:[%s233 + $0x48] sm:$0xf]
      %v1881 = vld [vmem:[%s233 + $0x4c] sm:$0xf]
      %v1882 = vld [vmem:[%s233 + $0x50] sm:$0xf]
      %v1883 = vld [vmem:[%s233 + $0x54] sm:$0xf]
      %v1884 = vld [vmem:[%s233 + $0x58] sm:$0xf]
      %v1885 = vld [vmem:[%s233 + $0x5c] sm:$0x1]
      %s1886 = scalar_lea.vmem %s237, 448
      %v1887 = vld [vmem:[%s1886] sm:$0xf]
      %v1888 = vld [vmem:[%s1886 + $0x4] sm:$0xf]
      %v1889 = vld [vmem:[%s1886 + $0x8] sm:$0xf]
      %v1890 = vld [vmem:[%s1886 + $0xc] sm:$0xf]
      %v1891 = vld [vmem:[%s1886 + $0x10] sm:$0xf]
      %v1892 = vld [vmem:[%s1886 + $0x14] sm:$0xf]
      %v1893 = vld [vmem:[%s1886 + $0x18] sm:$0xf]
      %v1894 = vld [vmem:[%s1886 + $0x1c] sm:$0xf]
      %v1895 = vld [vmem:[%s1886 + $0x20] sm:$0xf]
      %v1896 = vld [vmem:[%s1886 + $0x24] sm:$0xf]
      %v1897 = vld [vmem:[%s1886 + $0x28] sm:$0xf]
      %v1898 = vld [vmem:[%s1886 + $0x2c] sm:$0xf]
      %v1899 = vld [vmem:[%s1886 + $0x30] sm:$0xf]
      %v1900 = vld [vmem:[%s1886 + $0x34] sm:$0xf]
      %v1901 = vld [vmem:[%s1886 + $0x38] sm:$0xf]
      %v1902 = vld [vmem:[%s1886 + $0x3c] sm:$0xf]
      %v1914 = vunpack.c.l.b16 %v1875
      %v1915 = vunpack.c.l.b16 %v1876
      %v1916 = vunpack.c.l.b16 %v1877
      %v1917 = vunpack.c.l.b16 %v1878
      %v1918 = vunpack.c.l.b16 %v1879
      %v1919 = vunpack.c.l.b16 %v1880
      %v1920 = vunpack.c.l.b16 %v1881
      %v1921 = vunpack.c.l.b16 %v1882
      %v1922 = vunpack.c.l.b16 %v1883
      %v1923 = vunpack.c.l.b16 %v1884
      %v1924 = vunpack.c.l.b16 %v1885
      %v1925 = vpack.c.b16 %v1915, %v1914
      %v1926 = vpack.c.b16 %v1917, %v1916
      %v1927 = vpack.c.b16 %v1919, %v1918
      %v1928 = vpack.c.b16 %v1921, %v1920
      %v1929 = vpack.c.b16 %v1923, %v1922
      %v1930 = vpack.c.b16 %v1924, %v1924
      %v1932 = vshrl.u32 %v1925, 16
      %v1934 = vshll.u32 %v1925, 16
      %v1936 = vrot.slane %v1934, 1
      %v1937 = vor.u32 %v1932, %v1936
      %v1939 = vshll.u32 %v1926, 16
      %v1941 = vrot.slane %v1939, 1
      %v1942 = vsel %vm746, %v1937, %v1941
      %v1943 = vshrl.u32 %v1926, 16
      %v1945 = vor.u32 %v1943, %v1941
      %v1947 = vshll.u32 %v1927, 16
      %v1949 = vrot.slane %v1947, 1
      %v1950 = vsel %vm746, %v1945, %v1949
      %v1951 = vshrl.u32 %v1927, 16
      %v1953 = vor.u32 %v1951, %v1949
      %v1955 = vshll.u32 %v1928, 16
      %v1957 = vrot.slane %v1955, 1
      %v1958 = vsel %vm746, %v1953, %v1957
      %v1959 = vshrl.u32 %v1928, 16
      %v1961 = vor.u32 %v1959, %v1957
      %v1963 = vshll.u32 %v1929, 16
      %v1965 = vrot.slane %v1963, 1
      %v1966 = vsel %vm746, %v1961, %v1965
      %v1967 = vshrl.u32 %v1929, 16
      %v1969 = vor.u32 %v1967, %v1965
      %v1971 = vshll.u32 %v1930, 16
      %v1973 = vrot.slane %v1971, 1
      %v1974 = vsel %vm746, %v1969, %v1973
      %v1996 = vunpack.c.l.b16 %v1887
      %v1997 = vunpack.c.l.b16 %v1888
      %v1998 = vunpack.c.l.b16 %v1889
      %v1999 = vunpack.c.l.b16 %v1890
      %v2000 = vunpack.c.l.b16 %v1891
      %v2001 = vunpack.c.l.b16 %v1892
      %v2002 = vunpack.c.l.b16 %v1893
      %v2003 = vunpack.c.l.b16 %v1894
      %v2004 = vunpack.c.l.b16 %v1895
      %v2005 = vunpack.c.l.b16 %v1896
      %v2006 = vunpack.c.l.b16 %v1897
      %v2007 = vunpack.c.l.b16 %v1898
      %v2008 = vunpack.c.l.b16 %v1899
      %v2009 = vunpack.c.l.b16 %v1900
      %v2010 = vunpack.c.l.b16 %v1901
      %v2011 = vunpack.c.l.b16 %v1902
      %v2012 = vpack.c.b16 %v1997, %v1996
      %v2013 = vpack.c.b16 %v1999, %v1998
      %v2014 = vpack.c.b16 %v2001, %v2000
      %v2015 = vpack.c.b16 %v2003, %v2002
      %v2016 = vpack.c.b16 %v2005, %v2004
      %v2017 = vpack.c.b16 %v2007, %v2006
      %v2018 = vpack.c.b16 %v2009, %v2008
      %v2019 = vpack.c.b16 %v2011, %v2010
      %2028 = vmatprep.subr.bf16.mxu0 0
      %2029 = vmatpush1.bf16.msra.mxu0 %v2019
      %2030 = vmatprep.subr.bf16.mxu0 0
      %2031 = vmatpush1.bf16.msra.mxu0 %v2018
      %2032 = vmatprep.subr.bf16.mxu0 0
      %2033 = vmatpush1.bf16.msra.mxu0 %v2017
      %2034 = vmatprep.subr.bf16.mxu0 0
      %2035 = vmatpush1.bf16.msra.mxu0 %v2016
      %2036 = vmatprep.subr.bf16.mxu0 0
      %2037 = vmatpush1.bf16.msra.mxu0 %v2015
      %2038 = vmatprep.subr.bf16.mxu0 0
      %2039 = vmatpush1.bf16.msra.mxu0 %v2014
      %2040 = vmatprep.subr.bf16.mxu0 0
      %2041 = vmatpush1.bf16.msra.mxu0 %v2013
      %2042 = vmatprep.subr.bf16.mxu0 0
      %2043 = vmatpush1.bf16.msra.mxu0 %v2012
      %2044 = vmatprep.subr.bf16.mxu0 0
      %2045 = vmatpush2.bf16.msra.mxu0 0
      %2046 = vmatprep.subr.bf16.mxu0 0
      %2047 = vmatpush2.bf16.msra.mxu0 0
      %2048 = vmatprep.subr.bf16.mxu0 0
      %2049 = vmatpush2.bf16.msra.mxu0 0
      %2050 = vmatprep.subr.bf16.mxu0 0
      %2051 = vmatpush2.bf16.msra.mxu0 0
      %2052 = vmatprep.subr.bf16.mxu0 0
      %2053 = vmatpush2.bf16.msra.mxu0 0
      %2054 = vmatprep.subr.bf16.mxu0 0
      %2055 = vmatpush2.bf16.msra.mxu0 0
      %2056 = vmatprep.subr.bf16.mxu0 0
      %2057 = vmatpush2.bf16.msra.mxu0 0
      %2058 = vmatprep.subr.bf16.mxu0 0
      %2059 = vmatpush2.bf16.msra.mxu0 0
      %2060 = vmatprep.mubr.bf16.mxu0 0
      %2061 = vmatmul.mubr.bf16.gmra.mxu0 %v1942
      %v2062 = vpop.f32.mrf.mxu0
      %v2063 = vadd.f32 0.0, %v2062
      %v2064 = vpop.f32.mrf.mxu0
      %v2065 = vpop.f32.mrf.mxu0
      %v2066 = vadd.f32 0.0, %v2065
      %v2067 = vpop.f32.mrf.mxu0
      %2068 = vmatprep.mubr.bf16.mxu0 0
      %2069 = vmatmul.mubr.bf16.gmra.mxu0 %v1950
      %v2070 = vpop.f32.mrf.mxu0
      %v2071 = vadd.f32 0.0, %v2070
      %v2072 = vpop.f32.mrf.mxu0
      %v2073 = vpop.f32.mrf.mxu0
      %v2074 = vadd.f32 0.0, %v2073
      %v2075 = vpop.f32.mrf.mxu0
      %2076 = vmatprep.mubr.bf16.mxu0 0
      %2077 = vmatmul.mubr.bf16.gmra.mxu0 %v1958
      %v2078 = vpop.f32.mrf.mxu0
      %v2079 = vadd.f32 0.0, %v2078
      %v2080 = vpop.f32.mrf.mxu0
      %v2081 = vpop.f32.mrf.mxu0
      %v2082 = vadd.f32 0.0, %v2081
      %v2083 = vpop.f32.mrf.mxu0
      %2084 = vmatprep.mubr.bf16.mxu0 0
      %2085 = vmatmul.mubr.bf16.gmra.mxu0 %v1966
      %v2086 = vpop.f32.mrf.mxu0
      %v2087 = vadd.f32 0.0, %v2086
      %v2088 = vpop.f32.mrf.mxu0
      %v2089 = vpop.f32.mrf.mxu0
      %v2090 = vadd.f32 0.0, %v2089
      %v2091 = vpop.f32.mrf.mxu0
      %2092 = vmatprep.mubr.bf16.mxu0 0
      %2093 = vmatmul.mubr.bf16.gmra.mxu0 %v1974
      %v2094 = vpop.f32.mrf.mxu0
      %v2095 = vadd.f32 0.0, %v2094
      %v2096 = vpop.f32.mrf.mxu0
      %v2097 = vpop.f32.mrf.mxu0
      %v2098 = vadd.f32 0.0, %v2097
      %v2099 = vpop.f32.mrf.mxu0
      %2100 = vdwg.mxu0
      %v2101 = vadd.f32 %v1865, %v2063
      %v2102 = vadd.f32 %v1866, %v2066
      %v2103 = vadd.f32 %v1867, %v2071
      %v2104 = vadd.f32 %v1868, %v2074
      %v2105 = vadd.f32 %v1869, %v2079
      %v2106 = vadd.f32 %v1870, %v2082
      %v2107 = vadd.f32 %v1871, %v2087
      %v2108 = vadd.f32 %v1872, %v2090
      %v2109 = vadd.f32 %v1873, %v2095
      %v2110 = vadd.f32 %v1874, %v2098
      %2111 = vst [vmem:[#allocation2] sm:$0xff] %v2101
      %2112 = vst [vmem:[#allocation2 + $0x8] sm:$0xff] %v2102
      %2113 = vst [vmem:[#allocation2 + $0x10] sm:$0xff] %v2103
      %2114 = vst [vmem:[#allocation2 + $0x18] sm:$0xff] %v2104
      %2115 = vst [vmem:[#allocation2 + $0x20] sm:$0xff] %v2105
      %2116 = vst [vmem:[#allocation2 + $0x28] sm:$0xff] %v2106
      %2117 = vst [vmem:[#allocation2 + $0x30] sm:$0xff] %v2107
      %2118 = vst [vmem:[#allocation2 + $0x38] sm:$0xff] %v2108
      %2119 = vst [vmem:[#allocation2 + $0x40] sm:$0xff] %v2109
      %2120 = vst [vmem:[#allocation2 + $0x48] sm:$0xff] %v2110
      %v2121 = vld [vmem:[#allocation2] sm:$0xff]
      %v2122 = vld [vmem:[#allocation2 + $0x8] sm:$0xff]
      %v2123 = vld [vmem:[#allocation2 + $0x10] sm:$0xff]
      %v2124 = vld [vmem:[#allocation2 + $0x18] sm:$0xff]
      %v2125 = vld [vmem:[#allocation2 + $0x20] sm:$0xff]
      %v2126 = vld [vmem:[#allocation2 + $0x28] sm:$0xff]
      %v2127 = vld [vmem:[#allocation2 + $0x30] sm:$0xff]
      %v2128 = vld [vmem:[#allocation2 + $0x38] sm:$0xff]
      %v2129 = vld [vmem:[#allocation2 + $0x40] sm:$0xff]
      %v2130 = vld [vmem:[#allocation2 + $0x48] sm:$0xff]
      %v2131 = vld [vmem:[%s233 + $0x4] sm:$0xe]
      %v2132 = vld [vmem:[%s233 + $0x8] sm:$0xf]
      %v2133 = vld [vmem:[%s233 + $0xc] sm:$0xf]
      %v2134 = vld [vmem:[%s233 + $0x10] sm:$0xf]
      %v2135 = vld [vmem:[%s233 + $0x14] sm:$0xf]
      %v2136 = vld [vmem:[%s233 + $0x18] sm:$0xf]
      %v2137 = vld [vmem:[%s233 + $0x1c] sm:$0xf]
      %v2138 = vld [vmem:[%s233 + $0x20] sm:$0xf]
      %v2139 = vld [vmem:[%s233 + $0x24] sm:$0xf]
      %v2140 = vld [vmem:[%s233 + $0x28] sm:$0xf]
      %v2141 = vld [vmem:[%s233 + $0x2c] sm:$0x1]
      %s2142 = scalar_lea.vmem %s237, 512
      %v2143 = vld [vmem:[%s2142] sm:$0xf]
      %v2144 = vld [vmem:[%s2142 + $0x4] sm:$0xf]
      %v2145 = vld [vmem:[%s2142 + $0x8] sm:$0xf]
      %v2146 = vld [vmem:[%s2142 + $0xc] sm:$0xf]
      %v2147 = vld [vmem:[%s2142 + $0x10] sm:$0xf]
      %v2148 = vld [vmem:[%s2142 + $0x14] sm:$0xf]
      %v2149 = vld [vmem:[%s2142 + $0x18] sm:$0xf]
      %v2150 = vld [vmem:[%s2142 + $0x1c] sm:$0xf]
      %v2151 = vld [vmem:[%s2142 + $0x20] sm:$0xf]
      %v2152 = vld [vmem:[%s2142 + $0x24] sm:$0xf]
      %v2153 = vld [vmem:[%s2142 + $0x28] sm:$0xf]
      %v2154 = vld [vmem:[%s2142 + $0x2c] sm:$0xf]
      %v2155 = vld [vmem:[%s2142 + $0x30] sm:$0xf]
      %v2156 = vld [vmem:[%s2142 + $0x34] sm:$0xf]
      %v2157 = vld [vmem:[%s2142 + $0x38] sm:$0xf]
      %v2158 = vld [vmem:[%s2142 + $0x3c] sm:$0xf]
      %v2170 = vunpack.c.l.b16 %v2131
      %v2171 = vunpack.c.l.b16 %v2132
      %v2172 = vunpack.c.l.b16 %v2133
      %v2173 = vunpack.c.l.b16 %v2134
      %v2174 = vunpack.c.l.b16 %v2135
      %v2175 = vunpack.c.l.b16 %v2136
      %v2176 = vunpack.c.l.b16 %v2137
      %v2177 = vunpack.c.l.b16 %v2138
      %v2178 = vunpack.c.l.b16 %v2139
      %v2179 = vunpack.c.l.b16 %v2140
      %v2180 = vunpack.c.l.b16 %v2141
      %v2181 = vpack.c.b16 %v2171, %v2170
      %v2182 = vpack.c.b16 %v2173, %v2172
      %v2183 = vpack.c.b16 %v2175, %v2174
      %v2184 = vpack.c.b16 %v2177, %v2176
      %v2185 = vpack.c.b16 %v2179, %v2178
      %v2186 = vpack.c.b16 %v2180, %v2180
      %vm2187 = vcmask 1046528
      %v2188 = vrot.slane %v2181, 1
      %v2189 = vrot.slane %v2182, 1
      %v2190 = vsel %vm2187, %v2188, %v2189
      %v2191 = vrot.slane %v2183, 1
      %v2192 = vsel %vm2187, %v2189, %v2191
      %v2193 = vrot.slane %v2184, 1
      %v2194 = vsel %vm2187, %v2191, %v2193
      %v2195 = vrot.slane %v2185, 1
      %v2196 = vsel %vm2187, %v2193, %v2195
      %v2197 = vrot.slane %v2186, 1
      %v2198 = vsel %vm2187, %v2195, %v2197
      %v2220 = vunpack.c.l.b16 %v2143
      %v2221 = vunpack.c.l.b16 %v2144
      %v2222 = vunpack.c.l.b16 %v2145
      %v2223 = vunpack.c.l.b16 %v2146
      %v2224 = vunpack.c.l.b16 %v2147
      %v2225 = vunpack.c.l.b16 %v2148
      %v2226 = vunpack.c.l.b16 %v2149
      %v2227 = vunpack.c.l.b16 %v2150
      %v2228 = vunpack.c.l.b16 %v2151
      %v2229 = vunpack.c.l.b16 %v2152
      %v2230 = vunpack.c.l.b16 %v2153
      %v2231 = vunpack.c.l.b16 %v2154
      %v2232 = vunpack.c.l.b16 %v2155
      %v2233 = vunpack.c.l.b16 %v2156
      %v2234 = vunpack.c.l.b16 %v2157
      %v2235 = vunpack.c.l.b16 %v2158
      %v2236 = vpack.c.b16 %v2221, %v2220
      %v2237 = vpack.c.b16 %v2223, %v2222
      %v2238 = vpack.c.b16 %v2225, %v2224
      %v2239 = vpack.c.b16 %v2227, %v2226
      %v2240 = vpack.c.b16 %v2229, %v2228
      %v2241 = vpack.c.b16 %v2231, %v2230
      %v2242 = vpack.c.b16 %v2233, %v2232
      %v2243 = vpack.c.b16 %v2235, %v2234
      %2252 = vmatprep.subr.bf16.mxu0 0
      %2253 = vmatpush1.bf16.msra.mxu0 %v2243
      %2254 = vmatprep.subr.bf16.mxu0 0
      %2255 = vmatpush1.bf16.msra.mxu0 %v2242
      %2256 = vmatprep.subr.bf16.mxu0 0
      %2257 = vmatpush1.bf16.msra.mxu0 %v2241
      %2258 = vmatprep.subr.bf16.mxu0 0
      %2259 = vmatpush1.bf16.msra.mxu0 %v2240
      %2260 = vmatprep.subr.bf16.mxu0 0
      %2261 = vmatpush1.bf16.msra.mxu0 %v2239
      %2262 = vmatprep.subr.bf16.mxu0 0
      %2263 = vmatpush1.bf16.msra.mxu0 %v2238
      %2264 = vmatprep.subr.bf16.mxu0 0
      %2265 = vmatpush1.bf16.msra.mxu0 %v2237
      %2266 = vmatprep.subr.bf16.mxu0 0
      %2267 = vmatpush1.bf16.msra.mxu0 %v2236
      %2268 = vmatprep.subr.bf16.mxu0 0
      %2269 = vmatpush2.bf16.msra.mxu0 0
      %2270 = vmatprep.subr.bf16.mxu0 0
      %2271 = vmatpush2.bf16.msra.mxu0 0
      %2272 = vmatprep.subr.bf16.mxu0 0
      %2273 = vmatpush2.bf16.msra.mxu0 0
      %2274 = vmatprep.subr.bf16.mxu0 0
      %2275 = vmatpush2.bf16.msra.mxu0 0
      %2276 = vmatprep.subr.bf16.mxu0 0
      %2277 = vmatpush2.bf16.msra.mxu0 0
      %2278 = vmatprep.subr.bf16.mxu0 0
      %2279 = vmatpush2.bf16.msra.mxu0 0
      %2280 = vmatprep.subr.bf16.mxu0 0
      %2281 = vmatpush2.bf16.msra.mxu0 0
      %2282 = vmatprep.subr.bf16.mxu0 0
      %2283 = vmatpush2.bf16.msra.mxu0 0
      %2284 = vmatprep.mubr.bf16.mxu0 0
      %2285 = vmatmul.mubr.bf16.gmra.mxu0 %v2190
      %v2286 = vpop.f32.mrf.mxu0
      %v2287 = vadd.f32 0.0, %v2286
      %v2288 = vpop.f32.mrf.mxu0
      %v2289 = vpop.f32.mrf.mxu0
      %v2290 = vadd.f32 0.0, %v2289
      %v2291 = vpop.f32.mrf.mxu0
      %2292 = vmatprep.mubr.bf16.mxu0 0
      %2293 = vmatmul.mubr.bf16.gmra.mxu0 %v2192
      %v2294 = vpop.f32.mrf.mxu0
      %v2295 = vadd.f32 0.0, %v2294
      %v2296 = vpop.f32.mrf.mxu0
      %v2297 = vpop.f32.mrf.mxu0
      %v2298 = vadd.f32 0.0, %v2297
      %v2299 = vpop.f32.mrf.mxu0
      %2300 = vmatprep.mubr.bf16.mxu0 0
      %2301 = vmatmul.mubr.bf16.gmra.mxu0 %v2194
      %v2302 = vpop.f32.mrf.mxu0
      %v2303 = vadd.f32 0.0, %v2302
      %v2304 = vpop.f32.mrf.mxu0
      %v2305 = vpop.f32.mrf.mxu0
      %v2306 = vadd.f32 0.0, %v2305
      %v2307 = vpop.f32.mrf.mxu0
      %2308 = vmatprep.mubr.bf16.mxu0 0
      %2309 = vmatmul.mubr.bf16.gmra.mxu0 %v2196
      %v2310 = vpop.f32.mrf.mxu0
      %v2311 = vadd.f32 0.0, %v2310
      %v2312 = vpop.f32.mrf.mxu0
      %v2313 = vpop.f32.mrf.mxu0
      %v2314 = vadd.f32 0.0, %v2313
      %v2315 = vpop.f32.mrf.mxu0
      %2316 = vmatprep.mubr.bf16.mxu0 0
      %2317 = vmatmul.mubr.bf16.gmra.mxu0 %v2198
      %v2318 = vpop.f32.mrf.mxu0
      %v2319 = vadd.f32 0.0, %v2318
      %v2320 = vpop.f32.mrf.mxu0
      %v2321 = vpop.f32.mrf.mxu0
      %v2322 = vadd.f32 0.0, %v2321
      %v2323 = vpop.f32.mrf.mxu0
      %2324 = vdwg.mxu0
      %v2325 = vadd.f32 %v2121, %v2287
      %v2326 = vadd.f32 %v2122, %v2290
      %v2327 = vadd.f32 %v2123, %v2295
      %v2328 = vadd.f32 %v2124, %v2298
      %v2329 = vadd.f32 %v2125, %v2303
      %v2330 = vadd.f32 %v2126, %v2306
      %v2331 = vadd.f32 %v2127, %v2311
      %v2332 = vadd.f32 %v2128, %v2314
      %v2333 = vadd.f32 %v2129, %v2319
      %v2334 = vadd.f32 %v2130, %v2322
      %2335 = vst [vmem:[#allocation2] sm:$0xff] %v2325
      %2336 = vst [vmem:[#allocation2 + $0x8] sm:$0xff] %v2326
      %2337 = vst [vmem:[#allocation2 + $0x10] sm:$0xff] %v2327
      %2338 = vst [vmem:[#allocation2 + $0x18] sm:$0xff] %v2328
      %2339 = vst [vmem:[#allocation2 + $0x20] sm:$0xff] %v2329
      %2340 = vst [vmem:[#allocation2 + $0x28] sm:$0xff] %v2330
      %2341 = vst [vmem:[#allocation2 + $0x30] sm:$0xff] %v2331
      %2342 = vst [vmem:[#allocation2 + $0x38] sm:$0xff] %v2332
      %2343 = vst [vmem:[#allocation2 + $0x40] sm:$0xff] %v2333
      %2344 = vst [vmem:[#allocation2 + $0x48] sm:$0xff] %v2334
      %v2345 = vld [vmem:[#allocation2] sm:$0xff]
      %v2346 = vld [vmem:[#allocation2 + $0x8] sm:$0xff]
      %v2347 = vld [vmem:[#allocation2 + $0x10] sm:$0xff]
      %v2348 = vld [vmem:[#allocation2 + $0x18] sm:$0xff]
      %v2349 = vld [vmem:[#allocation2 + $0x20] sm:$0xff]
      %v2350 = vld [vmem:[#allocation2 + $0x28] sm:$0xff]
      %v2351 = vld [vmem:[#allocation2 + $0x30] sm:$0xff]
      %v2352 = vld [vmem:[#allocation2 + $0x38] sm:$0xff]
      %v2353 = vld [vmem:[#allocation2 + $0x40] sm:$0xff]
      %v2354 = vld [vmem:[#allocation2 + $0x48] sm:$0xff]
      %v2355 = vld [vmem:[%s240] sm:$0x1]
      %v2357 = vlaneseq
      %v2358 = vshrl.u32 %v2357, 7
      %v2359 = vsub.s32 0, %v2358
      %v2360 = vrot.slane %v2355, %v2359
      %v2362 = vadd.f32 %v2345, %v2360
      %v2363 = vadd.f32 %v2346, %v2360
      %v2364 = vadd.f32 %v2347, %v2360
      %v2365 = vadd.f32 %v2348, %v2360
      %v2366 = vadd.f32 %v2349, %v2360
      %v2367 = vadd.f32 %v2350, %v2360
      %v2368 = vadd.f32 %v2351, %v2360
      %v2369 = vadd.f32 %v2352, %v2360
      %v2370 = vadd.f32 %v2353, %v2360
      %v2371 = vadd.f32 %v2354, %v2360
      %v2372 = vmax.f32 %v2362, 0.0
      %v2373 = vmax.f32 %v2363, 0.0
      %v2374 = vmax.f32 %v2364, 0.0
      %v2375 = vmax.f32 %v2365, 0.0
      %v2376 = vmax.f32 %v2366, 0.0
      %v2377 = vmax.f32 %v2367, 0.0
      %v2378 = vmax.f32 %v2368, 0.0
      %v2379 = vmax.f32 %v2369, 0.0
      %v2380 = vmax.f32 %v2370, 0.0
      %v2381 = vmax.f32 %v2371, 0.0
      %v2382 = vpack.c.bf16 %v2373, %v2372
      %v2383 = vpack.c.bf16 %v2375, %v2374
      %v2384 = vpack.c.bf16 %v2377, %v2376
      %v2385 = vpack.c.bf16 %v2379, %v2378
      %v2386 = vpack.c.bf16 %v2381, %v2380
      %v2392 = vunpack.c.l.b16 %v2382
      %v2393 = vunpack.c.h.b16 %v2382
      %v2394 = vunpack.c.l.b16 %v2383
      %v2395 = vunpack.c.h.b16 %v2383
      %v2396 = vunpack.c.l.b16 %v2384
      %v2397 = vunpack.c.h.b16 %v2384
      %v2398 = vunpack.c.l.b16 %v2385
      %v2399 = vunpack.c.h.b16 %v2385
      %v2400 = vunpack.c.l.b16 %v2386
      %v2401 = vunpack.c.h.b16 %v2386
      %v2402 = vpack.c.b16 %v2392, %v2392
      %v2403 = vpack.c.b16 %v2393, %v2393
      %v2404 = vpack.c.b16 %v2394, %v2394
      %v2405 = vpack.c.b16 %v2395, %v2395
      %v2406 = vpack.c.b16 %v2396, %v2396
      %v2407 = vpack.c.b16 %v2397, %v2397
      %v2408 = vpack.c.b16 %v2398, %v2398
      %v2409 = vpack.c.b16 %v2399, %v2399
      %v2410 = vpack.c.b16 %v2400, %v2400
      %v2411 = vpack.c.b16 %v2401, %v2401
      %2422 = vst [vmem:[%s252] sm:$0xf] %v2402
      %2423 = vst [vmem:[%s252 + $0x4] sm:$0xf] %v2403
      %2424 = vst [vmem:[%s252 + $0x8] sm:$0xf] %v2404
      %2425 = vst [vmem:[%s252 + $0xc] sm:$0xf] %v2405
      %2426 = vst [vmem:[%s252 + $0x10] sm:$0xf] %v2406
      %2427 = vst [vmem:[%s252 + $0x14] sm:$0xf] %v2407
      %2428 = vst [vmem:[%s252 + $0x18] sm:$0xf] %v2408
      %2429 = vst [vmem:[%s252 + $0x1c] sm:$0xf] %v2409
      %2430 = vst [vmem:[%s252 + $0x20] sm:$0xf] %v2410
      %2431 = vst [vmem:[%s252 + $0x24] sm:$0xf] %v2411
      %s2432 = smul.u32 10, %s21
      %p2433 = scmp.lt.s32.totalorder %s20, 1
      %s2434 = scalar_select %p2433, %s20, 1
      %p2435 = scmp.lt.s32.totalorder %s2432, 9
      %s2436 = scalar_select %p2435, %s2432, 9
      %p2437 = scmp.lt.s32.totalorder %s19, 0
      %s2438 = scalar_select %p2437, %s19, 0
      %s2439 = sadd.s32 %s2438, %s2436
      %s2440 = smul.addr %s2434, 10
      %s2441 = sadd.s32 %s2439, %s2440
      %s2442 = smul.addr %s2441, 4
      %s2443 = scalar_lea.vmem %s3, %s2442
      // Predicated region
      $region33: #{timm_backbone_forward.6} parent=31 // pred_check
        %p2444 = pneg %p135
      $region34: #{timm_backbone_forward.6} parent=31 // pred_check_branch
        %2446 = sbr.rel (%p2444) target = $region36
      $region35: #{timm_backbone_forward.6} parent=31 // pred_region
        %s2447 = smul.u32 10, %s21
      $region36: #{timm_backbone_forward.6} parent=31 // pred_fallthru
        _
    $region32: #{timm_backbone_forward.6} parent=5 // pred_fallthru
      _
    %p2448 = scmp.le.s32.totalorder 2, %s9
    // Predicated region
    $region37: #{timm_backbone_forward.6} parent=5 // pred_check
      %p2449 = pneg %p2448
    $region38: #{timm_backbone_forward.6} parent=5 // pred_check_branch
      %2451 = sbr.rel (%p2449) target = $region40
    $region39: #{timm_backbone_forward.6} parent=5 // pred_region
      %s2452 = ssub.s32 %s9, 2
      // Predicated region
      $region41: #{timm_backbone_forward.6} parent=39 // pred_check
        %p2453 = pneg %p141
      $region42: #{timm_backbone_forward.6} parent=39 // pred_check_branch
        %2455 = sbr.rel (%p2453) target = $region44
      $region43: #{timm_backbone_forward.6} parent=39 // pred_region
        %s2456 = smul.u32 10, %s24
        %p2457 = scmp.lt.s32.totalorder %s23, 1
        %s2458 = scalar_select %p2457, %s23, 1
        %p2459 = scmp.lt.s32.totalorder %s2456, 9
        %s2460 = scalar_select %p2459, %s2456, 9
        %p2461 = scmp.lt.s32.totalorder %s22, 0
        %s2462 = scalar_select %p2461, %s22, 0
        %s2463 = sadd.s32 %s2462, %s2460
        %s2464 = smul.addr %s2458, 10
        %s2465 = sadd.s32 %s2463, %s2464
        %s2466 = smul.addr %s2465, 4
        %s2467 = scalar_lea.vmem %s3, %s2466
      $region44: #{timm_backbone_forward.6} parent=39 // pred_fallthru
        _
    $region40: #{timm_backbone_forward.6} parent=5 // pred_fallthru
      _
  $region6: #{timm_backbone_forward.6} parent=0 // loop_footer
    %s13 = sadd.s32 1, %s9
  $region7: #{timm_backbone_forward.6} parent=0 // loop_footer_branch
    %8 = sbr.rel target = $region3
  $region8: #{timm_backbone_forward.6} parent=0 // loop_exit
    _

// kernel: timm_backbone_forward.7
$region0: #{timm_backbone_forward.7}
  #allocation0 [shape = 'u32[]', space=smem, size = 0x4, offset = 0x4, fixed_abs, tag = 'smem constant byte address 0x4 - core index']
  #allocation1 [shape = 'u32[144,128]{1,0:T(1,128)}', space=vmem, size = 0x12000, scoped, tag = 'internal scratch']
  #allocation2 [shape = 'f32[32,128]{1,0:T(8,128)}', space=vmem, size = 0x4000, scoped, tag = 'scratch operand']
  %s0 = inlined_call_operand.vmem [shape: bf16[2,1,192,128], index: 0, kind: input, shape index: {}]
  %s1 = inlined_call_operand.vmem [shape: bf16[9,128,128], index: 1, kind: input, shape index: {}]
  %s2 = inlined_call_operand.vmem [shape: f32[1,128], index: 2, kind: input, shape index: {}]
  %s3 = inlined_call_operand.vmem [shape: bf16[2,32,128], index: 3, kind: output, shape index: {}]
  %s4 = sld [smem:[#allocation0]]
  $region45: #{timm_backbone_forward.7} parent=0
    _
  %s6 = ssub.s32 1, %s4
  %s7 = scalar_select 0, %s6, %s4
  loop: start=0, step=1, limit=4
  $region2: #{timm_backbone_forward.7} parent=0 // loop_pre_header
    _
  $region3: #{timm_backbone_forward.7} parent=0 // loop_header
    %s9 = sphi 0, %s13
    %p10 = scmp.ge.s32.totalorder %s9, 4
    %s16 = sphi 0, %s35
    %s17 = sphi 0, %s31
    %s18 = sphi 0, %s27
    %s19 = sphi 0, %s16
    %s20 = sphi 0, %s17
    %s21 = sphi 0, %s18
    %s22 = sphi 0, %s19
    %s23 = sphi 0, %s20
    %s24 = sphi 0, %s21
    %s40 = sphi 0, %s42
    %s43 = sphi 0, %s40
    %s44 = sphi 0, %s43
    %s60 = sphi 0, %s44
    %s66 = sphi 0, %s68
    %s69 = sphi 0, %s66
    %s70 = sphi 0, %s69
    %s86 = sphi 0, %s70
    %s92 = sphi 0, %s94
    %s95 = sphi 0, %s92
    %s96 = sphi 0, %s95
    %s112 = sphi 0, %s96
    %s122 = sphi 0, %s124
    %s125 = sphi 0, %s122
    %s126 = sphi 0, %s125
    %s142 = sphi 0, %s126
  $region4: #{timm_backbone_forward.7} parent=0 // loop_header_branch
    %12 = sbr.rel (%p10) target = $region8
  $region5: #{timm_backbone_forward.7} parent=0 // loop_body
    %s14 = ssub.s32 %s9, 1
    %s15 = ssub.s32 %s9, 2
    %s25 = sadd.s32 1, %s18
    %p26 = scmp.ge.s32.totalorder %s25, 1
    %s27 = scalar_select %p26, 0, %s25
    %s28 = sadd.s32 1, %s17
    %s29 = scalar_select %p26, %s28, %s17
    %p30 = scmp.ge.s32.totalorder %s29, 2
    %s31 = scalar_select %p30, 0, %s29
    %s32 = sadd.s32 1, %s16
    %s33 = scalar_select %p30, %s32, %s16
    %p34 = scmp.ge.s32.totalorder %s33, 1
    %s35 = scalar_select %p34, 0, %s33
    %s36 = ssub.s32 %s17, %s31
    %s37 = ssub.s32 %s18, %s27
    %s38 = sor.u32 %s36, %s37
    %p39 = scmp.eq.s32.totalorder %s38, 0
    %s41 = sadd.s32 %s40, 1
    %s42 = scalar_select %p39, %s40, %s41
    %p45 = pneg %p39
    %p46 = scmp.eq.s32.totalorder %s9, 1
    %p47 = por %p45, %p46
    %p48 = scmp.ne.s32.totalorder %s40, %s43
    %p49 = scmp.eq.s32.totalorder %s9, 0
    %p50 = por %p48, %p49
    %p51 = scmp.ne.s32.totalorder %s40, %s43
    %p52 = scmp.eq.s32.totalorder %s14, 1
    %p53 = por %p51, %p52
    %p54 = scmp.ne.s32.totalorder %s43, %s44
    %p55 = scmp.eq.s32.totalorder %s14, 0
    %p56 = por %p54, %p55
    %p57 = scmp.ne.s32.totalorder %s43, %s44
    %p58 = scmp.eq.s32.totalorder %s15, 1
    %p59 = por %p57, %p58
    %p61 = scmp.ne.s32.totalorder %s44, %s60
    %p62 = scmp.eq.s32.totalorder %s15, 0
    %p63 = por %p61, %p62
    %s64 = ssub.s32 %s16, %s35
    %p65 = scmp.eq.s32.totalorder %s64, 0
    %s67 = sadd.s32 %s66, 1
    %s68 = scalar_select %p65, %s66, %s67
    %p71 = pneg %p65
    %p72 = scmp.eq.s32.totalorder %s9, 1
    %p73 = por %p71, %p72
    %p74 = scmp.ne.s32.totalorder %s66, %s69
    %p75 = scmp.eq.s32.totalorder %s9, 0
    %p76 = por %p74, %p75
    %p77 = scmp.ne.s32.totalorder %s66, %s69
    %p78 = scmp.eq.s32.totalorder %s14, 1
    %p79 = por %p77, %p78
    %p80 = scmp.ne.s32.totalorder %s69, %s70
    %p81 = scmp.eq.s32.totalorder %s14, 0
    %p82 = por %p80, %p81
    %p83 = scmp.ne.s32.totalorder %s69, %s70
    %p84 = scmp.eq.s32.totalorder %s15, 1
    %p85 = por %p83, %p84
    %p87 = scmp.ne.s32.totalorder %s70, %s86
    %p88 = scmp.eq.s32.totalorder %s15, 0
    %p89 = por %p87, %p88
    %s90 = ssub.s32 %s16, %s35
    %p91 = scmp.eq.s32.totalorder %s90, 0
    %s93 = sadd.s32 %s92, 1
    %s94 = scalar_select %p91, %s92, %s93
    %p97 = pneg %p91
    %p98 = scmp.eq.s32.totalorder %s9, 1
    %p99 = por %p97, %p98
    %p100 = scmp.ne.s32.totalorder %s92, %s95
    %p101 = scmp.eq.s32.totalorder %s9, 0
    %p102 = por %p100, %p101
    %p103 = scmp.ne.s32.totalorder %s92, %s95
    %p104 = scmp.eq.s32.totalorder %s14, 1
    %p105 = por %p103, %p104
    %p106 = scmp.ne.s32.totalorder %s95, %s96
    %p107 = scmp.eq.s32.totalorder %s14, 0
    %p108 = por %p106, %p107
    %p109 = scmp.ne.s32.totalorder %s95, %s96
    %p110 = scmp.eq.s32.totalorder %s15, 1
    %p111 = por %p109, %p110
    %p113 = scmp.ne.s32.totalorder %s96, %s112
    %p114 = scmp.eq.s32.totalorder %s15, 0
    %p115 = por %p113, %p114
    %s116 = ssub.s32 %s17, %s31
    %s117 = ssub.s32 %s18, %s27
    %s118 = sor.u32 %s116, %s117
    %s119 = ssub.s32 %s16, %s35
    %s120 = sor.u32 %s118, %s119
    %p121 = scmp.eq.s32.totalorder %s120, 0
    %s123 = sadd.s32 %s122, 1
    %s124 = scalar_select %p121, %s122, %s123
    %p127 = pneg %p121
    %p128 = scmp.eq.s32.totalorder %s9, 1
    %p129 = por %p127, %p128
    %p130 = scmp.ne.s32.totalorder %s122, %s125
    %p131 = scmp.eq.s32.totalorder %s9, 0
    %p132 = por %p130, %p131
    %p133 = scmp.ne.s32.totalorder %s122, %s125
    %p134 = scmp.eq.s32.totalorder %s14, 1
    %p135 = por %p133, %p134
    %p136 = scmp.ne.s32.totalorder %s125, %s126
    %p137 = scmp.eq.s32.totalorder %s14, 0
    %p138 = por %p136, %p137
    %p139 = scmp.ne.s32.totalorder %s125, %s126
    %p140 = scmp.eq.s32.totalorder %s15, 1
    %p141 = por %p139, %p140
    %p143 = scmp.ne.s32.totalorder %s126, %s142
    %p144 = scmp.eq.s32.totalorder %s15, 0
    %p145 = por %p143, %p144
    %p146 = scmp.le.s32.totalorder 1, %s9
    %p147 = scmp.lt.s32.totalorder %s9, 3
    %p148 = pnand %p146, %p147
    %p149 = pneg %p148
    // Predicated region
    $region9: #{timm_backbone_forward.7} parent=5 // pred_check
      _
    $region10: #{timm_backbone_forward.7} parent=5 // pred_check_branch
      %151 = sbr.rel (%p148) target = $region12
    $region11: #{timm_backbone_forward.7} parent=5 // pred_region
      %s152 = ssub.s32 %s9, 1
      // Predicated region
      $region13: #{timm_backbone_forward.7} parent=11 // pred_check
        %p153 = pneg %p82
      $region14: #{timm_backbone_forward.7} parent=11 // pred_check_branch
        %155 = sbr.rel (%p153) target = $region16
      $region15: #{timm_backbone_forward.7} parent=11 // pred_region
        %p156 = scmp.lt.s32.totalorder %s19, 0
        %s157 = scalar_select %p156, %s19, 0
        %s158 = smul.addr %s157, 4
        %s159 = scalar_lea.vmem %s1, %s158
      $region16: #{timm_backbone_forward.7} parent=11 // pred_fallthru
        _
      // Predicated region
      $region17: #{timm_backbone_forward.7} parent=11 // pred_check
        %p160 = pneg %p108
      $region18: #{timm_backbone_forward.7} parent=11 // pred_check_branch
        %162 = sbr.rel (%p160) target = $region20
      $region19: #{timm_backbone_forward.7} parent=11 // pred_region
        %p163 = scmp.lt.s32.totalorder %s19, 0
        %s164 = scalar_select %p163, %s19, 0
        %s165 = scalar_lea.vmem %s2, %s164
      $region20: #{timm_backbone_forward.7} parent=11 // pred_fallthru
        _
    $region12: #{timm_backbone_forward.7} parent=5 // pred_fallthru
      _
    %p166 = scmp.lt.s32.totalorder %s9, 2
    // Predicated region
    $region21: #{timm_backbone_forward.7} parent=5 // pred_check
      %p167 = pneg %p166
    $region22: #{timm_backbone_forward.7} parent=5 // pred_check_branch
      %169 = sbr.rel (%p167) target = $region24
    $region23: #{timm_backbone_forward.7} parent=5 // pred_region
      // Predicated region
      $region25: #{timm_backbone_forward.7} parent=23 // pred_check
        %p170 = pneg %p50
      $region26: #{timm_backbone_forward.7} parent=23 // pred_check_branch
        %172 = sbr.rel (%p170) target = $region28
      $region27: #{timm_backbone_forward.7} parent=23 // pred_region
        %p173 = scmp.lt.s32.totalorder %s17, 1
        %s174 = scalar_select %p173, %s17, 1
        %p175 = scmp.lt.s32.totalorder %s18, 0
        %s176 = scalar_select %p175, %s18, 0
        %s177 = smul.addr %s176, 24
        %s178 = smul.addr %s174, 24
        %s179 = sadd.s32 %s177, %s178
        %s180 = smul.addr %s179, 4
        %s181 = scalar_lea.vmem %s0, %s180
      $region28: #{timm_backbone_forward.7} parent=23 // pred_fallthru
        _
    $region24: #{timm_backbone_forward.7} parent=5 // pred_fallthru
      _
    %p182 = scmp.le.s32.totalorder 1, %s9
    %p183 = scmp.lt.s32.totalorder %s9, 3
    %p184 = pnand %p182, %p183
    %p185 = pneg %p184
    // Predicated region
    $region29: #{timm_backbone_forward.7} parent=5 // pred_check
      _
    $region30: #{timm_backbone_forward.7} parent=5 // pred_check_branch
      %187 = sbr.rel (%p184) target = $region32
    $region31: #{timm_backbone_forward.7} parent=5 // pred_region
      %s188 = ssub.s32 %s9, 1
      %p189 = scmp.lt.s32.totalorder %s20, 1
      %s190 = scalar_select %p189, %s20, 1
      %p191 = scmp.lt.s32.totalorder %s21, 0
      %s192 = scalar_select %p191, %s21, 0
      %s193 = smul.addr %s192, 24
      %s194 = smul.addr %s190, 24
      %s195 = sadd.s32 %s193, %s194
      %s196 = smul.addr %s195, 4
      %s197 = scalar_lea.vmem %s0, %s196
      %p198 = pneg %p56
      %p199 = pneg %p53
      %p200 = scmp.lt.s32.totalorder %s19, 0
      %s201 = scalar_select %p200, %s19, 0
      %s202 = smul.addr %s201, 4
      %s203 = scalar_lea.vmem %s1, %s202
      %p204 = pneg %p82
      %p205 = pneg %p79
      %p206 = scmp.lt.s32.totalorder %s19, 0
      %s207 = scalar_select %p206, %s19, 0
      %s208 = scalar_lea.vmem %s2, %s207
      %p209 = pneg %p108
      %p210 = pneg %p105
      %p211 = pneg %p138
      %p212 = pneg %p135
      %s213 = smul.u32 4, %s21
      %p214 = scmp.lt.s32.totalorder %s20, 1
      %s215 = scalar_select %p214, %s20, 1
      %p216 = scmp.lt.s32.totalorder %s213, 3
      %s217 = scalar_select %p216, %s213, 3
      %p218 = scmp.lt.s32.totalorder %s19, 0
      %s219 = scalar_select %p218, %s19, 0
      %s220 = sadd.s32 %s219, %s217
      %s221 = smul.addr %s215, 4
      %s222 = sadd.s32 %s220, %s221
      %s223 = smul.addr %s222, 4
      %s224 = scalar_lea.vmem %s3, %s223
      %p225 = scmp.lt.s32.totalorder %s20, 1
      %s226 = scalar_select %p225, %s20, 1
      %p227 = scmp.lt.s32.totalorder %s21, 0
      %s228 = scalar_select %p227, %s21, 0
      %s229 = smul.addr %s228, 24
      %s230 = smul.addr %s226, 24
      %s231 = sadd.s32 %s229, %s230
      %s232 = smul.addr %s231, 4
      %s233 = scalar_lea.vmem %s0, %s232
      %p234 = scmp.lt.s32.totalorder %s19, 0
      %s235 = scalar_select %p234, %s19, 0
      %s236 = smul.addr %s235, 4
      %s237 = scalar_lea.vmem %s1, %s236
      %p238 = scmp.lt.s32.totalorder %s19, 0
      %s239 = scalar_select %p238, %s19, 0
      %s240 = scalar_lea.vmem %s2, %s239
      %s241 = smul.u32 4, %s21
      %p242 = scmp.lt.s32.totalorder %s20, 1
      %s243 = scalar_select %p242, %s20, 1
      %p244 = scmp.lt.s32.totalorder %s241, 3
      %s245 = scalar_select %p244, %s241, 3
      %p246 = scmp.lt.s32.totalorder %s19, 0
      %s247 = scalar_select %p246, %s19, 0
      %s248 = sadd.s32 %s247, %s245
      %s249 = smul.addr %s243, 4
      %s250 = sadd.s32 %s248, %s249
      %s251 = smul.addr %s250, 4
      %s252 = scalar_lea.vmem %s3, %s251
      %s253 = smul.u32 4, %s21
      %255 = vst [vmem:[#allocation2] sm:$0xff] 0.0
      %256 = vst [vmem:[#allocation2 + $0x8] sm:$0xff] 0.0
      %257 = vst [vmem:[#allocation2 + $0x10] sm:$0xff] 0.0
      %258 = vst [vmem:[#allocation2 + $0x18] sm:$0xff] 0.0
      %v259 = vld [vmem:[#allocation2] sm:$0xff]
      %v260 = vld [vmem:[#allocation2 + $0x8] sm:$0xff]
      %v261 = vld [vmem:[#allocation2 + $0x10] sm:$0xff]
      %v262 = vld [vmem:[#allocation2 + $0x18] sm:$0xff]
      %v263 = vld [vmem:[%s233] sm:$0xf]
      %v264 = vld [vmem:[%s233 + $0x4] sm:$0xf]
      %v265 = vld [vmem:[%s233 + $0x8] sm:$0xf]
      %v266 = vld [vmem:[%s233 + $0xc] sm:$0xf]
      %v267 = vld [vmem:[%s237] sm:$0xf]
      %v268 = vld [vmem:[%s237 + $0x4] sm:$0xf]
      %v269 = vld [vmem:[%s237 + $0x8] sm:$0xf]
      %v270 = vld [vmem:[%s237 + $0xc] sm:$0xf]
      %v271 = vld [vmem:[%s237 + $0x10] sm:$0xf]
      %v272 = vld [vmem:[%s237 + $0x14] sm:$0xf]
      %v273 = vld [vmem:[%s237 + $0x18] sm:$0xf]
      %v274 = vld [vmem:[%s237 + $0x1c] sm:$0xf]
      %v275 = vld [vmem:[%s237 + $0x20] sm:$0xf]
      %v276 = vld [vmem:[%s237 + $0x24] sm:$0xf]
      %v277 = vld [vmem:[%s237 + $0x28] sm:$0xf]
      %v278 = vld [vmem:[%s237 + $0x2c] sm:$0xf]
      %v279 = vld [vmem:[%s237 + $0x30] sm:$0xf]
      %v280 = vld [vmem:[%s237 + $0x34] sm:$0xf]
      %v281 = vld [vmem:[%s237 + $0x38] sm:$0xf]
      %v282 = vld [vmem:[%s237 + $0x3c] sm:$0xf]
      %v287 = vunpack.c.l.b16 %v263
      %v288 = vunpack.c.l.b16 %v264
      %v289 = vunpack.c.l.b16 %v265
      %v290 = vunpack.c.l.b16 %v266
      %v291 = vpack.c.b16 %v288, %v287
      %v292 = vpack.c.b16 %v290, %v289
      %v311 = vunpack.c.l.b16 %v267
      %v312 = vunpack.c.l.b16 %v268
      %v313 = vunpack.c.l.b16 %v269
      %v314 = vunpack.c.l.b16 %v270
      %v315 = vunpack.c.l.b16 %v271
      %v316 = vunpack.c.l.b16 %v272
      %v317 = vunpack.c.l.b16 %v273
      %v318 = vunpack.c.l.b16 %v274
      %v319 = vunpack.c.l.b16 %v275
      %v320 = vunpack.c.l.b16 %v276
      %v321 = vunpack.c.l.b16 %v277
      %v322 = vunpack.c.l.b16 %v278
      %v323 = vunpack.c.l.b16 %v279
      %v324 = vunpack.c.l.b16 %v280
      %v325 = vunpack.c.l.b16 %v281
      %v326 = vunpack.c.l.b16 %v282
      %v327 = vpack.c.b16 %v312, %v311
      %v328 = vpack.c.b16 %v314, %v313
      %v329 = vpack.c.b16 %v316, %v315
      %v330 = vpack.c.b16 %v318, %v317
      %v331 = vpack.c.b16 %v320, %v319
      %v332 = vpack.c.b16 %v322, %v321
      %v333 = vpack.c.b16 %v324, %v323
      %v334 = vpack.c.b16 %v326, %v325
      %343 = vmatprep.subr.bf16.mxu0 0
      %344 = vmatpush1.bf16.msra.mxu0 %v334
      %345 = vmatprep.subr.bf16.mxu0 0
      %346 = vmatpush1.bf16.msra.mxu0 %v333
      %347 = vmatprep.subr.bf16.mxu0 0
      %348 = vmatpush1.bf16.msra.mxu0 %v332
      %349 = vmatprep.subr.bf16.mxu0 0
      %350 = vmatpush1.bf16.msra.mxu0 %v331
      %351 = vmatprep.subr.bf16.mxu0 0
      %352 = vmatpush1.bf16.msra.mxu0 %v330
      %353 = vmatprep.subr.bf16.mxu0 0
      %354 = vmatpush1.bf16.msra.mxu0 %v329
      %355 = vmatprep.subr.bf16.mxu0 0
      %356 = vmatpush1.bf16.msra.mxu0 %v328
      %357 = vmatprep.subr.bf16.mxu0 0
      %358 = vmatpush1.bf16.msra.mxu0 %v327
      %359 = vmatprep.subr.bf16.mxu0 0
      %360 = vmatpush2.bf16.msra.mxu0 0
      %361 = vmatprep.subr.bf16.mxu0 0
      %362 = vmatpush2.bf16.msra.mxu0 0
      %363 = vmatprep.subr.bf16.mxu0 0
      %364 = vmatpush2.bf16.msra.mxu0 0
      %365 = vmatprep.subr.bf16.mxu0 0
      %366 = vmatpush2.bf16.msra.mxu0 0
      %367 = vmatprep.subr.bf16.mxu0 0
      %368 = vmatpush2.bf16.msra.mxu0 0
      %369 = vmatprep.subr.bf16.mxu0 0
      %370 = vmatpush2.bf16.msra.mxu0 0
      %371 = vmatprep.subr.bf16.mxu0 0
      %372 = vmatpush2.bf16.msra.mxu0 0
      %373 = vmatprep.subr.bf16.mxu0 0
      %374 = vmatpush2.bf16.msra.mxu0 0
      %375 = vmatprep.mubr.bf16.mxu0 0
      %376 = vmatmul.mubr.bf16.gmra.mxu0 %v291
      %v377 = vpop.f32.mrf.mxu0
      %v378 = vadd.f32 0.0, %v377
      %v379 = vpop.f32.mrf.mxu0
      %v380 = vpop.f32.mrf.mxu0
      %v381 = vadd.f32 0.0, %v380
      %v382 = vpop.f32.mrf.mxu0
      %383 = vmatprep.mubr.bf16.mxu0 0
      %384 = vmatmul.mubr.bf16.gmra.mxu0 %v292
      %v385 = vpop.f32.mrf.mxu0
      %v386 = vadd.f32 0.0, %v385
      %v387 = vpop.f32.mrf.mxu0
      %v388 = vpop.f32.mrf.mxu0
      %v389 = vadd.f32 0.0, %v388
      %v390 = vpop.f32.mrf.mxu0
      %391 = vdwg.mxu0
      %v392 = vadd.f32 %v259, %v378
      %v393 = vadd.f32 %v260, %v381
      %v394 = vadd.f32 %v261, %v386
      %v395 = vadd.f32 %v262, %v389
      %396 = vst [vmem:[#allocation2] sm:$0xff] %v392
      %397 = vst [vmem:[#allocation2 + $0x8] sm:$0xff] %v393
      %398 = vst [vmem:[#allocation2 + $0x10] sm:$0xff] %v394
      %399 = vst [vmem:[#allocation2 + $0x18] sm:$0xff] %v395
      %v400 = vld [vmem:[#allocation2] sm:$0xff]
      %v401 = vld [vmem:[#allocation2 + $0x8] sm:$0xff]
      %v402 = vld [vmem:[#allocation2 + $0x10] sm:$0xff]
      %v403 = vld [vmem:[#allocation2 + $0x18] sm:$0xff]
      %v404 = vld [vmem:[%s233 + $0x18] sm:$0xf]
      %v405 = vld [vmem:[%s233 + $0x1c] sm:$0xf]
      %v406 = vld [vmem:[%s233 + $0x20] sm:$0xf]
      %v407 = vld [vmem:[%s233 + $0x24] sm:$0xf]
      %s408 = scalar_lea.vmem %s237, 64
      %v409 = vld [vmem:[%s408] sm:$0xf]
      %v410 = vld [vmem:[%s408 + $0x4] sm:$0xf]
      %v411 = vld [vmem:[%s408 + $0x8] sm:$0xf]
      %v412 = vld [vmem:[%s408 + $0xc] sm:$0xf]
      %v413 = vld [vmem:[%s408 + $0x10] sm:$0xf]
      %v414 = vld [vmem:[%s408 + $0x14] sm:$0xf]
      %v415 = vld [vmem:[%s408 + $0x18] sm:$0xf]
      %v416 = vld [vmem:[%s408 + $0x1c] sm:$0xf]
      %v417 = vld [vmem:[%s408 + $0x20] sm:$0xf]
      %v418 = vld [vmem:[%s408 + $0x24] sm:$0xf]
      %v419 = vld [vmem:[%s408 + $0x28] sm:$0xf]
      %v420 = vld [vmem:[%s408 + $0x2c] sm:$0xf]
      %v421 = vld [vmem:[%s408 + $0x30] sm:$0xf]
      %v422 = vld [vmem:[%s408 + $0x34] sm:$0xf]
      %v423 = vld [vmem:[%s408 + $0x38] sm:$0xf]
      %v424 = vld [vmem:[%s408 + $0x3c] sm:$0xf]
      %v429 = vunpack.c.l.b16 %v404
      %v430 = vunpack.c.l.b16 %v405
      %v431 = vunpack.c.l.b16 %v406
      %v432 = vunpack.c.l.b16 %v407
      %v433 = vpack.c.b16 %v430, %v429
      %v434 = vpack.c.b16 %v432, %v431
      %v453 = vunpack.c.l.b16 %v409
      %v454 = vunpack.c.l.b16 %v410
      %v455 = vunpack.c.l.b16 %v411
      %v456 = vunpack.c.l.b16 %v412
      %v457 = vunpack.c.l.b16 %v413
      %v458 = vunpack.c.l.b16 %v414
      %v459 = vunpack.c.l.b16 %v415
      %v460 = vunpack.c.l.b16 %v416
      %v461 = vunpack.c.l.b16 %v417
      %v462 = vunpack.c.l.b16 %v418
      %v463 = vunpack.c.l.b16 %v419
      %v464 = vunpack.c.l.b16 %v420
      %v465 = vunpack.c.l.b16 %v421
      %v466 = vunpack.c.l.b16 %v422
      %v467 = vunpack.c.l.b16 %v423
      %v468 = vunpack.c.l.b16 %v424
      %v469 = vpack.c.b16 %v454, %v453
      %v470 = vpack.c.b16 %v456, %v455
      %v471 = vpack.c.b16 %v458, %v457
      %v472 = vpack.c.b16 %v460, %v459
      %v473 = vpack.c.b16 %v462, %v461
      %v474 = vpack.c.b16 %v464, %v463
      %v475 = vpack.c.b16 %v466, %v465
      %v476 = vpack.c.b16 %v468, %v467
      %485 = vmatprep.subr.bf16.mxu0 0
      %486 = vmatpush1.bf16.msra.mxu0 %v476
      %487 = vmatprep.subr.bf16.mxu0 0
      %488 = vmatpush1.bf16.msra.mxu0 %v475
      %489 = vmatprep.subr.bf16.mxu0 0
      %490 = vmatpush1.bf16.msra.mxu0 %v474
      %491 = vmatprep.subr.bf16.mxu0 0
      %492 = vmatpush1.bf16.msra.mxu0 %v473
      %493 = vmatprep.subr.bf16.mxu0 0
      %494 = vmatpush1.bf16.msra.mxu0 %v472
      %495 = vmatprep.subr.bf16.mxu0 0
      %496 = vmatpush1.bf16.msra.mxu0 %v471
      %497 = vmatprep.subr.bf16.mxu0 0
      %498 = vmatpush1.bf16.msra.mxu0 %v470
      %499 = vmatprep.subr.bf16.mxu0 0
      %500 = vmatpush1.bf16.msra.mxu0 %v469
      %501 = vmatprep.subr.bf16.mxu0 0
      %502 = vmatpush2.bf16.msra.mxu0 0
      %503 = vmatprep.subr.bf16.mxu0 0
      %504 = vmatpush2.bf16.msra.mxu0 0
      %505 = vmatprep.subr.bf16.mxu0 0
      %506 = vmatpush2.bf16.msra.mxu0 0
      %507 = vmatprep.subr.bf16.mxu0 0
      %508 = vmatpush2.bf16.msra.mxu0 0
      %509 = vmatprep.subr.bf16.mxu0 0
      %510 = vmatpush2.bf16.msra.mxu0 0
      %511 = vmatprep.subr.bf16.mxu0 0
      %512 = vmatpush2.bf16.msra.mxu0 0
      %513 = vmatprep.subr.bf16.mxu0 0
      %514 = vmatpush2.bf16.msra.mxu0 0
      %515 = vmatprep.subr.bf16.mxu0 0
      %516 = vmatpush2.bf16.msra.mxu0 0
      %517 = vmatprep.mubr.bf16.mxu0 0
      %518 = vmatmul.mubr.bf16.gmra.mxu0 %v433
      %v519 = vpop.f32.mrf.mxu0
      %v520 = vadd.f32 0.0, %v519
      %v521 = vpop.f32.mrf.mxu0
      %v522 = vpop.f32.mrf.mxu0
      %v523 = vadd.f32 0.0, %v522
      %v524 = vpop.f32.mrf.mxu0
      %525 = vmatprep.mubr.bf16.mxu0 0
      %526 = vmatmul.mubr.bf16.gmra.mxu0 %v434
      %v527 = vpop.f32.mrf.mxu0
      %v528 = vadd.f32 0.0, %v527
      %v529 = vpop.f32.mrf.mxu0
      %v530 = vpop.f32.mrf.mxu0
      %v531 = vadd.f32 0.0, %v530
      %v532 = vpop.f32.mrf.mxu0
      %533 = vdwg.mxu0
      %v534 = vadd.f32 %v400, %v520
      %v535 = vadd.f32 %v401, %v523
      %v536 = vadd.f32 %v402, %v528
      %v537 = vadd.f32 %v403, %v531
      %538 = vst [vmem:[#allocation2] sm:$0xff] %v534
      %539 = vst [vmem:[#allocation2 + $0x8] sm:$0xff] %v535
      %540 = vst [vmem:[#allocation2 + $0x10] sm:$0xff] %v536
      %541 = vst [vmem:[#allocation2 + $0x18] sm:$0xff] %v537
      %v542 = vld [vmem:[#allocation2] sm:$0xff]
      %v543 = vld [vmem:[#allocation2 + $0x8] sm:$0xff]
      %v544 = vld [vmem:[#allocation2 + $0x10] sm:$0xff]
      %v545 = vld [vmem:[#allocation2 + $0x18] sm:$0xff]
      %v546 = vld [vmem:[%s233] sm:$0xf]
      %v547 = vld [vmem:[%s233 + $0x4] sm:$0xf]
      %v548 = vld [vmem:[%s233 + $0x8] sm:$0xf]
      %v549 = vld [vmem:[%s233 + $0xc] sm:$0xf]
      %v550 = vld [vmem:[%s233 + $0x10] sm:$0x1]
      %s551 = scalar_lea.vmem %s237, 128
      %v552 = vld [vmem:[%s551] sm:$0xf]
      %v553 = vld [vmem:[%s551 + $0x4] sm:$0xf]
      %v554 = vld [vmem:[%s551 + $0x8] sm:$0xf]
      %v555 = vld [vmem:[%s551 + $0xc] sm:$0xf]
      %v556 = vld [vmem:[%s551 + $0x10] sm:$0xf]
      %v557 = vld [vmem:[%s551 + $0x14] sm:$0xf]
      %v558 = vld [vmem:[%s551 + $0x18] sm:$0xf]
      %v559 = vld [vmem:[%s551 + $0x1c] sm:$0xf]
      %v560 = vld [vmem:[%s551 + $0x20] sm:$0xf]
      %v561 = vld [vmem:[%s551 + $0x24] sm:$0xf]
      %v562 = vld [vmem:[%s551 + $0x28] sm:$0xf]
      %v563 = vld [vmem:[%s551 + $0x2c] sm:$0xf]
      %v564 = vld [vmem:[%s551 + $0x30] sm:$0xf]
      %v565 = vld [vmem:[%s551 + $0x34] sm:$0xf]
      %v566 = vld [vmem:[%s551 + $0x38] sm:$0xf]
      %v567 = vld [vmem:[%s551 + $0x3c] sm:$0xf]
      %v573 = vunpack.c.l.b16 %v546
      %v574 = vunpack.c.l.b16 %v547
      %v575 = vunpack.c.l.b16 %v548
      %v576 = vunpack.c.l.b16 %v549
      %v577 = vunpack.c.l.b16 %v550
      %v578 = vpack.c.b16 %v574, %v573
      %v579 = vpack.c.b16 %v576, %v575
      %v580 = vpack.c.b16 %v577, %v577
      %vm581 = vsmask.f32 7424
      %v583 = vshrl.u32 %v578, 16
      %v585 = vshll.u32 %v578, 16
      %v587 = vrot.slane %v585, 1
      %v588 = vor.u32 %v583, %v587
      %v590 = vshll.u32 %v579, 16
      %v592 = vrot.slane %v590, 1
      %v593 = vsel %vm581, %v588, %v592
      %v594 = vshrl.u32 %v579, 16
      %v596 = vor.u32 %v594, %v592
      %v598 = vshll.u32 %v580, 16
      %v600 = vrot.slane %v598, 1
      %v601 = vsel %vm581, %v596, %v600
      %v620 = vunpack.c.l.b16 %v552
      %v621 = vunpack.c.l.b16 %v553
      %v622 = vunpack.c.l.b16 %v554
      %v623 = vunpack.c.l.b16 %v555
      %v624 = vunpack.c.l.b16 %v556
      %v625 = vunpack.c.l.b16 %v557
      %v626 = vunpack.c.l.b16 %v558
      %v627 = vunpack.c.l.b16 %v559
      %v628 = vunpack.c.l.b16 %v560
      %v629 = vunpack.c.l.b16 %v561
      %v630 = vunpack.c.l.b16 %v562
      %v631 = vunpack.c.l.b16 %v563
      %v632 = vunpack.c.l.b16 %v564
      %v633 = vunpack.c.l.b16 %v565
      %v634 = vunpack.c.l.b16 %v566
      %v635 = vunpack.c.l.b16 %v567
      %v636 = vpack.c.b16 %v621, %v620
      %v637 = vpack.c.b16 %v623, %v622
      %v638 = vpack.c.b16 %v625, %v624
      %v639 = vpack.c.b16 %v627, %v626
      %v640 = vpack.c.b16 %v629, %v628
      %v641 = vpack.c.b16 %v631, %v630
      %v642 = vpack.c.b16 %v633, %v632
      %v643 = vpack.c.b16 %v635, %v634
      %652 = vmatprep.subr.bf16.mxu0 0
      %653 = vmatpush1.bf16.msra.mxu0 %v643
      %654 = vmatprep.subr.bf16.mxu0 0
      %655 = vmatpush1.bf16.msra.mxu0 %v642
      %656 = vmatprep.subr.bf16.mxu0 0
      %657 = vmatpush1.bf16.msra.mxu0 %v641
      %658 = vmatprep.subr.bf16.mxu0 0
      %659 = vmatpush1.bf16.msra.mxu0 %v640
      %660 = vmatprep.subr.bf16.mxu0 0
      %661 = vmatpush1.bf16.msra.mxu0 %v639
      %662 = vmatprep.subr.bf16.mxu0 0
      %663 = vmatpush1.bf16.msra.mxu0 %v638
      %664 = vmatprep.subr.bf16.mxu0 0
      %665 = vmatpush1.bf16.msra.mxu0 %v637
      %666 = vmatprep.subr.bf16.mxu0 0
      %667 = vmatpush1.bf16.msra.mxu0 %v636
      %668 = vmatprep.subr.bf16.mxu0 0
      %669 = vmatpush2.bf16.msra.mxu0 0
      %670 = vmatprep.subr.bf16.mxu0 0
      %671 = vmatpush2.bf16.msra.mxu0 0
      %672 = vmatprep.subr.bf16.mxu0 0
      %673 = vmatpush2.bf16.msra.mxu0 0
      %674 = vmatprep.subr.bf16.mxu0 0
      %675 = vmatpush2.bf16.msra.mxu0 0
      %676 = vmatprep.subr.bf16.mxu0 0
      %677 = vmatpush2.bf16.msra.mxu0 0
      %678 = vmatprep.subr.bf16.mxu0 0
      %679 = vmatpush2.bf16.msra.mxu0 0
      %680 = vmatprep.subr.bf16.mxu0 0
      %681 = vmatpush2.bf16.msra.mxu0 0
      %682 = vmatprep.subr.bf16.mxu0 0
      %683 = vmatpush2.bf16.msra.mxu0 0
      %684 = vmatprep.mubr.bf16.mxu0 0
      %685 = vmatmul.mubr.bf16.gmra.mxu0 %v593
      %v686 = vpop.f32.mrf.mxu0
      %v687 = vadd.f32 0.0, %v686
      %v688 = vpop.f32.mrf.mxu0
      %v689 = vpop.f32.mrf.mxu0
      %v690 = vadd.f32 0.0, %v689
      %v691 = vpop.f32.mrf.mxu0
      %692 = vmatprep.mubr.bf16.mxu0 0
      %693 = vmatmul.mubr.bf16.gmra.mxu0 %v601
      %v694 = vpop.f32.mrf.mxu0
      %v695 = vadd.f32 0.0, %v694
      %v696 = vpop.f32.mrf.mxu0
      %v697 = vpop.f32.mrf.mxu0
      %v698 = vadd.f32 0.0, %v697
      %v699 = vpop.f32.mrf.mxu0
      %700 = vdwg.mxu0
      %v701 = vadd.f32 %v542, %v687
      %v702 = vadd.f32 %v543, %v690
      %v703 = vadd.f32 %v544, %v695
      %v704 = vadd.f32 %v545, %v698
      %705 = vst [vmem:[#allocation2] sm:$0xff] %v701
      %706 = vst [vmem:[#allocation2 + $0x8] sm:$0xff] %v702
      %707 = vst [vmem:[#allocation2 + $0x10] sm:$0xff] %v703
      %708 = vst [vmem:[#allocation2 + $0x18] sm:$0xff] %v704
      %v709 = vld [vmem:[#allocation2] sm:$0xff]
      %v710 = vld [vmem:[#allocation2 + $0x8] sm:$0xff]
      %v711 = vld [vmem:[#allocation2 + $0x10] sm:$0xff]
      %v712 = vld [vmem:[#allocation2 + $0x18] sm:$0xff]
      %v713 = vld [vmem:[%s233 + $0x30] sm:$0xf]
      %v714 = vld [vmem:[%s233 + $0x34] sm:$0xf]
      %v715 = vld [vmem:[%s233 + $0x38] sm:$0xf]
      %v716 = vld [vmem:[%s233 + $0x3c] sm:$0xf]
      %s717 = scalar_lea.vmem %s237, 192
      %v718 = vld [vmem:[%s717] sm:$0xf]
      %v719 = vld [vmem:[%s717 + $0x4] sm:$0xf]
      %v720 = vld [vmem:[%s717 + $0x8] sm:$0xf]
      %v721 = vld [vmem:[%s717 + $0xc] sm:$0xf]
      %v722 = vld [vmem:[%s717 + $0x10] sm:$0xf]
      %v723 = vld [vmem:[%s717 + $0x14] sm:$0xf]
      %v724 = vld [vmem:[%s717 + $0x18] sm:$0xf]
      %v725 = vld [vmem:[%s717 + $0x1c] sm:$0xf]
      %v726 = vld [vmem:[%s717 + $0x20] sm:$0xf]
      %v727 = vld [vmem:[%s717 + $0x24] sm:$0xf]
      %v728 = vld [vmem:[%s717 + $0x28] sm:$0xf]
      %v729 = vld [vmem:[%s717 + $0x2c] sm:$0xf]
      %v730 = vld [vmem:[%s717 + $0x30] sm:$0xf]
      %v731 = vld [vmem:[%s717 + $0x34] sm:$0xf]
      %v732 = vld [vmem:[%s717 + $0x38] sm:$0xf]
      %v733 = vld [vmem:[%s717 + $0x3c] sm:$0xf]
      %v738 = vunpack.c.l.b16 %v713
      %v739 = vunpack.c.l.b16 %v714
      %v740 = vunpack.c.l.b16 %v715
      %v741 = vunpack.c.l.b16 %v716
      %v742 = vpack.c.b16 %v739, %v738
      %v743 = vpack.c.b16 %v741, %v740
      %v762 = vunpack.c.l.b16 %v718
      %v763 = vunpack.c.l.b16 %v719
      %v764 = vunpack.c.l.b16 %v720
      %v765 = vunpack.c.l.b16 %v721
      %v766 = vunpack.c.l.b16 %v722
      %v767 = vunpack.c.l.b16 %v723
      %v768 = vunpack.c.l.b16 %v724
      %v769 = vunpack.c.l.b16 %v725
      %v770 = vunpack.c.l.b16 %v726
      %v771 = vunpack.c.l.b16 %v727
      %v772 = vunpack.c.l.b16 %v728
      %v773 = vunpack.c.l.b16 %v729
      %v774 = vunpack.c.l.b16 %v730
      %v775 = vunpack.c.l.b16 %v731
      %v776 = vunpack.c.l.b16 %v732
      %v777 = vunpack.c.l.b16 %v733
      %v778 = vpack.c.b16 %v763, %v762
      %v779 = vpack.c.b16 %v765, %v764
      %v780 = vpack.c.b16 %v767, %v766
      %v781 = vpack.c.b16 %v769, %v768
      %v782 = vpack.c.b16 %v771, %v770
      %v783 = vpack.c.b16 %v773, %v772
      %v784 = vpack.c.b16 %v775, %v774
      %v785 = vpack.c.b16 %v777, %v776
      %794 = vmatprep.subr.bf16.mxu0 0
      %795 = vmatpush1.bf16.msra.mxu0 %v785
      %796 = vmatprep.subr.bf16.mxu0 0
      %797 = vmatpush1.bf16.msra.mxu0 %v784
      %798 = vmatprep.subr.bf16.mxu0 0
      %799 = vmatpush1.bf16.msra.mxu0 %v783
      %800 = vmatprep.subr.bf16.mxu0 0
      %801 = vmatpush1.bf16.msra.mxu0 %v782
      %802 = vmatprep.subr.bf16.mxu0 0
      %803 = vmatpush1.bf16.msra.mxu0 %v781
      %804 = vmatprep.subr.bf16.mxu0 0
      %805 = vmatpush1.bf16.msra.mxu0 %v780
      %806 = vmatprep.subr.bf16.mxu0 0
      %807 = vmatpush1.bf16.msra.mxu0 %v779
      %808 = vmatprep.subr.bf16.mxu0 0
      %809 = vmatpush1.bf16.msra.mxu0 %v778
      %810 = vmatprep.subr.bf16.mxu0 0
      %811 = vmatpush2.bf16.msra.mxu0 0
      %812 = vmatprep.subr.bf16.mxu0 0
      %813 = vmatpush2.bf16.msra.mxu0 0
      %814 = vmatprep.subr.bf16.mxu0 0
      %815 = vmatpush2.bf16.msra.mxu0 0
      %816 = vmatprep.subr.bf16.mxu0 0
      %817 = vmatpush2.bf16.msra.mxu0 0
      %818 = vmatprep.subr.bf16.mxu0 0
      %819 = vmatpush2.bf16.msra.mxu0 0
      %820 = vmatprep.subr.bf16.mxu0 0
      %821 = vmatpush2.bf16.msra.mxu0 0
      %822 = vmatprep.subr.bf16.mxu0 0
      %823 = vmatpush2.bf16.msra.mxu0 0
      %824 = vmatprep.subr.bf16.mxu0 0
      %825 = vmatpush2.bf16.msra.mxu0 0
      %826 = vmatprep.mubr.bf16.mxu0 0
      %827 = vmatmul.mubr.bf16.gmra.mxu0 %v742
      %v828 = vpop.f32.mrf.mxu0
      %v829 = vadd.f32 0.0, %v828
      %v830 = vpop.f32.mrf.mxu0
      %v831 = vpop.f32.mrf.mxu0
      %v832 = vadd.f32 0.0, %v831
      %v833 = vpop.f32.mrf.mxu0
      %834 = vmatprep.mubr.bf16.mxu0 0
      %835 = vmatmul.mubr.bf16.gmra.mxu0 %v743
      %v836 = vpop.f32.mrf.mxu0
      %v837 = vadd.f32 0.0, %v836
      %v838 = vpop.f32.mrf.mxu0
      %v839 = vpop.f32.mrf.mxu0
      %v840 = vadd.f32 0.0, %v839
      %v841 = vpop.f32.mrf.mxu0
      %842 = vdwg.mxu0
      %v843 = vadd.f32 %v709, %v829
      %v844 = vadd.f32 %v710, %v832
      %v845 = vadd.f32 %v711, %v837
      %v846 = vadd.f32 %v712, %v840
      %847 = vst [vmem:[#allocation2] sm:$0xff] %v843
      %848 = vst [vmem:[#allocation2 + $0x8] sm:$0xff] %v844
      %849 = vst [vmem:[#allocation2 + $0x10] sm:$0xff] %v845
      %850 = vst [vmem:[#allocation2 + $0x18] sm:$0xff] %v846
      %v851 = vld [vmem:[#allocation2] sm:$0xff]
      %v852 = vld [vmem:[#allocation2 + $0x8] sm:$0xff]
      %v853 = vld [vmem:[#allocation2 + $0x10] sm:$0xff]
      %v854 = vld [vmem:[#allocation2 + $0x18] sm:$0xff]
      %v855 = vld [vmem:[%s233 + $0x48] sm:$0xf]
      %v856 = vld [vmem:[%s233 + $0x4c] sm:$0xf]
      %v857 = vld [vmem:[%s233 + $0x50] sm:$0xf]
      %v858 = vld [vmem:[%s233 + $0x54] sm:$0xf]
      %s859 = scalar_lea.vmem %s237, 256
      %v860 = vld [vmem:[%s859] sm:$0xf]
      %v861 = vld [vmem:[%s859 + $0x4] sm:$0xf]
      %v862 = vld [vmem:[%s859 + $0x8] sm:$0xf]
      %v863 = vld [vmem:[%s859 + $0xc] sm:$0xf]
      %v864 = vld [vmem:[%s859 + $0x10] sm:$0xf]
      %v865 = vld [vmem:[%s859 + $0x14] sm:$0xf]
      %v866 = vld [vmem:[%s859 + $0x18] sm:$0xf]
      %v867 = vld [vmem:[%s859 + $0x1c] sm:$0xf]
      %v868 = vld [vmem:[%s859 + $0x20] sm:$0xf]
      %v869 = vld [vmem:[%s859 + $0x24] sm:$0xf]
      %v870 = vld [vmem:[%s859 + $0x28] sm:$0xf]
      %v871 = vld [vmem:[%s859 + $0x2c] sm:$0xf]
      %v872 = vld [vmem:[%s859 + $0x30] sm:$0xf]
      %v873 = vld [vmem:[%s859 + $0x34] sm:$0xf]
      %v874 = vld [vmem:[%s859 + $0x38] sm:$0xf]
      %v875 = vld [vmem:[%s859 + $0x3c] sm:$0xf]
      %v880 = vunpack.c.l.b16 %v855
      %v881 = vunpack.c.l.b16 %v856
      %v882 = vunpack.c.l.b16 %v857
      %v883 = vunpack.c.l.b16 %v858
      %v884 = vpack.c.b16 %v881, %v880
      %v885 = vpack.c.b16 %v883, %v882
      %v904 = vunpack.c.l.b16 %v860
      %v905 = vunpack.c.l.b16 %v861
      %v906 = vunpack.c.l.b16 %v862
      %v907 = vunpack.c.l.b16 %v863
      %v908 = vunpack.c.l.b16 %v864
      %v909 = vunpack.c.l.b16 %v865
      %v910 = vunpack.c.l.b16 %v866
      %v911 = vunpack.c.l.b16 %v867
      %v912 = vunpack.c.l.b16 %v868
      %v913 = vunpack.c.l.b16 %v869
      %v914 = vunpack.c.l.b16 %v870
      %v915 = vunpack.c.l.b16 %v871
      %v916 = vunpack.c.l.b16 %v872
      %v917 = vunpack.c.l.b16 %v873
      %v918 = vunpack.c.l.b16 %v874
      %v919 = vunpack.c.l.b16 %v875
      %v920 = vpack.c.b16 %v905, %v904
      %v921 = vpack.c.b16 %v907, %v906
      %v922 = vpack.c.b16 %v909, %v908
      %v923 = vpack.c.b16 %v911, %v910
      %v924 = vpack.c.b16 %v913, %v912
      %v925 = vpack.c.b16 %v915, %v914
      %v926 = vpack.c.b16 %v917, %v916
      %v927 = vpack.c.b16 %v919, %v918
      %936 = vmatprep.subr.bf16.mxu0 0
      %937 = vmatpush1.bf16.msra.mxu0 %v927
      %938 = vmatprep.subr.bf16.mxu0 0
      %939 = vmatpush1.bf16.msra.mxu0 %v926
      %940 = vmatprep.subr.bf16.mxu0 0
      %941 = vmatpush1.bf16.msra.mxu0 %v925
      %942 = vmatprep.subr.bf16.mxu0 0
      %943 = vmatpush1.bf16.msra.mxu0 %v924
      %944 = vmatprep.subr.bf16.mxu0 0
      %945 = vmatpush1.bf16.msra.mxu0 %v923
      %946 = vmatprep.subr.bf16.mxu0 0
      %947 = vmatpush1.bf16.msra.mxu0 %v922
      %948 = vmatprep.subr.bf16.mxu0 0
      %949 = vmatpush1.bf16.msra.mxu0 %v921
      %950 = vmatprep.subr.bf16.mxu0 0
      %951 = vmatpush1.bf16.msra.mxu0 %v920
      %952 = vmatprep.subr.bf16.mxu0 0
      %953 = vmatpush2.bf16.msra.mxu0 0
      %954 = vmatprep.subr.bf16.mxu0 0
      %955 = vmatpush2.bf16.msra.mxu0 0
      %956 = vmatprep.subr.bf16.mxu0 0
      %957 = vmatpush2.bf16.msra.mxu0 0
      %958 = vmatprep.subr.bf16.mxu0 0
      %959 = vmatpush2.bf16.msra.mxu0 0
      %960 = vmatprep.subr.bf16.mxu0 0
      %961 = vmatpush2.bf16.msra.mxu0 0
      %962 = vmatprep.subr.bf16.mxu0 0
      %963 = vmatpush2.bf16.msra.mxu0 0
      %964 = vmatprep.subr.bf16.mxu0 0
      %965 = vmatpush2.bf16.msra.mxu0 0
      %966 = vmatprep.subr.bf16.mxu0 0
      %967 = vmatpush2.bf16.msra.mxu0 0
      %968 = vmatprep.mubr.bf16.mxu0 0
      %969 = vmatmul.mubr.bf16.gmra.mxu0 %v884
      %v970 = vpop.f32.mrf.mxu0
      %v971 = vadd.f32 0.0, %v970
      %v972 = vpop.f32.mrf.mxu0
      %v973 = vpop.f32.mrf.mxu0
      %v974 = vadd.f32 0.0, %v973
      %v975 = vpop.f32.mrf.mxu0
      %976 = vmatprep.mubr.bf16.mxu0 0
      %977 = vmatmul.mubr.bf16.gmra.mxu0 %v885
      %v978 = vpop.f32.mrf.mxu0
      %v979 = vadd.f32 0.0, %v978
      %v980 = vpop.f32.mrf.mxu0
      %v981 = vpop.f32.mrf.mxu0
      %v982 = vadd.f32 0.0, %v981
      %v983 = vpop.f32.mrf.mxu0
      %984 = vdwg.mxu0
      %v985 = vadd.f32 %v851, %v971
      %v986 = vadd.f32 %v852, %v974
      %v987 = vadd.f32 %v853, %v979
      %v988 = vadd.f32 %v854, %v982
      %989 = vst [vmem:[#allocation2] sm:$0xff] %v985
      %990 = vst [vmem:[#allocation2 + $0x8] sm:$0xff] %v986
      %991 = vst [vmem:[#allocation2 + $0x10] sm:$0xff] %v987
      %992 = vst [vmem:[#allocation2 + $0x18] sm:$0xff] %v988
      %v993 = vld [vmem:[#allocation2] sm:$0xff]
      %v994 = vld [vmem:[#allocation2 + $0x8] sm:$0xff]
      %v995 = vld [vmem:[#allocation2 + $0x10] sm:$0xff]
      %v996 = vld [vmem:[#allocation2 + $0x18] sm:$0xff]
      %v997 = vld [vmem:[%s233 + $0x30] sm:$0xf]
      %v998 = vld [vmem:[%s233 + $0x34] sm:$0xf]
      %v999 = vld [vmem:[%s233 + $0x38] sm:$0xf]
      %v1000 = vld [vmem:[%s233 + $0x3c] sm:$0xf]
      %v1001 = vld [vmem:[%s233 + $0x40] sm:$0x1]
      %s1002 = scalar_lea.vmem %s237, 320
      %v1003 = vld [vmem:[%s1002] sm:$0xf]
      %v1004 = vld [vmem:[%s1002 + $0x4] sm:$0xf]
      %v1005 = vld [vmem:[%s1002 + $0x8] sm:$0xf]
      %v1006 = vld [vmem:[%s1002 + $0xc] sm:$0xf]
      %v1007 = vld [vmem:[%s1002 + $0x10] sm:$0xf]
      %v1008 = vld [vmem:[%s1002 + $0x14] sm:$0xf]
      %v1009 = vld [vmem:[%s1002 + $0x18] sm:$0xf]
      %v1010 = vld [vmem:[%s1002 + $0x1c] sm:$0xf]
      %v1011 = vld [vmem:[%s1002 + $0x20] sm:$0xf]
      %v1012 = vld [vmem:[%s1002 + $0x24] sm:$0xf]
      %v1013 = vld [vmem:[%s1002 + $0x28] sm:$0xf]
      %v1014 = vld [vmem:[%s1002 + $0x2c] sm:$0xf]
      %v1015 = vld [vmem:[%s1002 + $0x30] sm:$0xf]
      %v1016 = vld [vmem:[%s1002 + $0x34] sm:$0xf]
      %v1017 = vld [vmem:[%s1002 + $0x38] sm:$0xf]
      %v1018 = vld [vmem:[%s1002 + $0x3c] sm:$0xf]
      %v1024 = vunpack.c.l.b16 %v997
      %v1025 = vunpack.c.l.b16 %v998
      %v1026 = vunpack.c.l.b16 %v999
      %v1027 = vunpack.c.l.b16 %v1000
      %v1028 = vunpack.c.l.b16 %v1001
      %v1029 = vpack.c.b16 %v1025, %v1024
      %v1030 = vpack.c.b16 %v1027, %v1026
      %v1031 = vpack.c.b16 %v1028, %v1028
      %v1033 = vshrl.u32 %v1029, 16
      %v1035 = vshll.u32 %v1029, 16
      %v1037 = vrot.slane %v1035, 1
      %v1038 = vor.u32 %v1033, %v1037
      %v1040 = vshll.u32 %v1030, 16
      %v1042 = vrot.slane %v1040, 1
      %v1043 = vsel %vm581, %v1038, %v1042
      %v1044 = vshrl.u32 %v1030, 16
      %v1046 = vor.u32 %v1044, %v1042
      %v1048 = vshll.u32 %v1031, 16
      %v1050 = vrot.slane %v1048, 1
      %v1051 = vsel %vm581, %v1046, %v1050
      %v1070 = vunpack.c.l.b16 %v1003
      %v1071 = vunpack.c.l.b16 %v1004
      %v1072 = vunpack.c.l.b16 %v1005
      %v1073 = vunpack.c.l.b16 %v1006
      %v1074 = vunpack.c.l.b16 %v1007
      %v1075 = vunpack.c.l.b16 %v1008
      %v1076 = vunpack.c.l.b16 %v1009
      %v1077 = vunpack.c.l.b16 %v1010
      %v1078 = vunpack.c.l.b16 %v1011
      %v1079 = vunpack.c.l.b16 %v1012
      %v1080 = vunpack.c.l.b16 %v1013
      %v1081 = vunpack.c.l.b16 %v1014
      %v1082 = vunpack.c.l.b16 %v1015
      %v1083 = vunpack.c.l.b16 %v1016
      %v1084 = vunpack.c.l.b16 %v1017
      %v1085 = vunpack.c.l.b16 %v1018
      %v1086 = vpack.c.b16 %v1071, %v1070
      %v1087 = vpack.c.b16 %v1073, %v1072
      %v1088 = vpack.c.b16 %v1075, %v1074
      %v1089 = vpack.c.b16 %v1077, %v1076
      %v1090 = vpack.c.b16 %v1079, %v1078
      %v1091 = vpack.c.b16 %v1081, %v1080
      %v1092 = vpack.c.b16 %v1083, %v1082
      %v1093 = vpack.c.b16 %v1085, %v1084
      %1102 = vmatprep.subr.bf16.mxu0 0
      %1103 = vmatpush1.bf16.msra.mxu0 %v1093
      %1104 = vmatprep.subr.bf16.mxu0 0
      %1105 = vmatpush1.bf16.msra.mxu0 %v1092
      %1106 = vmatprep.subr.bf16.mxu0 0
      %1107 = vmatpush1.bf16.msra.mxu0 %v1091
      %1108 = vmatprep.subr.bf16.mxu0 0
      %1109 = vmatpush1.bf16.msra.mxu0 %v1090
      %1110 = vmatprep.subr.bf16.mxu0 0
      %1111 = vmatpush1.bf16.msra.mxu0 %v1089
      %1112 = vmatprep.subr.bf16.mxu0 0
      %1113 = vmatpush1.bf16.msra.mxu0 %v1088
      %1114 = vmatprep.subr.bf16.mxu0 0
      %1115 = vmatpush1.bf16.msra.mxu0 %v1087
      %1116 = vmatprep.subr.bf16.mxu0 0
      %1117 = vmatpush1.bf16.msra.mxu0 %v1086
      %1118 = vmatprep.subr.bf16.mxu0 0
      %1119 = vmatpush2.bf16.msra.mxu0 0
      %1120 = vmatprep.subr.bf16.mxu0 0
      %1121 = vmatpush2.bf16.msra.mxu0 0
      %1122 = vmatprep.subr.bf16.mxu0 0
      %1123 = vmatpush2.bf16.msra.mxu0 0
      %1124 = vmatprep.subr.bf16.mxu0 0
      %1125 = vmatpush2.bf16.msra.mxu0 0
      %1126 = vmatprep.subr.bf16.mxu0 0
      %1127 = vmatpush2.bf16.msra.mxu0 0
      %1128 = vmatprep.subr.bf16.mxu0 0
      %1129 = vmatpush2.bf16.msra.mxu0 0
      %1130 = vmatprep.subr.bf16.mxu0 0
      %1131 = vmatpush2.bf16.msra.mxu0 0
      %1132 = vmatprep.subr.bf16.mxu0 0
      %1133 = vmatpush2.bf16.msra.mxu0 0
      %1134 = vmatprep.mubr.bf16.mxu0 0
      %1135 = vmatmul.mubr.bf16.gmra.mxu0 %v1043
      %v1136 = vpop.f32.mrf.mxu0
      %v1137 = vadd.f32 0.0, %v1136
      %v1138 = vpop.f32.mrf.mxu0
      %v1139 = vpop.f32.mrf.mxu0
      %v1140 = vadd.f32 0.0, %v1139
      %v1141 = vpop.f32.mrf.mxu0
      %1142 = vmatprep.mubr.bf16.mxu0 0
      %1143 = vmatmul.mubr.bf16.gmra.mxu0 %v1051
      %v1144 = vpop.f32.mrf.mxu0
      %v1145 = vadd.f32 0.0, %v1144
      %v1146 = vpop.f32.mrf.mxu0
      %v1147 = vpop.f32.mrf.mxu0
      %v1148 = vadd.f32 0.0, %v1147
      %v1149 = vpop.f32.mrf.mxu0
      %1150 = vdwg.mxu0
      %v1151 = vadd.f32 %v993, %v1137
      %v1152 = vadd.f32 %v994, %v1140
      %v1153 = vadd.f32 %v995, %v1145
      %v1154 = vadd.f32 %v996, %v1148
      %1155 = vst [vmem:[#allocation2] sm:$0xff] %v1151
      %1156 = vst [vmem:[#allocation2 + $0x8] sm:$0xff] %v1152
      %1157 = vst [vmem:[#allocation2 + $0x10] sm:$0xff] %v1153
      %1158 = vst [vmem:[#allocation2 + $0x18] sm:$0xff] %v1154
      %v1159 = vld [vmem:[#allocation2] sm:$0xff]
      %v1160 = vld [vmem:[#allocation2 + $0x8] sm:$0xff]
      %v1161 = vld [vmem:[#allocation2 + $0x10] sm:$0xff]
      %v1162 = vld [vmem:[#allocation2 + $0x18] sm:$0xff]
      %v1163 = vld [vmem:[%s233] sm:$0xc]
      %v1164 = vld [vmem:[%s233 + $0x4] sm:$0xf]
      %v1165 = vld [vmem:[%s233 + $0x8] sm:$0xf]
      %v1166 = vld [vmem:[%s233 + $0xc] sm:$0xf]
      %v1167 = vld [vmem:[%s233 + $0x10] sm:$0x7]
      %s1168 = scalar_lea.vmem %s237, 384
      %v1169 = vld [vmem:[%s1168] sm:$0xf]
      %v1170 = vld [vmem:[%s1168 + $0x4] sm:$0xf]
      %v1171 = vld [vmem:[%s1168 + $0x8] sm:$0xf]
      %v1172 = vld [vmem:[%s1168 + $0xc] sm:$0xf]
      %v1173 = vld [vmem:[%s1168 + $0x10] sm:$0xf]
      %v1174 = vld [vmem:[%s1168 + $0x14] sm:$0xf]
      %v1175 = vld [vmem:[%s1168 + $0x18] sm:$0xf]
      %v1176 = vld [vmem:[%s1168 + $0x1c] sm:$0xf]
      %v1177 = vld [vmem:[%s1168 + $0x20] sm:$0xf]
      %v1178 = vld [vmem:[%s1168 + $0x24] sm:$0xf]
      %v1179 = vld [vmem:[%s1168 + $0x28] sm:$0xf]
      %v1180 = vld [vmem:[%s1168 + $0x2c] sm:$0xf]
      %v1181 = vld [vmem:[%s1168 + $0x30] sm:$0xf]
      %v1182 = vld [vmem:[%s1168 + $0x34] sm:$0xf]
      %v1183 = vld [vmem:[%s1168 + $0x38] sm:$0xf]
      %v1184 = vld [vmem:[%s1168 + $0x3c] sm:$0xf]
      %v1190 = vunpack.c.l.b16 %v1163
      %v1191 = vunpack.c.l.b16 %v1164
      %v1192 = vunpack.c.l.b16 %v1165
      %v1193 = vunpack.c.l.b16 %v1166
      %v1194 = vunpack.c.l.b16 %v1167
      %v1195 = vpack.c.b16 %v1191, %v1190
      %v1196 = vpack.c.b16 %v1193, %v1192
      %v1197 = vpack.c.b16 %v1194, %v1194
      %vm1198 = vsmask.f32 5376
      %v1200 = vshrl.u32 %v1195, 16
      %v1202 = vrot.slane %v1200, 2
      %v1203 = vshll.u32 %v1195, 16
      %v1205 = vrot.slane %v1203, 3
      %v1206 = vor.u32 %v1202, %v1205
      %v1208 = vshrl.u32 %v1196, 16
      %v1210 = vrot.slane %v1208, 2
      %v1211 = vshll.u32 %v1196, 16
      %v1213 = vrot.slane %v1211, 3
      %v1214 = vor.u32 %v1210, %v1213
      %v1215 = vsel %vm1198, %v1206, %v1214
      %v1217 = vshrl.u32 %v1197, 16
      %v1219 = vrot.slane %v1217, 2
      %v1220 = vshll.u32 %v1197, 16
      %v1222 = vrot.slane %v1220, 3
      %v1223 = vor.u32 %v1219, %v1222
      %v1224 = vsel %vm1198, %v1214, %v1223
      %v1243 = vunpack.c.l.b16 %v1169
      %v1244 = vunpack.c.l.b16 %v1170
      %v1245 = vunpack.c.l.b16 %v1171
      %v1246 = vunpack.c.l.b16 %v1172
      %v1247 = vunpack.c.l.b16 %v1173
      %v1248 = vunpack.c.l.b16 %v1174
      %v1249 = vunpack.c.l.b16 %v1175
      %v1250 = vunpack.c.l.b16 %v1176
      %v1251 = vunpack.c.l.b16 %v1177
      %v1252 = vunpack.c.l.b16 %v1178
      %v1253 = vunpack.c.l.b16 %v1179
      %v1254 = vunpack.c.l.b16 %v1180
      %v1255 = vunpack.c.l.b16 %v1181
      %v1256 = vunpack.c.l.b16 %v1182
      %v1257 = vunpack.c.l.b16 %v1183
      %v1258 = vunpack.c.l.b16 %v1184
      %v1259 = vpack.c.b16 %v1244, %v1243
      %v1260 = vpack.c.b16 %v1246, %v1245
      %v1261 = vpack.c.b16 %v1248, %v1247
      %v1262 = vpack.c.b16 %v1250, %v1249
      %v1263 = vpack.c.b16 %v1252, %v1251
      %v1264 = vpack.c.b16 %v1254, %v1253
      %v1265 = vpack.c.b16 %v1256, %v1255
      %v1266 = vpack.c.b16 %v1258, %v1257
      %1275 = vmatprep.subr.bf16.mxu0 0
      %1276 = vmatpush1.bf16.msra.mxu0 %v1266
      %1277 = vmatprep.subr.bf16.mxu0 0
      %1278 = vmatpush1.bf16.msra.mxu0 %v1265
      %1279 = vmatprep.subr.bf16.mxu0 0
      %1280 = vmatpush1.bf16.msra.mxu0 %v1264
      %1281 = vmatprep.subr.bf16.mxu0 0
      %1282 = vmatpush1.bf16.msra.mxu0 %v1263
      %1283 = vmatprep.subr.bf16.mxu0 0
      %1284 = vmatpush1.bf16.msra.mxu0 %v1262
      %1285 = vmatprep.subr.bf16.mxu0 0
      %1286 = vmatpush1.bf16.msra.mxu0 %v1261
      %1287 = vmatprep.subr.bf16.mxu0 0
      %1288 = vmatpush1.bf16.msra.mxu0 %v1260
      %1289 = vmatprep.subr.bf16.mxu0 0
      %1290 = vmatpush1.bf16.msra.mxu0 %v1259
      %1291 = vmatprep.subr.bf16.mxu0 0
      %1292 = vmatpush2.bf16.msra.mxu0 0
      %1293 = vmatprep.subr.bf16.mxu0 0
      %1294 = vmatpush2.bf16.msra.mxu0 0
      %1295 = vmatprep.subr.bf16.mxu0 0
      %1296 = vmatpush2.bf16.msra.mxu0 0
      %1297 = vmatprep.subr.bf16.mxu0 0
      %1298 = vmatpush2.bf16.msra.mxu0 0
      %1299 = vmatprep.subr.bf16.mxu0 0
      %1300 = vmatpush2.bf16.msra.mxu0 0
      %1301 = vmatprep.subr.bf16.mxu0 0
      %1302 = vmatpush2.bf16.msra.mxu0 0
      %1303 = vmatprep.subr.bf16.mxu0 0
      %1304 = vmatpush2.bf16.msra.mxu0 0
      %1305 = vmatprep.subr.bf16.mxu0 0
      %1306 = vmatpush2.bf16.msra.mxu0 0
      %1307 = vmatprep.mubr.bf16.mxu0 0
      %1308 = vmatmul.mubr.bf16.gmra.mxu0 %v1215
      %v1309 = vpop.f32.mrf.mxu0
      %v1310 = vadd.f32 0.0, %v1309
      %v1311 = vpop.f32.mrf.mxu0
      %v1312 = vpop.f32.mrf.mxu0
      %v1313 = vadd.f32 0.0, %v1312
      %v1314 = vpop.f32.mrf.mxu0
      %1315 = vmatprep.mubr.bf16.mxu0 0
      %1316 = vmatmul.mubr.bf16.gmra.mxu0 %v1224
      %v1317 = vpop.f32.mrf.mxu0
      %v1318 = vadd.f32 0.0, %v1317
      %v1319 = vpop.f32.mrf.mxu0
      %v1320 = vpop.f32.mrf.mxu0
      %v1321 = vadd.f32 0.0, %v1320
      %v1322 = vpop.f32.mrf.mxu0
      %1323 = vdwg.mxu0
      %v1324 = vadd.f32 %v1159, %v1310
      %v1325 = vadd.f32 %v1160, %v1313
      %v1326 = vadd.f32 %v1161, %v1318
      %v1327 = vadd.f32 %v1162, %v1321
      %1328 = vst [vmem:[#allocation2] sm:$0xff] %v1324
      %1329 = vst [vmem:[#allocation2 + $0x8] sm:$0xff] %v1325
      %1330 = vst [vmem:[#allocation2 + $0x10] sm:$0xff] %v1326
      %1331 = vst [vmem:[#allocation2 + $0x18] sm:$0xff] %v1327
      %v1332 = vld [vmem:[#allocation2] sm:$0xff]
      %v1333 = vld [vmem:[#allocation2 + $0x8] sm:$0xff]
      %v1334 = vld [vmem:[#allocation2 + $0x10] sm:$0xff]
      %v1335 = vld [vmem:[#allocation2 + $0x18] sm:$0xff]
      %v1336 = vld [vmem:[%s233 + $0x18] sm:$0xc]
      %v1337 = vld [vmem:[%s233 + $0x1c] sm:$0xf]
      %v1338 = vld [vmem:[%s233 + $0x20] sm:$0xf]
      %v1339 = vld [vmem:[%s233 + $0x24] sm:$0xf]
      %v1340 = vld [vmem:[%s233 + $0x28] sm:$0x7]
      %s1341 = scalar_lea.vmem %s237, 448
      %v1342 = vld [vmem:[%s1341] sm:$0xf]
      %v1343 = vld [vmem:[%s1341 + $0x4] sm:$0xf]
      %v1344 = vld [vmem:[%s1341 + $0x8] sm:$0xf]
      %v1345 = vld [vmem:[%s1341 + $0xc] sm:$0xf]
      %v1346 = vld [vmem:[%s1341 + $0x10] sm:$0xf]
      %v1347 = vld [vmem:[%s1341 + $0x14] sm:$0xf]
      %v1348 = vld [vmem:[%s1341 + $0x18] sm:$0xf]
      %v1349 = vld [vmem:[%s1341 + $0x1c] sm:$0xf]
      %v1350 = vld [vmem:[%s1341 + $0x20] sm:$0xf]
      %v1351 = vld [vmem:[%s1341 + $0x24] sm:$0xf]
      %v1352 = vld [vmem:[%s1341 + $0x28] sm:$0xf]
      %v1353 = vld [vmem:[%s1341 + $0x2c] sm:$0xf]
      %v1354 = vld [vmem:[%s1341 + $0x30] sm:$0xf]
      %v1355 = vld [vmem:[%s1341 + $0x34] sm:$0xf]
      %v1356 = vld [vmem:[%s1341 + $0x38] sm:$0xf]
      %v1357 = vld [vmem:[%s1341 + $0x3c] sm:$0xf]
      %v1363 = vunpack.c.l.b16 %v1336
      %v1364 = vunpack.c.l.b16 %v1337
      %v1365 = vunpack.c.l.b16 %v1338
      %v1366 = vunpack.c.l.b16 %v1339
      %v1367 = vunpack.c.l.b16 %v1340
      %v1368 = vpack.c.b16 %v1364, %v1363
      %v1369 = vpack.c.b16 %v1366, %v1365
      %v1370 = vpack.c.b16 %v1367, %v1367
      %v1372 = vshrl.u32 %v1368, 16
      %v1374 = vrot.slane %v1372, 2
      %v1375 = vshll.u32 %v1368, 16
      %v1377 = vrot.slane %v1375, 3
      %v1378 = vor.u32 %v1374, %v1377
      %v1380 = vshrl.u32 %v1369, 16
      %v1382 = vrot.slane %v1380, 2
      %v1383 = vshll.u32 %v1369, 16
      %v1385 = vrot.slane %v1383, 3
      %v1386 = vor.u32 %v1382, %v1385
      %v1387 = vsel %vm1198, %v1378, %v1386
      %v1389 = vshrl.u32 %v1370, 16
      %v1391 = vrot.slane %v1389, 2
      %v1392 = vshll.u32 %v1370, 16
      %v1394 = vrot.slane %v1392, 3
      %v1395 = vor.u32 %v1391, %v1394
      %v1396 = vsel %vm1198, %v1386, %v1395
      %v1415 = vunpack.c.l.b16 %v1342
      %v1416 = vunpack.c.l.b16 %v1343
      %v1417 = vunpack.c.l.b16 %v1344
      %v1418 = vunpack.c.l.b16 %v1345
      %v1419 = vunpack.c.l.b16 %v1346
      %v1420 = vunpack.c.l.b16 %v1347
      %v1421 = vunpack.c.l.b16 %v1348
      %v1422 = vunpack.c.l.b16 %v1349
      %v1423 = vunpack.c.l.b16 %v1350
      %v1424 = vunpack.c.l.b16 %v1351
      %v1425 = vunpack.c.l.b16 %v1352
      %v1426 = vunpack.c.l.b16 %v1353
      %v1427 = vunpack.c.l.b16 %v1354
      %v1428 = vunpack.c.l.b16 %v1355
      %v1429 = vunpack.c.l.b16 %v1356
      %v1430 = vunpack.c.l.b16 %v1357
      %v1431 = vpack.c.b16 %v1416, %v1415
      %v1432 = vpack.c.b16 %v1418, %v1417
      %v1433 = vpack.c.b16 %v1420, %v1419
      %v1434 = vpack.c.b16 %v1422, %v1421
      %v1435 = vpack.c.b16 %v1424, %v1423
      %v1436 = vpack.c.b16 %v1426, %v1425
      %v1437 = vpack.c.b16 %v1428, %v1427
      %v1438 = vpack.c.b16 %v1430, %v1429
      %1447 = vmatprep.subr.bf16.mxu0 0
      %1448 = vmatpush1.bf16.msra.mxu0 %v1438
      %1449 = vmatprep.subr.bf16.mxu0 0
      %1450 = vmatpush1.bf16.msra.mxu0 %v1437
      %1451 = vmatprep.subr.bf16.mxu0 0
      %1452 = vmatpush1.bf16.msra.mxu0 %v1436
      %1453 = vmatprep.subr.bf16.mxu0 0
      %1454 = vmatpush1.bf16.msra.mxu0 %v1435
      %1455 = vmatprep.subr.bf16.mxu0 0
      %1456 = vmatpush1.bf16.msra.mxu0 %v1434
      %1457 = vmatprep.subr.bf16.mxu0 0
      %1458 = vmatpush1.bf16.msra.mxu0 %v1433
      %1459 = vmatprep.subr.bf16.mxu0 0
      %1460 = vmatpush1.bf16.msra.mxu0 %v1432
      %1461 = vmatprep.subr.bf16.mxu0 0
      %1462 = vmatpush1.bf16.msra.mxu0 %v1431
      %1463 = vmatprep.subr.bf16.mxu0 0
      %1464 = vmatpush2.bf16.msra.mxu0 0
      %1465 = vmatprep.subr.bf16.mxu0 0
      %1466 = vmatpush2.bf16.msra.mxu0 0
      %1467 = vmatprep.subr.bf16.mxu0 0
      %1468 = vmatpush2.bf16.msra.mxu0 0
      %1469 = vmatprep.subr.bf16.mxu0 0
      %1470 = vmatpush2.bf16.msra.mxu0 0
      %1471 = vmatprep.subr.bf16.mxu0 0
      %1472 = vmatpush2.bf16.msra.mxu0 0
      %1473 = vmatprep.subr.bf16.mxu0 0
      %1474 = vmatpush2.bf16.msra.mxu0 0
      %1475 = vmatprep.subr.bf16.mxu0 0
      %1476 = vmatpush2.bf16.msra.mxu0 0
      %1477 = vmatprep.subr.bf16.mxu0 0
      %1478 = vmatpush2.bf16.msra.mxu0 0
      %1479 = vmatprep.mubr.bf16.mxu0 0
      %1480 = vmatmul.mubr.bf16.gmra.mxu0 %v1387
      %v1481 = vpop.f32.mrf.mxu0
      %v1482 = vadd.f32 0.0, %v1481
      %v1483 = vpop.f32.mrf.mxu0
      %v1484 = vpop.f32.mrf.mxu0
      %v1485 = vadd.f32 0.0, %v1484
      %v1486 = vpop.f32.mrf.mxu0
      %1487 = vmatprep.mubr.bf16.mxu0 0
      %1488 = vmatmul.mubr.bf16.gmra.mxu0 %v1396
      %v1489 = vpop.f32.mrf.mxu0
      %v1490 = vadd.f32 0.0, %v1489
      %v1491 = vpop.f32.mrf.mxu0
      %v1492 = vpop.f32.mrf.mxu0
      %v1493 = vadd.f32 0.0, %v1492
      %v1494 = vpop.f32.mrf.mxu0
      %1495 = vdwg.mxu0
      %v1496 = vadd.f32 %v1332, %v1482
      %v1497 = vadd.f32 %v1333, %v1485
      %v1498 = vadd.f32 %v1334, %v1490
      %v1499 = vadd.f32 %v1335, %v1493
      %1500 = vst [vmem:[#allocation2] sm:$0xff] %v1496
      %1501 = vst [vmem:[#allocation2 + $0x8] sm:$0xff] %v1497
      %1502 = vst [vmem:[#allocation2 + $0x10] sm:$0xff] %v1498
      %1503 = vst [vmem:[#allocation2 + $0x18] sm:$0xff] %v1499
      %v1504 = vld [vmem:[#allocation2] sm:$0xff]
      %v1505 = vld [vmem:[#allocation2 + $0x8] sm:$0xff]
      %v1506 = vld [vmem:[#allocation2 + $0x10] sm:$0xff]
      %v1507 = vld [vmem:[#allocation2 + $0x18] sm:$0xff]
      %v1508 = vld [vmem:[%s233] sm:$0x8]
      %v1509 = vld [vmem:[%s233 + $0x4] sm:$0xf]
      %v1510 = vld [vmem:[%s233 + $0x8] sm:$0xf]
      %v1511 = vld [vmem:[%s233 + $0xc] sm:$0xf]
      %v1512 = vld [vmem:[%s233 + $0x10] sm:$0x7]
      %s1513 = scalar_lea.vmem %s237, 512
      %v1514 = vld [vmem:[%s1513] sm:$0xf]
      %v1515 = vld [vmem:[%s1513 + $0x4] sm:$0xf]
      %v1516 = vld [vmem:[%s1513 + $0x8] sm:$0xf]
      %v1517 = vld [vmem:[%s1513 + $0xc] sm:$0xf]
      %v1518 = vld [vmem:[%s1513 + $0x10] sm:$0xf]
      %v1519 = vld [vmem:[%s1513 + $0x14] sm:$0xf]
      %v1520 = vld [vmem:[%s1513 + $0x18] sm:$0xf]
      %v1521 = vld [vmem:[%s1513 + $0x1c] sm:$0xf]
      %v1522 = vld [vmem:[%s1513 + $0x20] sm:$0xf]
      %v1523 = vld [vmem:[%s1513 + $0x24] sm:$0xf]
      %v1524 = vld [vmem:[%s1513 + $0x28] sm:$0xf]
      %v1525 = vld [vmem:[%s1513 + $0x2c] sm:$0xf]
      %v1526 = vld [vmem:[%s1513 + $0x30] sm:$0xf]
      %v1527 = vld [vmem:[%s1513 + $0x34] sm:$0xf]
      %v1528 = vld [vmem:[%s1513 + $0x38] sm:$0xf]
      %v1529 = vld [vmem:[%s1513 + $0x3c] sm:$0xf]
      %v1535 = vunpack.c.l.b16 %v1508
      %v1536 = vunpack.c.l.b16 %v1509
      %v1537 = vunpack.c.l.b16 %v1510
      %v1538 = vunpack.c.l.b16 %v1511
      %v1539 = vunpack.c.l.b16 %v1512
      %v1540 = vpack.c.b16 %v1536, %v1535
      %v1541 = vpack.c.b16 %v1538, %v1537
      %v1542 = vpack.c.b16 %v1539, %v1539
      %vm1543 = vcmask 1044480
      %v1544 = vrot.slane %v1540, 3
      %v1545 = vrot.slane %v1541, 3
      %v1546 = vsel %vm1543, %v1544, %v1545
      %v1547 = vrot.slane %v1542, 3
      %v1548 = vsel %vm1543, %v1545, %v1547
      %v1567 = vunpack.c.l.b16 %v1514
      %v1568 = vunpack.c.l.b16 %v1515
      %v1569 = vunpack.c.l.b16 %v1516
      %v1570 = vunpack.c.l.b16 %v1517
      %v1571 = vunpack.c.l.b16 %v1518
      %v1572 = vunpack.c.l.b16 %v1519
      %v1573 = vunpack.c.l.b16 %v1520
      %v1574 = vunpack.c.l.b16 %v1521
      %v1575 = vunpack.c.l.b16 %v1522
      %v1576 = vunpack.c.l.b16 %v1523
      %v1577 = vunpack.c.l.b16 %v1524
      %v1578 = vunpack.c.l.b16 %v1525
      %v1579 = vunpack.c.l.b16 %v1526
      %v1580 = vunpack.c.l.b16 %v1527
      %v1581 = vunpack.c.l.b16 %v1528
      %v1582 = vunpack.c.l.b16 %v1529
      %v1583 = vpack.c.b16 %v1568, %v1567
      %v1584 = vpack.c.b16 %v1570, %v1569
      %v1585 = vpack.c.b16 %v1572, %v1571
      %v1586 = vpack.c.b16 %v1574, %v1573
      %v1587 = vpack.c.b16 %v1576, %v1575
      %v1588 = vpack.c.b16 %v1578, %v1577
      %v1589 = vpack.c.b16 %v1580, %v1579
      %v1590 = vpack.c.b16 %v1582, %v1581
      %1599 = vmatprep.subr.bf16.mxu0 0
      %1600 = vmatpush1.bf16.msra.mxu0 %v1590
      %1601 = vmatprep.subr.bf16.mxu0 0
      %1602 = vmatpush1.bf16.msra.mxu0 %v1589
      %1603 = vmatprep.subr.bf16.mxu0 0
      %1604 = vmatpush1.bf16.msra.mxu0 %v1588
      %1605 = vmatprep.subr.bf16.mxu0 0
      %1606 = vmatpush1.bf16.msra.mxu0 %v1587
      %1607 = vmatprep.subr.bf16.mxu0 0
      %1608 = vmatpush1.bf16.msra.mxu0 %v1586
      %1609 = vmatprep.subr.bf16.mxu0 0
      %1610 = vmatpush1.bf16.msra.mxu0 %v1585
      %1611 = vmatprep.subr.bf16.mxu0 0
      %1612 = vmatpush1.bf16.msra.mxu0 %v1584
      %1613 = vmatprep.subr.bf16.mxu0 0
      %1614 = vmatpush1.bf16.msra.mxu0 %v1583
      %1615 = vmatprep.subr.bf16.mxu0 0
      %1616 = vmatpush2.bf16.msra.mxu0 0
      %1617 = vmatprep.subr.bf16.mxu0 0
      %1618 = vmatpush2.bf16.msra.mxu0 0
      %1619 = vmatprep.subr.bf16.mxu0 0
      %1620 = vmatpush2.bf16.msra.mxu0 0
      %1621 = vmatprep.subr.bf16.mxu0 0
      %1622 = vmatpush2.bf16.msra.mxu0 0
      %1623 = vmatprep.subr.bf16.mxu0 0
      %1624 = vmatpush2.bf16.msra.mxu0 0
      %1625 = vmatprep.subr.bf16.mxu0 0
      %1626 = vmatpush2.bf16.msra.mxu0 0
      %1627 = vmatprep.subr.bf16.mxu0 0
      %1628 = vmatpush2.bf16.msra.mxu0 0
      %1629 = vmatprep.subr.bf16.mxu0 0
      %1630 = vmatpush2.bf16.msra.mxu0 0
      %1631 = vmatprep.mubr.bf16.mxu0 0
      %1632 = vmatmul.mubr.bf16.gmra.mxu0 %v1546
      %v1633 = vpop.f32.mrf.mxu0
      %v1634 = vadd.f32 0.0, %v1633
      %v1635 = vpop.f32.mrf.mxu0
      %v1636 = vpop.f32.mrf.mxu0
      %v1637 = vadd.f32 0.0, %v1636
      %v1638 = vpop.f32.mrf.mxu0
      %1639 = vmatprep.mubr.bf16.mxu0 0
      %1640 = vmatmul.mubr.bf16.gmra.mxu0 %v1548
      %v1641 = vpop.f32.mrf.mxu0
      %v1642 = vadd.f32 0.0, %v1641
      %v1643 = vpop.f32.mrf.mxu0
      %v1644 = vpop.f32.mrf.mxu0
      %v1645 = vadd.f32 0.0, %v1644
      %v1646 = vpop.f32.mrf.mxu0
      %1647 = vdwg.mxu0
      %v1648 = vadd.f32 %v1504, %v1634
      %v1649 = vadd.f32 %v1505, %v1637
      %v1650 = vadd.f32 %v1506, %v1642
      %v1651 = vadd.f32 %v1507, %v1645
      %1652 = vst [vmem:[#allocation2] sm:$0xff] %v1648
      %1653 = vst [vmem:[#allocation2 + $0x8] sm:$0xff] %v1649
      %1654 = vst [vmem:[#allocation2 + $0x10] sm:$0xff] %v1650
      %1655 = vst [vmem:[#allocation2 + $0x18] sm:$0xff] %v1651
      %v1656 = vld [vmem:[#allocation2] sm:$0xff]
      %v1657 = vld [vmem:[#allocation2 + $0x8] sm:$0xff]
      %v1658 = vld [vmem:[#allocation2 + $0x10] sm:$0xff]
      %v1659 = vld [vmem:[#allocation2 + $0x18] sm:$0xff]
      %v1660 = vld [vmem:[%s240] sm:$0x1]
      %v1662 = vlaneseq
      %v1663 = vshrl.u32 %v1662, 7
      %v1664 = vsub.s32 0, %v1663
      %v1665 = vrot.slane %v1660, %v1664
      %v1667 = vadd.f32 %v1656, %v1665
      %v1668 = vadd.f32 %v1657, %v1665
      %v1669 = vadd.f32 %v1658, %v1665
      %v1670 = vadd.f32 %v1659, %v1665
      %v1671 = vmax.f32 %v1667, 0.0
      %v1672 = vmax.f32 %v1668, 0.0
      %v1673 = vmax.f32 %v1669, 0.0
      %v1674 = vmax.f32 %v1670, 0.0
      %v1675 = vpack.c.bf16 %v1672, %v1671
      %v1676 = vpack.c.bf16 %v1674, %v1673
      %v1679 = vunpack.c.l.b16 %v1675
      %v1680 = vunpack.c.h.b16 %v1675
      %v1681 = vunpack.c.l.b16 %v1676
      %v1682 = vunpack.c.h.b16 %v1676
      %v1683 = vpack.c.b16 %v1679, %v1679
      %v1684 = vpack.c.b16 %v1680, %v1680
      %v1685 = vpack.c.b16 %v1681, %v1681
      %v1686 = vpack.c.b16 %v1682, %v1682
      %1691 = vst [vmem:[%s252] sm:$0xf] %v1683
      %1692 = vst [vmem:[%s252 + $0x4] sm:$0xf] %v1684
      %1693 = vst [vmem:[%s252 + $0x8] sm:$0xf] %v1685
      %1694 = vst [vmem:[%s252 + $0xc] sm:$0xf] %v1686
      %s1695 = smul.u32 4, %s21
      %p1696 = scmp.lt.s32.totalorder %s20, 1
      %s1697 = scalar_select %p1696, %s20, 1
      %p1698 = scmp.lt.s32.totalorder %s1695, 3
      %s1699 = scalar_select %p1698, %s1695, 3
      %p1700 = scmp.lt.s32.totalorder %s19, 0
      %s1701 = scalar_select %p1700, %s19, 0
      %s1702 = sadd.s32 %s1701, %s1699
      %s1703 = smul.addr %s1697, 4
      %s1704 = sadd.s32 %s1702, %s1703
      %s1705 = smul.addr %s1704, 4
      %s1706 = scalar_lea.vmem %s3, %s1705
      // Predicated region
      $region33: #{timm_backbone_forward.7} parent=31 // pred_check
        %p1707 = pneg %p135
      $region34: #{timm_backbone_forward.7} parent=31 // pred_check_branch
        %1709 = sbr.rel (%p1707) target = $region36
      $region35: #{timm_backbone_forward.7} parent=31 // pred_region
        %s1710 = smul.u32 4, %s21
      $region36: #{timm_backbone_forward.7} parent=31 // pred_fallthru
        _
    $region32: #{timm_backbone_forward.7} parent=5 // pred_fallthru
      _
    %p1711 = scmp.le.s32.totalorder 2, %s9
    // Predicated region
    $region37: #{timm_backbone_forward.7} parent=5 // pred_check
      %p1712 = pneg %p1711
    $region38: #{timm_backbone_forward.7} parent=5 // pred_check_branch
      %1714 = sbr.rel (%p1712) target = $region40
    $region39: #{timm_backbone_forward.7} parent=5 // pred_region
      %s1715 = ssub.s32 %s9, 2
      // Predicated region
      $region41: #{timm_backbone_forward.7} parent=39 // pred_check
        %p1716 = pneg %p141
      $region42: #{timm_backbone_forward.7} parent=39 // pred_check_branch
        %1718 = sbr.rel (%p1716) target = $region44
      $region43: #{timm_backbone_forward.7} parent=39 // pred_region
        %s1719 = smul.u32 4, %s24
        %p1720 = scmp.lt.s32.totalorder %s23, 1
        %s1721 = scalar_select %p1720, %s23, 1
        %p1722 = scmp.lt.s32.totalorder %s1719, 3
        %s1723 = scalar_select %p1722, %s1719, 3
        %p1724 = scmp.lt.s32.totalorder %s22, 0
        %s1725 = scalar_select %p1724, %s22, 0
        %s1726 = sadd.s32 %s1725, %s1723
        %s1727 = smul.addr %s1721, 4
        %s1728 = sadd.s32 %s1726, %s1727
        %s1729 = smul.addr %s1728, 4
        %s1730 = scalar_lea.vmem %s3, %s1729
      $region44: #{timm_backbone_forward.7} parent=39 // pred_fallthru
        _
    $region40: #{timm_backbone_forward.7} parent=5 // pred_fallthru
      _
  $region6: #{timm_backbone_forward.7} parent=0 // loop_footer
    %s13 = sadd.s32 1, %s9
  $region7: #{timm_backbone_forward.7} parent=0 // loop_footer_branch
    %8 = sbr.rel target = $region3
  $region8: #{timm_backbone_forward.7} parent=0 // loop_exit
    _

// kernel: timm_backbone_forward.8
$region0: #{timm_backbone_forward.8}
  #allocation0 [shape = 'u32[]', space=smem, size = 0x4, offset = 0x4, fixed_abs, tag = 'smem constant byte address 0x4 - core index']
  #allocation1 [shape = 'u32[144,128]{1,0:T(1,128)}', space=vmem, size = 0x12000, scoped, tag = 'internal scratch']
  #allocation2 [shape = 'f32[16,128]{1,0:T(8,128)}', space=vmem, size = 0x2000, scoped, tag = 'scratch operand']
  %s0 = inlined_call_operand.vmem [shape: bf16[2,1,128,128], index: 0, kind: input, shape index: {}]
  %s1 = inlined_call_operand.vmem [shape: bf16[9,128,128], index: 1, kind: input, shape index: {}]
  %s2 = inlined_call_operand.vmem [shape: f32[1,128], index: 2, kind: input, shape index: {}]
  %s3 = inlined_call_operand.vmem [shape: bf16[2,16,128], index: 3, kind: output, shape index: {}]
  %s4 = sld [smem:[#allocation0]]
  $region45: #{timm_backbone_forward.8} parent=0
    _
  %s6 = ssub.s32 1, %s4
  %s7 = scalar_select 0, %s6, %s4
  loop: start=0, step=1, limit=4
  $region2: #{timm_backbone_forward.8} parent=0 // loop_pre_header
    _
  $region3: #{timm_backbone_forward.8} parent=0 // loop_header
    %s9 = sphi 0, %s13
    %p10 = scmp.ge.s32.totalorder %s9, 4
    %s16 = sphi 0, %s35
    %s17 = sphi 0, %s31
    %s18 = sphi 0, %s27
    %s19 = sphi 0, %s16
    %s20 = sphi 0, %s17
    %s21 = sphi 0, %s18
    %s22 = sphi 0, %s19
    %s23 = sphi 0, %s20
    %s24 = sphi 0, %s21
    %s40 = sphi 0, %s42
    %s43 = sphi 0, %s40
    %s44 = sphi 0, %s43
    %s60 = sphi 0, %s44
    %s66 = sphi 0, %s68
    %s69 = sphi 0, %s66
    %s70 = sphi 0, %s69
    %s86 = sphi 0, %s70
    %s92 = sphi 0, %s94
    %s95 = sphi 0, %s92
    %s96 = sphi 0, %s95
    %s112 = sphi 0, %s96
    %s122 = sphi 0, %s124
    %s125 = sphi 0, %s122
    %s126 = sphi 0, %s125
    %s142 = sphi 0, %s126
  $region4: #{timm_backbone_forward.8} parent=0 // loop_header_branch
    %12 = sbr.rel (%p10) target = $region8
  $region5: #{timm_backbone_forward.8} parent=0 // loop_body
    %s14 = ssub.s32 %s9, 1
    %s15 = ssub.s32 %s9, 2
    %s25 = sadd.s32 1, %s18
    %p26 = scmp.ge.s32.totalorder %s25, 1
    %s27 = scalar_select %p26, 0, %s25
    %s28 = sadd.s32 1, %s17
    %s29 = scalar_select %p26, %s28, %s17
    %p30 = scmp.ge.s32.totalorder %s29, 2
    %s31 = scalar_select %p30, 0, %s29
    %s32 = sadd.s32 1, %s16
    %s33 = scalar_select %p30, %s32, %s16
    %p34 = scmp.ge.s32.totalorder %s33, 1
    %s35 = scalar_select %p34, 0, %s33
    %s36 = ssub.s32 %s17, %s31
    %s37 = ssub.s32 %s18, %s27
    %s38 = sor.u32 %s36, %s37
    %p39 = scmp.eq.s32.totalorder %s38, 0
    %s41 = sadd.s32 %s40, 1
    %s42 = scalar_select %p39, %s40, %s41
    %p45 = pneg %p39
    %p46 = scmp.eq.s32.totalorder %s9, 1
    %p47 = por %p45, %p46
    %p48 = scmp.ne.s32.totalorder %s40, %s43
    %p49 = scmp.eq.s32.totalorder %s9, 0
    %p50 = por %p48, %p49
    %p51 = scmp.ne.s32.totalorder %s40, %s43
    %p52 = scmp.eq.s32.totalorder %s14, 1
    %p53 = por %p51, %p52
    %p54 = scmp.ne.s32.totalorder %s43, %s44
    %p55 = scmp.eq.s32.totalorder %s14, 0
    %p56 = por %p54, %p55
    %p57 = scmp.ne.s32.totalorder %s43, %s44
    %p58 = scmp.eq.s32.totalorder %s15, 1
    %p59 = por %p57, %p58
    %p61 = scmp.ne.s32.totalorder %s44, %s60
    %p62 = scmp.eq.s32.totalorder %s15, 0
    %p63 = por %p61, %p62
    %s64 = ssub.s32 %s16, %s35
    %p65 = scmp.eq.s32.totalorder %s64, 0
    %s67 = sadd.s32 %s66, 1
    %s68 = scalar_select %p65, %s66, %s67
    %p71 = pneg %p65
    %p72 = scmp.eq.s32.totalorder %s9, 1
    %p73 = por %p71, %p72
    %p74 = scmp.ne.s32.totalorder %s66, %s69
    %p75 = scmp.eq.s32.totalorder %s9, 0
    %p76 = por %p74, %p75
    %p77 = scmp.ne.s32.totalorder %s66, %s69
    %p78 = scmp.eq.s32.totalorder %s14, 1
    %p79 = por %p77, %p78
    %p80 = scmp.ne.s32.totalorder %s69, %s70
    %p81 = scmp.eq.s32.totalorder %s14, 0
    %p82 = por %p80, %p81
    %p83 = scmp.ne.s32.totalorder %s69, %s70
    %p84 = scmp.eq.s32.totalorder %s15, 1
    %p85 = por %p83, %p84
    %p87 = scmp.ne.s32.totalorder %s70, %s86
    %p88 = scmp.eq.s32.totalorder %s15, 0
    %p89 = por %p87, %p88
    %s90 = ssub.s32 %s16, %s35
    %p91 = scmp.eq.s32.totalorder %s90, 0
    %s93 = sadd.s32 %s92, 1
    %s94 = scalar_select %p91, %s92, %s93
    %p97 = pneg %p91
    %p98 = scmp.eq.s32.totalorder %s9, 1
    %p99 = por %p97, %p98
    %p100 = scmp.ne.s32.totalorder %s92, %s95
    %p101 = scmp.eq.s32.totalorder %s9, 0
    %p102 = por %p100, %p101
    %p103 = scmp.ne.s32.totalorder %s92, %s95
    %p104 = scmp.eq.s32.totalorder %s14, 1
    %p105 = por %p103, %p104
    %p106 = scmp.ne.s32.totalorder %s95, %s96
    %p107 = scmp.eq.s32.totalorder %s14, 0
    %p108 = por %p106, %p107
    %p109 = scmp.ne.s32.totalorder %s95, %s96
    %p110 = scmp.eq.s32.totalorder %s15, 1
    %p111 = por %p109, %p110
    %p113 = scmp.ne.s32.totalorder %s96, %s112
    %p114 = scmp.eq.s32.totalorder %s15, 0
    %p115 = por %p113, %p114
    %s116 = ssub.s32 %s17, %s31
    %s117 = ssub.s32 %s18, %s27
    %s118 = sor.u32 %s116, %s117
    %s119 = ssub.s32 %s16, %s35
    %s120 = sor.u32 %s118, %s119
    %p121 = scmp.eq.s32.totalorder %s120, 0
    %s123 = sadd.s32 %s122, 1
    %s124 = scalar_select %p121, %s122, %s123
    %p127 = pneg %p121
    %p128 = scmp.eq.s32.totalorder %s9, 1
    %p129 = por %p127, %p128
    %p130 = scmp.ne.s32.totalorder %s122, %s125
    %p131 = scmp.eq.s32.totalorder %s9, 0
    %p132 = por %p130, %p131
    %p133 = scmp.ne.s32.totalorder %s122, %s125
    %p134 = scmp.eq.s32.totalorder %s14, 1
    %p135 = por %p133, %p134
    %p136 = scmp.ne.s32.totalorder %s125, %s126
    %p137 = scmp.eq.s32.totalorder %s14, 0
    %p138 = por %p136, %p137
    %p139 = scmp.ne.s32.totalorder %s125, %s126
    %p140 = scmp.eq.s32.totalorder %s15, 1
    %p141 = por %p139, %p140
    %p143 = scmp.ne.s32.totalorder %s126, %s142
    %p144 = scmp.eq.s32.totalorder %s15, 0
    %p145 = por %p143, %p144
    %p146 = scmp.le.s32.totalorder 1, %s9
    %p147 = scmp.lt.s32.totalorder %s9, 3
    %p148 = pnand %p146, %p147
    %p149 = pneg %p148
    // Predicated region
    $region9: #{timm_backbone_forward.8} parent=5 // pred_check
      _
    $region10: #{timm_backbone_forward.8} parent=5 // pred_check_branch
      %151 = sbr.rel (%p148) target = $region12
    $region11: #{timm_backbone_forward.8} parent=5 // pred_region
      %s152 = ssub.s32 %s9, 1
      // Predicated region
      $region13: #{timm_backbone_forward.8} parent=11 // pred_check
        %p153 = pneg %p82
      $region14: #{timm_backbone_forward.8} parent=11 // pred_check_branch
        %155 = sbr.rel (%p153) target = $region16
      $region15: #{timm_backbone_forward.8} parent=11 // pred_region
        %p156 = scmp.lt.s32.totalorder %s19, 0
        %s157 = scalar_select %p156, %s19, 0
        %s158 = smul.addr %s157, 4
        %s159 = scalar_lea.vmem %s1, %s158
      $region16: #{timm_backbone_forward.8} parent=11 // pred_fallthru
        _
      // Predicated region
      $region17: #{timm_backbone_forward.8} parent=11 // pred_check
        %p160 = pneg %p108
      $region18: #{timm_backbone_forward.8} parent=11 // pred_check_branch
        %162 = sbr.rel (%p160) target = $region20
      $region19: #{timm_backbone_forward.8} parent=11 // pred_region
        %p163 = scmp.lt.s32.totalorder %s19, 0
        %s164 = scalar_select %p163, %s19, 0
        %s165 = scalar_lea.vmem %s2, %s164
      $region20: #{timm_backbone_forward.8} parent=11 // pred_fallthru
        _
    $region12: #{timm_backbone_forward.8} parent=5 // pred_fallthru
      _
    %p166 = scmp.lt.s32.totalorder %s9, 2
    // Predicated region
    $region21: #{timm_backbone_forward.8} parent=5 // pred_check
      %p167 = pneg %p166
    $region22: #{timm_backbone_forward.8} parent=5 // pred_check_branch
      %169 = sbr.rel (%p167) target = $region24
    $region23: #{timm_backbone_forward.8} parent=5 // pred_region
      // Predicated region
      $region25: #{timm_backbone_forward.8} parent=23 // pred_check
        %p170 = pneg %p50
      $region26: #{timm_backbone_forward.8} parent=23 // pred_check_branch
        %172 = sbr.rel (%p170) target = $region28
      $region27: #{timm_backbone_forward.8} parent=23 // pred_region
        %p173 = scmp.lt.s32.totalorder %s17, 1
        %s174 = scalar_select %p173, %s17, 1
        %p175 = scmp.lt.s32.totalorder %s18, 0
        %s176 = scalar_select %p175, %s18, 0
        %s177 = smul.addr %s176, 16
        %s178 = smul.addr %s174, 16
        %s179 = sadd.s32 %s177, %s178
        %s180 = smul.addr %s179, 4
        %s181 = scalar_lea.vmem %s0, %s180
      $region28: #{timm_backbone_forward.8} parent=23 // pred_fallthru
        _
    $region24: #{timm_backbone_forward.8} parent=5 // pred_fallthru
      _
    %p182 = scmp.le.s32.totalorder 1, %s9
    %p183 = scmp.lt.s32.totalorder %s9, 3
    %p184 = pnand %p182, %p183
    %p185 = pneg %p184
    // Predicated region
    $region29: #{timm_backbone_forward.8} parent=5 // pred_check
      _
    $region30: #{timm_backbone_forward.8} parent=5 // pred_check_branch
      %187 = sbr.rel (%p184) target = $region32
    $region31: #{timm_backbone_forward.8} parent=5 // pred_region
      %s188 = ssub.s32 %s9, 1
      %p189 = scmp.lt.s32.totalorder %s20, 1
      %s190 = scalar_select %p189, %s20, 1
      %p191 = scmp.lt.s32.totalorder %s21, 0
      %s192 = scalar_select %p191, %s21, 0
      %s193 = smul.addr %s192, 16
      %s194 = smul.addr %s190, 16
      %s195 = sadd.s32 %s193, %s194
      %s196 = smul.addr %s195, 4
      %s197 = scalar_lea.vmem %s0, %s196
      %p198 = pneg %p56
      %p199 = pneg %p53
      %p200 = scmp.lt.s32.totalorder %s19, 0
      %s201 = scalar_select %p200, %s19, 0
      %s202 = smul.addr %s201, 4
      %s203 = scalar_lea.vmem %s1, %s202
      %p204 = pneg %p82
      %p205 = pneg %p79
      %p206 = scmp.lt.s32.totalorder %s19, 0
      %s207 = scalar_select %p206, %s19, 0
      %s208 = scalar_lea.vmem %s2, %s207
      %p209 = pneg %p108
      %p210 = pneg %p105
      %p211 = pneg %p138
      %p212 = pneg %p135
      %s213 = smul.u32 2, %s21
      %p214 = scmp.lt.s32.totalorder %s20, 1
      %s215 = scalar_select %p214, %s20, 1
      %p216 = scmp.lt.s32.totalorder %s213, 1
      %s217 = scalar_select %p216, %s213, 1
      %p218 = scmp.lt.s32.totalorder %s19, 0
      %s219 = scalar_select %p218, %s19, 0
      %s220 = sadd.s32 %s219, %s217
      %s221 = smul.addr %s215, 2
      %s222 = sadd.s32 %s220, %s221
      %s223 = smul.addr %s222, 4
      %s224 = scalar_lea.vmem %s3, %s223
      %p225 = scmp.lt.s32.totalorder %s20, 1
      %s226 = scalar_select %p225, %s20, 1
      %p227 = scmp.lt.s32.totalorder %s21, 0
      %s228 = scalar_select %p227, %s21, 0
      %s229 = smul.addr %s228, 16
      %s230 = smul.addr %s226, 16
      %s231 = sadd.s32 %s229, %s230
      %s232 = smul.addr %s231, 4
      %s233 = scalar_lea.vmem %s0, %s232
      %p234 = scmp.lt.s32.totalorder %s19, 0
      %s235 = scalar_select %p234, %s19, 0
      %s236 = smul.addr %s235, 4
      %s237 = scalar_lea.vmem %s1, %s236
      %p238 = scmp.lt.s32.totalorder %s19, 0
      %s239 = scalar_select %p238, %s19, 0
      %s240 = scalar_lea.vmem %s2, %s239
      %s241 = smul.u32 2, %s21
      %p242 = scmp.lt.s32.totalorder %s20, 1
      %s243 = scalar_select %p242, %s20, 1
      %p244 = scmp.lt.s32.totalorder %s241, 1
      %s245 = scalar_select %p244, %s241, 1
      %p246 = scmp.lt.s32.totalorder %s19, 0
      %s247 = scalar_select %p246, %s19, 0
      %s248 = sadd.s32 %s247, %s245
      %s249 = smul.addr %s243, 2
      %s250 = sadd.s32 %s248, %s249
      %s251 = smul.addr %s250, 4
      %s252 = scalar_lea.vmem %s3, %s251
      %s253 = smul.u32 2, %s21
      %255 = vst [vmem:[#allocation2] sm:$0xff] 0.0
      %256 = vst [vmem:[#allocation2 + $0x8] sm:$0xff] 0.0
      %v257 = vld [vmem:[#allocation2] sm:$0xff]
      %v258 = vld [vmem:[#allocation2 + $0x8] sm:$0xff]
      %v259 = vld [vmem:[%s233] sm:$0xf]
      %v260 = vld [vmem:[%s233 + $0x4] sm:$0xf]
      %v261 = vld [vmem:[%s237] sm:$0xf]
      %v262 = vld [vmem:[%s237 + $0x4] sm:$0xf]
      %v263 = vld [vmem:[%s237 + $0x8] sm:$0xf]
      %v264 = vld [vmem:[%s237 + $0xc] sm:$0xf]
      %v265 = vld [vmem:[%s237 + $0x10] sm:$0xf]
      %v266 = vld [vmem:[%s237 + $0x14] sm:$0xf]
      %v267 = vld [vmem:[%s237 + $0x18] sm:$0xf]
      %v268 = vld [vmem:[%s237 + $0x1c] sm:$0xf]
      %v269 = vld [vmem:[%s237 + $0x20] sm:$0xf]
      %v270 = vld [vmem:[%s237 + $0x24] sm:$0xf]
      %v271 = vld [vmem:[%s237 + $0x28] sm:$0xf]
      %v272 = vld [vmem:[%s237 + $0x2c] sm:$0xf]
      %v273 = vld [vmem:[%s237 + $0x30] sm:$0xf]
      %v274 = vld [vmem:[%s237 + $0x34] sm:$0xf]
      %v275 = vld [vmem:[%s237 + $0x38] sm:$0xf]
      %v276 = vld [vmem:[%s237 + $0x3c] sm:$0xf]
      %v279 = vunpack.c.l.b16 %v259
      %v280 = vunpack.c.l.b16 %v260
      %v281 = vpack.c.b16 %v280, %v279
      %v299 = vunpack.c.l.b16 %v261
      %v300 = vunpack.c.l.b16 %v262
      %v301 = vunpack.c.l.b16 %v263
      %v302 = vunpack.c.l.b16 %v264
      %v303 = vunpack.c.l.b16 %v265
      %v304 = vunpack.c.l.b16 %v266
      %v305 = vunpack.c.l.b16 %v267
      %v306 = vunpack.c.l.b16 %v268
      %v307 = vunpack.c.l.b16 %v269
      %v308 = vunpack.c.l.b16 %v270
      %v309 = vunpack.c.l.b16 %v271
      %v310 = vunpack.c.l.b16 %v272
      %v311 = vunpack.c.l.b16 %v273
      %v312 = vunpack.c.l.b16 %v274
      %v313 = vunpack.c.l.b16 %v275
      %v314 = vunpack.c.l.b16 %v276
      %v315 = vpack.c.b16 %v300, %v299
      %v316 = vpack.c.b16 %v302, %v301
      %v317 = vpack.c.b16 %v304, %v303
      %v318 = vpack.c.b16 %v306, %v305
      %v319 = vpack.c.b16 %v308, %v307
      %v320 = vpack.c.b16 %v310, %v309
      %v321 = vpack.c.b16 %v312, %v311
      %v322 = vpack.c.b16 %v314, %v313
      %331 = vmatprep.subr.bf16.mxu0 0
      %332 = vmatpush1.bf16.msra.mxu0 %v322
      %333 = vmatprep.subr.bf16.mxu0 0
      %334 = vmatpush1.bf16.msra.mxu0 %v321
      %335 = vmatprep.subr.bf16.mxu0 0
      %336 = vmatpush1.bf16.msra.mxu0 %v320
      %337 = vmatprep.subr.bf16.mxu0 0
      %338 = vmatpush1.bf16.msra.mxu0 %v319
      %339 = vmatprep.subr.bf16.mxu0 0
      %340 = vmatpush1.bf16.msra.mxu0 %v318
      %341 = vmatprep.subr.bf16.mxu0 0
      %342 = vmatpush1.bf16.msra.mxu0 %v317
      %343 = vmatprep.subr.bf16.mxu0 0
      %344 = vmatpush1.bf16.msra.mxu0 %v316
      %345 = vmatprep.subr.bf16.mxu0 0
      %346 = vmatpush1.bf16.msra.mxu0 %v315
      %347 = vmatprep.subr.bf16.mxu0 0
      %348 = vmatpush2.bf16.msra.mxu0 0
      %349 = vmatprep.subr.bf16.mxu0 0
      %350 = vmatpush2.bf16.msra.mxu0 0
      %351 = vmatprep.subr.bf16.mxu0 0
      %352 = vmatpush2.bf16.msra.mxu0 0
      %353 = vmatprep.subr.bf16.mxu0 0
      %354 = vmatpush2.bf16.msra.mxu0 0
      %355 = vmatprep.subr.bf16.mxu0 0
      %356 = vmatpush2.bf16.msra.mxu0 0
      %357 = vmatprep.subr.bf16.mxu0 0
      %358 = vmatpush2.bf16.msra.mxu0 0
      %359 = vmatprep.subr.bf16.mxu0 0
      %360 = vmatpush2.bf16.msra.mxu0 0
      %361 = vmatprep.subr.bf16.mxu0 0
      %362 = vmatpush2.bf16.msra.mxu0 0
      %363 = vmatprep.mubr.bf16.mxu0 0
      %364 = vmatmul.mubr.bf16.gmra.mxu0 %v281
      %v365 = vpop.f32.mrf.mxu0
      %v366 = vadd.f32 0.0, %v365
      %v367 = vpop.f32.mrf.mxu0
      %v368 = vpop.f32.mrf.mxu0
      %v369 = vadd.f32 0.0, %v368
      %v370 = vpop.f32.mrf.mxu0
      %371 = vdwg.mxu0
      %v372 = vadd.f32 %v257, %v366
      %v373 = vadd.f32 %v258, %v369
      %374 = vst [vmem:[#allocation2] sm:$0xff] %v372
      %375 = vst [vmem:[#allocation2 + $0x8] sm:$0xff] %v373
      %v376 = vld [vmem:[#allocation2] sm:$0xff]
      %v377 = vld [vmem:[#allocation2 + $0x8] sm:$0xff]
      %v378 = vld [vmem:[%s233 + $0x10] sm:$0xf]
      %v379 = vld [vmem:[%s233 + $0x14] sm:$0xf]
      %s380 = scalar_lea.vmem %s237, 64
      %v381 = vld [vmem:[%s380] sm:$0xf]
      %v382 = vld [vmem:[%s380 + $0x4] sm:$0xf]
      %v383 = vld [vmem:[%s380 + $0x8] sm:$0xf]
      %v384 = vld [vmem:[%s380 + $0xc] sm:$0xf]
      %v385 = vld [vmem:[%s380 + $0x10] sm:$0xf]
      %v386 = vld [vmem:[%s380 + $0x14] sm:$0xf]
      %v387 = vld [vmem:[%s380 + $0x18] sm:$0xf]
      %v388 = vld [vmem:[%s380 + $0x1c] sm:$0xf]
      %v389 = vld [vmem:[%s380 + $0x20] sm:$0xf]
      %v390 = vld [vmem:[%s380 + $0x24] sm:$0xf]
      %v391 = vld [vmem:[%s380 + $0x28] sm:$0xf]
      %v392 = vld [vmem:[%s380 + $0x2c] sm:$0xf]
      %v393 = vld [vmem:[%s380 + $0x30] sm:$0xf]
      %v394 = vld [vmem:[%s380 + $0x34] sm:$0xf]
      %v395 = vld [vmem:[%s380 + $0x38] sm:$0xf]
      %v396 = vld [vmem:[%s380 + $0x3c] sm:$0xf]
      %v399 = vunpack.c.l.b16 %v378
      %v400 = vunpack.c.l.b16 %v379
      %v401 = vpack.c.b16 %v400, %v399
      %v419 = vunpack.c.l.b16 %v381
      %v420 = vunpack.c.l.b16 %v382
      %v421 = vunpack.c.l.b16 %v383
      %v422 = vunpack.c.l.b16 %v384
      %v423 = vunpack.c.l.b16 %v385
      %v424 = vunpack.c.l.b16 %v386
      %v425 = vunpack.c.l.b16 %v387
      %v426 = vunpack.c.l.b16 %v388
      %v427 = vunpack.c.l.b16 %v389
      %v428 = vunpack.c.l.b16 %v390
      %v429 = vunpack.c.l.b16 %v391
      %v430 = vunpack.c.l.b16 %v392
      %v431 = vunpack.c.l.b16 %v393
      %v432 = vunpack.c.l.b16 %v394
      %v433 = vunpack.c.l.b16 %v395
      %v434 = vunpack.c.l.b16 %v396
      %v435 = vpack.c.b16 %v420, %v419
      %v436 = vpack.c.b16 %v422, %v421
      %v437 = vpack.c.b16 %v424, %v423
      %v438 = vpack.c.b16 %v426, %v425
      %v439 = vpack.c.b16 %v428, %v427
      %v440 = vpack.c.b16 %v430, %v429
      %v441 = vpack.c.b16 %v432, %v431
      %v442 = vpack.c.b16 %v434, %v433
      %451 = vmatprep.subr.bf16.mxu0 0
      %452 = vmatpush1.bf16.msra.mxu0 %v442
      %453 = vmatprep.subr.bf16.mxu0 0
      %454 = vmatpush1.bf16.msra.mxu0 %v441
      %455 = vmatprep.subr.bf16.mxu0 0
      %456 = vmatpush1.bf16.msra.mxu0 %v440
      %457 = vmatprep.subr.bf16.mxu0 0
      %458 = vmatpush1.bf16.msra.mxu0 %v439
      %459 = vmatprep.subr.bf16.mxu0 0
      %460 = vmatpush1.bf16.msra.mxu0 %v438
      %461 = vmatprep.subr.bf16.mxu0 0
      %462 = vmatpush1.bf16.msra.mxu0 %v437
      %463 = vmatprep.subr.bf16.mxu0 0
      %464 = vmatpush1.bf16.msra.mxu0 %v436
      %465 = vmatprep.subr.bf16.mxu0 0
      %466 = vmatpush1.bf16.msra.mxu0 %v435
      %467 = vmatprep.subr.bf16.mxu0 0
      %468 = vmatpush2.bf16.msra.mxu0 0
      %469 = vmatprep.subr.bf16.mxu0 0
      %470 = vmatpush2.bf16.msra.mxu0 0
      %471 = vmatprep.subr.bf16.mxu0 0
      %472 = vmatpush2.bf16.msra.mxu0 0
      %473 = vmatprep.subr.bf16.mxu0 0
      %474 = vmatpush2.bf16.msra.mxu0 0
      %475 = vmatprep.subr.bf16.mxu0 0
      %476 = vmatpush2.bf16.msra.mxu0 0
      %477 = vmatprep.subr.bf16.mxu0 0
      %478 = vmatpush2.bf16.msra.mxu0 0
      %479 = vmatprep.subr.bf16.mxu0 0
      %480 = vmatpush2.bf16.msra.mxu0 0
      %481 = vmatprep.subr.bf16.mxu0 0
      %482 = vmatpush2.bf16.msra.mxu0 0
      %483 = vmatprep.mubr.bf16.mxu0 0
      %484 = vmatmul.mubr.bf16.gmra.mxu0 %v401
      %v485 = vpop.f32.mrf.mxu0
      %v486 = vadd.f32 0.0, %v485
      %v487 = vpop.f32.mrf.mxu0
      %v488 = vpop.f32.mrf.mxu0
      %v489 = vadd.f32 0.0, %v488
      %v490 = vpop.f32.mrf.mxu0
      %491 = vdwg.mxu0
      %v492 = vadd.f32 %v376, %v486
      %v493 = vadd.f32 %v377, %v489
      %494 = vst [vmem:[#allocation2] sm:$0xff] %v492
      %495 = vst [vmem:[#allocation2 + $0x8] sm:$0xff] %v493
      %v496 = vld [vmem:[#allocation2] sm:$0xff]
      %v497 = vld [vmem:[#allocation2 + $0x8] sm:$0xff]
      %v498 = vld [vmem:[%s233] sm:$0xf]
      %v499 = vld [vmem:[%s233 + $0x4] sm:$0xf]
      %v500 = vld [vmem:[%s233 + $0x8] sm:$0x1]
      %s501 = scalar_lea.vmem %s237, 128
      %v502 = vld [vmem:[%s501] sm:$0xf]
      %v503 = vld [vmem:[%s501 + $0x4] sm:$0xf]
      %v504 = vld [vmem:[%s501 + $0x8] sm:$0xf]
      %v505 = vld [vmem:[%s501 + $0xc] sm:$0xf]
      %v506 = vld [vmem:[%s501 + $0x10] sm:$0xf]
      %v507 = vld [vmem:[%s501 + $0x14] sm:$0xf]
      %v508 = vld [vmem:[%s501 + $0x18] sm:$0xf]
      %v509 = vld [vmem:[%s501 + $0x1c] sm:$0xf]
      %v510 = vld [vmem:[%s501 + $0x20] sm:$0xf]
      %v511 = vld [vmem:[%s501 + $0x24] sm:$0xf]
      %v512 = vld [vmem:[%s501 + $0x28] sm:$0xf]
      %v513 = vld [vmem:[%s501 + $0x2c] sm:$0xf]
      %v514 = vld [vmem:[%s501 + $0x30] sm:$0xf]
      %v515 = vld [vmem:[%s501 + $0x34] sm:$0xf]
      %v516 = vld [vmem:[%s501 + $0x38] sm:$0xf]
      %v517 = vld [vmem:[%s501 + $0x3c] sm:$0xf]
      %v521 = vunpack.c.l.b16 %v498
      %v522 = vunpack.c.l.b16 %v499
      %v523 = vunpack.c.l.b16 %v500
      %v524 = vpack.c.b16 %v522, %v521
      %v525 = vpack.c.b16 %v523, %v523
      %vm526 = vsmask.f32 7424
      %v528 = vshrl.u32 %v524, 16
      %v530 = vshll.u32 %v524, 16
      %v532 = vrot.slane %v530, 1
      %v533 = vor.u32 %v528, %v532
      %v535 = vshll.u32 %v525, 16
      %v537 = vrot.slane %v535, 1
      %v538 = vsel %vm526, %v533, %v537
      %v556 = vunpack.c.l.b16 %v502
      %v557 = vunpack.c.l.b16 %v503
      %v558 = vunpack.c.l.b16 %v504
      %v559 = vunpack.c.l.b16 %v505
      %v560 = vunpack.c.l.b16 %v506
      %v561 = vunpack.c.l.b16 %v507
      %v562 = vunpack.c.l.b16 %v508
      %v563 = vunpack.c.l.b16 %v509
      %v564 = vunpack.c.l.b16 %v510
      %v565 = vunpack.c.l.b16 %v511
      %v566 = vunpack.c.l.b16 %v512
      %v567 = vunpack.c.l.b16 %v513
      %v568 = vunpack.c.l.b16 %v514
      %v569 = vunpack.c.l.b16 %v515
      %v570 = vunpack.c.l.b16 %v516
      %v571 = vunpack.c.l.b16 %v517
      %v572 = vpack.c.b16 %v557, %v556
      %v573 = vpack.c.b16 %v559, %v558
      %v574 = vpack.c.b16 %v561, %v560
      %v575 = vpack.c.b16 %v563, %v562
      %v576 = vpack.c.b16 %v565, %v564
      %v577 = vpack.c.b16 %v567, %v566
      %v578 = vpack.c.b16 %v569, %v568
      %v579 = vpack.c.b16 %v571, %v570
      %588 = vmatprep.subr.bf16.mxu0 0
      %589 = vmatpush1.bf16.msra.mxu0 %v579
      %590 = vmatprep.subr.bf16.mxu0 0
      %591 = vmatpush1.bf16.msra.mxu0 %v578
      %592 = vmatprep.subr.bf16.mxu0 0
      %593 = vmatpush1.bf16.msra.mxu0 %v577
      %594 = vmatprep.subr.bf16.mxu0 0
      %595 = vmatpush1.bf16.msra.mxu0 %v576
      %596 = vmatprep.subr.bf16.mxu0 0
      %597 = vmatpush1.bf16.msra.mxu0 %v575
      %598 = vmatprep.subr.bf16.mxu0 0
      %599 = vmatpush1.bf16.msra.mxu0 %v574
      %600 = vmatprep.subr.bf16.mxu0 0
      %601 = vmatpush1.bf16.msra.mxu0 %v573
      %602 = vmatprep.subr.bf16.mxu0 0
      %603 = vmatpush1.bf16.msra.mxu0 %v572
      %604 = vmatprep.subr.bf16.mxu0 0
      %605 = vmatpush2.bf16.msra.mxu0 0
      %606 = vmatprep.subr.bf16.mxu0 0
      %607 = vmatpush2.bf16.msra.mxu0 0
      %608 = vmatprep.subr.bf16.mxu0 0
      %609 = vmatpush2.bf16.msra.mxu0 0
      %610 = vmatprep.subr.bf16.mxu0 0
      %611 = vmatpush2.bf16.msra.mxu0 0
      %612 = vmatprep.subr.bf16.mxu0 0
      %613 = vmatpush2.bf16.msra.mxu0 0
      %614 = vmatprep.subr.bf16.mxu0 0
      %615 = vmatpush2.bf16.msra.mxu0 0
      %616 = vmatprep.subr.bf16.mxu0 0
      %617 = vmatpush2.bf16.msra.mxu0 0
      %618 = vmatprep.subr.bf16.mxu0 0
      %619 = vmatpush2.bf16.msra.mxu0 0
      %620 = vmatprep.mubr.bf16.mxu0 0
      %621 = vmatmul.mubr.bf16.gmra.mxu0 %v538
      %v622 = vpop.f32.mrf.mxu0
      %v623 = vadd.f32 0.0, %v622
      %v624 = vpop.f32.mrf.mxu0
      %v625 = vpop.f32.mrf.mxu0
      %v626 = vadd.f32 0.0, %v625
      %v627 = vpop.f32.mrf.mxu0
      %628 = vdwg.mxu0
      %v629 = vadd.f32 %v496, %v623
      %v630 = vadd.f32 %v497, %v626
      %631 = vst [vmem:[#allocation2] sm:$0xff] %v629
      %632 = vst [vmem:[#allocation2 + $0x8] sm:$0xff] %v630
      %v633 = vld [vmem:[#allocation2] sm:$0xff]
      %v634 = vld [vmem:[#allocation2 + $0x8] sm:$0xff]
      %v635 = vld [vmem:[%s233 + $0x20] sm:$0xf]
      %v636 = vld [vmem:[%s233 + $0x24] sm:$0xf]
      %s637 = scalar_lea.vmem %s237, 192
      %v638 = vld [vmem:[%s637] sm:$0xf]
      %v639 = vld [vmem:[%s637 + $0x4] sm:$0xf]
      %v640 = vld [vmem:[%s637 + $0x8] sm:$0xf]
      %v641 = vld [vmem:[%s637 + $0xc] sm:$0xf]
      %v642 = vld [vmem:[%s637 + $0x10] sm:$0xf]
      %v643 = vld [vmem:[%s637 + $0x14] sm:$0xf]
      %v644 = vld [vmem:[%s637 + $0x18] sm:$0xf]
      %v645 = vld [vmem:[%s637 + $0x1c] sm:$0xf]
      %v646 = vld [vmem:[%s637 + $0x20] sm:$0xf]
      %v647 = vld [vmem:[%s637 + $0x24] sm:$0xf]
      %v648 = vld [vmem:[%s637 + $0x28] sm:$0xf]
      %v649 = vld [vmem:[%s637 + $0x2c] sm:$0xf]
      %v650 = vld [vmem:[%s637 + $0x30] sm:$0xf]
      %v651 = vld [vmem:[%s637 + $0x34] sm:$0xf]
      %v652 = vld [vmem:[%s637 + $0x38] sm:$0xf]
      %v653 = vld [vmem:[%s637 + $0x3c] sm:$0xf]
      %v656 = vunpack.c.l.b16 %v635
      %v657 = vunpack.c.l.b16 %v636
      %v658 = vpack.c.b16 %v657, %v656
      %v676 = vunpack.c.l.b16 %v638
      %v677 = vunpack.c.l.b16 %v639
      %v678 = vunpack.c.l.b16 %v640
      %v679 = vunpack.c.l.b16 %v641
      %v680 = vunpack.c.l.b16 %v642
      %v681 = vunpack.c.l.b16 %v643
      %v682 = vunpack.c.l.b16 %v644
      %v683 = vunpack.c.l.b16 %v645
      %v684 = vunpack.c.l.b16 %v646
      %v685 = vunpack.c.l.b16 %v647
      %v686 = vunpack.c.l.b16 %v648
      %v687 = vunpack.c.l.b16 %v649
      %v688 = vunpack.c.l.b16 %v650
      %v689 = vunpack.c.l.b16 %v651
      %v690 = vunpack.c.l.b16 %v652
      %v691 = vunpack.c.l.b16 %v653
      %v692 = vpack.c.b16 %v677, %v676
      %v693 = vpack.c.b16 %v679, %v678
      %v694 = vpack.c.b16 %v681, %v680
      %v695 = vpack.c.b16 %v683, %v682
      %v696 = vpack.c.b16 %v685, %v684
      %v697 = vpack.c.b16 %v687, %v686
      %v698 = vpack.c.b16 %v689, %v688
      %v699 = vpack.c.b16 %v691, %v690
      %708 = vmatprep.subr.bf16.mxu0 0
      %709 = vmatpush1.bf16.msra.mxu0 %v699
      %710 = vmatprep.subr.bf16.mxu0 0
      %711 = vmatpush1.bf16.msra.mxu0 %v698
      %712 = vmatprep.subr.bf16.mxu0 0
      %713 = vmatpush1.bf16.msra.mxu0 %v697
      %714 = vmatprep.subr.bf16.mxu0 0
      %715 = vmatpush1.bf16.msra.mxu0 %v696
      %716 = vmatprep.subr.bf16.mxu0 0
      %717 = vmatpush1.bf16.msra.mxu0 %v695
      %718 = vmatprep.subr.bf16.mxu0 0
      %719 = vmatpush1.bf16.msra.mxu0 %v694
      %720 = vmatprep.subr.bf16.mxu0 0
      %721 = vmatpush1.bf16.msra.mxu0 %v693
      %722 = vmatprep.subr.bf16.mxu0 0
      %723 = vmatpush1.bf16.msra.mxu0 %v692
      %724 = vmatprep.subr.bf16.mxu0 0
      %725 = vmatpush2.bf16.msra.mxu0 0
      %726 = vmatprep.subr.bf16.mxu0 0
      %727 = vmatpush2.bf16.msra.mxu0 0
      %728 = vmatprep.subr.bf16.mxu0 0
      %729 = vmatpush2.bf16.msra.mxu0 0
      %730 = vmatprep.subr.bf16.mxu0 0
      %731 = vmatpush2.bf16.msra.mxu0 0
      %732 = vmatprep.subr.bf16.mxu0 0
      %733 = vmatpush2.bf16.msra.mxu0 0
      %734 = vmatprep.subr.bf16.mxu0 0
      %735 = vmatpush2.bf16.msra.mxu0 0
      %736 = vmatprep.subr.bf16.mxu0 0
      %737 = vmatpush2.bf16.msra.mxu0 0
      %738 = vmatprep.subr.bf16.mxu0 0
      %739 = vmatpush2.bf16.msra.mxu0 0
      %740 = vmatprep.mubr.bf16.mxu0 0
      %741 = vmatmul.mubr.bf16.gmra.mxu0 %v658
      %v742 = vpop.f32.mrf.mxu0
      %v743 = vadd.f32 0.0, %v742
      %v744 = vpop.f32.mrf.mxu0
      %v745 = vpop.f32.mrf.mxu0
      %v746 = vadd.f32 0.0, %v745
      %v747 = vpop.f32.mrf.mxu0
      %748 = vdwg.mxu0
      %v749 = vadd.f32 %v633, %v743
      %v750 = vadd.f32 %v634, %v746
      %751 = vst [vmem:[#allocation2] sm:$0xff] %v749
      %752 = vst [vmem:[#allocation2 + $0x8] sm:$0xff] %v750
      %v753 = vld [vmem:[#allocation2] sm:$0xff]
      %v754 = vld [vmem:[#allocation2 + $0x8] sm:$0xff]
      %v755 = vld [vmem:[%s233 + $0x30] sm:$0xf]
      %v756 = vld [vmem:[%s233 + $0x34] sm:$0xf]
      %s757 = scalar_lea.vmem %s237, 256
      %v758 = vld [vmem:[%s757] sm:$0xf]
      %v759 = vld [vmem:[%s757 + $0x4] sm:$0xf]
      %v760 = vld [vmem:[%s757 + $0x8] sm:$0xf]
      %v761 = vld [vmem:[%s757 + $0xc] sm:$0xf]
      %v762 = vld [vmem:[%s757 + $0x10] sm:$0xf]
      %v763 = vld [vmem:[%s757 + $0x14] sm:$0xf]
      %v764 = vld [vmem:[%s757 + $0x18] sm:$0xf]
      %v765 = vld [vmem:[%s757 + $0x1c] sm:$0xf]
      %v766 = vld [vmem:[%s757 + $0x20] sm:$0xf]
      %v767 = vld [vmem:[%s757 + $0x24] sm:$0xf]
      %v768 = vld [vmem:[%s757 + $0x28] sm:$0xf]
      %v769 = vld [vmem:[%s757 + $0x2c] sm:$0xf]
      %v770 = vld [vmem:[%s757 + $0x30] sm:$0xf]
      %v771 = vld [vmem:[%s757 + $0x34] sm:$0xf]
      %v772 = vld [vmem:[%s757 + $0x38] sm:$0xf]
      %v773 = vld [vmem:[%s757 + $0x3c] sm:$0xf]
      %v776 = vunpack.c.l.b16 %v755
      %v777 = vunpack.c.l.b16 %v756
      %v778 = vpack.c.b16 %v777, %v776
      %v796 = vunpack.c.l.b16 %v758
      %v797 = vunpack.c.l.b16 %v759
      %v798 = vunpack.c.l.b16 %v760
      %v799 = vunpack.c.l.b16 %v761
      %v800 = vunpack.c.l.b16 %v762
      %v801 = vunpack.c.l.b16 %v763
      %v802 = vunpack.c.l.b16 %v764
      %v803 = vunpack.c.l.b16 %v765
      %v804 = vunpack.c.l.b16 %v766
      %v805 = vunpack.c.l.b16 %v767
      %v806 = vunpack.c.l.b16 %v768
      %v807 = vunpack.c.l.b16 %v769
      %v808 = vunpack.c.l.b16 %v770
      %v809 = vunpack.c.l.b16 %v771
      %v810 = vunpack.c.l.b16 %v772
      %v811 = vunpack.c.l.b16 %v773
      %v812 = vpack.c.b16 %v797, %v796
      %v813 = vpack.c.b16 %v799, %v798
      %v814 = vpack.c.b16 %v801, %v800
      %v815 = vpack.c.b16 %v803, %v802
      %v816 = vpack.c.b16 %v805, %v804
      %v817 = vpack.c.b16 %v807, %v806
      %v818 = vpack.c.b16 %v809, %v808
      %v819 = vpack.c.b16 %v811, %v810
      %828 = vmatprep.subr.bf16.mxu0 0
      %829 = vmatpush1.bf16.msra.mxu0 %v819
      %830 = vmatprep.subr.bf16.mxu0 0
      %831 = vmatpush1.bf16.msra.mxu0 %v818
      %832 = vmatprep.subr.bf16.mxu0 0
      %833 = vmatpush1.bf16.msra.mxu0 %v817
      %834 = vmatprep.subr.bf16.mxu0 0
      %835 = vmatpush1.bf16.msra.mxu0 %v816
      %836 = vmatprep.subr.bf16.mxu0 0
      %837 = vmatpush1.bf16.msra.mxu0 %v815
      %838 = vmatprep.subr.bf16.mxu0 0
      %839 = vmatpush1.bf16.msra.mxu0 %v814
      %840 = vmatprep.subr.bf16.mxu0 0
      %841 = vmatpush1.bf16.msra.mxu0 %v813
      %842 = vmatprep.subr.bf16.mxu0 0
      %843 = vmatpush1.bf16.msra.mxu0 %v812
      %844 = vmatprep.subr.bf16.mxu0 0
      %845 = vmatpush2.bf16.msra.mxu0 0
      %846 = vmatprep.subr.bf16.mxu0 0
      %847 = vmatpush2.bf16.msra.mxu0 0
      %848 = vmatprep.subr.bf16.mxu0 0
      %849 = vmatpush2.bf16.msra.mxu0 0
      %850 = vmatprep.subr.bf16.mxu0 0
      %851 = vmatpush2.bf16.msra.mxu0 0
      %852 = vmatprep.subr.bf16.mxu0 0
      %853 = vmatpush2.bf16.msra.mxu0 0
      %854 = vmatprep.subr.bf16.mxu0 0
      %855 = vmatpush2.bf16.msra.mxu0 0
      %856 = vmatprep.subr.bf16.mxu0 0
      %857 = vmatpush2.bf16.msra.mxu0 0
      %858 = vmatprep.subr.bf16.mxu0 0
      %859 = vmatpush2.bf16.msra.mxu0 0
      %860 = vmatprep.mubr.bf16.mxu0 0
      %861 = vmatmul.mubr.bf16.gmra.mxu0 %v778
      %v862 = vpop.f32.mrf.mxu0
      %v863 = vadd.f32 0.0, %v862
      %v864 = vpop.f32.mrf.mxu0
      %v865 = vpop.f32.mrf.mxu0
      %v866 = vadd.f32 0.0, %v865
      %v867 = vpop.f32.mrf.mxu0
      %868 = vdwg.mxu0
      %v869 = vadd.f32 %v753, %v863
      %v870 = vadd.f32 %v754, %v866
      %871 = vst [vmem:[#allocation2] sm:$0xff] %v869
      %872 = vst [vmem:[#allocation2 + $0x8] sm:$0xff] %v870
      %v873 = vld [vmem:[#allocation2] sm:$0xff]
      %v874 = vld [vmem:[#allocation2 + $0x8] sm:$0xff]
      %v875 = vld [vmem:[%s233 + $0x20] sm:$0xf]
      %v876 = vld [vmem:[%s233 + $0x24] sm:$0xf]
      %v877 = vld [vmem:[%s233 + $0x28] sm:$0x1]
      %s878 = scalar_lea.vmem %s237, 320
      %v879 = vld [vmem:[%s878] sm:$0xf]
      %v880 = vld [vmem:[%s878 + $0x4] sm:$0xf]
      %v881 = vld [vmem:[%s878 + $0x8] sm:$0xf]
      %v882 = vld [vmem:[%s878 + $0xc] sm:$0xf]
      %v883 = vld [vmem:[%s878 + $0x10] sm:$0xf]
      %v884 = vld [vmem:[%s878 + $0x14] sm:$0xf]
      %v885 = vld [vmem:[%s878 + $0x18] sm:$0xf]
      %v886 = vld [vmem:[%s878 + $0x1c] sm:$0xf]
      %v887 = vld [vmem:[%s878 + $0x20] sm:$0xf]
      %v888 = vld [vmem:[%s878 + $0x24] sm:$0xf]
      %v889 = vld [vmem:[%s878 + $0x28] sm:$0xf]
      %v890 = vld [vmem:[%s878 + $0x2c] sm:$0xf]
      %v891 = vld [vmem:[%s878 + $0x30] sm:$0xf]
      %v892 = vld [vmem:[%s878 + $0x34] sm:$0xf]
      %v893 = vld [vmem:[%s878 + $0x38] sm:$0xf]
      %v894 = vld [vmem:[%s878 + $0x3c] sm:$0xf]
      %v898 = vunpack.c.l.b16 %v875
      %v899 = vunpack.c.l.b16 %v876
      %v900 = vunpack.c.l.b16 %v877
      %v901 = vpack.c.b16 %v899, %v898
      %v902 = vpack.c.b16 %v900, %v900
      %v904 = vshrl.u32 %v901, 16
      %v906 = vshll.u32 %v901, 16
      %v908 = vrot.slane %v906, 1
      %v909 = vor.u32 %v904, %v908
      %v911 = vshll.u32 %v902, 16
      %v913 = vrot.slane %v911, 1
      %v914 = vsel %vm526, %v909, %v913
      %v932 = vunpack.c.l.b16 %v879
      %v933 = vunpack.c.l.b16 %v880
      %v934 = vunpack.c.l.b16 %v881
      %v935 = vunpack.c.l.b16 %v882
      %v936 = vunpack.c.l.b16 %v883
      %v937 = vunpack.c.l.b16 %v884
      %v938 = vunpack.c.l.b16 %v885
      %v939 = vunpack.c.l.b16 %v886
      %v940 = vunpack.c.l.b16 %v887
      %v941 = vunpack.c.l.b16 %v888
      %v942 = vunpack.c.l.b16 %v889
      %v943 = vunpack.c.l.b16 %v890
      %v944 = vunpack.c.l.b16 %v891
      %v945 = vunpack.c.l.b16 %v892
      %v946 = vunpack.c.l.b16 %v893
      %v947 = vunpack.c.l.b16 %v894
      %v948 = vpack.c.b16 %v933, %v932
      %v949 = vpack.c.b16 %v935, %v934
      %v950 = vpack.c.b16 %v937, %v936
      %v951 = vpack.c.b16 %v939, %v938
      %v952 = vpack.c.b16 %v941, %v940
      %v953 = vpack.c.b16 %v943, %v942
      %v954 = vpack.c.b16 %v945, %v944
      %v955 = vpack.c.b16 %v947, %v946
      %964 = vmatprep.subr.bf16.mxu0 0
      %965 = vmatpush1.bf16.msra.mxu0 %v955
      %966 = vmatprep.subr.bf16.mxu0 0
      %967 = vmatpush1.bf16.msra.mxu0 %v954
      %968 = vmatprep.subr.bf16.mxu0 0
      %969 = vmatpush1.bf16.msra.mxu0 %v953
      %970 = vmatprep.subr.bf16.mxu0 0
      %971 = vmatpush1.bf16.msra.mxu0 %v952
      %972 = vmatprep.subr.bf16.mxu0 0
      %973 = vmatpush1.bf16.msra.mxu0 %v951
      %974 = vmatprep.subr.bf16.mxu0 0
      %975 = vmatpush1.bf16.msra.mxu0 %v950
      %976 = vmatprep.subr.bf16.mxu0 0
      %977 = vmatpush1.bf16.msra.mxu0 %v949
      %978 = vmatprep.subr.bf16.mxu0 0
      %979 = vmatpush1.bf16.msra.mxu0 %v948
      %980 = vmatprep.subr.bf16.mxu0 0
      %981 = vmatpush2.bf16.msra.mxu0 0
      %982 = vmatprep.subr.bf16.mxu0 0
      %983 = vmatpush2.bf16.msra.mxu0 0
      %984 = vmatprep.subr.bf16.mxu0 0
      %985 = vmatpush2.bf16.msra.mxu0 0
      %986 = vmatprep.subr.bf16.mxu0 0
      %987 = vmatpush2.bf16.msra.mxu0 0
      %988 = vmatprep.subr.bf16.mxu0 0
      %989 = vmatpush2.bf16.msra.mxu0 0
      %990 = vmatprep.subr.bf16.mxu0 0
      %991 = vmatpush2.bf16.msra.mxu0 0
      %992 = vmatprep.subr.bf16.mxu0 0
      %993 = vmatpush2.bf16.msra.mxu0 0
      %994 = vmatprep.subr.bf16.mxu0 0
      %995 = vmatpush2.bf16.msra.mxu0 0
      %996 = vmatprep.mubr.bf16.mxu0 0
      %997 = vmatmul.mubr.bf16.gmra.mxu0 %v914
      %v998 = vpop.f32.mrf.mxu0
      %v999 = vadd.f32 0.0, %v998
      %v1000 = vpop.f32.mrf.mxu0
      %v1001 = vpop.f32.mrf.mxu0
      %v1002 = vadd.f32 0.0, %v1001
      %v1003 = vpop.f32.mrf.mxu0
      %1004 = vdwg.mxu0
      %v1005 = vadd.f32 %v873, %v999
      %v1006 = vadd.f32 %v874, %v1002
      %1007 = vst [vmem:[#allocation2] sm:$0xff] %v1005
      %1008 = vst [vmem:[#allocation2 + $0x8] sm:$0xff] %v1006
      %v1009 = vld [vmem:[#allocation2] sm:$0xff]
      %v1010 = vld [vmem:[#allocation2 + $0x8] sm:$0xff]
      %v1011 = vld [vmem:[%s233] sm:$0xe]
      %v1012 = vld [vmem:[%s233 + $0x4] sm:$0xf]
      %v1013 = vld [vmem:[%s233 + $0x8] sm:$0x3]
      %s1014 = scalar_lea.vmem %s237, 384
      %v1015 = vld [vmem:[%s1014] sm:$0xf]
      %v1016 = vld [vmem:[%s1014 + $0x4] sm:$0xf]
      %v1017 = vld [vmem:[%s1014 + $0x8] sm:$0xf]
      %v1018 = vld [vmem:[%s1014 + $0xc] sm:$0xf]
      %v1019 = vld [vmem:[%s1014 + $0x10] sm:$0xf]
      %v1020 = vld [vmem:[%s1014 + $0x14] sm:$0xf]
      %v1021 = vld [vmem:[%s1014 + $0x18] sm:$0xf]
      %v1022 = vld [vmem:[%s1014 + $0x1c] sm:$0xf]
      %v1023 = vld [vmem:[%s1014 + $0x20] sm:$0xf]
      %v1024 = vld [vmem:[%s1014 + $0x24] sm:$0xf]
      %v1025 = vld [vmem:[%s1014 + $0x28] sm:$0xf]
      %v1026 = vld [vmem:[%s1014 + $0x2c] sm:$0xf]
      %v1027 = vld [vmem:[%s1014 + $0x30] sm:$0xf]
      %v1028 = vld [vmem:[%s1014 + $0x34] sm:$0xf]
      %v1029 = vld [vmem:[%s1014 + $0x38] sm:$0xf]
      %v1030 = vld [vmem:[%s1014 + $0x3c] sm:$0xf]
      %v1034 = vunpack.c.l.b16 %v1011
      %v1035 = vunpack.c.l.b16 %v1012
      %v1036 = vunpack.c.l.b16 %v1013
      %v1037 = vpack.c.b16 %v1035, %v1034
      %v1038 = vpack.c.b16 %v1036, %v1036
      %vm1039 = vsmask.f32 6400
      %v1041 = vshrl.u32 %v1037, 16
      %v1043 = vrot.slane %v1041, 1
      %v1044 = vshll.u32 %v1037, 16
      %v1046 = vrot.slane %v1044, 2
      %v1047 = vor.u32 %v1043, %v1046
      %v1049 = vshrl.u32 %v1038, 16
      %v1051 = vrot.slane %v1049, 1
      %v1052 = vshll.u32 %v1038, 16
      %v1054 = vrot.slane %v1052, 2
      %v1055 = vor.u32 %v1051, %v1054
      %v1056 = vsel %vm1039, %v1047, %v1055
      %v1074 = vunpack.c.l.b16 %v1015
      %v1075 = vunpack.c.l.b16 %v1016
      %v1076 = vunpack.c.l.b16 %v1017
      %v1077 = vunpack.c.l.b16 %v1018
      %v1078 = vunpack.c.l.b16 %v1019
      %v1079 = vunpack.c.l.b16 %v1020
      %v1080 = vunpack.c.l.b16 %v1021
      %v1081 = vunpack.c.l.b16 %v1022
      %v1082 = vunpack.c.l.b16 %v1023
      %v1083 = vunpack.c.l.b16 %v1024
      %v1084 = vunpack.c.l.b16 %v1025
      %v1085 = vunpack.c.l.b16 %v1026
      %v1086 = vunpack.c.l.b16 %v1027
      %v1087 = vunpack.c.l.b16 %v1028
      %v1088 = vunpack.c.l.b16 %v1029
      %v1089 = vunpack.c.l.b16 %v1030
      %v1090 = vpack.c.b16 %v1075, %v1074
      %v1091 = vpack.c.b16 %v1077, %v1076
      %v1092 = vpack.c.b16 %v1079, %v1078
      %v1093 = vpack.c.b16 %v1081, %v1080
      %v1094 = vpack.c.b16 %v1083, %v1082
      %v1095 = vpack.c.b16 %v1085, %v1084
      %v1096 = vpack.c.b16 %v1087, %v1086
      %v1097 = vpack.c.b16 %v1089, %v1088
      %1106 = vmatprep.subr.bf16.mxu0 0
      %1107 = vmatpush1.bf16.msra.mxu0 %v1097
      %1108 = vmatprep.subr.bf16.mxu0 0
      %1109 = vmatpush1.bf16.msra.mxu0 %v1096
      %1110 = vmatprep.subr.bf16.mxu0 0
      %1111 = vmatpush1.bf16.msra.mxu0 %v1095
      %1112 = vmatprep.subr.bf16.mxu0 0
      %1113 = vmatpush1.bf16.msra.mxu0 %v1094
      %1114 = vmatprep.subr.bf16.mxu0 0
      %1115 = vmatpush1.bf16.msra.mxu0 %v1093
      %1116 = vmatprep.subr.bf16.mxu0 0
      %1117 = vmatpush1.bf16.msra.mxu0 %v1092
      %1118 = vmatprep.subr.bf16.mxu0 0
      %1119 = vmatpush1.bf16.msra.mxu0 %v1091
      %1120 = vmatprep.subr.bf16.mxu0 0
      %1121 = vmatpush1.bf16.msra.mxu0 %v1090
      %1122 = vmatprep.subr.bf16.mxu0 0
      %1123 = vmatpush2.bf16.msra.mxu0 0
      %1124 = vmatprep.subr.bf16.mxu0 0
      %1125 = vmatpush2.bf16.msra.mxu0 0
      %1126 = vmatprep.subr.bf16.mxu0 0
      %1127 = vmatpush2.bf16.msra.mxu0 0
      %1128 = vmatprep.subr.bf16.mxu0 0
      %1129 = vmatpush2.bf16.msra.mxu0 0
      %1130 = vmatprep.subr.bf16.mxu0 0
      %1131 = vmatpush2.bf16.msra.mxu0 0
      %1132 = vmatprep.subr.bf16.mxu0 0
      %1133 = vmatpush2.bf16.msra.mxu0 0
      %1134 = vmatprep.subr.bf16.mxu0 0
      %1135 = vmatpush2.bf16.msra.mxu0 0
      %1136 = vmatprep.subr.bf16.mxu0 0
      %1137 = vmatpush2.bf16.msra.mxu0 0
      %1138 = vmatprep.mubr.bf16.mxu0 0
      %1139 = vmatmul.mubr.bf16.gmra.mxu0 %v1056
      %v1140 = vpop.f32.mrf.mxu0
      %v1141 = vadd.f32 0.0, %v1140
      %v1142 = vpop.f32.mrf.mxu0
      %v1143 = vpop.f32.mrf.mxu0
      %v1144 = vadd.f32 0.0, %v1143
      %v1145 = vpop.f32.mrf.mxu0
      %1146 = vdwg.mxu0
      %v1147 = vadd.f32 %v1009, %v1141
      %v1148 = vadd.f32 %v1010, %v1144
      %1149 = vst [vmem:[#allocation2] sm:$0xff] %v1147
      %1150 = vst [vmem:[#allocation2 + $0x8] sm:$0xff] %v1148
      %v1151 = vld [vmem:[#allocation2] sm:$0xff]
      %v1152 = vld [vmem:[#allocation2 + $0x8] sm:$0xff]
      %v1153 = vld [vmem:[%s233 + $0x10] sm:$0xe]
      %v1154 = vld [vmem:[%s233 + $0x14] sm:$0xf]
      %v1155 = vld [vmem:[%s233 + $0x18] sm:$0x3]
      %s1156 = scalar_lea.vmem %s237, 448
      %v1157 = vld [vmem:[%s1156] sm:$0xf]
      %v1158 = vld [vmem:[%s1156 + $0x4] sm:$0xf]
      %v1159 = vld [vmem:[%s1156 + $0x8] sm:$0xf]
      %v1160 = vld [vmem:[%s1156 + $0xc] sm:$0xf]
      %v1161 = vld [vmem:[%s1156 + $0x10] sm:$0xf]
      %v1162 = vld [vmem:[%s1156 + $0x14] sm:$0xf]
      %v1163 = vld [vmem:[%s1156 + $0x18] sm:$0xf]
      %v1164 = vld [vmem:[%s1156 + $0x1c] sm:$0xf]
      %v1165 = vld [vmem:[%s1156 + $0x20] sm:$0xf]
      %v1166 = vld [vmem:[%s1156 + $0x24] sm:$0xf]
      %v1167 = vld [vmem:[%s1156 + $0x28] sm:$0xf]
      %v1168 = vld [vmem:[%s1156 + $0x2c] sm:$0xf]
      %v1169 = vld [vmem:[%s1156 + $0x30] sm:$0xf]
      %v1170 = vld [vmem:[%s1156 + $0x34] sm:$0xf]
      %v1171 = vld [vmem:[%s1156 + $0x38] sm:$0xf]
      %v1172 = vld [vmem:[%s1156 + $0x3c] sm:$0xf]
      %v1176 = vunpack.c.l.b16 %v1153
      %v1177 = vunpack.c.l.b16 %v1154
      %v1178 = vunpack.c.l.b16 %v1155
      %v1179 = vpack.c.b16 %v1177, %v1176
      %v1180 = vpack.c.b16 %v1178, %v1178
      %v1182 = vshrl.u32 %v1179, 16
      %v1184 = vrot.slane %v1182, 1
      %v1185 = vshll.u32 %v1179, 16
      %v1187 = vrot.slane %v1185, 2
      %v1188 = vor.u32 %v1184, %v1187
      %v1190 = vshrl.u32 %v1180, 16
      %v1192 = vrot.slane %v1190, 1
      %v1193 = vshll.u32 %v1180, 16
      %v1195 = vrot.slane %v1193, 2
      %v1196 = vor.u32 %v1192, %v1195
      %v1197 = vsel %vm1039, %v1188, %v1196
      %v1215 = vunpack.c.l.b16 %v1157
      %v1216 = vunpack.c.l.b16 %v1158
      %v1217 = vunpack.c.l.b16 %v1159
      %v1218 = vunpack.c.l.b16 %v1160
      %v1219 = vunpack.c.l.b16 %v1161
      %v1220 = vunpack.c.l.b16 %v1162
      %v1221 = vunpack.c.l.b16 %v1163
      %v1222 = vunpack.c.l.b16 %v1164
      %v1223 = vunpack.c.l.b16 %v1165
      %v1224 = vunpack.c.l.b16 %v1166
      %v1225 = vunpack.c.l.b16 %v1167
      %v1226 = vunpack.c.l.b16 %v1168
      %v1227 = vunpack.c.l.b16 %v1169
      %v1228 = vunpack.c.l.b16 %v1170
      %v1229 = vunpack.c.l.b16 %v1171
      %v1230 = vunpack.c.l.b16 %v1172
      %v1231 = vpack.c.b16 %v1216, %v1215
      %v1232 = vpack.c.b16 %v1218, %v1217
      %v1233 = vpack.c.b16 %v1220, %v1219
      %v1234 = vpack.c.b16 %v1222, %v1221
      %v1235 = vpack.c.b16 %v1224, %v1223
      %v1236 = vpack.c.b16 %v1226, %v1225
      %v1237 = vpack.c.b16 %v1228, %v1227
      %v1238 = vpack.c.b16 %v1230, %v1229
      %1247 = vmatprep.subr.bf16.mxu0 0
      %1248 = vmatpush1.bf16.msra.mxu0 %v1238
      %1249 = vmatprep.subr.bf16.mxu0 0
      %1250 = vmatpush1.bf16.msra.mxu0 %v1237
      %1251 = vmatprep.subr.bf16.mxu0 0
      %1252 = vmatpush1.bf16.msra.mxu0 %v1236
      %1253 = vmatprep.subr.bf16.mxu0 0
      %1254 = vmatpush1.bf16.msra.mxu0 %v1235
      %1255 = vmatprep.subr.bf16.mxu0 0
      %1256 = vmatpush1.bf16.msra.mxu0 %v1234
      %1257 = vmatprep.subr.bf16.mxu0 0
      %1258 = vmatpush1.bf16.msra.mxu0 %v1233
      %1259 = vmatprep.subr.bf16.mxu0 0
      %1260 = vmatpush1.bf16.msra.mxu0 %v1232
      %1261 = vmatprep.subr.bf16.mxu0 0
      %1262 = vmatpush1.bf16.msra.mxu0 %v1231
      %1263 = vmatprep.subr.bf16.mxu0 0
      %1264 = vmatpush2.bf16.msra.mxu0 0
      %1265 = vmatprep.subr.bf16.mxu0 0
      %1266 = vmatpush2.bf16.msra.mxu0 0
      %1267 = vmatprep.subr.bf16.mxu0 0
      %1268 = vmatpush2.bf16.msra.mxu0 0
      %1269 = vmatprep.subr.bf16.mxu0 0
      %1270 = vmatpush2.bf16.msra.mxu0 0
      %1271 = vmatprep.subr.bf16.mxu0 0
      %1272 = vmatpush2.bf16.msra.mxu0 0
      %1273 = vmatprep.subr.bf16.mxu0 0
      %1274 = vmatpush2.bf16.msra.mxu0 0
      %1275 = vmatprep.subr.bf16.mxu0 0
      %1276 = vmatpush2.bf16.msra.mxu0 0
      %1277 = vmatprep.subr.bf16.mxu0 0
      %1278 = vmatpush2.bf16.msra.mxu0 0
      %1279 = vmatprep.mubr.bf16.mxu0 0
      %1280 = vmatmul.mubr.bf16.gmra.mxu0 %v1197
      %v1281 = vpop.f32.mrf.mxu0
      %v1282 = vadd.f32 0.0, %v1281
      %v1283 = vpop.f32.mrf.mxu0
      %v1284 = vpop.f32.mrf.mxu0
      %v1285 = vadd.f32 0.0, %v1284
      %v1286 = vpop.f32.mrf.mxu0
      %1287 = vdwg.mxu0
      %v1288 = vadd.f32 %v1151, %v1282
      %v1289 = vadd.f32 %v1152, %v1285
      %1290 = vst [vmem:[#allocation2] sm:$0xff] %v1288
      %1291 = vst [vmem:[#allocation2 + $0x8] sm:$0xff] %v1289
      %v1292 = vld [vmem:[#allocation2] sm:$0xff]
      %v1293 = vld [vmem:[#allocation2 + $0x8] sm:$0xff]
      %v1294 = vld [vmem:[%s233] sm:$0xc]
      %v1295 = vld [vmem:[%s233 + $0x4] sm:$0xf]
      %v1296 = vld [vmem:[%s233 + $0x8] sm:$0x3]
      %s1297 = scalar_lea.vmem %s237, 512
      %v1298 = vld [vmem:[%s1297] sm:$0xf]
      %v1299 = vld [vmem:[%s1297 + $0x4] sm:$0xf]
      %v1300 = vld [vmem:[%s1297 + $0x8] sm:$0xf]
      %v1301 = vld [vmem:[%s1297 + $0xc] sm:$0xf]
      %v1302 = vld [vmem:[%s1297 + $0x10] sm:$0xf]
      %v1303 = vld [vmem:[%s1297 + $0x14] sm:$0xf]
      %v1304 = vld [vmem:[%s1297 + $0x18] sm:$0xf]
      %v1305 = vld [vmem:[%s1297 + $0x1c] sm:$0xf]
      %v1306 = vld [vmem:[%s1297 + $0x20] sm:$0xf]
      %v1307 = vld [vmem:[%s1297 + $0x24] sm:$0xf]
      %v1308 = vld [vmem:[%s1297 + $0x28] sm:$0xf]
      %v1309 = vld [vmem:[%s1297 + $0x2c] sm:$0xf]
      %v1310 = vld [vmem:[%s1297 + $0x30] sm:$0xf]
      %v1311 = vld [vmem:[%s1297 + $0x34] sm:$0xf]
      %v1312 = vld [vmem:[%s1297 + $0x38] sm:$0xf]
      %v1313 = vld [vmem:[%s1297 + $0x3c] sm:$0xf]
      %v1317 = vunpack.c.l.b16 %v1294
      %v1318 = vunpack.c.l.b16 %v1295
      %v1319 = vunpack.c.l.b16 %v1296
      %v1320 = vpack.c.b16 %v1318, %v1317
      %v1321 = vpack.c.b16 %v1319, %v1319
      %vm1322 = vcmask 1045504
      %v1323 = vrot.slane %v1320, 2
      %v1324 = vrot.slane %v1321, 2
      %v1325 = vsel %vm1322, %v1323, %v1324
      %v1343 = vunpack.c.l.b16 %v1298
      %v1344 = vunpack.c.l.b16 %v1299
      %v1345 = vunpack.c.l.b16 %v1300
      %v1346 = vunpack.c.l.b16 %v1301
      %v1347 = vunpack.c.l.b16 %v1302
      %v1348 = vunpack.c.l.b16 %v1303
      %v1349 = vunpack.c.l.b16 %v1304
      %v1350 = vunpack.c.l.b16 %v1305
      %v1351 = vunpack.c.l.b16 %v1306
      %v1352 = vunpack.c.l.b16 %v1307
      %v1353 = vunpack.c.l.b16 %v1308
      %v1354 = vunpack.c.l.b16 %v1309
      %v1355 = vunpack.c.l.b16 %v1310
      %v1356 = vunpack.c.l.b16 %v1311
      %v1357 = vunpack.c.l.b16 %v1312
      %v1358 = vunpack.c.l.b16 %v1313
      %v1359 = vpack.c.b16 %v1344, %v1343
      %v1360 = vpack.c.b16 %v1346, %v1345
      %v1361 = vpack.c.b16 %v1348, %v1347
      %v1362 = vpack.c.b16 %v1350, %v1349
      %v1363 = vpack.c.b16 %v1352, %v1351
      %v1364 = vpack.c.b16 %v1354, %v1353
      %v1365 = vpack.c.b16 %v1356, %v1355
      %v1366 = vpack.c.b16 %v1358, %v1357
      %1375 = vmatprep.subr.bf16.mxu0 0
      %1376 = vmatpush1.bf16.msra.mxu0 %v1366
      %1377 = vmatprep.subr.bf16.mxu0 0
      %1378 = vmatpush1.bf16.msra.mxu0 %v1365
      %1379 = vmatprep.subr.bf16.mxu0 0
      %1380 = vmatpush1.bf16.msra.mxu0 %v1364
      %1381 = vmatprep.subr.bf16.mxu0 0
      %1382 = vmatpush1.bf16.msra.mxu0 %v1363
      %1383 = vmatprep.subr.bf16.mxu0 0
      %1384 = vmatpush1.bf16.msra.mxu0 %v1362
      %1385 = vmatprep.subr.bf16.mxu0 0
      %1386 = vmatpush1.bf16.msra.mxu0 %v1361
      %1387 = vmatprep.subr.bf16.mxu0 0
      %1388 = vmatpush1.bf16.msra.mxu0 %v1360
      %1389 = vmatprep.subr.bf16.mxu0 0
      %1390 = vmatpush1.bf16.msra.mxu0 %v1359
      %1391 = vmatprep.subr.bf16.mxu0 0
      %1392 = vmatpush2.bf16.msra.mxu0 0
      %1393 = vmatprep.subr.bf16.mxu0 0
      %1394 = vmatpush2.bf16.msra.mxu0 0
      %1395 = vmatprep.subr.bf16.mxu0 0
      %1396 = vmatpush2.bf16.msra.mxu0 0
      %1397 = vmatprep.subr.bf16.mxu0 0
      %1398 = vmatpush2.bf16.msra.mxu0 0
      %1399 = vmatprep.subr.bf16.mxu0 0
      %1400 = vmatpush2.bf16.msra.mxu0 0
      %1401 = vmatprep.subr.bf16.mxu0 0
      %1402 = vmatpush2.bf16.msra.mxu0 0
      %1403 = vmatprep.subr.bf16.mxu0 0
      %1404 = vmatpush2.bf16.msra.mxu0 0
      %1405 = vmatprep.subr.bf16.mxu0 0
      %1406 = vmatpush2.bf16.msra.mxu0 0
      %1407 = vmatprep.mubr.bf16.mxu0 0
      %1408 = vmatmul.mubr.bf16.gmra.mxu0 %v1325
      %v1409 = vpop.f32.mrf.mxu0
      %v1410 = vadd.f32 0.0, %v1409
      %v1411 = vpop.f32.mrf.mxu0
      %v1412 = vpop.f32.mrf.mxu0
      %v1413 = vadd.f32 0.0, %v1412
      %v1414 = vpop.f32.mrf.mxu0
      %1415 = vdwg.mxu0
      %v1416 = vadd.f32 %v1292, %v1410
      %v1417 = vadd.f32 %v1293, %v1413
      %1418 = vst [vmem:[#allocation2] sm:$0xff] %v1416
      %1419 = vst [vmem:[#allocation2 + $0x8] sm:$0xff] %v1417
      %v1420 = vld [vmem:[#allocation2] sm:$0xff]
      %v1421 = vld [vmem:[#allocation2 + $0x8] sm:$0xff]
      %v1422 = vld [vmem:[%s240] sm:$0x1]
      %v1424 = vlaneseq
      %v1425 = vshrl.u32 %v1424, 7
      %v1426 = vsub.s32 0, %v1425
      %v1427 = vrot.slane %v1422, %v1426
      %v1429 = vadd.f32 %v1420, %v1427
      %v1430 = vadd.f32 %v1421, %v1427
      %v1431 = vmax.f32 %v1429, 0.0
      %v1432 = vmax.f32 %v1430, 0.0
      %v1433 = vpack.c.bf16 %v1432, %v1431
      %v1435 = vunpack.c.l.b16 %v1433
      %v1436 = vunpack.c.h.b16 %v1433
      %v1437 = vpack.c.b16 %v1435, %v1435
      %v1438 = vpack.c.b16 %v1436, %v1436
      %1441 = vst [vmem:[%s252] sm:$0xf] %v1437
      %1442 = vst [vmem:[%s252 + $0x4] sm:$0xf] %v1438
      %s1443 = smul.u32 2, %s21
      %p1444 = scmp.lt.s32.totalorder %s20, 1
      %s1445 = scalar_select %p1444, %s20, 1
      %p1446 = scmp.lt.s32.totalorder %s1443, 1
      %s1447 = scalar_select %p1446, %s1443, 1
      %p1448 = scmp.lt.s32.totalorder %s19, 0
      %s1449 = scalar_select %p1448, %s19, 0
      %s1450 = sadd.s32 %s1449, %s1447
      %s1451 = smul.addr %s1445, 2
      %s1452 = sadd.s32 %s1450, %s1451
      %s1453 = smul.addr %s1452, 4
      %s1454 = scalar_lea.vmem %s3, %s1453
      // Predicated region
      $region33: #{timm_backbone_forward.8} parent=31 // pred_check
        %p1455 = pneg %p135
      $region34: #{timm_backbone_forward.8} parent=31 // pred_check_branch
        %1457 = sbr.rel (%p1455) target = $region36
      $region35: #{timm_backbone_forward.8} parent=31 // pred_region
        %s1458 = smul.u32 2, %s21
      $region36: #{timm_backbone_forward.8} parent=31 // pred_fallthru
        _
    $region32: #{timm_backbone_forward.8} parent=5 // pred_fallthru
      _
    %p1459 = scmp.le.s32.totalorder 2, %s9
    // Predicated region
    $region37: #{timm_backbone_forward.8} parent=5 // pred_check
      %p1460 = pneg %p1459
    $region38: #{timm_backbone_forward.8} parent=5 // pred_check_branch
      %1462 = sbr.rel (%p1460) target = $region40
    $region39: #{timm_backbone_forward.8} parent=5 // pred_region
      %s1463 = ssub.s32 %s9, 2
      // Predicated region
      $region41: #{timm_backbone_forward.8} parent=39 // pred_check
        %p1464 = pneg %p141
      $region42: #{timm_backbone_forward.8} parent=39 // pred_check_branch
        %1466 = sbr.rel (%p1464) target = $region44
      $region43: #{timm_backbone_forward.8} parent=39 // pred_region
        %s1467 = smul.u32 2, %s24
        %p1468 = scmp.lt.s32.totalorder %s23, 1
        %s1469 = scalar_select %p1468, %s23, 1
        %p1470 = scmp.lt.s32.totalorder %s1467, 1
        %s1471 = scalar_select %p1470, %s1467, 1
        %p1472 = scmp.lt.s32.totalorder %s22, 0
        %s1473 = scalar_select %p1472, %s22, 0
        %s1474 = sadd.s32 %s1473, %s1471
        %s1475 = smul.addr %s1469, 2
        %s1476 = sadd.s32 %s1474, %s1475
        %s1477 = smul.addr %s1476, 4
        %s1478 = scalar_lea.vmem %s3, %s1477
      $region44: #{timm_backbone_forward.8} parent=39 // pred_fallthru
        _
    $region40: #{timm_backbone_forward.8} parent=5 // pred_fallthru
      _
  $region6: #{timm_backbone_forward.8} parent=0 // loop_footer
    %s13 = sadd.s32 1, %s9
  $region7: #{timm_backbone_forward.8} parent=0 // loop_footer_branch
    %8 = sbr.rel target = $region3
  $region8: #{timm_backbone_forward.8} parent=0 // loop_exit
    _

// kernel: timm_backbone_forward.9
$region0: #{timm_backbone_forward.9}
  #allocation0 [shape = 'u32[]', space=smem, size = 0x4, offset = 0x4, fixed_abs, tag = 'smem constant byte address 0x4 - core index']
  #allocation1 [shape = 'u32[144,128]{1,0:T(1,128)}', space=vmem, size = 0x12000, scoped, tag = 'internal scratch']
  #allocation2 [shape = 'f32[16,128]{1,0:T(8,128)}', space=vmem, size = 0x2000, scoped, tag = 'scratch operand']
  %s0 = inlined_call_operand.vmem [shape: bf16[2,1,128,128], index: 0, kind: input, shape index: {}]
  %s1 = inlined_call_operand.vmem [shape: bf16[9,128,128], index: 1, kind: input, shape index: {}]
  %s2 = inlined_call_operand.vmem [shape: f32[1,128], index: 2, kind: input, shape index: {}]
  %s3 = inlined_call_operand.vmem [shape: bf16[2,16,128], index: 3, kind: output, shape index: {}]
  %s4 = sld [smem:[#allocation0]]
  $region45: #{timm_backbone_forward.9} parent=0
    _
  %s6 = ssub.s32 1, %s4
  %s7 = scalar_select 0, %s6, %s4
  loop: start=0, step=1, limit=4
  $region2: #{timm_backbone_forward.9} parent=0 // loop_pre_header
    _
  $region3: #{timm_backbone_forward.9} parent=0 // loop_header
    %s9 = sphi 0, %s13
    %p10 = scmp.ge.s32.totalorder %s9, 4
    %s16 = sphi 0, %s35
    %s17 = sphi 0, %s31
    %s18 = sphi 0, %s27
    %s19 = sphi 0, %s16
    %s20 = sphi 0, %s17
    %s21 = sphi 0, %s18
    %s22 = sphi 0, %s19
    %s23 = sphi 0, %s20
    %s24 = sphi 0, %s21
    %s40 = sphi 0, %s42
    %s43 = sphi 0, %s40
    %s44 = sphi 0, %s43
    %s60 = sphi 0, %s44
    %s66 = sphi 0, %s68
    %s69 = sphi 0, %s66
    %s70 = sphi 0, %s69
    %s86 = sphi 0, %s70
    %s92 = sphi 0, %s94
    %s95 = sphi 0, %s92
    %s96 = sphi 0, %s95
    %s112 = sphi 0, %s96
    %s122 = sphi 0, %s124
    %s125 = sphi 0, %s122
    %s126 = sphi 0, %s125
    %s142 = sphi 0, %s126
  $region4: #{timm_backbone_forward.9} parent=0 // loop_header_branch
    %12 = sbr.rel (%p10) target = $region8
  $region5: #{timm_backbone_forward.9} parent=0 // loop_body
    %s14 = ssub.s32 %s9, 1
    %s15 = ssub.s32 %s9, 2
    %s25 = sadd.s32 1, %s18
    %p26 = scmp.ge.s32.totalorder %s25, 1
    %s27 = scalar_select %p26, 0, %s25
    %s28 = sadd.s32 1, %s17
    %s29 = scalar_select %p26, %s28, %s17
    %p30 = scmp.ge.s32.totalorder %s29, 2
    %s31 = scalar_select %p30, 0, %s29
    %s32 = sadd.s32 1, %s16
    %s33 = scalar_select %p30, %s32, %s16
    %p34 = scmp.ge.s32.totalorder %s33, 1
    %s35 = scalar_select %p34, 0, %s33
    %s36 = ssub.s32 %s17, %s31
    %s37 = ssub.s32 %s18, %s27
    %s38 = sor.u32 %s36, %s37
    %p39 = scmp.eq.s32.totalorder %s38, 0
    %s41 = sadd.s32 %s40, 1
    %s42 = scalar_select %p39, %s40, %s41
    %p45 = pneg %p39
    %p46 = scmp.eq.s32.totalorder %s9, 1
    %p47 = por %p45, %p46
    %p48 = scmp.ne.s32.totalorder %s40, %s43
    %p49 = scmp.eq.s32.totalorder %s9, 0
    %p50 = por %p48, %p49
    %p51 = scmp.ne.s32.totalorder %s40, %s43
    %p52 = scmp.eq.s32.totalorder %s14, 1
    %p53 = por %p51, %p52
    %p54 = scmp.ne.s32.totalorder %s43, %s44
    %p55 = scmp.eq.s32.totalorder %s14, 0
    %p56 = por %p54, %p55
    %p57 = scmp.ne.s32.totalorder %s43, %s44
    %p58 = scmp.eq.s32.totalorder %s15, 1
    %p59 = por %p57, %p58
    %p61 = scmp.ne.s32.totalorder %s44, %s60
    %p62 = scmp.eq.s32.totalorder %s15, 0
    %p63 = por %p61, %p62
    %s64 = ssub.s32 %s16, %s35
    %p65 = scmp.eq.s32.totalorder %s64, 0
    %s67 = sadd.s32 %s66, 1
    %s68 = scalar_select %p65, %s66, %s67
    %p71 = pneg %p65
    %p72 = scmp.eq.s32.totalorder %s9, 1
    %p73 = por %p71, %p72
    %p74 = scmp.ne.s32.totalorder %s66, %s69
    %p75 = scmp.eq.s32.totalorder %s9, 0
    %p76 = por %p74, %p75
    %p77 = scmp.ne.s32.totalorder %s66, %s69
    %p78 = scmp.eq.s32.totalorder %s14, 1
    %p79 = por %p77, %p78
    %p80 = scmp.ne.s32.totalorder %s69, %s70
    %p81 = scmp.eq.s32.totalorder %s14, 0
    %p82 = por %p80, %p81
    %p83 = scmp.ne.s32.totalorder %s69, %s70
    %p84 = scmp.eq.s32.totalorder %s15, 1
    %p85 = por %p83, %p84
    %p87 = scmp.ne.s32.totalorder %s70, %s86
    %p88 = scmp.eq.s32.totalorder %s15, 0
    %p89 = por %p87, %p88
    %s90 = ssub.s32 %s16, %s35
    %p91 = scmp.eq.s32.totalorder %s90, 0
    %s93 = sadd.s32 %s92, 1
    %s94 = scalar_select %p91, %s92, %s93
    %p97 = pneg %p91
    %p98 = scmp.eq.s32.totalorder %s9, 1
    %p99 = por %p97, %p98
    %p100 = scmp.ne.s32.totalorder %s92, %s95
    %p101 = scmp.eq.s32.totalorder %s9, 0
    %p102 = por %p100, %p101
    %p103 = scmp.ne.s32.totalorder %s92, %s95
    %p104 = scmp.eq.s32.totalorder %s14, 1
    %p105 = por %p103, %p104
    %p106 = scmp.ne.s32.totalorder %s95, %s96
    %p107 = scmp.eq.s32.totalorder %s14, 0
    %p108 = por %p106, %p107
    %p109 = scmp.ne.s32.totalorder %s95, %s96
    %p110 = scmp.eq.s32.totalorder %s15, 1
    %p111 = por %p109, %p110
    %p113 = scmp.ne.s32.totalorder %s96, %s112
    %p114 = scmp.eq.s32.totalorder %s15, 0
    %p115 = por %p113, %p114
    %s116 = ssub.s32 %s17, %s31
    %s117 = ssub.s32 %s18, %s27
    %s118 = sor.u32 %s116, %s117
    %s119 = ssub.s32 %s16, %s35
    %s120 = sor.u32 %s118, %s119
    %p121 = scmp.eq.s32.totalorder %s120, 0
    %s123 = sadd.s32 %s122, 1
    %s124 = scalar_select %p121, %s122, %s123
    %p127 = pneg %p121
    %p128 = scmp.eq.s32.totalorder %s9, 1
    %p129 = por %p127, %p128
    %p130 = scmp.ne.s32.totalorder %s122, %s125
    %p131 = scmp.eq.s32.totalorder %s9, 0
    %p132 = por %p130, %p131
    %p133 = scmp.ne.s32.totalorder %s122, %s125
    %p134 = scmp.eq.s32.totalorder %s14, 1
    %p135 = por %p133, %p134
    %p136 = scmp.ne.s32.totalorder %s125, %s126
    %p137 = scmp.eq.s32.totalorder %s14, 0
    %p138 = por %p136, %p137
    %p139 = scmp.ne.s32.totalorder %s125, %s126
    %p140 = scmp.eq.s32.totalorder %s15, 1
    %p141 = por %p139, %p140
    %p143 = scmp.ne.s32.totalorder %s126, %s142
    %p144 = scmp.eq.s32.totalorder %s15, 0
    %p145 = por %p143, %p144
    %p146 = scmp.le.s32.totalorder 1, %s9
    %p147 = scmp.lt.s32.totalorder %s9, 3
    %p148 = pnand %p146, %p147
    %p149 = pneg %p148
    // Predicated region
    $region9: #{timm_backbone_forward.9} parent=5 // pred_check
      _
    $region10: #{timm_backbone_forward.9} parent=5 // pred_check_branch
      %151 = sbr.rel (%p148) target = $region12
    $region11: #{timm_backbone_forward.9} parent=5 // pred_region
      %s152 = ssub.s32 %s9, 1
      // Predicated region
      $region13: #{timm_backbone_forward.9} parent=11 // pred_check
        %p153 = pneg %p82
      $region14: #{timm_backbone_forward.9} parent=11 // pred_check_branch
        %155 = sbr.rel (%p153) target = $region16
      $region15: #{timm_backbone_forward.9} parent=11 // pred_region
        %p156 = scmp.lt.s32.totalorder %s19, 0
        %s157 = scalar_select %p156, %s19, 0
        %s158 = smul.addr %s157, 4
        %s159 = scalar_lea.vmem %s1, %s158
      $region16: #{timm_backbone_forward.9} parent=11 // pred_fallthru
        _
      // Predicated region
      $region17: #{timm_backbone_forward.9} parent=11 // pred_check
        %p160 = pneg %p108
      $region18: #{timm_backbone_forward.9} parent=11 // pred_check_branch
        %162 = sbr.rel (%p160) target = $region20
      $region19: #{timm_backbone_forward.9} parent=11 // pred_region
        %p163 = scmp.lt.s32.totalorder %s19, 0
        %s164 = scalar_select %p163, %s19, 0
        %s165 = scalar_lea.vmem %s2, %s164
      $region20: #{timm_backbone_forward.9} parent=11 // pred_fallthru
        _
    $region12: #{timm_backbone_forward.9} parent=5 // pred_fallthru
      _
    %p166 = scmp.lt.s32.totalorder %s9, 2
    // Predicated region
    $region21: #{timm_backbone_forward.9} parent=5 // pred_check
      %p167 = pneg %p166
    $region22: #{timm_backbone_forward.9} parent=5 // pred_check_branch
      %169 = sbr.rel (%p167) target = $region24
    $region23: #{timm_backbone_forward.9} parent=5 // pred_region
      // Predicated region
      $region25: #{timm_backbone_forward.9} parent=23 // pred_check
        %p170 = pneg %p50
      $region26: #{timm_backbone_forward.9} parent=23 // pred_check_branch
        %172 = sbr.rel (%p170) target = $region28
      $region27: #{timm_backbone_forward.9} parent=23 // pred_region
        %p173 = scmp.lt.s32.totalorder %s17, 1
        %s174 = scalar_select %p173, %s17, 1
        %p175 = scmp.lt.s32.totalorder %s18, 0
        %s176 = scalar_select %p175, %s18, 0
        %s177 = smul.addr %s176, 16
        %s178 = smul.addr %s174, 16
        %s179 = sadd.s32 %s177, %s178
        %s180 = smul.addr %s179, 4
        %s181 = scalar_lea.vmem %s0, %s180
      $region28: #{timm_backbone_forward.9} parent=23 // pred_fallthru
        _
    $region24: #{timm_backbone_forward.9} parent=5 // pred_fallthru
      _
    %p182 = scmp.le.s32.totalorder 1, %s9
    %p183 = scmp.lt.s32.totalorder %s9, 3
    %p184 = pnand %p182, %p183
    %p185 = pneg %p184
    // Predicated region
    $region29: #{timm_backbone_forward.9} parent=5 // pred_check
      _
    $region30: #{timm_backbone_forward.9} parent=5 // pred_check_branch
      %187 = sbr.rel (%p184) target = $region32
    $region31: #{timm_backbone_forward.9} parent=5 // pred_region
      %s188 = ssub.s32 %s9, 1
      %p189 = scmp.lt.s32.totalorder %s20, 1
      %s190 = scalar_select %p189, %s20, 1
      %p191 = scmp.lt.s32.totalorder %s21, 0
      %s192 = scalar_select %p191, %s21, 0
      %s193 = smul.addr %s192, 16
      %s194 = smul.addr %s190, 16
      %s195 = sadd.s32 %s193, %s194
      %s196 = smul.addr %s195, 4
      %s197 = scalar_lea.vmem %s0, %s196
      %p198 = pneg %p56
      %p199 = pneg %p53
      %p200 = scmp.lt.s32.totalorder %s19, 0
      %s201 = scalar_select %p200, %s19, 0
      %s202 = smul.addr %s201, 4
      %s203 = scalar_lea.vmem %s1, %s202
      %p204 = pneg %p82
      %p205 = pneg %p79
      %p206 = scmp.lt.s32.totalorder %s19, 0
      %s207 = scalar_select %p206, %s19, 0
      %s208 = scalar_lea.vmem %s2, %s207
      %p209 = pneg %p108
      %p210 = pneg %p105
      %p211 = pneg %p138
      %p212 = pneg %p135
      %s213 = smul.u32 2, %s21
      %p214 = scmp.lt.s32.totalorder %s20, 1
      %s215 = scalar_select %p214, %s20, 1
      %p216 = scmp.lt.s32.totalorder %s213, 1
      %s217 = scalar_select %p216, %s213, 1
      %p218 = scmp.lt.s32.totalorder %s19, 0
      %s219 = scalar_select %p218, %s19, 0
      %s220 = sadd.s32 %s219, %s217
      %s221 = smul.addr %s215, 2
      %s222 = sadd.s32 %s220, %s221
      %s223 = smul.addr %s222, 4
      %s224 = scalar_lea.vmem %s3, %s223
      %p225 = scmp.lt.s32.totalorder %s20, 1
      %s226 = scalar_select %p225, %s20, 1
      %p227 = scmp.lt.s32.totalorder %s21, 0
      %s228 = scalar_select %p227, %s21, 0
      %s229 = smul.addr %s228, 16
      %s230 = smul.addr %s226, 16
      %s231 = sadd.s32 %s229, %s230
      %s232 = smul.addr %s231, 4
      %s233 = scalar_lea.vmem %s0, %s232
      %p234 = scmp.lt.s32.totalorder %s19, 0
      %s235 = scalar_select %p234, %s19, 0
      %s236 = smul.addr %s235, 4
      %s237 = scalar_lea.vmem %s1, %s236
      %p238 = scmp.lt.s32.totalorder %s19, 0
      %s239 = scalar_select %p238, %s19, 0
      %s240 = scalar_lea.vmem %s2, %s239
      %s241 = smul.u32 2, %s21
      %p242 = scmp.lt.s32.totalorder %s20, 1
      %s243 = scalar_select %p242, %s20, 1
      %p244 = scmp.lt.s32.totalorder %s241, 1
      %s245 = scalar_select %p244, %s241, 1
      %p246 = scmp.lt.s32.totalorder %s19, 0
      %s247 = scalar_select %p246, %s19, 0
      %s248 = sadd.s32 %s247, %s245
      %s249 = smul.addr %s243, 2
      %s250 = sadd.s32 %s248, %s249
      %s251 = smul.addr %s250, 4
      %s252 = scalar_lea.vmem %s3, %s251
      %s253 = smul.u32 2, %s21
      %255 = vst [vmem:[#allocation2] sm:$0xff] 0.0
      %256 = vst [vmem:[#allocation2 + $0x8] sm:$0xff] 0.0
      %v257 = vld [vmem:[#allocation2] sm:$0xff]
      %v258 = vld [vmem:[#allocation2 + $0x8] sm:$0xff]
      %v259 = vld [vmem:[%s233] sm:$0xf]
      %v260 = vld [vmem:[%s233 + $0x4] sm:$0xf]
      %v261 = vld [vmem:[%s237] sm:$0xf]
      %v262 = vld [vmem:[%s237 + $0x4] sm:$0xf]
      %v263 = vld [vmem:[%s237 + $0x8] sm:$0xf]
      %v264 = vld [vmem:[%s237 + $0xc] sm:$0xf]
      %v265 = vld [vmem:[%s237 + $0x10] sm:$0xf]
      %v266 = vld [vmem:[%s237 + $0x14] sm:$0xf]
      %v267 = vld [vmem:[%s237 + $0x18] sm:$0xf]
      %v268 = vld [vmem:[%s237 + $0x1c] sm:$0xf]
      %v269 = vld [vmem:[%s237 + $0x20] sm:$0xf]
      %v270 = vld [vmem:[%s237 + $0x24] sm:$0xf]
      %v271 = vld [vmem:[%s237 + $0x28] sm:$0xf]
      %v272 = vld [vmem:[%s237 + $0x2c] sm:$0xf]
      %v273 = vld [vmem:[%s237 + $0x30] sm:$0xf]
      %v274 = vld [vmem:[%s237 + $0x34] sm:$0xf]
      %v275 = vld [vmem:[%s237 + $0x38] sm:$0xf]
      %v276 = vld [vmem:[%s237 + $0x3c] sm:$0xf]
      %v279 = vunpack.c.l.b16 %v259
      %v280 = vunpack.c.l.b16 %v260
      %v281 = vpack.c.b16 %v280, %v279
      %v299 = vunpack.c.l.b16 %v261
      %v300 = vunpack.c.l.b16 %v262
      %v301 = vunpack.c.l.b16 %v263
      %v302 = vunpack.c.l.b16 %v264
      %v303 = vunpack.c.l.b16 %v265
      %v304 = vunpack.c.l.b16 %v266
      %v305 = vunpack.c.l.b16 %v267
      %v306 = vunpack.c.l.b16 %v268
      %v307 = vunpack.c.l.b16 %v269
      %v308 = vunpack.c.l.b16 %v270
      %v309 = vunpack.c.l.b16 %v271
      %v310 = vunpack.c.l.b16 %v272
      %v311 = vunpack.c.l.b16 %v273
      %v312 = vunpack.c.l.b16 %v274
      %v313 = vunpack.c.l.b16 %v275
      %v314 = vunpack.c.l.b16 %v276
      %v315 = vpack.c.b16 %v300, %v299
      %v316 = vpack.c.b16 %v302, %v301
      %v317 = vpack.c.b16 %v304, %v303
      %v318 = vpack.c.b16 %v306, %v305
      %v319 = vpack.c.b16 %v308, %v307
      %v320 = vpack.c.b16 %v310, %v309
      %v321 = vpack.c.b16 %v312, %v311
      %v322 = vpack.c.b16 %v314, %v313
      %331 = vmatprep.subr.bf16.mxu0 0
      %332 = vmatpush1.bf16.msra.mxu0 %v322
      %333 = vmatprep.subr.bf16.mxu0 0
      %334 = vmatpush1.bf16.msra.mxu0 %v321
      %335 = vmatprep.subr.bf16.mxu0 0
      %336 = vmatpush1.bf16.msra.mxu0 %v320
      %337 = vmatprep.subr.bf16.mxu0 0
      %338 = vmatpush1.bf16.msra.mxu0 %v319
      %339 = vmatprep.subr.bf16.mxu0 0
      %340 = vmatpush1.bf16.msra.mxu0 %v318
      %341 = vmatprep.subr.bf16.mxu0 0
      %342 = vmatpush1.bf16.msra.mxu0 %v317
      %343 = vmatprep.subr.bf16.mxu0 0
      %344 = vmatpush1.bf16.msra.mxu0 %v316
      %345 = vmatprep.subr.bf16.mxu0 0
      %346 = vmatpush1.bf16.msra.mxu0 %v315
      %347 = vmatprep.subr.bf16.mxu0 0
      %348 = vmatpush2.bf16.msra.mxu0 0
      %349 = vmatprep.subr.bf16.mxu0 0
      %350 = vmatpush2.bf16.msra.mxu0 0
      %351 = vmatprep.subr.bf16.mxu0 0
      %352 = vmatpush2.bf16.msra.mxu0 0
      %353 = vmatprep.subr.bf16.mxu0 0
      %354 = vmatpush2.bf16.msra.mxu0 0
      %355 = vmatprep.subr.bf16.mxu0 0
      %356 = vmatpush2.bf16.msra.mxu0 0
      %357 = vmatprep.subr.bf16.mxu0 0
      %358 = vmatpush2.bf16.msra.mxu0 0
      %359 = vmatprep.subr.bf16.mxu0 0
      %360 = vmatpush2.bf16.msra.mxu0 0
      %361 = vmatprep.subr.bf16.mxu0 0
      %362 = vmatpush2.bf16.msra.mxu0 0
      %363 = vmatprep.mubr.bf16.mxu0 0
      %364 = vmatmul.mubr.bf16.gmra.mxu0 %v281
      %v365 = vpop.f32.mrf.mxu0
      %v366 = vadd.f32 0.0, %v365
      %v367 = vpop.f32.mrf.mxu0
      %v368 = vpop.f32.mrf.mxu0
      %v369 = vadd.f32 0.0, %v368
      %v370 = vpop.f32.mrf.mxu0
      %371 = vdwg.mxu0
      %v372 = vadd.f32 %v257, %v366
      %v373 = vadd.f32 %v258, %v369
      %374 = vst [vmem:[#allocation2] sm:$0xff] %v372
      %375 = vst [vmem:[#allocation2 + $0x8] sm:$0xff] %v373
      %v376 = vld [vmem:[#allocation2] sm:$0xff]
      %v377 = vld [vmem:[#allocation2 + $0x8] sm:$0xff]
      %v378 = vld [vmem:[%s233 + $0x10] sm:$0xf]
      %v379 = vld [vmem:[%s233 + $0x14] sm:$0xf]
      %s380 = scalar_lea.vmem %s237, 64
      %v381 = vld [vmem:[%s380] sm:$0xf]
      %v382 = vld [vmem:[%s380 + $0x4] sm:$0xf]
      %v383 = vld [vmem:[%s380 + $0x8] sm:$0xf]
      %v384 = vld [vmem:[%s380 + $0xc] sm:$0xf]
      %v385 = vld [vmem:[%s380 + $0x10] sm:$0xf]
      %v386 = vld [vmem:[%s380 + $0x14] sm:$0xf]
      %v387 = vld [vmem:[%s380 + $0x18] sm:$0xf]
      %v388 = vld [vmem:[%s380 + $0x1c] sm:$0xf]
      %v389 = vld [vmem:[%s380 + $0x20] sm:$0xf]
      %v390 = vld [vmem:[%s380 + $0x24] sm:$0xf]
      %v391 = vld [vmem:[%s380 + $0x28] sm:$0xf]
      %v392 = vld [vmem:[%s380 + $0x2c] sm:$0xf]
      %v393 = vld [vmem:[%s380 + $0x30] sm:$0xf]
      %v394 = vld [vmem:[%s380 + $0x34] sm:$0xf]
      %v395 = vld [vmem:[%s380 + $0x38] sm:$0xf]
      %v396 = vld [vmem:[%s380 + $0x3c] sm:$0xf]
      %v399 = vunpack.c.l.b16 %v378
      %v400 = vunpack.c.l.b16 %v379
      %v401 = vpack.c.b16 %v400, %v399
      %v419 = vunpack.c.l.b16 %v381
      %v420 = vunpack.c.l.b16 %v382
      %v421 = vunpack.c.l.b16 %v383
      %v422 = vunpack.c.l.b16 %v384
      %v423 = vunpack.c.l.b16 %v385
      %v424 = vunpack.c.l.b16 %v386
      %v425 = vunpack.c.l.b16 %v387
      %v426 = vunpack.c.l.b16 %v388
      %v427 = vunpack.c.l.b16 %v389
      %v428 = vunpack.c.l.b16 %v390
      %v429 = vunpack.c.l.b16 %v391
      %v430 = vunpack.c.l.b16 %v392
      %v431 = vunpack.c.l.b16 %v393
      %v432 = vunpack.c.l.b16 %v394
      %v433 = vunpack.c.l.b16 %v395
      %v434 = vunpack.c.l.b16 %v396
      %v435 = vpack.c.b16 %v420, %v419
      %v436 = vpack.c.b16 %v422, %v421
      %v437 = vpack.c.b16 %v424, %v423
      %v438 = vpack.c.b16 %v426, %v425
      %v439 = vpack.c.b16 %v428, %v427
      %v440 = vpack.c.b16 %v430, %v429
      %v441 = vpack.c.b16 %v432, %v431
      %v442 = vpack.c.b16 %v434, %v433
      %451 = vmatprep.subr.bf16.mxu0 0
      %452 = vmatpush1.bf16.msra.mxu0 %v442
      %453 = vmatprep.subr.bf16.mxu0 0
      %454 = vmatpush1.bf16.msra.mxu0 %v441
      %455 = vmatprep.subr.bf16.mxu0 0
      %456 = vmatpush1.bf16.msra.mxu0 %v440
      %457 = vmatprep.subr.bf16.mxu0 0
      %458 = vmatpush1.bf16.msra.mxu0 %v439
      %459 = vmatprep.subr.bf16.mxu0 0
      %460 = vmatpush1.bf16.msra.mxu0 %v438
      %461 = vmatprep.subr.bf16.mxu0 0
      %462 = vmatpush1.bf16.msra.mxu0 %v437
      %463 = vmatprep.subr.bf16.mxu0 0
      %464 = vmatpush1.bf16.msra.mxu0 %v436
      %465 = vmatprep.subr.bf16.mxu0 0
      %466 = vmatpush1.bf16.msra.mxu0 %v435
      %467 = vmatprep.subr.bf16.mxu0 0
      %468 = vmatpush2.bf16.msra.mxu0 0
      %469 = vmatprep.subr.bf16.mxu0 0
      %470 = vmatpush2.bf16.msra.mxu0 0
      %471 = vmatprep.subr.bf16.mxu0 0
      %472 = vmatpush2.bf16.msra.mxu0 0
      %473 = vmatprep.subr.bf16.mxu0 0
      %474 = vmatpush2.bf16.msra.mxu0 0
      %475 = vmatprep.subr.bf16.mxu0 0
      %476 = vmatpush2.bf16.msra.mxu0 0
      %477 = vmatprep.subr.bf16.mxu0 0
      %478 = vmatpush2.bf16.msra.mxu0 0
      %479 = vmatprep.subr.bf16.mxu0 0
      %480 = vmatpush2.bf16.msra.mxu0 0
      %481 = vmatprep.subr.bf16.mxu0 0
      %482 = vmatpush2.bf16.msra.mxu0 0
      %483 = vmatprep.mubr.bf16.mxu0 0
      %484 = vmatmul.mubr.bf16.gmra.mxu0 %v401
      %v485 = vpop.f32.mrf.mxu0
      %v486 = vadd.f32 0.0, %v485
      %v487 = vpop.f32.mrf.mxu0
      %v488 = vpop.f32.mrf.mxu0
      %v489 = vadd.f32 0.0, %v488
      %v490 = vpop.f32.mrf.mxu0
      %491 = vdwg.mxu0
      %v492 = vadd.f32 %v376, %v486
      %v493 = vadd.f32 %v377, %v489
      %494 = vst [vmem:[#allocation2] sm:$0xff] %v492
      %495 = vst [vmem:[#allocation2 + $0x8] sm:$0xff] %v493
      %v496 = vld [vmem:[#allocation2] sm:$0xff]
      %v497 = vld [vmem:[#allocation2 + $0x8] sm:$0xff]
      %v498 = vld [vmem:[%s233] sm:$0xf]
      %v499 = vld [vmem:[%s233 + $0x4] sm:$0xf]
      %v500 = vld [vmem:[%s233 + $0x8] sm:$0x1]
      %s501 = scalar_lea.vmem %s237, 128
      %v502 = vld [vmem:[%s501] sm:$0xf]
      %v503 = vld [vmem:[%s501 + $0x4] sm:$0xf]
      %v504 = vld [vmem:[%s501 + $0x8] sm:$0xf]
      %v505 = vld [vmem:[%s501 + $0xc] sm:$0xf]
      %v506 = vld [vmem:[%s501 + $0x10] sm:$0xf]
      %v507 = vld [vmem:[%s501 + $0x14] sm:$0xf]
      %v508 = vld [vmem:[%s501 + $0x18] sm:$0xf]
      %v509 = vld [vmem:[%s501 + $0x1c] sm:$0xf]
      %v510 = vld [vmem:[%s501 + $0x20] sm:$0xf]
      %v511 = vld [vmem:[%s501 + $0x24] sm:$0xf]
      %v512 = vld [vmem:[%s501 + $0x28] sm:$0xf]
      %v513 = vld [vmem:[%s501 + $0x2c] sm:$0xf]
      %v514 = vld [vmem:[%s501 + $0x30] sm:$0xf]
      %v515 = vld [vmem:[%s501 + $0x34] sm:$0xf]
      %v516 = vld [vmem:[%s501 + $0x38] sm:$0xf]
      %v517 = vld [vmem:[%s501 + $0x3c] sm:$0xf]
      %v521 = vunpack.c.l.b16 %v498
      %v522 = vunpack.c.l.b16 %v499
      %v523 = vunpack.c.l.b16 %v500
      %v524 = vpack.c.b16 %v522, %v521
      %v525 = vpack.c.b16 %v523, %v523
      %vm526 = vsmask.f32 7424
      %v528 = vshrl.u32 %v524, 16
      %v530 = vshll.u32 %v524, 16
      %v532 = vrot.slane %v530, 1
      %v533 = vor.u32 %v528, %v532
      %v535 = vshll.u32 %v525, 16
      %v537 = vrot.slane %v535, 1
      %v538 = vsel %vm526, %v533, %v537
      %v556 = vunpack.c.l.b16 %v502
      %v557 = vunpack.c.l.b16 %v503
      %v558 = vunpack.c.l.b16 %v504
      %v559 = vunpack.c.l.b16 %v505
      %v560 = vunpack.c.l.b16 %v506
      %v561 = vunpack.c.l.b16 %v507
      %v562 = vunpack.c.l.b16 %v508
      %v563 = vunpack.c.l.b16 %v509
      %v564 = vunpack.c.l.b16 %v510
      %v565 = vunpack.c.l.b16 %v511
      %v566 = vunpack.c.l.b16 %v512
      %v567 = vunpack.c.l.b16 %v513
      %v568 = vunpack.c.l.b16 %v514
      %v569 = vunpack.c.l.b16 %v515
      %v570 = vunpack.c.l.b16 %v516
      %v571 = vunpack.c.l.b16 %v517
      %v572 = vpack.c.b16 %v557, %v556
      %v573 = vpack.c.b16 %v559, %v558
      %v574 = vpack.c.b16 %v561, %v560
      %v575 = vpack.c.b16 %v563, %v562
      %v576 = vpack.c.b16 %v565, %v564
      %v577 = vpack.c.b16 %v567, %v566
      %v578 = vpack.c.b16 %v569, %v568
      %v579 = vpack.c.b16 %v571, %v570
      %588 = vmatprep.subr.bf16.mxu0 0
      %589 = vmatpush1.bf16.msra.mxu0 %v579
      %590 = vmatprep.subr.bf16.mxu0 0
      %591 = vmatpush1.bf16.msra.mxu0 %v578
      %592 = vmatprep.subr.bf16.mxu0 0
      %593 = vmatpush1.bf16.msra.mxu0 %v577
      %594 = vmatprep.subr.bf16.mxu0 0
      %595 = vmatpush1.bf16.msra.mxu0 %v576
      %596 = vmatprep.subr.bf16.mxu0 0
      %597 = vmatpush1.bf16.msra.mxu0 %v575
      %598 = vmatprep.subr.bf16.mxu0 0
      %599 = vmatpush1.bf16.msra.mxu0 %v574
      %600 = vmatprep.subr.bf16.mxu0 0
      %601 = vmatpush1.bf16.msra.mxu0 %v573
      %602 = vmatprep.subr.bf16.mxu0 0
      %603 = vmatpush1.bf16.msra.mxu0 %v572
      %604 = vmatprep.subr.bf16.mxu0 0
      %605 = vmatpush2.bf16.msra.mxu0 0
      %606 = vmatprep.subr.bf16.mxu0 0
      %607 = vmatpush2.bf16.msra.mxu0 0
      %608 = vmatprep.subr.bf16.mxu0 0
      %609 = vmatpush2.bf16.msra.mxu0 0
      %610 = vmatprep.subr.bf16.mxu0 0
      %611 = vmatpush2.bf16.msra.mxu0 0
      %612 = vmatprep.subr.bf16.mxu0 0
      %613 = vmatpush2.bf16.msra.mxu0 0
      %614 = vmatprep.subr.bf16.mxu0 0
      %615 = vmatpush2.bf16.msra.mxu0 0
      %616 = vmatprep.subr.bf16.mxu0 0
      %617 = vmatpush2.bf16.msra.mxu0 0
      %618 = vmatprep.subr.bf16.mxu0 0
      %619 = vmatpush2.bf16.msra.mxu0 0
      %620 = vmatprep.mubr.bf16.mxu0 0
      %621 = vmatmul.mubr.bf16.gmra.mxu0 %v538
      %v622 = vpop.f32.mrf.mxu0
      %v623 = vadd.f32 0.0, %v622
      %v624 = vpop.f32.mrf.mxu0
      %v625 = vpop.f32.mrf.mxu0
      %v626 = vadd.f32 0.0, %v625
      %v627 = vpop.f32.mrf.mxu0
      %628 = vdwg.mxu0
      %v629 = vadd.f32 %v496, %v623
      %v630 = vadd.f32 %v497, %v626
      %631 = vst [vmem:[#allocation2] sm:$0xff] %v629
      %632 = vst [vmem:[#allocation2 + $0x8] sm:$0xff] %v630
      %v633 = vld [vmem:[#allocation2] sm:$0xff]
      %v634 = vld [vmem:[#allocation2 + $0x8] sm:$0xff]
      %v635 = vld [vmem:[%s233 + $0x20] sm:$0xf]
      %v636 = vld [vmem:[%s233 + $0x24] sm:$0xf]
      %s637 = scalar_lea.vmem %s237, 192
      %v638 = vld [vmem:[%s637] sm:$0xf]
      %v639 = vld [vmem:[%s637 + $0x4] sm:$0xf]
      %v640 = vld [vmem:[%s637 + $0x8] sm:$0xf]
      %v641 = vld [vmem:[%s637 + $0xc] sm:$0xf]
      %v642 = vld [vmem:[%s637 + $0x10] sm:$0xf]
      %v643 = vld [vmem:[%s637 + $0x14] sm:$0xf]
      %v644 = vld [vmem:[%s637 + $0x18] sm:$0xf]
      %v645 = vld [vmem:[%s637 + $0x1c] sm:$0xf]
      %v646 = vld [vmem:[%s637 + $0x20] sm:$0xf]
      %v647 = vld [vmem:[%s637 + $0x24] sm:$0xf]
      %v648 = vld [vmem:[%s637 + $0x28] sm:$0xf]
      %v649 = vld [vmem:[%s637 + $0x2c] sm:$0xf]
      %v650 = vld [vmem:[%s637 + $0x30] sm:$0xf]
      %v651 = vld [vmem:[%s637 + $0x34] sm:$0xf]
      %v652 = vld [vmem:[%s637 + $0x38] sm:$0xf]
      %v653 = vld [vmem:[%s637 + $0x3c] sm:$0xf]
      %v656 = vunpack.c.l.b16 %v635
      %v657 = vunpack.c.l.b16 %v636
      %v658 = vpack.c.b16 %v657, %v656
      %v676 = vunpack.c.l.b16 %v638
      %v677 = vunpack.c.l.b16 %v639
      %v678 = vunpack.c.l.b16 %v640
      %v679 = vunpack.c.l.b16 %v641
      %v680 = vunpack.c.l.b16 %v642
      %v681 = vunpack.c.l.b16 %v643
      %v682 = vunpack.c.l.b16 %v644
      %v683 = vunpack.c.l.b16 %v645
      %v684 = vunpack.c.l.b16 %v646
      %v685 = vunpack.c.l.b16 %v647
      %v686 = vunpack.c.l.b16 %v648
      %v687 = vunpack.c.l.b16 %v649
      %v688 = vunpack.c.l.b16 %v650
      %v689 = vunpack.c.l.b16 %v651
      %v690 = vunpack.c.l.b16 %v652
      %v691 = vunpack.c.l.b16 %v653
      %v692 = vpack.c.b16 %v677, %v676
      %v693 = vpack.c.b16 %v679, %v678
      %v694 = vpack.c.b16 %v681, %v680
      %v695 = vpack.c.b16 %v683, %v682
      %v696 = vpack.c.b16 %v685, %v684
      %v697 = vpack.c.b16 %v687, %v686
      %v698 = vpack.c.b16 %v689, %v688
      %v699 = vpack.c.b16 %v691, %v690
      %708 = vmatprep.subr.bf16.mxu0 0
      %709 = vmatpush1.bf16.msra.mxu0 %v699
      %710 = vmatprep.subr.bf16.mxu0 0
      %711 = vmatpush1.bf16.msra.mxu0 %v698
      %712 = vmatprep.subr.bf16.mxu0 0
      %713 = vmatpush1.bf16.msra.mxu0 %v697
      %714 = vmatprep.subr.bf16.mxu0 0
      %715 = vmatpush1.bf16.msra.mxu0 %v696
      %716 = vmatprep.subr.bf16.mxu0 0
      %717 = vmatpush1.bf16.msra.mxu0 %v695
      %718 = vmatprep.subr.bf16.mxu0 0
      %719 = vmatpush1.bf16.msra.mxu0 %v694
      %720 = vmatprep.subr.bf16.mxu0 0
      %721 = vmatpush1.bf16.msra.mxu0 %v693
      %722 = vmatprep.subr.bf16.mxu0 0
      %723 = vmatpush1.bf16.msra.mxu0 %v692
      %724 = vmatprep.subr.bf16.mxu0 0
      %725 = vmatpush2.bf16.msra.mxu0 0
      %726 = vmatprep.subr.bf16.mxu0 0
      %727 = vmatpush2.bf16.msra.mxu0 0
      %728 = vmatprep.subr.bf16.mxu0 0
      %729 = vmatpush2.bf16.msra.mxu0 0
      %730 = vmatprep.subr.bf16.mxu0 0
      %731 = vmatpush2.bf16.msra.mxu0 0
      %732 = vmatprep.subr.bf16.mxu0 0
      %733 = vmatpush2.bf16.msra.mxu0 0
      %734 = vmatprep.subr.bf16.mxu0 0
      %735 = vmatpush2.bf16.msra.mxu0 0
      %736 = vmatprep.subr.bf16.mxu0 0
      %737 = vmatpush2.bf16.msra.mxu0 0
      %738 = vmatprep.subr.bf16.mxu0 0
      %739 = vmatpush2.bf16.msra.mxu0 0
      %740 = vmatprep.mubr.bf16.mxu0 0
      %741 = vmatmul.mubr.bf16.gmra.mxu0 %v658
      %v742 = vpop.f32.mrf.mxu0
      %v743 = vadd.f32 0.0, %v742
      %v744 = vpop.f32.mrf.mxu0
      %v745 = vpop.f32.mrf.mxu0
      %v746 = vadd.f32 0.0, %v745
      %v747 = vpop.f32.mrf.mxu0
      %748 = vdwg.mxu0
      %v749 = vadd.f32 %v633, %v743
      %v750 = vadd.f32 %v634, %v746
      %751 = vst [vmem:[#allocation2] sm:$0xff] %v749
      %752 = vst [vmem:[#allocation2 + $0x8] sm:$0xff] %v750
      %v753 = vld [vmem:[#allocation2] sm:$0xff]
      %v754 = vld [vmem:[#allocation2 + $0x8] sm:$0xff]
      %v755 = vld [vmem:[%s233 + $0x30] sm:$0xf]
      %v756 = vld [vmem:[%s233 + $0x34] sm:$0xf]
      %s757 = scalar_lea.vmem %s237, 256
      %v758 = vld [vmem:[%s757] sm:$0xf]
      %v759 = vld [vmem:[%s757 + $0x4] sm:$0xf]
      %v760 = vld [vmem:[%s757 + $0x8] sm:$0xf]
      %v761 = vld [vmem:[%s757 + $0xc] sm:$0xf]
      %v762 = vld [vmem:[%s757 + $0x10] sm:$0xf]
      %v763 = vld [vmem:[%s757 + $0x14] sm:$0xf]
      %v764 = vld [vmem:[%s757 + $0x18] sm:$0xf]
      %v765 = vld [vmem:[%s757 + $0x1c] sm:$0xf]
      %v766 = vld [vmem:[%s757 + $0x20] sm:$0xf]
      %v767 = vld [vmem:[%s757 + $0x24] sm:$0xf]
      %v768 = vld [vmem:[%s757 + $0x28] sm:$0xf]
      %v769 = vld [vmem:[%s757 + $0x2c] sm:$0xf]
      %v770 = vld [vmem:[%s757 + $0x30] sm:$0xf]
      %v771 = vld [vmem:[%s757 + $0x34] sm:$0xf]
      %v772 = vld [vmem:[%s757 + $0x38] sm:$0xf]
      %v773 = vld [vmem:[%s757 + $0x3c] sm:$0xf]
      %v776 = vunpack.c.l.b16 %v755
      %v777 = vunpack.c.l.b16 %v756
      %v778 = vpack.c.b16 %v777, %v776
      %v796 = vunpack.c.l.b16 %v758
      %v797 = vunpack.c.l.b16 %v759
      %v798 = vunpack.c.l.b16 %v760
      %v799 = vunpack.c.l.b16 %v761
      %v800 = vunpack.c.l.b16 %v762
      %v801 = vunpack.c.l.b16 %v763
      %v802 = vunpack.c.l.b16 %v764
      %v803 = vunpack.c.l.b16 %v765
      %v804 = vunpack.c.l.b16 %v766
      %v805 = vunpack.c.l.b16 %v767
      %v806 = vunpack.c.l.b16 %v768
      %v807 = vunpack.c.l.b16 %v769
      %v808 = vunpack.c.l.b16 %v770
      %v809 = vunpack.c.l.b16 %v771
      %v810 = vunpack.c.l.b16 %v772
      %v811 = vunpack.c.l.b16 %v773
      %v812 = vpack.c.b16 %v797, %v796
      %v813 = vpack.c.b16 %v799, %v798
      %v814 = vpack.c.b16 %v801, %v800
      %v815 = vpack.c.b16 %v803, %v802
      %v816 = vpack.c.b16 %v805, %v804
      %v817 = vpack.c.b16 %v807, %v806
      %v818 = vpack.c.b16 %v809, %v808
      %v819 = vpack.c.b16 %v811, %v810
      %828 = vmatprep.subr.bf16.mxu0 0
      %829 = vmatpush1.bf16.msra.mxu0 %v819
      %830 = vmatprep.subr.bf16.mxu0 0
      %831 = vmatpush1.bf16.msra.mxu0 %v818
      %832 = vmatprep.subr.bf16.mxu0 0
      %833 = vmatpush1.bf16.msra.mxu0 %v817
      %834 = vmatprep.subr.bf16.mxu0 0
      %835 = vmatpush1.bf16.msra.mxu0 %v816
      %836 = vmatprep.subr.bf16.mxu0 0
      %837 = vmatpush1.bf16.msra.mxu0 %v815
      %838 = vmatprep.subr.bf16.mxu0 0
      %839 = vmatpush1.bf16.msra.mxu0 %v814
      %840 = vmatprep.subr.bf16.mxu0 0
      %841 = vmatpush1.bf16.msra.mxu0 %v813
      %842 = vmatprep.subr.bf16.mxu0 0
      %843 = vmatpush1.bf16.msra.mxu0 %v812
      %844 = vmatprep.subr.bf16.mxu0 0
      %845 = vmatpush2.bf16.msra.mxu0 0
      %846 = vmatprep.subr.bf16.mxu0 0
      %847 = vmatpush2.bf16.msra.mxu0 0
      %848 = vmatprep.subr.bf16.mxu0 0
      %849 = vmatpush2.bf16.msra.mxu0 0
      %850 = vmatprep.subr.bf16.mxu0 0
      %851 = vmatpush2.bf16.msra.mxu0 0
      %852 = vmatprep.subr.bf16.mxu0 0
      %853 = vmatpush2.bf16.msra.mxu0 0
      %854 = vmatprep.subr.bf16.mxu0 0
      %855 = vmatpush2.bf16.msra.mxu0 0
      %856 = vmatprep.subr.bf16.mxu0 0
      %857 = vmatpush2.bf16.msra.mxu0 0
      %858 = vmatprep.subr.bf16.mxu0 0
      %859 = vmatpush2.bf16.msra.mxu0 0
      %860 = vmatprep.mubr.bf16.mxu0 0
      %861 = vmatmul.mubr.bf16.gmra.mxu0 %v778
      %v862 = vpop.f32.mrf.mxu0
      %v863 = vadd.f32 0.0, %v862
      %v864 = vpop.f32.mrf.mxu0
      %v865 = vpop.f32.mrf.mxu0
      %v866 = vadd.f32 0.0, %v865
      %v867 = vpop.f32.mrf.mxu0
      %868 = vdwg.mxu0
      %v869 = vadd.f32 %v753, %v863
      %v870 = vadd.f32 %v754, %v866
      %871 = vst [vmem:[#allocation2] sm:$0xff] %v869
      %872 = vst [vmem:[#allocation2 + $0x8] sm:$0xff] %v870
      %v873 = vld [vmem:[#allocation2] sm:$0xff]
      %v874 = vld [vmem:[#allocation2 + $0x8] sm:$0xff]
      %v875 = vld [vmem:[%s233 + $0x20] sm:$0xf]
      %v876 = vld [vmem:[%s233 + $0x24] sm:$0xf]
      %v877 = vld [vmem:[%s233 + $0x28] sm:$0x1]
      %s878 = scalar_lea.vmem %s237, 320
      %v879 = vld [vmem:[%s878] sm:$0xf]
      %v880 = vld [vmem:[%s878 + $0x4] sm:$0xf]
      %v881 = vld [vmem:[%s878 + $0x8] sm:$0xf]
      %v882 = vld [vmem:[%s878 + $0xc] sm:$0xf]
      %v883 = vld [vmem:[%s878 + $0x10] sm:$0xf]
      %v884 = vld [vmem:[%s878 + $0x14] sm:$0xf]
      %v885 = vld [vmem:[%s878 + $0x18] sm:$0xf]
      %v886 = vld [vmem:[%s878 + $0x1c] sm:$0xf]
      %v887 = vld [vmem:[%s878 + $0x20] sm:$0xf]
      %v888 = vld [vmem:[%s878 + $0x24] sm:$0xf]
      %v889 = vld [vmem:[%s878 + $0x28] sm:$0xf]
      %v890 = vld [vmem:[%s878 + $0x2c] sm:$0xf]
      %v891 = vld [vmem:[%s878 + $0x30] sm:$0xf]
      %v892 = vld [vmem:[%s878 + $0x34] sm:$0xf]
      %v893 = vld [vmem:[%s878 + $0x38] sm:$0xf]
      %v894 = vld [vmem:[%s878 + $0x3c] sm:$0xf]
      %v898 = vunpack.c.l.b16 %v875
      %v899 = vunpack.c.l.b16 %v876
      %v900 = vunpack.c.l.b16 %v877
      %v901 = vpack.c.b16 %v899, %v898
      %v902 = vpack.c.b16 %v900, %v900
      %v904 = vshrl.u32 %v901, 16
      %v906 = vshll.u32 %v901, 16
      %v908 = vrot.slane %v906, 1
      %v909 = vor.u32 %v904, %v908
      %v911 = vshll.u32 %v902, 16
      %v913 = vrot.slane %v911, 1
      %v914 = vsel %vm526, %v909, %v913
      %v932 = vunpack.c.l.b16 %v879
      %v933 = vunpack.c.l.b16 %v880
      %v934 = vunpack.c.l.b16 %v881
      %v935 = vunpack.c.l.b16 %v882
      %v936 = vunpack.c.l.b16 %v883
      %v937 = vunpack.c.l.b16 %v884
      %v938 = vunpack.c.l.b16 %v885
      %v939 = vunpack.c.l.b16 %v886
      %v940 = vunpack.c.l.b16 %v887
      %v941 = vunpack.c.l.b16 %v888
      %v942 = vunpack.c.l.b16 %v889
      %v943 = vunpack.c.l.b16 %v890
      %v944 = vunpack.c.l.b16 %v891
      %v945 = vunpack.c.l.b16 %v892
      %v946 = vunpack.c.l.b16 %v893
      %v947 = vunpack.c.l.b16 %v894
      %v948 = vpack.c.b16 %v933, %v932
      %v949 = vpack.c.b16 %v935, %v934
      %v950 = vpack.c.b16 %v937, %v936
      %v951 = vpack.c.b16 %v939, %v938
      %v952 = vpack.c.b16 %v941, %v940
      %v953 = vpack.c.b16 %v943, %v942
      %v954 = vpack.c.b16 %v945, %v944
      %v955 = vpack.c.b16 %v947, %v946
      %964 = vmatprep.subr.bf16.mxu0 0
      %965 = vmatpush1.bf16.msra.mxu0 %v955
      %966 = vmatprep.subr.bf16.mxu0 0
      %967 = vmatpush1.bf16.msra.mxu0 %v954
      %968 = vmatprep.subr.bf16.mxu0 0
      %969 = vmatpush1.bf16.msra.mxu0 %v953
      %970 = vmatprep.subr.bf16.mxu0 0
      %971 = vmatpush1.bf16.msra.mxu0 %v952
      %972 = vmatprep.subr.bf16.mxu0 0
      %973 = vmatpush1.bf16.msra.mxu0 %v951
      %974 = vmatprep.subr.bf16.mxu0 0
      %975 = vmatpush1.bf16.msra.mxu0 %v950
      %976 = vmatprep.subr.bf16.mxu0 0
      %977 = vmatpush1.bf16.msra.mxu0 %v949
      %978 = vmatprep.subr.bf16.mxu0 0
      %979 = vmatpush1.bf16.msra.mxu0 %v948
      %980 = vmatprep.subr.bf16.mxu0 0
      %981 = vmatpush2.bf16.msra.mxu0 0
      %982 = vmatprep.subr.bf16.mxu0 0
      %983 = vmatpush2.bf16.msra.mxu0 0
      %984 = vmatprep.subr.bf16.mxu0 0
      %985 = vmatpush2.bf16.msra.mxu0 0
      %986 = vmatprep.subr.bf16.mxu0 0
      %987 = vmatpush2.bf16.msra.mxu0 0
      %988 = vmatprep.subr.bf16.mxu0 0
      %989 = vmatpush2.bf16.msra.mxu0 0
      %990 = vmatprep.subr.bf16.mxu0 0
      %991 = vmatpush2.bf16.msra.mxu0 0
      %992 = vmatprep.subr.bf16.mxu0 0
      %993 = vmatpush2.bf16.msra.mxu0 0
      %994 = vmatprep.subr.bf16.mxu0 0
      %995 = vmatpush2.bf16.msra.mxu0 0
      %996 = vmatprep.mubr.bf16.mxu0 0
      %997 = vmatmul.mubr.bf16.gmra.mxu0 %v914
      %v998 = vpop.f32.mrf.mxu0
      %v999 = vadd.f32 0.0, %v998
      %v1000 = vpop.f32.mrf.mxu0
      %v1001 = vpop.f32.mrf.mxu0
      %v1002 = vadd.f32 0.0, %v1001
      %v1003 = vpop.f32.mrf.mxu0
      %1004 = vdwg.mxu0
      %v1005 = vadd.f32 %v873, %v999
      %v1006 = vadd.f32 %v874, %v1002
      %1007 = vst [vmem:[#allocation2] sm:$0xff] %v1005
      %1008 = vst [vmem:[#allocation2 + $0x8] sm:$0xff] %v1006
      %v1009 = vld [vmem:[#allocation2] sm:$0xff]
      %v1010 = vld [vmem:[#allocation2 + $0x8] sm:$0xff]
      %v1011 = vld [vmem:[%s233] sm:$0xe]
      %v1012 = vld [vmem:[%s233 + $0x4] sm:$0xf]
      %v1013 = vld [vmem:[%s233 + $0x8] sm:$0x1]
      %s1014 = scalar_lea.vmem %s237, 384
      %v1015 = vld [vmem:[%s1014] sm:$0xf]
      %v1016 = vld [vmem:[%s1014 + $0x4] sm:$0xf]
      %v1017 = vld [vmem:[%s1014 + $0x8] sm:$0xf]
      %v1018 = vld [vmem:[%s1014 + $0xc] sm:$0xf]
      %v1019 = vld [vmem:[%s1014 + $0x10] sm:$0xf]
      %v1020 = vld [vmem:[%s1014 + $0x14] sm:$0xf]
      %v1021 = vld [vmem:[%s1014 + $0x18] sm:$0xf]
      %v1022 = vld [vmem:[%s1014 + $0x1c] sm:$0xf]
      %v1023 = vld [vmem:[%s1014 + $0x20] sm:$0xf]
      %v1024 = vld [vmem:[%s1014 + $0x24] sm:$0xf]
      %v1025 = vld [vmem:[%s1014 + $0x28] sm:$0xf]
      %v1026 = vld [vmem:[%s1014 + $0x2c] sm:$0xf]
      %v1027 = vld [vmem:[%s1014 + $0x30] sm:$0xf]
      %v1028 = vld [vmem:[%s1014 + $0x34] sm:$0xf]
      %v1029 = vld [vmem:[%s1014 + $0x38] sm:$0xf]
      %v1030 = vld [vmem:[%s1014 + $0x3c] sm:$0xf]
      %v1034 = vunpack.c.l.b16 %v1011
      %v1035 = vunpack.c.l.b16 %v1012
      %v1036 = vunpack.c.l.b16 %v1013
      %v1037 = vpack.c.b16 %v1035, %v1034
      %v1038 = vpack.c.b16 %v1036, %v1036
      %vm1039 = vcmask 1046528
      %v1040 = vrot.slane %v1037, 1
      %v1041 = vrot.slane %v1038, 1
      %v1042 = vsel %vm1039, %v1040, %v1041
      %v1060 = vunpack.c.l.b16 %v1015
      %v1061 = vunpack.c.l.b16 %v1016
      %v1062 = vunpack.c.l.b16 %v1017
      %v1063 = vunpack.c.l.b16 %v1018
      %v1064 = vunpack.c.l.b16 %v1019
      %v1065 = vunpack.c.l.b16 %v1020
      %v1066 = vunpack.c.l.b16 %v1021
      %v1067 = vunpack.c.l.b16 %v1022
      %v1068 = vunpack.c.l.b16 %v1023
      %v1069 = vunpack.c.l.b16 %v1024
      %v1070 = vunpack.c.l.b16 %v1025
      %v1071 = vunpack.c.l.b16 %v1026
      %v1072 = vunpack.c.l.b16 %v1027
      %v1073 = vunpack.c.l.b16 %v1028
      %v1074 = vunpack.c.l.b16 %v1029
      %v1075 = vunpack.c.l.b16 %v1030
      %v1076 = vpack.c.b16 %v1061, %v1060
      %v1077 = vpack.c.b16 %v1063, %v1062
      %v1078 = vpack.c.b16 %v1065, %v1064
      %v1079 = vpack.c.b16 %v1067, %v1066
      %v1080 = vpack.c.b16 %v1069, %v1068
      %v1081 = vpack.c.b16 %v1071, %v1070
      %v1082 = vpack.c.b16 %v1073, %v1072
      %v1083 = vpack.c.b16 %v1075, %v1074
      %1092 = vmatprep.subr.bf16.mxu0 0
      %1093 = vmatpush1.bf16.msra.mxu0 %v1083
      %1094 = vmatprep.subr.bf16.mxu0 0
      %1095 = vmatpush1.bf16.msra.mxu0 %v1082
      %1096 = vmatprep.subr.bf16.mxu0 0
      %1097 = vmatpush1.bf16.msra.mxu0 %v1081
      %1098 = vmatprep.subr.bf16.mxu0 0
      %1099 = vmatpush1.bf16.msra.mxu0 %v1080
      %1100 = vmatprep.subr.bf16.mxu0 0
      %1101 = vmatpush1.bf16.msra.mxu0 %v1079
      %1102 = vmatprep.subr.bf16.mxu0 0
      %1103 = vmatpush1.bf16.msra.mxu0 %v1078
      %1104 = vmatprep.subr.bf16.mxu0 0
      %1105 = vmatpush1.bf16.msra.mxu0 %v1077
      %1106 = vmatprep.subr.bf16.mxu0 0
      %1107 = vmatpush1.bf16.msra.mxu0 %v1076
      %1108 = vmatprep.subr.bf16.mxu0 0
      %1109 = vmatpush2.bf16.msra.mxu0 0
      %1110 = vmatprep.subr.bf16.mxu0 0
      %1111 = vmatpush2.bf16.msra.mxu0 0
      %1112 = vmatprep.subr.bf16.mxu0 0
      %1113 = vmatpush2.bf16.msra.mxu0 0
      %1114 = vmatprep.subr.bf16.mxu0 0
      %1115 = vmatpush2.bf16.msra.mxu0 0
      %1116 = vmatprep.subr.bf16.mxu0 0
      %1117 = vmatpush2.bf16.msra.mxu0 0
      %1118 = vmatprep.subr.bf16.mxu0 0
      %1119 = vmatpush2.bf16.msra.mxu0 0
      %1120 = vmatprep.subr.bf16.mxu0 0
      %1121 = vmatpush2.bf16.msra.mxu0 0
      %1122 = vmatprep.subr.bf16.mxu0 0
      %1123 = vmatpush2.bf16.msra.mxu0 0
      %1124 = vmatprep.mubr.bf16.mxu0 0
      %1125 = vmatmul.mubr.bf16.gmra.mxu0 %v1042
      %v1126 = vpop.f32.mrf.mxu0
      %v1127 = vadd.f32 0.0, %v1126
      %v1128 = vpop.f32.mrf.mxu0
      %v1129 = vpop.f32.mrf.mxu0
      %v1130 = vadd.f32 0.0, %v1129
      %v1131 = vpop.f32.mrf.mxu0
      %1132 = vdwg.mxu0
      %v1133 = vadd.f32 %v1009, %v1127
      %v1134 = vadd.f32 %v1010, %v1130
      %1135 = vst [vmem:[#allocation2] sm:$0xff] %v1133
      %1136 = vst [vmem:[#allocation2 + $0x8] sm:$0xff] %v1134
      %v1137 = vld [vmem:[#allocation2] sm:$0xff]
      %v1138 = vld [vmem:[#allocation2 + $0x8] sm:$0xff]
      %v1139 = vld [vmem:[%s233 + $0x10] sm:$0xe]
      %v1140 = vld [vmem:[%s233 + $0x14] sm:$0xf]
      %v1141 = vld [vmem:[%s233 + $0x18] sm:$0x1]
      %s1142 = scalar_lea.vmem %s237, 448
      %v1143 = vld [vmem:[%s1142] sm:$0xf]
      %v1144 = vld [vmem:[%s1142 + $0x4] sm:$0xf]
      %v1145 = vld [vmem:[%s1142 + $0x8] sm:$0xf]
      %v1146 = vld [vmem:[%s1142 + $0xc] sm:$0xf]
      %v1147 = vld [vmem:[%s1142 + $0x10] sm:$0xf]
      %v1148 = vld [vmem:[%s1142 + $0x14] sm:$0xf]
      %v1149 = vld [vmem:[%s1142 + $0x18] sm:$0xf]
      %v1150 = vld [vmem:[%s1142 + $0x1c] sm:$0xf]
      %v1151 = vld [vmem:[%s1142 + $0x20] sm:$0xf]
      %v1152 = vld [vmem:[%s1142 + $0x24] sm:$0xf]
      %v1153 = vld [vmem:[%s1142 + $0x28] sm:$0xf]
      %v1154 = vld [vmem:[%s1142 + $0x2c] sm:$0xf]
      %v1155 = vld [vmem:[%s1142 + $0x30] sm:$0xf]
      %v1156 = vld [vmem:[%s1142 + $0x34] sm:$0xf]
      %v1157 = vld [vmem:[%s1142 + $0x38] sm:$0xf]
      %v1158 = vld [vmem:[%s1142 + $0x3c] sm:$0xf]
      %v1162 = vunpack.c.l.b16 %v1139
      %v1163 = vunpack.c.l.b16 %v1140
      %v1164 = vunpack.c.l.b16 %v1141
      %v1165 = vpack.c.b16 %v1163, %v1162
      %v1166 = vpack.c.b16 %v1164, %v1164
      %v1167 = vrot.slane %v1165, 1
      %v1168 = vrot.slane %v1166, 1
      %v1169 = vsel %vm1039, %v1167, %v1168
      %v1187 = vunpack.c.l.b16 %v1143
      %v1188 = vunpack.c.l.b16 %v1144
      %v1189 = vunpack.c.l.b16 %v1145
      %v1190 = vunpack.c.l.b16 %v1146
      %v1191 = vunpack.c.l.b16 %v1147
      %v1192 = vunpack.c.l.b16 %v1148
      %v1193 = vunpack.c.l.b16 %v1149
      %v1194 = vunpack.c.l.b16 %v1150
      %v1195 = vunpack.c.l.b16 %v1151
      %v1196 = vunpack.c.l.b16 %v1152
      %v1197 = vunpack.c.l.b16 %v1153
      %v1198 = vunpack.c.l.b16 %v1154
      %v1199 = vunpack.c.l.b16 %v1155
      %v1200 = vunpack.c.l.b16 %v1156
      %v1201 = vunpack.c.l.b16 %v1157
      %v1202 = vunpack.c.l.b16 %v1158
      %v1203 = vpack.c.b16 %v1188, %v1187
      %v1204 = vpack.c.b16 %v1190, %v1189
      %v1205 = vpack.c.b16 %v1192, %v1191
      %v1206 = vpack.c.b16 %v1194, %v1193
      %v1207 = vpack.c.b16 %v1196, %v1195
      %v1208 = vpack.c.b16 %v1198, %v1197
      %v1209 = vpack.c.b16 %v1200, %v1199
      %v1210 = vpack.c.b16 %v1202, %v1201
      %1219 = vmatprep.subr.bf16.mxu0 0
      %1220 = vmatpush1.bf16.msra.mxu0 %v1210
      %1221 = vmatprep.subr.bf16.mxu0 0
      %1222 = vmatpush1.bf16.msra.mxu0 %v1209
      %1223 = vmatprep.subr.bf16.mxu0 0
      %1224 = vmatpush1.bf16.msra.mxu0 %v1208
      %1225 = vmatprep.subr.bf16.mxu0 0
      %1226 = vmatpush1.bf16.msra.mxu0 %v1207
      %1227 = vmatprep.subr.bf16.mxu0 0
      %1228 = vmatpush1.bf16.msra.mxu0 %v1206
      %1229 = vmatprep.subr.bf16.mxu0 0
      %1230 = vmatpush1.bf16.msra.mxu0 %v1205
      %1231 = vmatprep.subr.bf16.mxu0 0
      %1232 = vmatpush1.bf16.msra.mxu0 %v1204
      %1233 = vmatprep.subr.bf16.mxu0 0
      %1234 = vmatpush1.bf16.msra.mxu0 %v1203
      %1235 = vmatprep.subr.bf16.mxu0 0
      %1236 = vmatpush2.bf16.msra.mxu0 0
      %1237 = vmatprep.subr.bf16.mxu0 0
      %1238 = vmatpush2.bf16.msra.mxu0 0
      %1239 = vmatprep.subr.bf16.mxu0 0
      %1240 = vmatpush2.bf16.msra.mxu0 0
      %1241 = vmatprep.subr.bf16.mxu0 0
      %1242 = vmatpush2.bf16.msra.mxu0 0
      %1243 = vmatprep.subr.bf16.mxu0 0
      %1244 = vmatpush2.bf16.msra.mxu0 0
      %1245 = vmatprep.subr.bf16.mxu0 0
      %1246 = vmatpush2.bf16.msra.mxu0 0
      %1247 = vmatprep.subr.bf16.mxu0 0
      %1248 = vmatpush2.bf16.msra.mxu0 0
      %1249 = vmatprep.subr.bf16.mxu0 0
      %1250 = vmatpush2.bf16.msra.mxu0 0
      %1251 = vmatprep.mubr.bf16.mxu0 0
      %1252 = vmatmul.mubr.bf16.gmra.mxu0 %v1169
      %v1253 = vpop.f32.mrf.mxu0
      %v1254 = vadd.f32 0.0, %v1253
      %v1255 = vpop.f32.mrf.mxu0
      %v1256 = vpop.f32.mrf.mxu0
      %v1257 = vadd.f32 0.0, %v1256
      %v1258 = vpop.f32.mrf.mxu0
      %1259 = vdwg.mxu0
      %v1260 = vadd.f32 %v1137, %v1254
      %v1261 = vadd.f32 %v1138, %v1257
      %1262 = vst [vmem:[#allocation2] sm:$0xff] %v1260
      %1263 = vst [vmem:[#allocation2 + $0x8] sm:$0xff] %v1261
      %v1264 = vld [vmem:[#allocation2] sm:$0xff]
      %v1265 = vld [vmem:[#allocation2 + $0x8] sm:$0xff]
      %v1266 = vld [vmem:[%s233] sm:$0xe]
      %v1267 = vld [vmem:[%s233 + $0x4] sm:$0xf]
      %v1268 = vld [vmem:[%s233 + $0x8] sm:$0x3]
      %s1269 = scalar_lea.vmem %s237, 512
      %v1270 = vld [vmem:[%s1269] sm:$0xf]
      %v1271 = vld [vmem:[%s1269 + $0x4] sm:$0xf]
      %v1272 = vld [vmem:[%s1269 + $0x8] sm:$0xf]
      %v1273 = vld [vmem:[%s1269 + $0xc] sm:$0xf]
      %v1274 = vld [vmem:[%s1269 + $0x10] sm:$0xf]
      %v1275 = vld [vmem:[%s1269 + $0x14] sm:$0xf]
      %v1276 = vld [vmem:[%s1269 + $0x18] sm:$0xf]
      %v1277 = vld [vmem:[%s1269 + $0x1c] sm:$0xf]
      %v1278 = vld [vmem:[%s1269 + $0x20] sm:$0xf]
      %v1279 = vld [vmem:[%s1269 + $0x24] sm:$0xf]
      %v1280 = vld [vmem:[%s1269 + $0x28] sm:$0xf]
      %v1281 = vld [vmem:[%s1269 + $0x2c] sm:$0xf]
      %v1282 = vld [vmem:[%s1269 + $0x30] sm:$0xf]
      %v1283 = vld [vmem:[%s1269 + $0x34] sm:$0xf]
      %v1284 = vld [vmem:[%s1269 + $0x38] sm:$0xf]
      %v1285 = vld [vmem:[%s1269 + $0x3c] sm:$0xf]
      %v1289 = vunpack.c.l.b16 %v1266
      %v1290 = vunpack.c.l.b16 %v1267
      %v1291 = vunpack.c.l.b16 %v1268
      %v1292 = vpack.c.b16 %v1290, %v1289
      %v1293 = vpack.c.b16 %v1291, %v1291
      %vm1294 = vsmask.f32 6400
      %v1296 = vshrl.u32 %v1292, 16
      %v1298 = vrot.slane %v1296, 1
      %v1299 = vshll.u32 %v1292, 16
      %v1301 = vrot.slane %v1299, 2
      %v1302 = vor.u32 %v1298, %v1301
      %v1304 = vshrl.u32 %v1293, 16
      %v1306 = vrot.slane %v1304, 1
      %v1307 = vshll.u32 %v1293, 16
      %v1309 = vrot.slane %v1307, 2
      %v1310 = vor.u32 %v1306, %v1309
      %v1311 = vsel %vm1294, %v1302, %v1310
      %v1329 = vunpack.c.l.b16 %v1270
      %v1330 = vunpack.c.l.b16 %v1271
      %v1331 = vunpack.c.l.b16 %v1272
      %v1332 = vunpack.c.l.b16 %v1273
      %v1333 = vunpack.c.l.b16 %v1274
      %v1334 = vunpack.c.l.b16 %v1275
      %v1335 = vunpack.c.l.b16 %v1276
      %v1336 = vunpack.c.l.b16 %v1277
      %v1337 = vunpack.c.l.b16 %v1278
      %v1338 = vunpack.c.l.b16 %v1279
      %v1339 = vunpack.c.l.b16 %v1280
      %v1340 = vunpack.c.l.b16 %v1281
      %v1341 = vunpack.c.l.b16 %v1282
      %v1342 = vunpack.c.l.b16 %v1283
      %v1343 = vunpack.c.l.b16 %v1284
      %v1344 = vunpack.c.l.b16 %v1285
      %v1345 = vpack.c.b16 %v1330, %v1329
      %v1346 = vpack.c.b16 %v1332, %v1331
      %v1347 = vpack.c.b16 %v1334, %v1333
      %v1348 = vpack.c.b16 %v1336, %v1335
      %v1349 = vpack.c.b16 %v1338, %v1337
      %v1350 = vpack.c.b16 %v1340, %v1339
      %v1351 = vpack.c.b16 %v1342, %v1341
      %v1352 = vpack.c.b16 %v1344, %v1343
      %1361 = vmatprep.subr.bf16.mxu0 0
      %1362 = vmatpush1.bf16.msra.mxu0 %v1352
      %1363 = vmatprep.subr.bf16.mxu0 0
      %1364 = vmatpush1.bf16.msra.mxu0 %v1351
      %1365 = vmatprep.subr.bf16.mxu0 0
      %1366 = vmatpush1.bf16.msra.mxu0 %v1350
      %1367 = vmatprep.subr.bf16.mxu0 0
      %1368 = vmatpush1.bf16.msra.mxu0 %v1349
      %1369 = vmatprep.subr.bf16.mxu0 0
      %1370 = vmatpush1.bf16.msra.mxu0 %v1348
      %1371 = vmatprep.subr.bf16.mxu0 0
      %1372 = vmatpush1.bf16.msra.mxu0 %v1347
      %1373 = vmatprep.subr.bf16.mxu0 0
      %1374 = vmatpush1.bf16.msra.mxu0 %v1346
      %1375 = vmatprep.subr.bf16.mxu0 0
      %1376 = vmatpush1.bf16.msra.mxu0 %v1345
      %1377 = vmatprep.subr.bf16.mxu0 0
      %1378 = vmatpush2.bf16.msra.mxu0 0
      %1379 = vmatprep.subr.bf16.mxu0 0
      %1380 = vmatpush2.bf16.msra.mxu0 0
      %1381 = vmatprep.subr.bf16.mxu0 0
      %1382 = vmatpush2.bf16.msra.mxu0 0
      %1383 = vmatprep.subr.bf16.mxu0 0
      %1384 = vmatpush2.bf16.msra.mxu0 0
      %1385 = vmatprep.subr.bf16.mxu0 0
      %1386 = vmatpush2.bf16.msra.mxu0 0
      %1387 = vmatprep.subr.bf16.mxu0 0
      %1388 = vmatpush2.bf16.msra.mxu0 0
      %1389 = vmatprep.subr.bf16.mxu0 0
      %1390 = vmatpush2.bf16.msra.mxu0 0
      %1391 = vmatprep.subr.bf16.mxu0 0
      %1392 = vmatpush2.bf16.msra.mxu0 0
      %1393 = vmatprep.mubr.bf16.mxu0 0
      %1394 = vmatmul.mubr.bf16.gmra.mxu0 %v1311
      %v1395 = vpop.f32.mrf.mxu0
      %v1396 = vadd.f32 0.0, %v1395
      %v1397 = vpop.f32.mrf.mxu0
      %v1398 = vpop.f32.mrf.mxu0
      %v1399 = vadd.f32 0.0, %v1398
      %v1400 = vpop.f32.mrf.mxu0
      %1401 = vdwg.mxu0
      %v1402 = vadd.f32 %v1264, %v1396
      %v1403 = vadd.f32 %v1265, %v1399
      %1404 = vst [vmem:[#allocation2] sm:$0xff] %v1402
      %1405 = vst [vmem:[#allocation2 + $0x8] sm:$0xff] %v1403
      %v1406 = vld [vmem:[#allocation2] sm:$0xff]
      %v1407 = vld [vmem:[#allocation2 + $0x8] sm:$0xff]
      %v1408 = vld [vmem:[%s240] sm:$0x1]
      %v1410 = vlaneseq
      %v1411 = vshrl.u32 %v1410, 7
      %v1412 = vsub.s32 0, %v1411
      %v1413 = vrot.slane %v1408, %v1412
      %v1415 = vadd.f32 %v1406, %v1413
      %v1416 = vadd.f32 %v1407, %v1413
      %v1417 = vmax.f32 %v1415, 0.0
      %v1418 = vmax.f32 %v1416, 0.0
      %v1419 = vpack.c.bf16 %v1418, %v1417
      %v1421 = vunpack.c.l.b16 %v1419
      %v1422 = vunpack.c.h.b16 %v1419
      %v1423 = vpack.c.b16 %v1421, %v1421
      %v1424 = vpack.c.b16 %v1422, %v1422
      %1427 = vst [vmem:[%s252] sm:$0xf] %v1423
      %1428 = vst [vmem:[%s252 + $0x4] sm:$0xf] %v1424
      %s1429 = smul.u32 2, %s21
      %p1430 = scmp.lt.s32.totalorder %s20, 1
      %s1431 = scalar_select %p1430, %s20, 1
      %p1432 = scmp.lt.s32.totalorder %s1429, 1
      %s1433 = scalar_select %p1432, %s1429, 1
      %p1434 = scmp.lt.s32.totalorder %s19, 0
      %s1435 = scalar_select %p1434, %s19, 0
      %s1436 = sadd.s32 %s1435, %s1433
      %s1437 = smul.addr %s1431, 2
      %s1438 = sadd.s32 %s1436, %s1437
      %s1439 = smul.addr %s1438, 4
      %s1440 = scalar_lea.vmem %s3, %s1439
      // Predicated region
      $region33: #{timm_backbone_forward.9} parent=31 // pred_check
        %p1441 = pneg %p135
      $region34: #{timm_backbone_forward.9} parent=31 // pred_check_branch
        %1443 = sbr.rel (%p1441) target = $region36
      $region35: #{timm_backbone_forward.9} parent=31 // pred_region
        %s1444 = smul.u32 2, %s21
      $region36: #{timm_backbone_forward.9} parent=31 // pred_fallthru
        _
    $region32: #{timm_backbone_forward.9} parent=5 // pred_fallthru
      _
    %p1445 = scmp.le.s32.totalorder 2, %s9
    // Predicated region
    $region37: #{timm_backbone_forward.9} parent=5 // pred_check
      %p1446 = pneg %p1445
    $region38: #{timm_backbone_forward.9} parent=5 // pred_check_branch
      %1448 = sbr.rel (%p1446) target = $region40
    $region39: #{timm_backbone_forward.9} parent=5 // pred_region
      %s1449 = ssub.s32 %s9, 2
      // Predicated region
      $region41: #{timm_backbone_forward.9} parent=39 // pred_check
        %p1450 = pneg %p141
      $region42: #{timm_backbone_forward.9} parent=39 // pred_check_branch
        %1452 = sbr.rel (%p1450) target = $region44
      $region43: #{timm_backbone_forward.9} parent=39 // pred_region
        %s1453 = smul.u32 2, %s24
        %p1454 = scmp.lt.s32.totalorder %s23, 1
        %s1455 = scalar_select %p1454, %s23, 1
        %p1456 = scmp.lt.s32.totalorder %s1453, 1
        %s1457 = scalar_select %p1456, %s1453, 1
        %p1458 = scmp.lt.s32.totalorder %s22, 0
        %s1459 = scalar_select %p1458, %s22, 0
        %s1460 = sadd.s32 %s1459, %s1457
        %s1461 = smul.addr %s1455, 2
        %s1462 = sadd.s32 %s1460, %s1461
        %s1463 = smul.addr %s1462, 4
        %s1464 = scalar_lea.vmem %s3, %s1463
      $region44: #{timm_backbone_forward.9} parent=39 // pred_fallthru
        _
    $region40: #{timm_backbone_forward.9} parent=5 // pred_fallthru
      _
  $region6: #{timm_backbone_forward.9} parent=0 // loop_footer
    %s13 = sadd.s32 1, %s9
  $region7: #{timm_backbone_forward.9} parent=0 // loop_footer_branch
    %8 = sbr.rel target = $region3
  $region8: #{timm_backbone_forward.9} parent=0 // loop_exit
    _

</llo_original>
